<compile_context>
chip_gen: v6e
topology: v6e:2x2x1
jax: 0.10.0
libtpu: 0.0.40
codegen_flags: <defaults>
</compile_context>

<pallas_src>
import functools
import math

import numpy as np
import jax
import jax.numpy as jnp
from jax import lax
from jax.experimental import pallas as pl
from jax.experimental.pallas import tpu as pltpu

# ---- module hyper-parameters (same defaults as the PyTorch MIND module) ----
NL = 9                      # non_local_region_size
P = 7                       # patch_size
N = 3                       # neighbor_size
SIGMA2 = 3.0 * 3.0          # gaussian_patch_sigma ** 2
PAD_NL = (NL - 1) // 2      # 4
PAD_P = (P - 1) // 2        # 3
PAD_N = (N - 1) // 2        # 1
PAD_TOT = PAD_NL + PAD_P    # 7


def _gaussian_patch():
    # Matches torch init: t[0, x, y] = exp(-||(x-cx, y-cy)||_2 / sigma^2)
    k = np.zeros((P, P), np.float32)
    c = PAD_P
    for a in range(P):
        for b in range(P):
            k[a, b] = math.exp(-math.sqrt((a - c) ** 2 + (b - c) ** 2) / SIGMA2)
    return k


GK = _gaussian_patch()
# Folded weights: GK[ky, kx] == G2[|ky - 3|][|kx - 3|]  (10 distinct values).
G2 = [[float(GK[PAD_P + a, PAD_P + b]) for b in range(PAD_P + 1)]
      for a in range(PAD_P + 1)]


def mind_kernel(xp_ref, out_ref, *, H, W, TH):
    """xp_ref : (1, H+2*PAD_TOT, W+2*PAD_TOT) f32 zero-padded image (whole image).
       out_ref: (1, NL*NL, TH, W) f32 MIND descriptor for row-tile pl.program_id(1)."""
    He = TH + 2 * PAD_P          # extended rows needed by the 7x7 patch convs
    We = W + 2 * PAD_P
    r0 = pl.program_id(1) * TH   # first image row covered by this tile

    # Validity mask on the extended (He, We) domain: 1 inside the original image
    # (the second conv of each branch zero-pads the first conv's H x W output).
    ys = lax.broadcasted_iota(jnp.int32, (He, We), 0) + r0
    xs = lax.broadcasted_iota(jnp.int32, (He, We), 1)
    mask = ((ys >= PAD_P) & (ys < PAD_P + H) &
            (xs >= PAD_P) & (xs < PAD_P + W)).astype(jnp.float32)

    # Un-shifted image on the extended domain (loaded once, reused by all 81 channels).
    center = xp_ref[0, pl.ds(r0 + PAD_NL, He), pl.ds(PAD_NL, We)]

    # ---- neighbours(): 3x3 one-hot shifts -> separable all-ones 7x7 sum -> variance ----
    nb_rows = []
    for c in range(N * N):
        dy = c % N - PAD_N
        dx = c // N - PAD_N
        sh = xp_ref[0, pl.ds(r0 + PAD_NL + dy, He), pl.ds(PAD_NL + dx, We)]
        m = mask * sh
        rs = m[:, 0:W]
        for kx in range(1, P):                   # 7-tap row (lane) sum
            rs = rs + m[:, kx:kx + W]
        cs = rs[0:TH, :]
        for ky in range(1, P):                   # 7-tap column (sublane) sum
            cs = cs + rs[ky:ky + TH, :]
        nb_rows.append(cs[None])
    nb = jnp.concatenate(nb_rows, axis=0)        # (9, TH, W)
    mean = jnp.mean(nb, axis=0, keepdims=True)
    vx = jnp.sum((nb - mean) ** 2, axis=0) / float(N * N - 1)   # unbiased (torch .var)
    # Exact reciprocal (approx=True drifts past the 1e-4 parity with the reference).
    neg_inv_vx = -pl.reciprocal(vx + 1e-8, approx=False)        # (TH, W)

    # ---- image_shifter() + summation_patcher() + exp, fused per channel ----
    def channel_body(dxi):
        def body(dyi, den):
            ch = dxi * NL + dyi
            # shift by (dyi-4, dxi-4); reads of the zero pad implement the conv padding
            sh = xp_ref[0, pl.ds(r0 + dyi, He), pl.ds(dxi, We)]
            diff = sh - center
            d2 = mask * diff * diff              # (He, We)

            # fold kx symmetry: 7 hoisted lane shifts -> 4 arrays
            eb = [d2[:, PAD_P:PAD_P + W]]
            for b in range(1, PAD_P + 1):
                eb.append(d2[:, PAD_P - b:PAD_P - b + W] +
                          d2[:, PAD_P + b:PAD_P + b + W])

            # fold ky symmetry + weighted accumulation (10 distinct Gaussian weights)
            acc = jnp.zeros((TH, W), jnp.float32)
            for a in range(PAD_P + 1):
                for b in range(PAD_P + 1):
                    if a == 0:
                        t = eb[b][PAD_P:PAD_P + TH, :]
                    else:
                        t = (eb[b][PAD_P - a:PAD_P - a + TH, :] +
                             eb[b][PAD_P + a:PAD_P + a + TH, :])
                    acc = acc + G2[a][b] * t

            nume_c = jnp.exp(acc * neg_inv_vx)   # exp -> EUP
            out_ref[0, pl.ds(ch, 1), :, :] = nume_c[None]
            return den + nume_c
        return body

    denom = jnp.zeros((TH, W), jnp.float32)
    for dxi in range(NL):                        # static lane offsets (0..8)
        denom = lax.fori_loop(0, NL, channel_body(dxi), denom)

    # ---- channel softmax normalization: one reciprocal + 81 multiplies ----
    inv_den = pl.reciprocal(denom, approx=False)
    out_ref[0] = out_ref[0] * inv_den[None, :, :]


def _pick_tile_h(H, tile_h):
    if tile_h is not None:
        assert H % tile_h == 0, "tile_h must divide H"
        assert tile_h % 8 == 0 or tile_h == H, "tile_h must be a multiple of 8 (or H)"
        return tile_h
    for cand in (16, 8):                         # keeps VMEM modest on v7x (64 MiB)
        if H % cand == 0:
            return cand
    return H


def mind_pallas(orig, tile_h=None):
    B, C, H, W = orig.shape
    assert C == 1
    x = orig[:, 0].astype(jnp.float32)                                   # (B, H, W)
    xpad = jnp.pad(x, ((0, 0), (PAD_TOT, PAD_TOT), (PAD_TOT, PAD_TOT)))  # zero pad by 7
    Hp, Wp = H + 2 * PAD_TOT, W + 2 * PAD_TOT
    TH = _pick_tile_h(H, tile_h)
    n_tiles = H // TH

    kernel = functools.partial(mind_kernel, H=H, W=W, TH=TH)
    return pl.pallas_call(
        kernel,
        out_shape=jax.ShapeDtypeStruct((B, NL * NL, H, W), jnp.float32),
        grid_spec=pltpu.PrefetchScalarGridSpec(
            num_scalar_prefetch=0,
            grid=(B, n_tiles),
            # padded image block is constant along the tile axis -> fetched once per batch
            in_specs=[pl.BlockSpec((1, Hp, Wp), lambda b, i: (b, 0, 0))],
            out_specs=pl.BlockSpec((1, NL * NL, TH, W), lambda b, i: (b, 0, i, 0)),
        ),
        compiler_params=pltpu.CompilerParams(
            dimension_semantics=("parallel", "parallel"),   # both v7x TCs used at B=1
            vmem_limit_bytes=48 * 1024 * 1024,              # headroom on v7x's 64 MiB
        ),
    )(xpad)


# ---------------- pure-JAX reference (mirrors the PyTorch convs exactly) ----------------
def mind_reference(orig):
    w_shift = np.zeros((NL * NL, 1, NL, NL), np.float32)
    for i in range(NL * NL):
        w_shift[i, 0, i % NL, i // NL] = 1.0
    w_sum = np.tile(GK[None, None], (NL * NL, 1, 1, 1)).astype(np.float32)
    w_nb = np.zeros((N * N, 1, N, N), np.float32)
    for i in range(N * N):
        w_nb[i, 0, i % N, i // N] = 1.0
    w_nbsum = np.ones((N * N, 1, P, P), np.float32)

    def conv(x, w, pad, groups):
        return lax.conv_general_dilated(
            x, jnp.asarray(w), (1, 1), [(pad, pad), (pad, pad)],
            feature_group_count=groups,
            dimension_numbers=("NCHW", "OIHW", "NCHW"))

    shifted = conv(orig, w_shift, PAD_NL, 1)
    stack = jnp.tile(orig, (1, NL * NL, 1, 1))
    dx_alpha = conv((shifted - stack) ** 2, w_sum, PAD_P, NL * NL)
    nbi = conv(conv(orig, w_nb, PAD_N, 1), w_nbsum, PAD_P, N * N)
    vx = jnp.var(nbi, axis=1, ddof=1, keepdims=True)
    nume = jnp.exp(-dx_alpha / (vx + 1e-8))
    return nume / jnp.sum(nume, axis=1, keepdims=True)


if __name__ == "__main__":
    B, H, W = 2, 16, 16
    key = jax.random.PRNGKey(0)
    orig = jax.random.normal(key, (B, 1, H, W), dtype=jnp.float32)

    # tile_h=8 -> two row-tiles per image, exercising the tiled/global-mask path.
    out = jax.block_until_ready(mind_pallas(orig, tile_h=8))
    ref = jax.block_until_ready(mind_reference(orig))

    assert out.shape == (B, NL * NL, H, W), out.shape
    err = float(jnp.max(jnp.abs(out - ref)))
    assert err < 1e-4, f"max abs err = {err}"
    print("KERNEL_OK")
</pallas_src>

<mosaic_0001>
module attributes {stable_mosaic.version = 11 : i64} {
  func.func @mind_kernel(%arg0: i32, %arg1: i32, %arg2: memref<1x30x30xf32, #tpu.memory_space<vmem>>, %arg3: memref<1x81x8x16xf32, #tpu.memory_space<vmem>>) attributes {dimension_semantics = [#tpu.dimension_semantics<parallel>, #tpu.dimension_semantics<parallel>], iteration_bounds = array<i64: 2, 2>, scalar_prefetch = 0 : i64, scratch_operands = 0 : i64, tpu.core_type = #tpu.core_type<tc>, window_params = [{transform_indices = @transform_0, window_bounds = array<i64: 1, 30, 30>}, {transform_indices = @transform_1, window_bounds = array<i64: 1, 81, 8, 16>}]} {
    %c8_i32 = arith.constant 8 : i32
    %0 = arith.muli %arg1, %c8_i32 : i32
    %1 = tpu.iota {dimensions = array<i32: 0>} : vector<14x22xi32>
    %2 = vector.broadcast %0 : i32 to vector<14x22xi32>
    %3 = arith.addi %1, %2 : vector<14x22xi32>
    %4 = tpu.iota {dimensions = array<i32: 1>} : vector<14x22xi32>
    %c3_i32 = arith.constant 3 : i32
    %5 = vector.broadcast %c3_i32 : i32 to vector<14x22xi32>
    %6 = arith.cmpi sge, %3, %5 : vector<14x22xi32>
    %c19_i32 = arith.constant 19 : i32
    %7 = vector.broadcast %c19_i32 : i32 to vector<14x22xi32>
    %8 = arith.cmpi slt, %3, %7 : vector<14x22xi32>
    %9 = arith.andi %6, %8 : vector<14x22xi1>
    %c3_i32_0 = arith.constant 3 : i32
    %10 = vector.broadcast %c3_i32_0 : i32 to vector<14x22xi32>
    %11 = arith.cmpi sge, %4, %10 : vector<14x22xi32>
    %12 = arith.andi %9, %11 : vector<14x22xi1>
    %c19_i32_1 = arith.constant 19 : i32
    %13 = vector.broadcast %c19_i32_1 : i32 to vector<14x22xi32>
    %14 = arith.cmpi slt, %4, %13 : vector<14x22xi32>
    %15 = arith.andi %12, %14 : vector<14x22xi1>
    %16 = arith.extui %15 : vector<14x22xi1> to vector<14x22xi32>
    %17 = arith.sitofp %16 : vector<14x22xi32> to vector<14x22xf32>
    %c4_i32 = arith.constant 4 : i32
    %18 = arith.addi %0, %c4_i32 : i32
    %c0 = arith.constant 0 : index
    %19 = arith.index_cast %18 : i32 to index
    %c4 = arith.constant 4 : index
    %20 = vector.load %arg2[%c0, %19, %c4] : memref<1x30x30xf32, #tpu.memory_space<vmem>>, vector<1x14x22xf32>
    %21 = vector.shape_cast %20 : vector<1x14x22xf32> to vector<14x22xf32>
    %c4_i32_2 = arith.constant 4 : i32
    %22 = arith.addi %0, %c4_i32_2 : i32
    %c-1_i32 = arith.constant -1 : i32
    %23 = arith.addi %22, %c-1_i32 : i32
    %c0_3 = arith.constant 0 : index
    %24 = arith.index_cast %23 : i32 to index
    %c3 = arith.constant 3 : index
    %25 = vector.load %arg2[%c0_3, %24, %c3] : memref<1x30x30xf32, #tpu.memory_space<vmem>>, vector<1x14x22xf32>
    %26 = vector.shape_cast %25 : vector<1x14x22xf32> to vector<14x22xf32>
    %27 = arith.mulf %17, %26 : vector<14x22xf32>
    %28 = vector.extract_strided_slice %27 {offsets = [0, 0], sizes = [14, 16], strides = [1, 1]} : vector<14x22xf32> to vector<14x16xf32>
    %29 = vector.extract_strided_slice %27 {offsets = [0, 1], sizes = [14, 16], strides = [1, 1]} : vector<14x22xf32> to vector<14x16xf32>
    %30 = arith.addf %28, %29 : vector<14x16xf32>
    %31 = vector.extract_strided_slice %27 {offsets = [0, 2], sizes = [14, 16], strides = [1, 1]} : vector<14x22xf32> to vector<14x16xf32>
    %32 = arith.addf %30, %31 : vector<14x16xf32>
    %33 = vector.extract_strided_slice %27 {offsets = [0, 3], sizes = [14, 16], strides = [1, 1]} : vector<14x22xf32> to vector<14x16xf32>
    %34 = arith.addf %32, %33 : vector<14x16xf32>
    %35 = vector.extract_strided_slice %27 {offsets = [0, 4], sizes = [14, 16], strides = [1, 1]} : vector<14x22xf32> to vector<14x16xf32>
    %36 = arith.addf %34, %35 : vector<14x16xf32>
    %37 = vector.extract_strided_slice %27 {offsets = [0, 5], sizes = [14, 16], strides = [1, 1]} : vector<14x22xf32> to vector<14x16xf32>
    %38 = arith.addf %36, %37 : vector<14x16xf32>
    %39 = vector.extract_strided_slice %27 {offsets = [0, 6], sizes = [14, 16], strides = [1, 1]} : vector<14x22xf32> to vector<14x16xf32>
    %40 = arith.addf %38, %39 : vector<14x16xf32>
    %41 = vector.extract_strided_slice %40 {offsets = [0, 0], sizes = [8, 16], strides = [1, 1]} : vector<14x16xf32> to vector<8x16xf32>
    %42 = vector.extract_strided_slice %40 {offsets = [1, 0], sizes = [8, 16], strides = [1, 1]} : vector<14x16xf32> to vector<8x16xf32>
    %43 = arith.addf %41, %42 : vector<8x16xf32>
    %44 = vector.extract_strided_slice %40 {offsets = [2, 0], sizes = [8, 16], strides = [1, 1]} : vector<14x16xf32> to vector<8x16xf32>
    %45 = arith.addf %43, %44 : vector<8x16xf32>
    %46 = vector.extract_strided_slice %40 {offsets = [3, 0], sizes = [8, 16], strides = [1, 1]} : vector<14x16xf32> to vector<8x16xf32>
    %47 = arith.addf %45, %46 : vector<8x16xf32>
    %48 = vector.extract_strided_slice %40 {offsets = [4, 0], sizes = [8, 16], strides = [1, 1]} : vector<14x16xf32> to vector<8x16xf32>
    %49 = arith.addf %47, %48 : vector<8x16xf32>
    %50 = vector.extract_strided_slice %40 {offsets = [5, 0], sizes = [8, 16], strides = [1, 1]} : vector<14x16xf32> to vector<8x16xf32>
    %51 = arith.addf %49, %50 : vector<8x16xf32>
    %52 = vector.extract_strided_slice %40 {offsets = [6, 0], sizes = [8, 16], strides = [1, 1]} : vector<14x16xf32> to vector<8x16xf32>
    %53 = arith.addf %51, %52 : vector<8x16xf32>
    %54 = vector.shape_cast %53 : vector<8x16xf32> to vector<1x8x16xf32>
    %c4_i32_4 = arith.constant 4 : i32
    %55 = arith.addi %0, %c4_i32_4 : i32
    %c0_i32 = arith.constant 0 : i32
    %56 = arith.addi %55, %c0_i32 : i32
    %c0_5 = arith.constant 0 : index
    %57 = arith.index_cast %56 : i32 to index
    %c3_6 = arith.constant 3 : index
    %58 = vector.load %arg2[%c0_5, %57, %c3_6] : memref<1x30x30xf32, #tpu.memory_space<vmem>>, vector<1x14x22xf32>
    %59 = vector.shape_cast %58 : vector<1x14x22xf32> to vector<14x22xf32>
    %60 = arith.mulf %17, %59 : vector<14x22xf32>
    %61 = vector.extract_strided_slice %60 {offsets = [0, 0], sizes = [14, 16], strides = [1, 1]} : vector<14x22xf32> to vector<14x16xf32>
    %62 = vector.extract_strided_slice %60 {offsets = [0, 1], sizes = [14, 16], strides = [1, 1]} : vector<14x22xf32> to vector<14x16xf32>
    %63 = arith.addf %61, %62 : vector<14x16xf32>
    %64 = vector.extract_strided_slice %60 {offsets = [0, 2], sizes = [14, 16], strides = [1, 1]} : vector<14x22xf32> to vector<14x16xf32>
    %65 = arith.addf %63, %64 : vector<14x16xf32>
    %66 = vector.extract_strided_slice %60 {offsets = [0, 3], sizes = [14, 16], strides = [1, 1]} : vector<14x22xf32> to vector<14x16xf32>
    %67 = arith.addf %65, %66 : vector<14x16xf32>
    %68 = vector.extract_strided_slice %60 {offsets = [0, 4], sizes = [14, 16], strides = [1, 1]} : vector<14x22xf32> to vector<14x16xf32>
    %69 = arith.addf %67, %68 : vector<14x16xf32>
    %70 = vector.extract_strided_slice %60 {offsets = [0, 5], sizes = [14, 16], strides = [1, 1]} : vector<14x22xf32> to vector<14x16xf32>
    %71 = arith.addf %69, %70 : vector<14x16xf32>
    %72 = vector.extract_strided_slice %60 {offsets = [0, 6], sizes = [14, 16], strides = [1, 1]} : vector<14x22xf32> to vector<14x16xf32>
    %73 = arith.addf %71, %72 : vector<14x16xf32>
    %74 = vector.extract_strided_slice %73 {offsets = [0, 0], sizes = [8, 16], strides = [1, 1]} : vector<14x16xf32> to vector<8x16xf32>
    %75 = vector.extract_strided_slice %73 {offsets = [1, 0], sizes = [8, 16], strides = [1, 1]} : vector<14x16xf32> to vector<8x16xf32>
    %76 = arith.addf %74, %75 : vector<8x16xf32>
    %77 = vector.extract_strided_slice %73 {offsets = [2, 0], sizes = [8, 16], strides = [1, 1]} : vector<14x16xf32> to vector<8x16xf32>
    %78 = arith.addf %76, %77 : vector<8x16xf32>
    %79 = vector.extract_strided_slice %73 {offsets = [3, 0], sizes = [8, 16], strides = [1, 1]} : vector<14x16xf32> to vector<8x16xf32>
    %80 = arith.addf %78, %79 : vector<8x16xf32>
    %81 = vector.extract_strided_slice %73 {offsets = [4, 0], sizes = [8, 16], strides = [1, 1]} : vector<14x16xf32> to vector<8x16xf32>
    %82 = arith.addf %80, %81 : vector<8x16xf32>
    %83 = vector.extract_strided_slice %73 {offsets = [5, 0], sizes = [8, 16], strides = [1, 1]} : vector<14x16xf32> to vector<8x16xf32>
    %84 = arith.addf %82, %83 : vector<8x16xf32>
    %85 = vector.extract_strided_slice %73 {offsets = [6, 0], sizes = [8, 16], strides = [1, 1]} : vector<14x16xf32> to vector<8x16xf32>
    %86 = arith.addf %84, %85 : vector<8x16xf32>
    %87 = vector.shape_cast %86 : vector<8x16xf32> to vector<1x8x16xf32>
    %c4_i32_7 = arith.constant 4 : i32
    %88 = arith.addi %0, %c4_i32_7 : i32
    %c1_i32 = arith.constant 1 : i32
    %89 = arith.addi %88, %c1_i32 : i32
    %c0_8 = arith.constant 0 : index
    %90 = arith.index_cast %89 : i32 to index
    %c3_9 = arith.constant 3 : index
    %91 = vector.load %arg2[%c0_8, %90, %c3_9] : memref<1x30x30xf32, #tpu.memory_space<vmem>>, vector<1x14x22xf32>
    %92 = vector.shape_cast %91 : vector<1x14x22xf32> to vector<14x22xf32>
    %93 = arith.mulf %17, %92 : vector<14x22xf32>
    %94 = vector.extract_strided_slice %93 {offsets = [0, 0], sizes = [14, 16], strides = [1, 1]} : vector<14x22xf32> to vector<14x16xf32>
    %95 = vector.extract_strided_slice %93 {offsets = [0, 1], sizes = [14, 16], strides = [1, 1]} : vector<14x22xf32> to vector<14x16xf32>
    %96 = arith.addf %94, %95 : vector<14x16xf32>
    %97 = vector.extract_strided_slice %93 {offsets = [0, 2], sizes = [14, 16], strides = [1, 1]} : vector<14x22xf32> to vector<14x16xf32>
    %98 = arith.addf %96, %97 : vector<14x16xf32>
    %99 = vector.extract_strided_slice %93 {offsets = [0, 3], sizes = [14, 16], strides = [1, 1]} : vector<14x22xf32> to vector<14x16xf32>
    %100 = arith.addf %98, %99 : vector<14x16xf32>
    %101 = vector.extract_strided_slice %93 {offsets = [0, 4], sizes = [14, 16], strides = [1, 1]} : vector<14x22xf32> to vector<14x16xf32>
    %102 = arith.addf %100, %101 : vector<14x16xf32>
    %103 = vector.extract_strided_slice %93 {offsets = [0, 5], sizes = [14, 16], strides = [1, 1]} : vector<14x22xf32> to vector<14x16xf32>
    %104 = arith.addf %102, %103 : vector<14x16xf32>
    %105 = vector.extract_strided_slice %93 {offsets = [0, 6], sizes = [14, 16], strides = [1, 1]} : vector<14x22xf32> to vector<14x16xf32>
    %106 = arith.addf %104, %105 : vector<14x16xf32>
    %107 = vector.extract_strided_slice %106 {offsets = [0, 0], sizes = [8, 16], strides = [1, 1]} : vector<14x16xf32> to vector<8x16xf32>
    %108 = vector.extract_strided_slice %106 {offsets = [1, 0], sizes = [8, 16], strides = [1, 1]} : vector<14x16xf32> to vector<8x16xf32>
    %109 = arith.addf %107, %108 : vector<8x16xf32>
    %110 = vector.extract_strided_slice %106 {offsets = [2, 0], sizes = [8, 16], strides = [1, 1]} : vector<14x16xf32> to vector<8x16xf32>
    %111 = arith.addf %109, %110 : vector<8x16xf32>
    %112 = vector.extract_strided_slice %106 {offsets = [3, 0], sizes = [8, 16], strides = [1, 1]} : vector<14x16xf32> to vector<8x16xf32>
    %113 = arith.addf %111, %112 : vector<8x16xf32>
    %114 = vector.extract_strided_slice %106 {offsets = [4, 0], sizes = [8, 16], strides = [1, 1]} : vector<14x16xf32> to vector<8x16xf32>
    %115 = arith.addf %113, %114 : vector<8x16xf32>
    %116 = vector.extract_strided_slice %106 {offsets = [5, 0], sizes = [8, 16], strides = [1, 1]} : vector<14x16xf32> to vector<8x16xf32>
    %117 = arith.addf %115, %116 : vector<8x16xf32>
    %118 = vector.extract_strided_slice %106 {offsets = [6, 0], sizes = [8, 16], strides = [1, 1]} : vector<14x16xf32> to vector<8x16xf32>
    %119 = arith.addf %117, %118 : vector<8x16xf32>
    %120 = vector.shape_cast %119 : vector<8x16xf32> to vector<1x8x16xf32>
    %c4_i32_10 = arith.constant 4 : i32
    %121 = arith.addi %0, %c4_i32_10 : i32
    %c-1_i32_11 = arith.constant -1 : i32
    %122 = arith.addi %121, %c-1_i32_11 : i32
    %c0_12 = arith.constant 0 : index
    %123 = arith.index_cast %122 : i32 to index
    %c4_13 = arith.constant 4 : index
    %124 = vector.load %arg2[%c0_12, %123, %c4_13] : memref<1x30x30xf32, #tpu.memory_space<vmem>>, vector<1x14x22xf32>
    %125 = vector.shape_cast %124 : vector<1x14x22xf32> to vector<14x22xf32>
    %126 = arith.mulf %17, %125 : vector<14x22xf32>
    %127 = vector.extract_strided_slice %126 {offsets = [0, 0], sizes = [14, 16], strides = [1, 1]} : vector<14x22xf32> to vector<14x16xf32>
    %128 = vector.extract_strided_slice %126 {offsets = [0, 1], sizes = [14, 16], strides = [1, 1]} : vector<14x22xf32> to vector<14x16xf32>
    %129 = arith.addf %127, %128 : vector<14x16xf32>
    %130 = vector.extract_strided_slice %126 {offsets = [0, 2], sizes = [14, 16], strides = [1, 1]} : vector<14x22xf32> to vector<14x16xf32>
    %131 = arith.addf %129, %130 : vector<14x16xf32>
    %132 = vector.extract_strided_slice %126 {offsets = [0, 3], sizes = [14, 16], strides = [1, 1]} : vector<14x22xf32> to vector<14x16xf32>
    %133 = arith.addf %131, %132 : vector<14x16xf32>
    %134 = vector.extract_strided_slice %126 {offsets = [0, 4], sizes = [14, 16], strides = [1, 1]} : vector<14x22xf32> to vector<14x16xf32>
    %135 = arith.addf %133, %134 : vector<14x16xf32>
    %136 = vector.extract_strided_slice %126 {offsets = [0, 5], sizes = [14, 16], strides = [1, 1]} : vector<14x22xf32> to vector<14x16xf32>
    %137 = arith.addf %135, %136 : vector<14x16xf32>
    %138 = vector.extract_strided_slice %126 {offsets = [0, 6], sizes = [14, 16], strides = [1, 1]} : vector<14x22xf32> to vector<14x16xf32>
    %139 = arith.addf %137, %138 : vector<14x16xf32>
    %140 = vector.extract_strided_slice %139 {offsets = [0, 0], sizes = [8, 16], strides = [1, 1]} : vector<14x16xf32> to vector<8x16xf32>
    %141 = vector.extract_strided_slice %139 {offsets = [1, 0], sizes = [8, 16], strides = [1, 1]} : vector<14x16xf32> to vector<8x16xf32>
    %142 = arith.addf %140, %141 : vector<8x16xf32>
    %143 = vector.extract_strided_slice %139 {offsets = [2, 0], sizes = [8, 16], strides = [1, 1]} : vector<14x16xf32> to vector<8x16xf32>
    %144 = arith.addf %142, %143 : vector<8x16xf32>
    %145 = vector.extract_strided_slice %139 {offsets = [3, 0], sizes = [8, 16], strides = [1, 1]} : vector<14x16xf32> to vector<8x16xf32>
    %146 = arith.addf %144, %145 : vector<8x16xf32>
    %147 = vector.extract_strided_slice %139 {offsets = [4, 0], sizes = [8, 16], strides = [1, 1]} : vector<14x16xf32> to vector<8x16xf32>
    %148 = arith.addf %146, %147 : vector<8x16xf32>
    %149 = vector.extract_strided_slice %139 {offsets = [5, 0], sizes = [8, 16], strides = [1, 1]} : vector<14x16xf32> to vector<8x16xf32>
    %150 = arith.addf %148, %149 : vector<8x16xf32>
    %151 = vector.extract_strided_slice %139 {offsets = [6, 0], sizes = [8, 16], strides = [1, 1]} : vector<14x16xf32> to vector<8x16xf32>
    %152 = arith.addf %150, %151 : vector<8x16xf32>
    %153 = vector.shape_cast %152 : vector<8x16xf32> to vector<1x8x16xf32>
    %c4_i32_14 = arith.constant 4 : i32
    %154 = arith.addi %0, %c4_i32_14 : i32
    %c0_i32_15 = arith.constant 0 : i32
    %155 = arith.addi %154, %c0_i32_15 : i32
    %c0_16 = arith.constant 0 : index
    %156 = arith.index_cast %155 : i32 to index
    %c4_17 = arith.constant 4 : index
    %157 = vector.load %arg2[%c0_16, %156, %c4_17] : memref<1x30x30xf32, #tpu.memory_space<vmem>>, vector<1x14x22xf32>
    %158 = vector.shape_cast %157 : vector<1x14x22xf32> to vector<14x22xf32>
    %159 = arith.mulf %17, %158 : vector<14x22xf32>
    %160 = vector.extract_strided_slice %159 {offsets = [0, 0], sizes = [14, 16], strides = [1, 1]} : vector<14x22xf32> to vector<14x16xf32>
    %161 = vector.extract_strided_slice %159 {offsets = [0, 1], sizes = [14, 16], strides = [1, 1]} : vector<14x22xf32> to vector<14x16xf32>
    %162 = arith.addf %160, %161 : vector<14x16xf32>
    %163 = vector.extract_strided_slice %159 {offsets = [0, 2], sizes = [14, 16], strides = [1, 1]} : vector<14x22xf32> to vector<14x16xf32>
    %164 = arith.addf %162, %163 : vector<14x16xf32>
    %165 = vector.extract_strided_slice %159 {offsets = [0, 3], sizes = [14, 16], strides = [1, 1]} : vector<14x22xf32> to vector<14x16xf32>
    %166 = arith.addf %164, %165 : vector<14x16xf32>
    %167 = vector.extract_strided_slice %159 {offsets = [0, 4], sizes = [14, 16], strides = [1, 1]} : vector<14x22xf32> to vector<14x16xf32>
    %168 = arith.addf %166, %167 : vector<14x16xf32>
    %169 = vector.extract_strided_slice %159 {offsets = [0, 5], sizes = [14, 16], strides = [1, 1]} : vector<14x22xf32> to vector<14x16xf32>
    %170 = arith.addf %168, %169 : vector<14x16xf32>
    %171 = vector.extract_strided_slice %159 {offsets = [0, 6], sizes = [14, 16], strides = [1, 1]} : vector<14x22xf32> to vector<14x16xf32>
    %172 = arith.addf %170, %171 : vector<14x16xf32>
    %173 = vector.extract_strided_slice %172 {offsets = [0, 0], sizes = [8, 16], strides = [1, 1]} : vector<14x16xf32> to vector<8x16xf32>
    %174 = vector.extract_strided_slice %172 {offsets = [1, 0], sizes = [8, 16], strides = [1, 1]} : vector<14x16xf32> to vector<8x16xf32>
    %175 = arith.addf %173, %174 : vector<8x16xf32>
    %176 = vector.extract_strided_slice %172 {offsets = [2, 0], sizes = [8, 16], strides = [1, 1]} : vector<14x16xf32> to vector<8x16xf32>
    %177 = arith.addf %175, %176 : vector<8x16xf32>
    %178 = vector.extract_strided_slice %172 {offsets = [3, 0], sizes = [8, 16], strides = [1, 1]} : vector<14x16xf32> to vector<8x16xf32>
    %179 = arith.addf %177, %178 : vector<8x16xf32>
    %180 = vector.extract_strided_slice %172 {offsets = [4, 0], sizes = [8, 16], strides = [1, 1]} : vector<14x16xf32> to vector<8x16xf32>
    %181 = arith.addf %179, %180 : vector<8x16xf32>
    %182 = vector.extract_strided_slice %172 {offsets = [5, 0], sizes = [8, 16], strides = [1, 1]} : vector<14x16xf32> to vector<8x16xf32>
    %183 = arith.addf %181, %182 : vector<8x16xf32>
    %184 = vector.extract_strided_slice %172 {offsets = [6, 0], sizes = [8, 16], strides = [1, 1]} : vector<14x16xf32> to vector<8x16xf32>
    %185 = arith.addf %183, %184 : vector<8x16xf32>
    %186 = vector.shape_cast %185 : vector<8x16xf32> to vector<1x8x16xf32>
    %c4_i32_18 = arith.constant 4 : i32
    %187 = arith.addi %0, %c4_i32_18 : i32
    %c1_i32_19 = arith.constant 1 : i32
    %188 = arith.addi %187, %c1_i32_19 : i32
    %c0_20 = arith.constant 0 : index
    %189 = arith.index_cast %188 : i32 to index
    %c4_21 = arith.constant 4 : index
    %190 = vector.load %arg2[%c0_20, %189, %c4_21] : memref<1x30x30xf32, #tpu.memory_space<vmem>>, vector<1x14x22xf32>
    %191 = vector.shape_cast %190 : vector<1x14x22xf32> to vector<14x22xf32>
    %192 = arith.mulf %17, %191 : vector<14x22xf32>
    %193 = vector.extract_strided_slice %192 {offsets = [0, 0], sizes = [14, 16], strides = [1, 1]} : vector<14x22xf32> to vector<14x16xf32>
    %194 = vector.extract_strided_slice %192 {offsets = [0, 1], sizes = [14, 16], strides = [1, 1]} : vector<14x22xf32> to vector<14x16xf32>
    %195 = arith.addf %193, %194 : vector<14x16xf32>
    %196 = vector.extract_strided_slice %192 {offsets = [0, 2], sizes = [14, 16], strides = [1, 1]} : vector<14x22xf32> to vector<14x16xf32>
    %197 = arith.addf %195, %196 : vector<14x16xf32>
    %198 = vector.extract_strided_slice %192 {offsets = [0, 3], sizes = [14, 16], strides = [1, 1]} : vector<14x22xf32> to vector<14x16xf32>
    %199 = arith.addf %197, %198 : vector<14x16xf32>
    %200 = vector.extract_strided_slice %192 {offsets = [0, 4], sizes = [14, 16], strides = [1, 1]} : vector<14x22xf32> to vector<14x16xf32>
    %201 = arith.addf %199, %200 : vector<14x16xf32>
    %202 = vector.extract_strided_slice %192 {offsets = [0, 5], sizes = [14, 16], strides = [1, 1]} : vector<14x22xf32> to vector<14x16xf32>
    %203 = arith.addf %201, %202 : vector<14x16xf32>
    %204 = vector.extract_strided_slice %192 {offsets = [0, 6], sizes = [14, 16], strides = [1, 1]} : vector<14x22xf32> to vector<14x16xf32>
    %205 = arith.addf %203, %204 : vector<14x16xf32>
    %206 = vector.extract_strided_slice %205 {offsets = [0, 0], sizes = [8, 16], strides = [1, 1]} : vector<14x16xf32> to vector<8x16xf32>
    %207 = vector.extract_strided_slice %205 {offsets = [1, 0], sizes = [8, 16], strides = [1, 1]} : vector<14x16xf32> to vector<8x16xf32>
    %208 = arith.addf %206, %207 : vector<8x16xf32>
    %209 = vector.extract_strided_slice %205 {offsets = [2, 0], sizes = [8, 16], strides = [1, 1]} : vector<14x16xf32> to vector<8x16xf32>
    %210 = arith.addf %208, %209 : vector<8x16xf32>
    %211 = vector.extract_strided_slice %205 {offsets = [3, 0], sizes = [8, 16], strides = [1, 1]} : vector<14x16xf32> to vector<8x16xf32>
    %212 = arith.addf %210, %211 : vector<8x16xf32>
    %213 = vector.extract_strided_slice %205 {offsets = [4, 0], sizes = [8, 16], strides = [1, 1]} : vector<14x16xf32> to vector<8x16xf32>
    %214 = arith.addf %212, %213 : vector<8x16xf32>
    %215 = vector.extract_strided_slice %205 {offsets = [5, 0], sizes = [8, 16], strides = [1, 1]} : vector<14x16xf32> to vector<8x16xf32>
    %216 = arith.addf %214, %215 : vector<8x16xf32>
    %217 = vector.extract_strided_slice %205 {offsets = [6, 0], sizes = [8, 16], strides = [1, 1]} : vector<14x16xf32> to vector<8x16xf32>
    %218 = arith.addf %216, %217 : vector<8x16xf32>
    %219 = vector.shape_cast %218 : vector<8x16xf32> to vector<1x8x16xf32>
    %c4_i32_22 = arith.constant 4 : i32
    %220 = arith.addi %0, %c4_i32_22 : i32
    %c-1_i32_23 = arith.constant -1 : i32
    %221 = arith.addi %220, %c-1_i32_23 : i32
    %c0_24 = arith.constant 0 : index
    %222 = arith.index_cast %221 : i32 to index
    %c5 = arith.constant 5 : index
    %223 = vector.load %arg2[%c0_24, %222, %c5] : memref<1x30x30xf32, #tpu.memory_space<vmem>>, vector<1x14x22xf32>
    %224 = vector.shape_cast %223 : vector<1x14x22xf32> to vector<14x22xf32>
    %225 = arith.mulf %17, %224 : vector<14x22xf32>
    %226 = vector.extract_strided_slice %225 {offsets = [0, 0], sizes = [14, 16], strides = [1, 1]} : vector<14x22xf32> to vector<14x16xf32>
    %227 = vector.extract_strided_slice %225 {offsets = [0, 1], sizes = [14, 16], strides = [1, 1]} : vector<14x22xf32> to vector<14x16xf32>
    %228 = arith.addf %226, %227 : vector<14x16xf32>
    %229 = vector.extract_strided_slice %225 {offsets = [0, 2], sizes = [14, 16], strides = [1, 1]} : vector<14x22xf32> to vector<14x16xf32>
    %230 = arith.addf %228, %229 : vector<14x16xf32>
    %231 = vector.extract_strided_slice %225 {offsets = [0, 3], sizes = [14, 16], strides = [1, 1]} : vector<14x22xf32> to vector<14x16xf32>
    %232 = arith.addf %230, %231 : vector<14x16xf32>
    %233 = vector.extract_strided_slice %225 {offsets = [0, 4], sizes = [14, 16], strides = [1, 1]} : vector<14x22xf32> to vector<14x16xf32>
    %234 = arith.addf %232, %233 : vector<14x16xf32>
    %235 = vector.extract_strided_slice %225 {offsets = [0, 5], sizes = [14, 16], strides = [1, 1]} : vector<14x22xf32> to vector<14x16xf32>
    %236 = arith.addf %234, %235 : vector<14x16xf32>
    %237 = vector.extract_strided_slice %225 {offsets = [0, 6], sizes = [14, 16], strides = [1, 1]} : vector<14x22xf32> to vector<14x16xf32>
    %238 = arith.addf %236, %237 : vector<14x16xf32>
    %239 = vector.extract_strided_slice %238 {offsets = [0, 0], sizes = [8, 16], strides = [1, 1]} : vector<14x16xf32> to vector<8x16xf32>
    %240 = vector.extract_strided_slice %238 {offsets = [1, 0], sizes = [8, 16], strides = [1, 1]} : vector<14x16xf32> to vector<8x16xf32>
    %241 = arith.addf %239, %240 : vector<8x16xf32>
    %242 = vector.extract_strided_slice %238 {offsets = [2, 0], sizes = [8, 16], strides = [1, 1]} : vector<14x16xf32> to vector<8x16xf32>
    %243 = arith.addf %241, %242 : vector<8x16xf32>
    %244 = vector.extract_strided_slice %238 {offsets = [3, 0], sizes = [8, 16], strides = [1, 1]} : vector<14x16xf32> to vector<8x16xf32>
    %245 = arith.addf %243, %244 : vector<8x16xf32>
    %246 = vector.extract_strided_slice %238 {offsets = [4, 0], sizes = [8, 16], strides = [1, 1]} : vector<14x16xf32> to vector<8x16xf32>
    %247 = arith.addf %245, %246 : vector<8x16xf32>
    %248 = vector.extract_strided_slice %238 {offsets = [5, 0], sizes = [8, 16], strides = [1, 1]} : vector<14x16xf32> to vector<8x16xf32>
    %249 = arith.addf %247, %248 : vector<8x16xf32>
    %250 = vector.extract_strided_slice %238 {offsets = [6, 0], sizes = [8, 16], strides = [1, 1]} : vector<14x16xf32> to vector<8x16xf32>
    %251 = arith.addf %249, %250 : vector<8x16xf32>
    %252 = vector.shape_cast %251 : vector<8x16xf32> to vector<1x8x16xf32>
    %c4_i32_25 = arith.constant 4 : i32
    %253 = arith.addi %0, %c4_i32_25 : i32
    %c0_i32_26 = arith.constant 0 : i32
    %254 = arith.addi %253, %c0_i32_26 : i32
    %c0_27 = arith.constant 0 : index
    %255 = arith.index_cast %254 : i32 to index
    %c5_28 = arith.constant 5 : index
    %256 = vector.load %arg2[%c0_27, %255, %c5_28] : memref<1x30x30xf32, #tpu.memory_space<vmem>>, vector<1x14x22xf32>
    %257 = vector.shape_cast %256 : vector<1x14x22xf32> to vector<14x22xf32>
    %258 = arith.mulf %17, %257 : vector<14x22xf32>
    %259 = vector.extract_strided_slice %258 {offsets = [0, 0], sizes = [14, 16], strides = [1, 1]} : vector<14x22xf32> to vector<14x16xf32>
    %260 = vector.extract_strided_slice %258 {offsets = [0, 1], sizes = [14, 16], strides = [1, 1]} : vector<14x22xf32> to vector<14x16xf32>
    %261 = arith.addf %259, %260 : vector<14x16xf32>
    %262 = vector.extract_strided_slice %258 {offsets = [0, 2], sizes = [14, 16], strides = [1, 1]} : vector<14x22xf32> to vector<14x16xf32>
    %263 = arith.addf %261, %262 : vector<14x16xf32>
    %264 = vector.extract_strided_slice %258 {offsets = [0, 3], sizes = [14, 16], strides = [1, 1]} : vector<14x22xf32> to vector<14x16xf32>
    %265 = arith.addf %263, %264 : vector<14x16xf32>
    %266 = vector.extract_strided_slice %258 {offsets = [0, 4], sizes = [14, 16], strides = [1, 1]} : vector<14x22xf32> to vector<14x16xf32>
    %267 = arith.addf %265, %266 : vector<14x16xf32>
    %268 = vector.extract_strided_slice %258 {offsets = [0, 5], sizes = [14, 16], strides = [1, 1]} : vector<14x22xf32> to vector<14x16xf32>
    %269 = arith.addf %267, %268 : vector<14x16xf32>
    %270 = vector.extract_strided_slice %258 {offsets = [0, 6], sizes = [14, 16], strides = [1, 1]} : vector<14x22xf32> to vector<14x16xf32>
    %271 = arith.addf %269, %270 : vector<14x16xf32>
    %272 = vector.extract_strided_slice %271 {offsets = [0, 0], sizes = [8, 16], strides = [1, 1]} : vector<14x16xf32> to vector<8x16xf32>
    %273 = vector.extract_strided_slice %271 {offsets = [1, 0], sizes = [8, 16], strides = [1, 1]} : vector<14x16xf32> to vector<8x16xf32>
    %274 = arith.addf %272, %273 : vector<8x16xf32>
    %275 = vector.extract_strided_slice %271 {offsets = [2, 0], sizes = [8, 16], strides = [1, 1]} : vector<14x16xf32> to vector<8x16xf32>
    %276 = arith.addf %274, %275 : vector<8x16xf32>
    %277 = vector.extract_strided_slice %271 {offsets = [3, 0], sizes = [8, 16], strides = [1, 1]} : vector<14x16xf32> to vector<8x16xf32>
    %278 = arith.addf %276, %277 : vector<8x16xf32>
    %279 = vector.extract_strided_slice %271 {offsets = [4, 0], sizes = [8, 16], strides = [1, 1]} : vector<14x16xf32> to vector<8x16xf32>
    %280 = arith.addf %278, %279 : vector<8x16xf32>
    %281 = vector.extract_strided_slice %271 {offsets = [5, 0], sizes = [8, 16], strides = [1, 1]} : vector<14x16xf32> to vector<8x16xf32>
    %282 = arith.addf %280, %281 : vector<8x16xf32>
    %283 = vector.extract_strided_slice %271 {offsets = [6, 0], sizes = [8, 16], strides = [1, 1]} : vector<14x16xf32> to vector<8x16xf32>
    %284 = arith.addf %282, %283 : vector<8x16xf32>
    %285 = vector.shape_cast %284 : vector<8x16xf32> to vector<1x8x16xf32>
    %c4_i32_29 = arith.constant 4 : i32
    %286 = arith.addi %0, %c4_i32_29 : i32
    %c1_i32_30 = arith.constant 1 : i32
    %287 = arith.addi %286, %c1_i32_30 : i32
    %c0_31 = arith.constant 0 : index
    %288 = arith.index_cast %287 : i32 to index
    %c5_32 = arith.constant 5 : index
    %289 = vector.load %arg2[%c0_31, %288, %c5_32] : memref<1x30x30xf32, #tpu.memory_space<vmem>>, vector<1x14x22xf32>
    %290 = vector.shape_cast %289 : vector<1x14x22xf32> to vector<14x22xf32>
    %291 = arith.mulf %17, %290 : vector<14x22xf32>
    %292 = vector.extract_strided_slice %291 {offsets = [0, 0], sizes = [14, 16], strides = [1, 1]} : vector<14x22xf32> to vector<14x16xf32>
    %293 = vector.extract_strided_slice %291 {offsets = [0, 1], sizes = [14, 16], strides = [1, 1]} : vector<14x22xf32> to vector<14x16xf32>
    %294 = arith.addf %292, %293 : vector<14x16xf32>
    %295 = vector.extract_strided_slice %291 {offsets = [0, 2], sizes = [14, 16], strides = [1, 1]} : vector<14x22xf32> to vector<14x16xf32>
    %296 = arith.addf %294, %295 : vector<14x16xf32>
    %297 = vector.extract_strided_slice %291 {offsets = [0, 3], sizes = [14, 16], strides = [1, 1]} : vector<14x22xf32> to vector<14x16xf32>
    %298 = arith.addf %296, %297 : vector<14x16xf32>
    %299 = vector.extract_strided_slice %291 {offsets = [0, 4], sizes = [14, 16], strides = [1, 1]} : vector<14x22xf32> to vector<14x16xf32>
    %300 = arith.addf %298, %299 : vector<14x16xf32>
    %301 = vector.extract_strided_slice %291 {offsets = [0, 5], sizes = [14, 16], strides = [1, 1]} : vector<14x22xf32> to vector<14x16xf32>
    %302 = arith.addf %300, %301 : vector<14x16xf32>
    %303 = vector.extract_strided_slice %291 {offsets = [0, 6], sizes = [14, 16], strides = [1, 1]} : vector<14x22xf32> to vector<14x16xf32>
    %304 = arith.addf %302, %303 : vector<14x16xf32>
    %305 = vector.extract_strided_slice %304 {offsets = [0, 0], sizes = [8, 16], strides = [1, 1]} : vector<14x16xf32> to vector<8x16xf32>
    %306 = vector.extract_strided_slice %304 {offsets = [1, 0], sizes = [8, 16], strides = [1, 1]} : vector<14x16xf32> to vector<8x16xf32>
    %307 = arith.addf %305, %306 : vector<8x16xf32>
    %308 = vector.extract_strided_slice %304 {offsets = [2, 0], sizes = [8, 16], strides = [1, 1]} : vector<14x16xf32> to vector<8x16xf32>
    %309 = arith.addf %307, %308 : vector<8x16xf32>
    %310 = vector.extract_strided_slice %304 {offsets = [3, 0], sizes = [8, 16], strides = [1, 1]} : vector<14x16xf32> to vector<8x16xf32>
    %311 = arith.addf %309, %310 : vector<8x16xf32>
    %312 = vector.extract_strided_slice %304 {offsets = [4, 0], sizes = [8, 16], strides = [1, 1]} : vector<14x16xf32> to vector<8x16xf32>
    %313 = arith.addf %311, %312 : vector<8x16xf32>
    %314 = vector.extract_strided_slice %304 {offsets = [5, 0], sizes = [8, 16], strides = [1, 1]} : vector<14x16xf32> to vector<8x16xf32>
    %315 = arith.addf %313, %314 : vector<8x16xf32>
    %316 = vector.extract_strided_slice %304 {offsets = [6, 0], sizes = [8, 16], strides = [1, 1]} : vector<14x16xf32> to vector<8x16xf32>
    %317 = arith.addf %315, %316 : vector<8x16xf32>
    %318 = vector.shape_cast %317 : vector<8x16xf32> to vector<1x8x16xf32>
    %319 = tpu.concatenate %54, %87, %120, %153, %186, %219, %252, %285, %318 in 0 : vector<1x8x16xf32>, vector<1x8x16xf32>, vector<1x8x16xf32>, vector<1x8x16xf32>, vector<1x8x16xf32>, vector<1x8x16xf32>, vector<1x8x16xf32>, vector<1x8x16xf32>, vector<1x8x16xf32> -> vector<9x8x16xf32>
    %cst = arith.constant dense<0.000000e+00> : vector<8x16xf32>
    %320 = vector.multi_reduction <add>, %319, %cst [0] : vector<9x8x16xf32> to vector<8x16xf32>
    %321 = vector.shape_cast %320 : vector<8x16xf32> to vector<1x8x16xf32>
    %cst_33 = arith.constant 9.000000e+00 : f32
    %322 = vector.broadcast %cst_33 : f32 to vector<1x8x16xf32>
    %323 = arith.divf %321, %322 : vector<1x8x16xf32>
    %324 = vector.broadcast %323 : vector<1x8x16xf32> to vector<9x8x16xf32>
    %325 = arith.subf %319, %324 : vector<9x8x16xf32>
    %326 = arith.mulf %325, %325 : vector<9x8x16xf32>
    %cst_34 = arith.constant dense<0.000000e+00> : vector<8x16xf32>
    %327 = vector.multi_reduction <add>, %326, %cst_34 [0] : vector<9x8x16xf32> to vector<8x16xf32>
    %cst_35 = arith.constant 8.000000e+00 : f32
    %328 = vector.broadcast %cst_35 : f32 to vector<8x16xf32>
    %329 = arith.divf %327, %328 : vector<8x16xf32>
    %cst_36 = arith.constant 9.99999993E-9 : f32
    %330 = vector.broadcast %cst_36 : f32 to vector<8x16xf32>
    %331 = arith.addf %329, %330 : vector<8x16xf32>
    %332 = tpu.reciprocal %331 : vector<8x16xf32> -> vector<8x16xf32>
    %cst_37 = arith.constant 0.000000e+00 : f32
    %333 = vector.broadcast %cst_37 : f32 to vector<8x16xf32>
    %334 = arith.subf %333, %332 : vector<8x16xf32>
    %cst_38 = arith.constant 0.000000e+00 : f32
    %335 = vector.broadcast %cst_38 : f32 to vector<8x16xf32>
    %c0_i32_39 = arith.constant 0 : i32
    %c9_i32 = arith.constant 9 : i32
    %336 = arith.addi %c0_i32_39, %c9_i32 : i32
    %c1_i32_40 = arith.constant 1 : i32
    %337 = scf.for %arg4 = %c0_i32_39 to %336 step %c1_i32_40 iter_args(%arg5 = %335) -> (vector<8x16xf32>)  : i32 {
      %c0_i32_82 = arith.constant 0 : i32
      %363 = arith.addi %c0_i32_82, %arg4 : i32
      %364 = arith.addi %0, %arg4 : i32
      %c0_83 = arith.constant 0 : index
      %365 = arith.index_cast %364 : i32 to index
      %c0_84 = arith.constant 0 : index
      %366 = vector.load %arg2[%c0_83, %365, %c0_84] : memref<1x30x30xf32, #tpu.memory_space<vmem>>, vector<1x14x22xf32>
      %367 = vector.shape_cast %366 : vector<1x14x22xf32> to vector<14x22xf32>
      %368 = arith.subf %367, %21 : vector<14x22xf32>
      %369 = arith.mulf %17, %368 : vector<14x22xf32>
      %370 = arith.mulf %369, %368 : vector<14x22xf32>
      %371 = vector.extract_strided_slice %370 {offsets = [0, 3], sizes = [14, 16], strides = [1, 1]} : vector<14x22xf32> to vector<14x16xf32>
      %372 = vector.extract_strided_slice %370 {offsets = [0, 2], sizes = [14, 16], strides = [1, 1]} : vector<14x22xf32> to vector<14x16xf32>
      %373 = vector.extract_strided_slice %370 {offsets = [0, 4], sizes = [14, 16], strides = [1, 1]} : vector<14x22xf32> to vector<14x16xf32>
      %374 = arith.addf %372, %373 : vector<14x16xf32>
      %375 = vector.extract_strided_slice %370 {offsets = [0, 1], sizes = [14, 16], strides = [1, 1]} : vector<14x22xf32> to vector<14x16xf32>
      %376 = vector.extract_strided_slice %370 {offsets = [0, 5], sizes = [14, 16], strides = [1, 1]} : vector<14x22xf32> to vector<14x16xf32>
      %377 = arith.addf %375, %376 : vector<14x16xf32>
      %378 = vector.extract_strided_slice %370 {offsets = [0, 0], sizes = [14, 16], strides = [1, 1]} : vector<14x22xf32> to vector<14x16xf32>
      %379 = vector.extract_strided_slice %370 {offsets = [0, 6], sizes = [14, 16], strides = [1, 1]} : vector<14x22xf32> to vector<14x16xf32>
      %380 = arith.addf %378, %379 : vector<14x16xf32>
      %cst_85 = arith.constant 0.000000e+00 : f32
      %381 = vector.broadcast %cst_85 : f32 to vector<8x16xf32>
      %382 = vector.extract_strided_slice %371 {offsets = [3, 0], sizes = [8, 16], strides = [1, 1]} : vector<14x16xf32> to vector<8x16xf32>
      %cst_86 = arith.constant 1.000000e+00 : f32
      %383 = vector.broadcast %cst_86 : f32 to vector<8x16xf32>
      %384 = arith.mulf %383, %382 : vector<8x16xf32>
      %385 = arith.addf %381, %384 : vector<8x16xf32>
      %386 = vector.extract_strided_slice %374 {offsets = [3, 0], sizes = [8, 16], strides = [1, 1]} : vector<14x16xf32> to vector<8x16xf32>
      %cst_87 = arith.constant 0.894839346 : f32
      %387 = vector.broadcast %cst_87 : f32 to vector<8x16xf32>
      %388 = arith.mulf %387, %386 : vector<8x16xf32>
      %389 = arith.addf %385, %388 : vector<8x16xf32>
      %390 = vector.extract_strided_slice %377 {offsets = [3, 0], sizes = [8, 16], strides = [1, 1]} : vector<14x16xf32> to vector<8x16xf32>
      %cst_88 = arith.constant 0.800737381 : f32
      %391 = vector.broadcast %cst_88 : f32 to vector<8x16xf32>
      %392 = arith.mulf %391, %390 : vector<8x16xf32>
      %393 = arith.addf %389, %392 : vector<8x16xf32>
      %394 = vector.extract_strided_slice %380 {offsets = [3, 0], sizes = [8, 16], strides = [1, 1]} : vector<14x16xf32> to vector<8x16xf32>
      %cst_89 = arith.constant 0.716531336 : f32
      %395 = vector.broadcast %cst_89 : f32 to vector<8x16xf32>
      %396 = arith.mulf %395, %394 : vector<8x16xf32>
      %397 = arith.addf %393, %396 : vector<8x16xf32>
      %398 = vector.extract_strided_slice %371 {offsets = [2, 0], sizes = [8, 16], strides = [1, 1]} : vector<14x16xf32> to vector<8x16xf32>
      %399 = vector.extract_strided_slice %371 {offsets = [4, 0], sizes = [8, 16], strides = [1, 1]} : vector<14x16xf32> to vector<8x16xf32>
      %400 = arith.addf %398, %399 : vector<8x16xf32>
      %cst_90 = arith.constant 0.894839346 : f32
      %401 = vector.broadcast %cst_90 : f32 to vector<8x16xf32>
      %402 = arith.mulf %401, %400 : vector<8x16xf32>
      %403 = arith.addf %397, %402 : vector<8x16xf32>
      %404 = vector.extract_strided_slice %374 {offsets = [2, 0], sizes = [8, 16], strides = [1, 1]} : vector<14x16xf32> to vector<8x16xf32>
      %405 = vector.extract_strided_slice %374 {offsets = [4, 0], sizes = [8, 16], strides = [1, 1]} : vector<14x16xf32> to vector<8x16xf32>
      %406 = arith.addf %404, %405 : vector<8x16xf32>
      %cst_91 = arith.constant 0.854588806 : f32
      %407 = vector.broadcast %cst_91 : f32 to vector<8x16xf32>
      %408 = arith.mulf %407, %406 : vector<8x16xf32>
      %409 = arith.addf %403, %408 : vector<8x16xf32>
      %410 = vector.extract_strided_slice %377 {offsets = [2, 0], sizes = [8, 16], strides = [1, 1]} : vector<14x16xf32> to vector<8x16xf32>
      %411 = vector.extract_strided_slice %377 {offsets = [4, 0], sizes = [8, 16], strides = [1, 1]} : vector<14x16xf32> to vector<8x16xf32>
      %412 = arith.addf %410, %411 : vector<8x16xf32>
      %cst_92 = arith.constant 0.780007302 : f32
      %413 = vector.broadcast %cst_92 : f32 to vector<8x16xf32>
      %414 = arith.mulf %413, %412 : vector<8x16xf32>
      %415 = arith.addf %409, %414 : vector<8x16xf32>
      %416 = vector.extract_strided_slice %380 {offsets = [2, 0], sizes = [8, 16], strides = [1, 1]} : vector<14x16xf32> to vector<8x16xf32>
      %417 = vector.extract_strided_slice %380 {offsets = [4, 0], sizes = [8, 16], strides = [1, 1]} : vector<14x16xf32> to vector<8x16xf32>
      %418 = arith.addf %416, %417 : vector<8x16xf32>
      %cst_93 = arith.constant 0.703727424 : f32
      %419 = vector.broadcast %cst_93 : f32 to vector<8x16xf32>
      %420 = arith.mulf %419, %418 : vector<8x16xf32>
      %421 = arith.addf %415, %420 : vector<8x16xf32>
      %422 = vector.extract_strided_slice %371 {offsets = [1, 0], sizes = [8, 16], strides = [1, 1]} : vector<14x16xf32> to vector<8x16xf32>
      %423 = vector.extract_strided_slice %371 {offsets = [5, 0], sizes = [8, 16], strides = [1, 1]} : vector<14x16xf32> to vector<8x16xf32>
      %424 = arith.addf %422, %423 : vector<8x16xf32>
      %cst_94 = arith.constant 0.800737381 : f32
      %425 = vector.broadcast %cst_94 : f32 to vector<8x16xf32>
      %426 = arith.mulf %425, %424 : vector<8x16xf32>
      %427 = arith.addf %421, %426 : vector<8x16xf32>
      %428 = vector.extract_strided_slice %374 {offsets = [1, 0], sizes = [8, 16], strides = [1, 1]} : vector<14x16xf32> to vector<8x16xf32>
      %429 = vector.extract_strided_slice %374 {offsets = [5, 0], sizes = [8, 16], strides = [1, 1]} : vector<14x16xf32> to vector<8x16xf32>
      %430 = arith.addf %428, %429 : vector<8x16xf32>
      %cst_95 = arith.constant 0.780007302 : f32
      %431 = vector.broadcast %cst_95 : f32 to vector<8x16xf32>
      %432 = arith.mulf %431, %430 : vector<8x16xf32>
      %433 = arith.addf %427, %432 : vector<8x16xf32>
      %434 = vector.extract_strided_slice %377 {offsets = [1, 0], sizes = [8, 16], strides = [1, 1]} : vector<14x16xf32> to vector<8x16xf32>
      %435 = vector.extract_strided_slice %377 {offsets = [5, 0], sizes = [8, 16], strides = [1, 1]} : vector<14x16xf32> to vector<8x16xf32>
      %436 = arith.addf %434, %435 : vector<8x16xf32>
      %cst_96 = arith.constant 0.730322062 : f32
      %437 = vector.broadcast %cst_96 : f32 to vector<8x16xf32>
      %438 = arith.mulf %437, %436 : vector<8x16xf32>
      %439 = arith.addf %433, %438 : vector<8x16xf32>
      %440 = vector.extract_strided_slice %380 {offsets = [1, 0], sizes = [8, 16], strides = [1, 1]} : vector<14x16xf32> to vector<8x16xf32>
      %441 = vector.extract_strided_slice %380 {offsets = [5, 0], sizes = [8, 16], strides = [1, 1]} : vector<14x16xf32> to vector<8x16xf32>
      %442 = arith.addf %440, %441 : vector<8x16xf32>
      %cst_97 = arith.constant 0.669906735 : f32
      %443 = vector.broadcast %cst_97 : f32 to vector<8x16xf32>
      %444 = arith.mulf %443, %442 : vector<8x16xf32>
      %445 = arith.addf %439, %444 : vector<8x16xf32>
      %446 = vector.extract_strided_slice %371 {offsets = [0, 0], sizes = [8, 16], strides = [1, 1]} : vector<14x16xf32> to vector<8x16xf32>
      %447 = vector.extract_strided_slice %371 {offsets = [6, 0], sizes = [8, 16], strides = [1, 1]} : vector<14x16xf32> to vector<8x16xf32>
      %448 = arith.addf %446, %447 : vector<8x16xf32>
      %cst_98 = arith.constant 0.716531336 : f32
      %449 = vector.broadcast %cst_98 : f32 to vector<8x16xf32>
      %450 = arith.mulf %449, %448 : vector<8x16xf32>
      %451 = arith.addf %445, %450 : vector<8x16xf32>
      %452 = vector.extract_strided_slice %374 {offsets = [0, 0], sizes = [8, 16], strides = [1, 1]} : vector<14x16xf32> to vector<8x16xf32>
      %453 = vector.extract_strided_slice %374 {offsets = [6, 0], sizes = [8, 16], strides = [1, 1]} : vector<14x16xf32> to vector<8x16xf32>
      %454 = arith.addf %452, %453 : vector<8x16xf32>
      %cst_99 = arith.constant 0.703727424 : f32
      %455 = vector.broadcast %cst_99 : f32 to vector<8x16xf32>
      %456 = arith.mulf %455, %454 : vector<8x16xf32>
      %457 = arith.addf %451, %456 : vector<8x16xf32>
      %458 = vector.extract_strided_slice %377 {offsets = [0, 0], sizes = [8, 16], strides = [1, 1]} : vector<14x16xf32> to vector<8x16xf32>
      %459 = vector.extract_strided_slice %377 {offsets = [6, 0], sizes = [8, 16], strides = [1, 1]} : vector<14x16xf32> to vector<8x16xf32>
      %460 = arith.addf %458, %459 : vector<8x16xf32>
      %cst_100 = arith.constant 0.669906735 : f32
      %461 = vector.broadcast %cst_100 : f32 to vector<8x16xf32>
      %462 = arith.mulf %461, %460 : vector<8x16xf32>
      %463 = arith.addf %457, %462 : vector<8x16xf32>
      %464 = vector.extract_strided_slice %380 {offsets = [0, 0], sizes = [8, 16], strides = [1, 1]} : vector<14x16xf32> to vector<8x16xf32>
      %465 = vector.extract_strided_slice %380 {offsets = [6, 0], sizes = [8, 16], strides = [1, 1]} : vector<14x16xf32> to vector<8x16xf32>
      %466 = arith.addf %464, %465 : vector<8x16xf32>
      %cst_101 = arith.constant 0.624125063 : f32
      %467 = vector.broadcast %cst_101 : f32 to vector<8x16xf32>
      %468 = arith.mulf %467, %466 : vector<8x16xf32>
      %469 = arith.addf %463, %468 : vector<8x16xf32>
      %470 = arith.mulf %469, %334 : vector<8x16xf32>
      %471 = math.exp %470 : vector<8x16xf32>
      %472 = vector.shape_cast %471 : vector<8x16xf32> to vector<1x8x16xf32>
      %c0_102 = arith.constant 0 : index
      %473 = arith.index_cast %363 : i32 to index
      %c0_103 = arith.constant 0 : index
      %c0_104 = arith.constant 0 : index
      %474 = vector.load %arg3[%c0_102, %473, %c0_103, %c0_104] : memref<1x81x8x16xf32, #tpu.memory_space<vmem>>, vector<1x1x8x16xf32>
      %475 = vector.shape_cast %474 : vector<1x1x8x16xf32> to vector<1x8x16xf32>
      %476 = vector.shape_cast %472 : vector<1x8x16xf32> to vector<1x1x8x16xf32>
      tpu.vector_store %arg3[%c0_102, %473, %c0_103, %c0_104], %476 {strides = array<i32>} : memref<1x81x8x16xf32, #tpu.memory_space<vmem>>, vector<1x1x8x16xf32>,
      %477 = arith.addf %arg5, %471 : vector<8x16xf32>
      scf.yield %477 : vector<8x16xf32>
    }
    %c9_i32_41 = arith.constant 9 : i32
    %c0_i32_42 = arith.constant 0 : i32
    %c9_i32_43 = arith.constant 9 : i32
    %338 = arith.addi %c0_i32_42, %c9_i32_43 : i32
    %c1_i32_44 = arith.constant 1 : i32
    %339 = scf.for %arg4 = %c0_i32_42 to %338 step %c1_i32_44 iter_args(%arg5 = %337) -> (vector<8x16xf32>)  : i32 {
      %c9_i32_82 = arith.constant 9 : i32
      %363 = arith.addi %c9_i32_82, %arg4 : i32
      %364 = arith.addi %0, %arg4 : i32
      %c0_83 = arith.constant 0 : index
      %365 = arith.index_cast %364 : i32 to index
      %c1 = arith.constant 1 : index
      %366 = vector.load %arg2[%c0_83, %365, %c1] : memref<1x30x30xf32, #tpu.memory_space<vmem>>, vector<1x14x22xf32>
      %367 = vector.shape_cast %366 : vector<1x14x22xf32> to vector<14x22xf32>
      %368 = arith.subf %367, %21 : vector<14x22xf32>
      %369 = arith.mulf %17, %368 : vector<14x22xf32>
      %370 = arith.mulf %369, %368 : vector<14x22xf32>
      %371 = vector.extract_strided_slice %370 {offsets = [0, 3], sizes = [14, 16], strides = [1, 1]} : vector<14x22xf32> to vector<14x16xf32>
      %372 = vector.extract_strided_slice %370 {offsets = [0, 2], sizes = [14, 16], strides = [1, 1]} : vector<14x22xf32> to vector<14x16xf32>
      %373 = vector.extract_strided_slice %370 {offsets = [0, 4], sizes = [14, 16], strides = [1, 1]} : vector<14x22xf32> to vector<14x16xf32>
      %374 = arith.addf %372, %373 : vector<14x16xf32>
      %375 = vector.extract_strided_slice %370 {offsets = [0, 1], sizes = [14, 16], strides = [1, 1]} : vector<14x22xf32> to vector<14x16xf32>
      %376 = vector.extract_strided_slice %370 {offsets = [0, 5], sizes = [14, 16], strides = [1, 1]} : vector<14x22xf32> to vector<14x16xf32>
      %377 = arith.addf %375, %376 : vector<14x16xf32>
      %378 = vector.extract_strided_slice %370 {offsets = [0, 0], sizes = [14, 16], strides = [1, 1]} : vector<14x22xf32> to vector<14x16xf32>
      %379 = vector.extract_strided_slice %370 {offsets = [0, 6], sizes = [14, 16], strides = [1, 1]} : vector<14x22xf32> to vector<14x16xf32>
      %380 = arith.addf %378, %379 : vector<14x16xf32>
      %cst_84 = arith.constant 0.000000e+00 : f32
      %381 = vector.broadcast %cst_84 : f32 to vector<8x16xf32>
      %382 = vector.extract_strided_slice %371 {offsets = [3, 0], sizes = [8, 16], strides = [1, 1]} : vector<14x16xf32> to vector<8x16xf32>
      %cst_85 = arith.constant 1.000000e+00 : f32
      %383 = vector.broadcast %cst_85 : f32 to vector<8x16xf32>
      %384 = arith.mulf %383, %382 : vector<8x16xf32>
      %385 = arith.addf %381, %384 : vector<8x16xf32>
      %386 = vector.extract_strided_slice %374 {offsets = [3, 0], sizes = [8, 16], strides = [1, 1]} : vector<14x16xf32> to vector<8x16xf32>
      %cst_86 = arith.constant 0.894839346 : f32
      %387 = vector.broadcast %cst_86 : f32 to vector<8x16xf32>
      %388 = arith.mulf %387, %386 : vector<8x16xf32>
      %389 = arith.addf %385, %388 : vector<8x16xf32>
      %390 = vector.extract_strided_slice %377 {offsets = [3, 0], sizes = [8, 16], strides = [1, 1]} : vector<14x16xf32> to vector<8x16xf32>
      %cst_87 = arith.constant 0.800737381 : f32
      %391 = vector.broadcast %cst_87 : f32 to vector<8x16xf32>
      %392 = arith.mulf %391, %390 : vector<8x16xf32>
      %393 = arith.addf %389, %392 : vector<8x16xf32>
      %394 = vector.extract_strided_slice %380 {offsets = [3, 0], sizes = [8, 16], strides = [1, 1]} : vector<14x16xf32> to vector<8x16xf32>
      %cst_88 = arith.constant 0.716531336 : f32
      %395 = vector.broadcast %cst_88 : f32 to vector<8x16xf32>
      %396 = arith.mulf %395, %394 : vector<8x16xf32>
      %397 = arith.addf %393, %396 : vector<8x16xf32>
      %398 = vector.extract_strided_slice %371 {offsets = [2, 0], sizes = [8, 16], strides = [1, 1]} : vector<14x16xf32> to vector<8x16xf32>
      %399 = vector.extract_strided_slice %371 {offsets = [4, 0], sizes = [8, 16], strides = [1, 1]} : vector<14x16xf32> to vector<8x16xf32>
      %400 = arith.addf %398, %399 : vector<8x16xf32>
      %cst_89 = arith.constant 0.894839346 : f32
      %401 = vector.broadcast %cst_89 : f32 to vector<8x16xf32>
      %402 = arith.mulf %401, %400 : vector<8x16xf32>
      %403 = arith.addf %397, %402 : vector<8x16xf32>
      %404 = vector.extract_strided_slice %374 {offsets = [2, 0], sizes = [8, 16], strides = [1, 1]} : vector<14x16xf32> to vector<8x16xf32>
      %405 = vector.extract_strided_slice %374 {offsets = [4, 0], sizes = [8, 16], strides = [1, 1]} : vector<14x16xf32> to vector<8x16xf32>
      %406 = arith.addf %404, %405 : vector<8x16xf32>
      %cst_90 = arith.constant 0.854588806 : f32
      %407 = vector.broadcast %cst_90 : f32 to vector<8x16xf32>
      %408 = arith.mulf %407, %406 : vector<8x16xf32>
      %409 = arith.addf %403, %408 : vector<8x16xf32>
      %410 = vector.extract_strided_slice %377 {offsets = [2, 0], sizes = [8, 16], strides = [1, 1]} : vector<14x16xf32> to vector<8x16xf32>
      %411 = vector.extract_strided_slice %377 {offsets = [4, 0], sizes = [8, 16], strides = [1, 1]} : vector<14x16xf32> to vector<8x16xf32>
      %412 = arith.addf %410, %411 : vector<8x16xf32>
      %cst_91 = arith.constant 0.780007302 : f32
      %413 = vector.broadcast %cst_91 : f32 to vector<8x16xf32>
      %414 = arith.mulf %413, %412 : vector<8x16xf32>
      %415 = arith.addf %409, %414 : vector<8x16xf32>
      %416 = vector.extract_strided_slice %380 {offsets = [2, 0], sizes = [8, 16], strides = [1, 1]} : vector<14x16xf32> to vector<8x16xf32>
      %417 = vector.extract_strided_slice %380 {offsets = [4, 0], sizes = [8, 16], strides = [1, 1]} : vector<14x16xf32> to vector<8x16xf32>
      %418 = arith.addf %416, %417 : vector<8x16xf32>
      %cst_92 = arith.constant 0.703727424 : f32
      %419 = vector.broadcast %cst_92 : f32 to vector<8x16xf32>
      %420 = arith.mulf %419, %418 : vector<8x16xf32>
      %421 = arith.addf %415, %420 : vector<8x16xf32>
      %422 = vector.extract_strided_slice %371 {offsets = [1, 0], sizes = [8, 16], strides = [1, 1]} : vector<14x16xf32> to vector<8x16xf32>
      %423 = vector.extract_strided_slice %371 {offsets = [5, 0], sizes = [8, 16], strides = [1, 1]} : vector<14x16xf32> to vector<8x16xf32>
      %424 = arith.addf %422, %423 : vector<8x16xf32>
      %cst_93 = arith.constant 0.800737381 : f32
      %425 = vector.broadcast %cst_93 : f32 to vector<8x16xf32>
      %426 = arith.mulf %425, %424 : vector<8x16xf32>
      %427 = arith.addf %421, %426 : vector<8x16xf32>
      %428 = vector.extract_strided_slice %374 {offsets = [1, 0], sizes = [8, 16], strides = [1, 1]} : vector<14x16xf32> to vector<8x16xf32>
      %429 = vector.extract_strided_slice %374 {offsets = [5, 0], sizes = [8, 16], strides = [1, 1]} : vector<14x16xf32> to vector<8x16xf32>
      %430 = arith.addf %428, %429 : vector<8x16xf32>
      %cst_94 = arith.constant 0.780007302 : f32
      %431 = vector.broadcast %cst_94 : f32 to vector<8x16xf32>
      %432 = arith.mulf %431, %430 : vector<8x16xf32>
      %433 = arith.addf %427, %432 : vector<8x16xf32>
      %434 = vector.extract_strided_slice %377 {offsets = [1, 0], sizes = [8, 16], strides = [1, 1]} : vector<14x16xf32> to vector<8x16xf32>
      %435 = vector.extract_strided_slice %377 {offsets = [5, 0], sizes = [8, 16], strides = [1, 1]} : vector<14x16xf32> to vector<8x16xf32>
      %436 = arith.addf %434, %435 : vector<8x16xf32>
      %cst_95 = arith.constant 0.730322062 : f32
      %437 = vector.broadcast %cst_95 : f32 to vector<8x16xf32>
      %438 = arith.mulf %437, %436 : vector<8x16xf32>
      %439 = arith.addf %433, %438 : vector<8x16xf32>
      %440 = vector.extract_strided_slice %380 {offsets = [1, 0], sizes = [8, 16], strides = [1, 1]} : vector<14x16xf32> to vector<8x16xf32>
      %441 = vector.extract_strided_slice %380 {offsets = [5, 0], sizes = [8, 16], strides = [1, 1]} : vector<14x16xf32> to vector<8x16xf32>
      %442 = arith.addf %440, %441 : vector<8x16xf32>
      %cst_96 = arith.constant 0.669906735 : f32
      %443 = vector.broadcast %cst_96 : f32 to vector<8x16xf32>
      %444 = arith.mulf %443, %442 : vector<8x16xf32>
      %445 = arith.addf %439, %444 : vector<8x16xf32>
      %446 = vector.extract_strided_slice %371 {offsets = [0, 0], sizes = [8, 16], strides = [1, 1]} : vector<14x16xf32> to vector<8x16xf32>
      %447 = vector.extract_strided_slice %371 {offsets = [6, 0], sizes = [8, 16], strides = [1, 1]} : vector<14x16xf32> to vector<8x16xf32>
      %448 = arith.addf %446, %447 : vector<8x16xf32>
      %cst_97 = arith.constant 0.716531336 : f32
      %449 = vector.broadcast %cst_97 : f32 to vector<8x16xf32>
      %450 = arith.mulf %449, %448 : vector<8x16xf32>
      %451 = arith.addf %445, %450 : vector<8x16xf32>
      %452 = vector.extract_strided_slice %374 {offsets = [0, 0], sizes = [8, 16], strides = [1, 1]} : vector<14x16xf32> to vector<8x16xf32>
      %453 = vector.extract_strided_slice %374 {offsets = [6, 0], sizes = [8, 16], strides = [1, 1]} : vector<14x16xf32> to vector<8x16xf32>
      %454 = arith.addf %452, %453 : vector<8x16xf32>
      %cst_98 = arith.constant 0.703727424 : f32
      %455 = vector.broadcast %cst_98 : f32 to vector<8x16xf32>
      %456 = arith.mulf %455, %454 : vector<8x16xf32>
      %457 = arith.addf %451, %456 : vector<8x16xf32>
      %458 = vector.extract_strided_slice %377 {offsets = [0, 0], sizes = [8, 16], strides = [1, 1]} : vector<14x16xf32> to vector<8x16xf32>
      %459 = vector.extract_strided_slice %377 {offsets = [6, 0], sizes = [8, 16], strides = [1, 1]} : vector<14x16xf32> to vector<8x16xf32>
      %460 = arith.addf %458, %459 : vector<8x16xf32>
      %cst_99 = arith.constant 0.669906735 : f32
      %461 = vector.broadcast %cst_99 : f32 to vector<8x16xf32>
      %462 = arith.mulf %461, %460 : vector<8x16xf32>
      %463 = arith.addf %457, %462 : vector<8x16xf32>
      %464 = vector.extract_strided_slice %380 {offsets = [0, 0], sizes = [8, 16], strides = [1, 1]} : vector<14x16xf32> to vector<8x16xf32>
      %465 = vector.extract_strided_slice %380 {offsets = [6, 0], sizes = [8, 16], strides = [1, 1]} : vector<14x16xf32> to vector<8x16xf32>
      %466 = arith.addf %464, %465 : vector<8x16xf32>
      %cst_100 = arith.constant 0.624125063 : f32
      %467 = vector.broadcast %cst_100 : f32 to vector<8x16xf32>
      %468 = arith.mulf %467, %466 : vector<8x16xf32>
      %469 = arith.addf %463, %468 : vector<8x16xf32>
      %470 = arith.mulf %469, %334 : vector<8x16xf32>
      %471 = math.exp %470 : vector<8x16xf32>
      %472 = vector.shape_cast %471 : vector<8x16xf32> to vector<1x8x16xf32>
      %c0_101 = arith.constant 0 : index
      %473 = arith.index_cast %363 : i32 to index
      %c0_102 = arith.constant 0 : index
      %c0_103 = arith.constant 0 : index
      %474 = vector.load %arg3[%c0_101, %473, %c0_102, %c0_103] : memref<1x81x8x16xf32, #tpu.memory_space<vmem>>, vector<1x1x8x16xf32>
      %475 = vector.shape_cast %474 : vector<1x1x8x16xf32> to vector<1x8x16xf32>
      %476 = vector.shape_cast %472 : vector<1x8x16xf32> to vector<1x1x8x16xf32>
      tpu.vector_store %arg3[%c0_101, %473, %c0_102, %c0_103], %476 {strides = array<i32>} : memref<1x81x8x16xf32, #tpu.memory_space<vmem>>, vector<1x1x8x16xf32>,
      %477 = arith.addf %arg5, %471 : vector<8x16xf32>
      scf.yield %477 : vector<8x16xf32>
    }
    %c9_i32_45 = arith.constant 9 : i32
    %c0_i32_46 = arith.constant 0 : i32
    %c9_i32_47 = arith.constant 9 : i32
    %340 = arith.addi %c0_i32_46, %c9_i32_47 : i32
    %c1_i32_48 = arith.constant 1 : i32
    %341 = scf.for %arg4 = %c0_i32_46 to %340 step %c1_i32_48 iter_args(%arg5 = %339) -> (vector<8x16xf32>)  : i32 {
      %c18_i32 = arith.constant 18 : i32
      %363 = arith.addi %c18_i32, %arg4 : i32
      %364 = arith.addi %0, %arg4 : i32
      %c0_82 = arith.constant 0 : index
      %365 = arith.index_cast %364 : i32 to index
      %c2 = arith.constant 2 : index
      %366 = vector.load %arg2[%c0_82, %365, %c2] : memref<1x30x30xf32, #tpu.memory_space<vmem>>, vector<1x14x22xf32>
      %367 = vector.shape_cast %366 : vector<1x14x22xf32> to vector<14x22xf32>
      %368 = arith.subf %367, %21 : vector<14x22xf32>
      %369 = arith.mulf %17, %368 : vector<14x22xf32>
      %370 = arith.mulf %369, %368 : vector<14x22xf32>
      %371 = vector.extract_strided_slice %370 {offsets = [0, 3], sizes = [14, 16], strides = [1, 1]} : vector<14x22xf32> to vector<14x16xf32>
      %372 = vector.extract_strided_slice %370 {offsets = [0, 2], sizes = [14, 16], strides = [1, 1]} : vector<14x22xf32> to vector<14x16xf32>
      %373 = vector.extract_strided_slice %370 {offsets = [0, 4], sizes = [14, 16], strides = [1, 1]} : vector<14x22xf32> to vector<14x16xf32>
      %374 = arith.addf %372, %373 : vector<14x16xf32>
      %375 = vector.extract_strided_slice %370 {offsets = [0, 1], sizes = [14, 16], strides = [1, 1]} : vector<14x22xf32> to vector<14x16xf32>
      %376 = vector.extract_strided_slice %370 {offsets = [0, 5], sizes = [14, 16], strides = [1, 1]} : vector<14x22xf32> to vector<14x16xf32>
      %377 = arith.addf %375, %376 : vector<14x16xf32>
      %378 = vector.extract_strided_slice %370 {offsets = [0, 0], sizes = [14, 16], strides = [1, 1]} : vector<14x22xf32> to vector<14x16xf32>
      %379 = vector.extract_strided_slice %370 {offsets = [0, 6], sizes = [14, 16], strides = [1, 1]} : vector<14x22xf32> to vector<14x16xf32>
      %380 = arith.addf %378, %379 : vector<14x16xf32>
      %cst_83 = arith.constant 0.000000e+00 : f32
      %381 = vector.broadcast %cst_83 : f32 to vector<8x16xf32>
      %382 = vector.extract_strided_slice %371 {offsets = [3, 0], sizes = [8, 16], strides = [1, 1]} : vector<14x16xf32> to vector<8x16xf32>
      %cst_84 = arith.constant 1.000000e+00 : f32
      %383 = vector.broadcast %cst_84 : f32 to vector<8x16xf32>
      %384 = arith.mulf %383, %382 : vector<8x16xf32>
      %385 = arith.addf %381, %384 : vector<8x16xf32>
      %386 = vector.extract_strided_slice %374 {offsets = [3, 0], sizes = [8, 16], strides = [1, 1]} : vector<14x16xf32> to vector<8x16xf32>
      %cst_85 = arith.constant 0.894839346 : f32
      %387 = vector.broadcast %cst_85 : f32 to vector<8x16xf32>
      %388 = arith.mulf %387, %386 : vector<8x16xf32>
      %389 = arith.addf %385, %388 : vector<8x16xf32>
      %390 = vector.extract_strided_slice %377 {offsets = [3, 0], sizes = [8, 16], strides = [1, 1]} : vector<14x16xf32> to vector<8x16xf32>
      %cst_86 = arith.constant 0.800737381 : f32
      %391 = vector.broadcast %cst_86 : f32 to vector<8x16xf32>
      %392 = arith.mulf %391, %390 : vector<8x16xf32>
      %393 = arith.addf %389, %392 : vector<8x16xf32>
      %394 = vector.extract_strided_slice %380 {offsets = [3, 0], sizes = [8, 16], strides = [1, 1]} : vector<14x16xf32> to vector<8x16xf32>
      %cst_87 = arith.constant 0.716531336 : f32
      %395 = vector.broadcast %cst_87 : f32 to vector<8x16xf32>
      %396 = arith.mulf %395, %394 : vector<8x16xf32>
      %397 = arith.addf %393, %396 : vector<8x16xf32>
      %398 = vector.extract_strided_slice %371 {offsets = [2, 0], sizes = [8, 16], strides = [1, 1]} : vector<14x16xf32> to vector<8x16xf32>
      %399 = vector.extract_strided_slice %371 {offsets = [4, 0], sizes = [8, 16], strides = [1, 1]} : vector<14x16xf32> to vector<8x16xf32>
      %400 = arith.addf %398, %399 : vector<8x16xf32>
      %cst_88 = arith.constant 0.894839346 : f32
      %401 = vector.broadcast %cst_88 : f32 to vector<8x16xf32>
      %402 = arith.mulf %401, %400 : vector<8x16xf32>
      %403 = arith.addf %397, %402 : vector<8x16xf32>
      %404 = vector.extract_strided_slice %374 {offsets = [2, 0], sizes = [8, 16], strides = [1, 1]} : vector<14x16xf32> to vector<8x16xf32>
      %405 = vector.extract_strided_slice %374 {offsets = [4, 0], sizes = [8, 16], strides = [1, 1]} : vector<14x16xf32> to vector<8x16xf32>
      %406 = arith.addf %404, %405 : vector<8x16xf32>
      %cst_89 = arith.constant 0.854588806 : f32
      %407 = vector.broadcast %cst_89 : f32 to vector<8x16xf32>
      %408 = arith.mulf %407, %406 : vector<8x16xf32>
      %409 = arith.addf %403, %408 : vector<8x16xf32>
      %410 = vector.extract_strided_slice %377 {offsets = [2, 0], sizes = [8, 16], strides = [1, 1]} : vector<14x16xf32> to vector<8x16xf32>
      %411 = vector.extract_strided_slice %377 {offsets = [4, 0], sizes = [8, 16], strides = [1, 1]} : vector<14x16xf32> to vector<8x16xf32>
      %412 = arith.addf %410, %411 : vector<8x16xf32>
      %cst_90 = arith.constant 0.780007302 : f32
      %413 = vector.broadcast %cst_90 : f32 to vector<8x16xf32>
      %414 = arith.mulf %413, %412 : vector<8x16xf32>
      %415 = arith.addf %409, %414 : vector<8x16xf32>
      %416 = vector.extract_strided_slice %380 {offsets = [2, 0], sizes = [8, 16], strides = [1, 1]} : vector<14x16xf32> to vector<8x16xf32>
      %417 = vector.extract_strided_slice %380 {offsets = [4, 0], sizes = [8, 16], strides = [1, 1]} : vector<14x16xf32> to vector<8x16xf32>
      %418 = arith.addf %416, %417 : vector<8x16xf32>
      %cst_91 = arith.constant 0.703727424 : f32
      %419 = vector.broadcast %cst_91 : f32 to vector<8x16xf32>
      %420 = arith.mulf %419, %418 : vector<8x16xf32>
      %421 = arith.addf %415, %420 : vector<8x16xf32>
      %422 = vector.extract_strided_slice %371 {offsets = [1, 0], sizes = [8, 16], strides = [1, 1]} : vector<14x16xf32> to vector<8x16xf32>
      %423 = vector.extract_strided_slice %371 {offsets = [5, 0], sizes = [8, 16], strides = [1, 1]} : vector<14x16xf32> to vector<8x16xf32>
      %424 = arith.addf %422, %423 : vector<8x16xf32>
      %cst_92 = arith.constant 0.800737381 : f32
      %425 = vector.broadcast %cst_92 : f32 to vector<8x16xf32>
      %426 = arith.mulf %425, %424 : vector<8x16xf32>
      %427 = arith.addf %421, %426 : vector<8x16xf32>
      %428 = vector.extract_strided_slice %374 {offsets = [1, 0], sizes = [8, 16], strides = [1, 1]} : vector<14x16xf32> to vector<8x16xf32>
      %429 = vector.extract_strided_slice %374 {offsets = [5, 0], sizes = [8, 16], strides = [1, 1]} : vector<14x16xf32> to vector<8x16xf32>
      %430 = arith.addf %428, %429 : vector<8x16xf32>
      %cst_93 = arith.constant 0.780007302 : f32
      %431 = vector.broadcast %cst_93 : f32 to vector<8x16xf32>
      %432 = arith.mulf %431, %430 : vector<8x16xf32>
      %433 = arith.addf %427, %432 : vector<8x16xf32>
      %434 = vector.extract_strided_slice %377 {offsets = [1, 0], sizes = [8, 16], strides = [1, 1]} : vector<14x16xf32> to vector<8x16xf32>
      %435 = vector.extract_strided_slice %377 {offsets = [5, 0], sizes = [8, 16], strides = [1, 1]} : vector<14x16xf32> to vector<8x16xf32>
      %436 = arith.addf %434, %435 : vector<8x16xf32>
      %cst_94 = arith.constant 0.730322062 : f32
      %437 = vector.broadcast %cst_94 : f32 to vector<8x16xf32>
      %438 = arith.mulf %437, %436 : vector<8x16xf32>
      %439 = arith.addf %433, %438 : vector<8x16xf32>
      %440 = vector.extract_strided_slice %380 {offsets = [1, 0], sizes = [8, 16], strides = [1, 1]} : vector<14x16xf32> to vector<8x16xf32>
      %441 = vector.extract_strided_slice %380 {offsets = [5, 0], sizes = [8, 16], strides = [1, 1]} : vector<14x16xf32> to vector<8x16xf32>
      %442 = arith.addf %440, %441 : vector<8x16xf32>
      %cst_95 = arith.constant 0.669906735 : f32
      %443 = vector.broadcast %cst_95 : f32 to vector<8x16xf32>
      %444 = arith.mulf %443, %442 : vector<8x16xf32>
      %445 = arith.addf %439, %444 : vector<8x16xf32>
      %446 = vector.extract_strided_slice %371 {offsets = [0, 0], sizes = [8, 16], strides = [1, 1]} : vector<14x16xf32> to vector<8x16xf32>
      %447 = vector.extract_strided_slice %371 {offsets = [6, 0], sizes = [8, 16], strides = [1, 1]} : vector<14x16xf32> to vector<8x16xf32>
      %448 = arith.addf %446, %447 : vector<8x16xf32>
      %cst_96 = arith.constant 0.716531336 : f32
      %449 = vector.broadcast %cst_96 : f32 to vector<8x16xf32>
      %450 = arith.mulf %449, %448 : vector<8x16xf32>
      %451 = arith.addf %445, %450 : vector<8x16xf32>
      %452 = vector.extract_strided_slice %374 {offsets = [0, 0], sizes = [8, 16], strides = [1, 1]} : vector<14x16xf32> to vector<8x16xf32>
      %453 = vector.extract_strided_slice %374 {offsets = [6, 0], sizes = [8, 16], strides = [1, 1]} : vector<14x16xf32> to vector<8x16xf32>
      %454 = arith.addf %452, %453 : vector<8x16xf32>
      %cst_97 = arith.constant 0.703727424 : f32
      %455 = vector.broadcast %cst_97 : f32 to vector<8x16xf32>
      %456 = arith.mulf %455, %454 : vector<8x16xf32>
      %457 = arith.addf %451, %456 : vector<8x16xf32>
      %458 = vector.extract_strided_slice %377 {offsets = [0, 0], sizes = [8, 16], strides = [1, 1]} : vector<14x16xf32> to vector<8x16xf32>
      %459 = vector.extract_strided_slice %377 {offsets = [6, 0], sizes = [8, 16], strides = [1, 1]} : vector<14x16xf32> to vector<8x16xf32>
      %460 = arith.addf %458, %459 : vector<8x16xf32>
      %cst_98 = arith.constant 0.669906735 : f32
      %461 = vector.broadcast %cst_98 : f32 to vector<8x16xf32>
      %462 = arith.mulf %461, %460 : vector<8x16xf32>
      %463 = arith.addf %457, %462 : vector<8x16xf32>
      %464 = vector.extract_strided_slice %380 {offsets = [0, 0], sizes = [8, 16], strides = [1, 1]} : vector<14x16xf32> to vector<8x16xf32>
      %465 = vector.extract_strided_slice %380 {offsets = [6, 0], sizes = [8, 16], strides = [1, 1]} : vector<14x16xf32> to vector<8x16xf32>
      %466 = arith.addf %464, %465 : vector<8x16xf32>
      %cst_99 = arith.constant 0.624125063 : f32
      %467 = vector.broadcast %cst_99 : f32 to vector<8x16xf32>
      %468 = arith.mulf %467, %466 : vector<8x16xf32>
      %469 = arith.addf %463, %468 : vector<8x16xf32>
      %470 = arith.mulf %469, %334 : vector<8x16xf32>
      %471 = math.exp %470 : vector<8x16xf32>
      %472 = vector.shape_cast %471 : vector<8x16xf32> to vector<1x8x16xf32>
      %c0_100 = arith.constant 0 : index
      %473 = arith.index_cast %363 : i32 to index
      %c0_101 = arith.constant 0 : index
      %c0_102 = arith.constant 0 : index
      %474 = vector.load %arg3[%c0_100, %473, %c0_101, %c0_102] : memref<1x81x8x16xf32, #tpu.memory_space<vmem>>, vector<1x1x8x16xf32>
      %475 = vector.shape_cast %474 : vector<1x1x8x16xf32> to vector<1x8x16xf32>
      %476 = vector.shape_cast %472 : vector<1x8x16xf32> to vector<1x1x8x16xf32>
      tpu.vector_store %arg3[%c0_100, %473, %c0_101, %c0_102], %476 {strides = array<i32>} : memref<1x81x8x16xf32, #tpu.memory_space<vmem>>, vector<1x1x8x16xf32>,
      %477 = arith.addf %arg5, %471 : vector<8x16xf32>
      scf.yield %477 : vector<8x16xf32>
    }
    %c9_i32_49 = arith.constant 9 : i32
    %c0_i32_50 = arith.constant 0 : i32
    %c9_i32_51 = arith.constant 9 : i32
    %342 = arith.addi %c0_i32_50, %c9_i32_51 : i32
    %c1_i32_52 = arith.constant 1 : i32
    %343 = scf.for %arg4 = %c0_i32_50 to %342 step %c1_i32_52 iter_args(%arg5 = %341) -> (vector<8x16xf32>)  : i32 {
      %c27_i32 = arith.constant 27 : i32
      %363 = arith.addi %c27_i32, %arg4 : i32
      %364 = arith.addi %0, %arg4 : i32
      %c0_82 = arith.constant 0 : index
      %365 = arith.index_cast %364 : i32 to index
      %c3_83 = arith.constant 3 : index
      %366 = vector.load %arg2[%c0_82, %365, %c3_83] : memref<1x30x30xf32, #tpu.memory_space<vmem>>, vector<1x14x22xf32>
      %367 = vector.shape_cast %366 : vector<1x14x22xf32> to vector<14x22xf32>
      %368 = arith.subf %367, %21 : vector<14x22xf32>
      %369 = arith.mulf %17, %368 : vector<14x22xf32>
      %370 = arith.mulf %369, %368 : vector<14x22xf32>
      %371 = vector.extract_strided_slice %370 {offsets = [0, 3], sizes = [14, 16], strides = [1, 1]} : vector<14x22xf32> to vector<14x16xf32>
      %372 = vector.extract_strided_slice %370 {offsets = [0, 2], sizes = [14, 16], strides = [1, 1]} : vector<14x22xf32> to vector<14x16xf32>
      %373 = vector.extract_strided_slice %370 {offsets = [0, 4], sizes = [14, 16], strides = [1, 1]} : vector<14x22xf32> to vector<14x16xf32>
      %374 = arith.addf %372, %373 : vector<14x16xf32>
      %375 = vector.extract_strided_slice %370 {offsets = [0, 1], sizes = [14, 16], strides = [1, 1]} : vector<14x22xf32> to vector<14x16xf32>
      %376 = vector.extract_strided_slice %370 {offsets = [0, 5], sizes = [14, 16], strides = [1, 1]} : vector<14x22xf32> to vector<14x16xf32>
      %377 = arith.addf %375, %376 : vector<14x16xf32>
      %378 = vector.extract_strided_slice %370 {offsets = [0, 0], sizes = [14, 16], strides = [1, 1]} : vector<14x22xf32> to vector<14x16xf32>
      %379 = vector.extract_strided_slice %370 {offsets = [0, 6], sizes = [14, 16], strides = [1, 1]} : vector<14x22xf32> to vector<14x16xf32>
      %380 = arith.addf %378, %379 : vector<14x16xf32>
      %cst_84 = arith.constant 0.000000e+00 : f32
      %381 = vector.broadcast %cst_84 : f32 to vector<8x16xf32>
      %382 = vector.extract_strided_slice %371 {offsets = [3, 0], sizes = [8, 16], strides = [1, 1]} : vector<14x16xf32> to vector<8x16xf32>
      %cst_85 = arith.constant 1.000000e+00 : f32
      %383 = vector.broadcast %cst_85 : f32 to vector<8x16xf32>
      %384 = arith.mulf %383, %382 : vector<8x16xf32>
      %385 = arith.addf %381, %384 : vector<8x16xf32>
      %386 = vector.extract_strided_slice %374 {offsets = [3, 0], sizes = [8, 16], strides = [1, 1]} : vector<14x16xf32> to vector<8x16xf32>
      %cst_86 = arith.constant 0.894839346 : f32
      %387 = vector.broadcast %cst_86 : f32 to vector<8x16xf32>
      %388 = arith.mulf %387, %386 : vector<8x16xf32>
      %389 = arith.addf %385, %388 : vector<8x16xf32>
      %390 = vector.extract_strided_slice %377 {offsets = [3, 0], sizes = [8, 16], strides = [1, 1]} : vector<14x16xf32> to vector<8x16xf32>
      %cst_87 = arith.constant 0.800737381 : f32
      %391 = vector.broadcast %cst_87 : f32 to vector<8x16xf32>
      %392 = arith.mulf %391, %390 : vector<8x16xf32>
      %393 = arith.addf %389, %392 : vector<8x16xf32>
      %394 = vector.extract_strided_slice %380 {offsets = [3, 0], sizes = [8, 16], strides = [1, 1]} : vector<14x16xf32> to vector<8x16xf32>
      %cst_88 = arith.constant 0.716531336 : f32
      %395 = vector.broadcast %cst_88 : f32 to vector<8x16xf32>
      %396 = arith.mulf %395, %394 : vector<8x16xf32>
      %397 = arith.addf %393, %396 : vector<8x16xf32>
      %398 = vector.extract_strided_slice %371 {offsets = [2, 0], sizes = [8, 16], strides = [1, 1]} : vector<14x16xf32> to vector<8x16xf32>
      %399 = vector.extract_strided_slice %371 {offsets = [4, 0], sizes = [8, 16], strides = [1, 1]} : vector<14x16xf32> to vector<8x16xf32>
      %400 = arith.addf %398, %399 : vector<8x16xf32>
      %cst_89 = arith.constant 0.894839346 : f32
      %401 = vector.broadcast %cst_89 : f32 to vector<8x16xf32>
      %402 = arith.mulf %401, %400 : vector<8x16xf32>
      %403 = arith.addf %397, %402 : vector<8x16xf32>
      %404 = vector.extract_strided_slice %374 {offsets = [2, 0], sizes = [8, 16], strides = [1, 1]} : vector<14x16xf32> to vector<8x16xf32>
      %405 = vector.extract_strided_slice %374 {offsets = [4, 0], sizes = [8, 16], strides = [1, 1]} : vector<14x16xf32> to vector<8x16xf32>
      %406 = arith.addf %404, %405 : vector<8x16xf32>
      %cst_90 = arith.constant 0.854588806 : f32
      %407 = vector.broadcast %cst_90 : f32 to vector<8x16xf32>
      %408 = arith.mulf %407, %406 : vector<8x16xf32>
      %409 = arith.addf %403, %408 : vector<8x16xf32>
      %410 = vector.extract_strided_slice %377 {offsets = [2, 0], sizes = [8, 16], strides = [1, 1]} : vector<14x16xf32> to vector<8x16xf32>
      %411 = vector.extract_strided_slice %377 {offsets = [4, 0], sizes = [8, 16], strides = [1, 1]} : vector<14x16xf32> to vector<8x16xf32>
      %412 = arith.addf %410, %411 : vector<8x16xf32>
      %cst_91 = arith.constant 0.780007302 : f32
      %413 = vector.broadcast %cst_91 : f32 to vector<8x16xf32>
      %414 = arith.mulf %413, %412 : vector<8x16xf32>
      %415 = arith.addf %409, %414 : vector<8x16xf32>
      %416 = vector.extract_strided_slice %380 {offsets = [2, 0], sizes = [8, 16], strides = [1, 1]} : vector<14x16xf32> to vector<8x16xf32>
      %417 = vector.extract_strided_slice %380 {offsets = [4, 0], sizes = [8, 16], strides = [1, 1]} : vector<14x16xf32> to vector<8x16xf32>
      %418 = arith.addf %416, %417 : vector<8x16xf32>
      %cst_92 = arith.constant 0.703727424 : f32
      %419 = vector.broadcast %cst_92 : f32 to vector<8x16xf32>
      %420 = arith.mulf %419, %418 : vector<8x16xf32>
      %421 = arith.addf %415, %420 : vector<8x16xf32>
      %422 = vector.extract_strided_slice %371 {offsets = [1, 0], sizes = [8, 16], strides = [1, 1]} : vector<14x16xf32> to vector<8x16xf32>
      %423 = vector.extract_strided_slice %371 {offsets = [5, 0], sizes = [8, 16], strides = [1, 1]} : vector<14x16xf32> to vector<8x16xf32>
      %424 = arith.addf %422, %423 : vector<8x16xf32>
      %cst_93 = arith.constant 0.800737381 : f32
      %425 = vector.broadcast %cst_93 : f32 to vector<8x16xf32>
      %426 = arith.mulf %425, %424 : vector<8x16xf32>
      %427 = arith.addf %421, %426 : vector<8x16xf32>
      %428 = vector.extract_strided_slice %374 {offsets = [1, 0], sizes = [8, 16], strides = [1, 1]} : vector<14x16xf32> to vector<8x16xf32>
      %429 = vector.extract_strided_slice %374 {offsets = [5, 0], sizes = [8, 16], strides = [1, 1]} : vector<14x16xf32> to vector<8x16xf32>
      %430 = arith.addf %428, %429 : vector<8x16xf32>
      %cst_94 = arith.constant 0.780007302 : f32
      %431 = vector.broadcast %cst_94 : f32 to vector<8x16xf32>
      %432 = arith.mulf %431, %430 : vector<8x16xf32>
      %433 = arith.addf %427, %432 : vector<8x16xf32>
      %434 = vector.extract_strided_slice %377 {offsets = [1, 0], sizes = [8, 16], strides = [1, 1]} : vector<14x16xf32> to vector<8x16xf32>
      %435 = vector.extract_strided_slice %377 {offsets = [5, 0], sizes = [8, 16], strides = [1, 1]} : vector<14x16xf32> to vector<8x16xf32>
      %436 = arith.addf %434, %435 : vector<8x16xf32>
      %cst_95 = arith.constant 0.730322062 : f32
      %437 = vector.broadcast %cst_95 : f32 to vector<8x16xf32>
      %438 = arith.mulf %437, %436 : vector<8x16xf32>
      %439 = arith.addf %433, %438 : vector<8x16xf32>
      %440 = vector.extract_strided_slice %380 {offsets = [1, 0], sizes = [8, 16], strides = [1, 1]} : vector<14x16xf32> to vector<8x16xf32>
      %441 = vector.extract_strided_slice %380 {offsets = [5, 0], sizes = [8, 16], strides = [1, 1]} : vector<14x16xf32> to vector<8x16xf32>
      %442 = arith.addf %440, %441 : vector<8x16xf32>
      %cst_96 = arith.constant 0.669906735 : f32
      %443 = vector.broadcast %cst_96 : f32 to vector<8x16xf32>
      %444 = arith.mulf %443, %442 : vector<8x16xf32>
      %445 = arith.addf %439, %444 : vector<8x16xf32>
      %446 = vector.extract_strided_slice %371 {offsets = [0, 0], sizes = [8, 16], strides = [1, 1]} : vector<14x16xf32> to vector<8x16xf32>
      %447 = vector.extract_strided_slice %371 {offsets = [6, 0], sizes = [8, 16], strides = [1, 1]} : vector<14x16xf32> to vector<8x16xf32>
      %448 = arith.addf %446, %447 : vector<8x16xf32>
      %cst_97 = arith.constant 0.716531336 : f32
      %449 = vector.broadcast %cst_97 : f32 to vector<8x16xf32>
      %450 = arith.mulf %449, %448 : vector<8x16xf32>
      %451 = arith.addf %445, %450 : vector<8x16xf32>
      %452 = vector.extract_strided_slice %374 {offsets = [0, 0], sizes = [8, 16], strides = [1, 1]} : vector<14x16xf32> to vector<8x16xf32>
      %453 = vector.extract_strided_slice %374 {offsets = [6, 0], sizes = [8, 16], strides = [1, 1]} : vector<14x16xf32> to vector<8x16xf32>
      %454 = arith.addf %452, %453 : vector<8x16xf32>
      %cst_98 = arith.constant 0.703727424 : f32
      %455 = vector.broadcast %cst_98 : f32 to vector<8x16xf32>
      %456 = arith.mulf %455, %454 : vector<8x16xf32>
      %457 = arith.addf %451, %456 : vector<8x16xf32>
      %458 = vector.extract_strided_slice %377 {offsets = [0, 0], sizes = [8, 16], strides = [1, 1]} : vector<14x16xf32> to vector<8x16xf32>
      %459 = vector.extract_strided_slice %377 {offsets = [6, 0], sizes = [8, 16], strides = [1, 1]} : vector<14x16xf32> to vector<8x16xf32>
      %460 = arith.addf %458, %459 : vector<8x16xf32>
      %cst_99 = arith.constant 0.669906735 : f32
      %461 = vector.broadcast %cst_99 : f32 to vector<8x16xf32>
      %462 = arith.mulf %461, %460 : vector<8x16xf32>
      %463 = arith.addf %457, %462 : vector<8x16xf32>
      %464 = vector.extract_strided_slice %380 {offsets = [0, 0], sizes = [8, 16], strides = [1, 1]} : vector<14x16xf32> to vector<8x16xf32>
      %465 = vector.extract_strided_slice %380 {offsets = [6, 0], sizes = [8, 16], strides = [1, 1]} : vector<14x16xf32> to vector<8x16xf32>
      %466 = arith.addf %464, %465 : vector<8x16xf32>
      %cst_100 = arith.constant 0.624125063 : f32
      %467 = vector.broadcast %cst_100 : f32 to vector<8x16xf32>
      %468 = arith.mulf %467, %466 : vector<8x16xf32>
      %469 = arith.addf %463, %468 : vector<8x16xf32>
      %470 = arith.mulf %469, %334 : vector<8x16xf32>
      %471 = math.exp %470 : vector<8x16xf32>
      %472 = vector.shape_cast %471 : vector<8x16xf32> to vector<1x8x16xf32>
      %c0_101 = arith.constant 0 : index
      %473 = arith.index_cast %363 : i32 to index
      %c0_102 = arith.constant 0 : index
      %c0_103 = arith.constant 0 : index
      %474 = vector.load %arg3[%c0_101, %473, %c0_102, %c0_103] : memref<1x81x8x16xf32, #tpu.memory_space<vmem>>, vector<1x1x8x16xf32>
      %475 = vector.shape_cast %474 : vector<1x1x8x16xf32> to vector<1x8x16xf32>
      %476 = vector.shape_cast %472 : vector<1x8x16xf32> to vector<1x1x8x16xf32>
      tpu.vector_store %arg3[%c0_101, %473, %c0_102, %c0_103], %476 {strides = array<i32>} : memref<1x81x8x16xf32, #tpu.memory_space<vmem>>, vector<1x1x8x16xf32>,
      %477 = arith.addf %arg5, %471 : vector<8x16xf32>
      scf.yield %477 : vector<8x16xf32>
    }
    %c9_i32_53 = arith.constant 9 : i32
    %c0_i32_54 = arith.constant 0 : i32
    %c9_i32_55 = arith.constant 9 : i32
    %344 = arith.addi %c0_i32_54, %c9_i32_55 : i32
    %c1_i32_56 = arith.constant 1 : i32
    %345 = scf.for %arg4 = %c0_i32_54 to %344 step %c1_i32_56 iter_args(%arg5 = %343) -> (vector<8x16xf32>)  : i32 {
      %c36_i32 = arith.constant 36 : i32
      %363 = arith.addi %c36_i32, %arg4 : i32
      %364 = arith.addi %0, %arg4 : i32
      %c0_82 = arith.constant 0 : index
      %365 = arith.index_cast %364 : i32 to index
      %c4_83 = arith.constant 4 : index
      %366 = vector.load %arg2[%c0_82, %365, %c4_83] : memref<1x30x30xf32, #tpu.memory_space<vmem>>, vector<1x14x22xf32>
      %367 = vector.shape_cast %366 : vector<1x14x22xf32> to vector<14x22xf32>
      %368 = arith.subf %367, %21 : vector<14x22xf32>
      %369 = arith.mulf %17, %368 : vector<14x22xf32>
      %370 = arith.mulf %369, %368 : vector<14x22xf32>
      %371 = vector.extract_strided_slice %370 {offsets = [0, 3], sizes = [14, 16], strides = [1, 1]} : vector<14x22xf32> to vector<14x16xf32>
      %372 = vector.extract_strided_slice %370 {offsets = [0, 2], sizes = [14, 16], strides = [1, 1]} : vector<14x22xf32> to vector<14x16xf32>
      %373 = vector.extract_strided_slice %370 {offsets = [0, 4], sizes = [14, 16], strides = [1, 1]} : vector<14x22xf32> to vector<14x16xf32>
      %374 = arith.addf %372, %373 : vector<14x16xf32>
      %375 = vector.extract_strided_slice %370 {offsets = [0, 1], sizes = [14, 16], strides = [1, 1]} : vector<14x22xf32> to vector<14x16xf32>
      %376 = vector.extract_strided_slice %370 {offsets = [0, 5], sizes = [14, 16], strides = [1, 1]} : vector<14x22xf32> to vector<14x16xf32>
      %377 = arith.addf %375, %376 : vector<14x16xf32>
      %378 = vector.extract_strided_slice %370 {offsets = [0, 0], sizes = [14, 16], strides = [1, 1]} : vector<14x22xf32> to vector<14x16xf32>
      %379 = vector.extract_strided_slice %370 {offsets = [0, 6], sizes = [14, 16], strides = [1, 1]} : vector<14x22xf32> to vector<14x16xf32>
      %380 = arith.addf %378, %379 : vector<14x16xf32>
      %cst_84 = arith.constant 0.000000e+00 : f32
      %381 = vector.broadcast %cst_84 : f32 to vector<8x16xf32>
      %382 = vector.extract_strided_slice %371 {offsets = [3, 0], sizes = [8, 16], strides = [1, 1]} : vector<14x16xf32> to vector<8x16xf32>
      %cst_85 = arith.constant 1.000000e+00 : f32
      %383 = vector.broadcast %cst_85 : f32 to vector<8x16xf32>
      %384 = arith.mulf %383, %382 : vector<8x16xf32>
      %385 = arith.addf %381, %384 : vector<8x16xf32>
      %386 = vector.extract_strided_slice %374 {offsets = [3, 0], sizes = [8, 16], strides = [1, 1]} : vector<14x16xf32> to vector<8x16xf32>
      %cst_86 = arith.constant 0.894839346 : f32
      %387 = vector.broadcast %cst_86 : f32 to vector<8x16xf32>
      %388 = arith.mulf %387, %386 : vector<8x16xf32>
      %389 = arith.addf %385, %388 : vector<8x16xf32>
      %390 = vector.extract_strided_slice %377 {offsets = [3, 0], sizes = [8, 16], strides = [1, 1]} : vector<14x16xf32> to vector<8x16xf32>
      %cst_87 = arith.constant 0.800737381 : f32
      %391 = vector.broadcast %cst_87 : f32 to vector<8x16xf32>
      %392 = arith.mulf %391, %390 : vector<8x16xf32>
      %393 = arith.addf %389, %392 : vector<8x16xf32>
      %394 = vector.extract_strided_slice %380 {offsets = [3, 0], sizes = [8, 16], strides = [1, 1]} : vector<14x16xf32> to vector<8x16xf32>
      %cst_88 = arith.constant 0.716531336 : f32
      %395 = vector.broadcast %cst_88 : f32 to vector<8x16xf32>
      %396 = arith.mulf %395, %394 : vector<8x16xf32>
      %397 = arith.addf %393, %396 : vector<8x16xf32>
      %398 = vector.extract_strided_slice %371 {offsets = [2, 0], sizes = [8, 16], strides = [1, 1]} : vector<14x16xf32> to vector<8x16xf32>
      %399 = vector.extract_strided_slice %371 {offsets = [4, 0], sizes = [8, 16], strides = [1, 1]} : vector<14x16xf32> to vector<8x16xf32>
      %400 = arith.addf %398, %399 : vector<8x16xf32>
      %cst_89 = arith.constant 0.894839346 : f32
      %401 = vector.broadcast %cst_89 : f32 to vector<8x16xf32>
      %402 = arith.mulf %401, %400 : vector<8x16xf32>
      %403 = arith.addf %397, %402 : vector<8x16xf32>
      %404 = vector.extract_strided_slice %374 {offsets = [2, 0], sizes = [8, 16], strides = [1, 1]} : vector<14x16xf32> to vector<8x16xf32>
      %405 = vector.extract_strided_slice %374 {offsets = [4, 0], sizes = [8, 16], strides = [1, 1]} : vector<14x16xf32> to vector<8x16xf32>
      %406 = arith.addf %404, %405 : vector<8x16xf32>
      %cst_90 = arith.constant 0.854588806 : f32
      %407 = vector.broadcast %cst_90 : f32 to vector<8x16xf32>
      %408 = arith.mulf %407, %406 : vector<8x16xf32>
      %409 = arith.addf %403, %408 : vector<8x16xf32>
      %410 = vector.extract_strided_slice %377 {offsets = [2, 0], sizes = [8, 16], strides = [1, 1]} : vector<14x16xf32> to vector<8x16xf32>
      %411 = vector.extract_strided_slice %377 {offsets = [4, 0], sizes = [8, 16], strides = [1, 1]} : vector<14x16xf32> to vector<8x16xf32>
      %412 = arith.addf %410, %411 : vector<8x16xf32>
      %cst_91 = arith.constant 0.780007302 : f32
      %413 = vector.broadcast %cst_91 : f32 to vector<8x16xf32>
      %414 = arith.mulf %413, %412 : vector<8x16xf32>
      %415 = arith.addf %409, %414 : vector<8x16xf32>
      %416 = vector.extract_strided_slice %380 {offsets = [2, 0], sizes = [8, 16], strides = [1, 1]} : vector<14x16xf32> to vector<8x16xf32>
      %417 = vector.extract_strided_slice %380 {offsets = [4, 0], sizes = [8, 16], strides = [1, 1]} : vector<14x16xf32> to vector<8x16xf32>
      %418 = arith.addf %416, %417 : vector<8x16xf32>
      %cst_92 = arith.constant 0.703727424 : f32
      %419 = vector.broadcast %cst_92 : f32 to vector<8x16xf32>
      %420 = arith.mulf %419, %418 : vector<8x16xf32>
      %421 = arith.addf %415, %420 : vector<8x16xf32>
      %422 = vector.extract_strided_slice %371 {offsets = [1, 0], sizes = [8, 16], strides = [1, 1]} : vector<14x16xf32> to vector<8x16xf32>
      %423 = vector.extract_strided_slice %371 {offsets = [5, 0], sizes = [8, 16], strides = [1, 1]} : vector<14x16xf32> to vector<8x16xf32>
      %424 = arith.addf %422, %423 : vector<8x16xf32>
      %cst_93 = arith.constant 0.800737381 : f32
      %425 = vector.broadcast %cst_93 : f32 to vector<8x16xf32>
      %426 = arith.mulf %425, %424 : vector<8x16xf32>
      %427 = arith.addf %421, %426 : vector<8x16xf32>
      %428 = vector.extract_strided_slice %374 {offsets = [1, 0], sizes = [8, 16], strides = [1, 1]} : vector<14x16xf32> to vector<8x16xf32>
      %429 = vector.extract_strided_slice %374 {offsets = [5, 0], sizes = [8, 16], strides = [1, 1]} : vector<14x16xf32> to vector<8x16xf32>
      %430 = arith.addf %428, %429 : vector<8x16xf32>
      %cst_94 = arith.constant 0.780007302 : f32
      %431 = vector.broadcast %cst_94 : f32 to vector<8x16xf32>
      %432 = arith.mulf %431, %430 : vector<8x16xf32>
      %433 = arith.addf %427, %432 : vector<8x16xf32>
      %434 = vector.extract_strided_slice %377 {offsets = [1, 0], sizes = [8, 16], strides = [1, 1]} : vector<14x16xf32> to vector<8x16xf32>
      %435 = vector.extract_strided_slice %377 {offsets = [5, 0], sizes = [8, 16], strides = [1, 1]} : vector<14x16xf32> to vector<8x16xf32>
      %436 = arith.addf %434, %435 : vector<8x16xf32>
      %cst_95 = arith.constant 0.730322062 : f32
      %437 = vector.broadcast %cst_95 : f32 to vector<8x16xf32>
      %438 = arith.mulf %437, %436 : vector<8x16xf32>
      %439 = arith.addf %433, %438 : vector<8x16xf32>
      %440 = vector.extract_strided_slice %380 {offsets = [1, 0], sizes = [8, 16], strides = [1, 1]} : vector<14x16xf32> to vector<8x16xf32>
      %441 = vector.extract_strided_slice %380 {offsets = [5, 0], sizes = [8, 16], strides = [1, 1]} : vector<14x16xf32> to vector<8x16xf32>
      %442 = arith.addf %440, %441 : vector<8x16xf32>
      %cst_96 = arith.constant 0.669906735 : f32
      %443 = vector.broadcast %cst_96 : f32 to vector<8x16xf32>
      %444 = arith.mulf %443, %442 : vector<8x16xf32>
      %445 = arith.addf %439, %444 : vector<8x16xf32>
      %446 = vector.extract_strided_slice %371 {offsets = [0, 0], sizes = [8, 16], strides = [1, 1]} : vector<14x16xf32> to vector<8x16xf32>
      %447 = vector.extract_strided_slice %371 {offsets = [6, 0], sizes = [8, 16], strides = [1, 1]} : vector<14x16xf32> to vector<8x16xf32>
      %448 = arith.addf %446, %447 : vector<8x16xf32>
      %cst_97 = arith.constant 0.716531336 : f32
      %449 = vector.broadcast %cst_97 : f32 to vector<8x16xf32>
      %450 = arith.mulf %449, %448 : vector<8x16xf32>
      %451 = arith.addf %445, %450 : vector<8x16xf32>
      %452 = vector.extract_strided_slice %374 {offsets = [0, 0], sizes = [8, 16], strides = [1, 1]} : vector<14x16xf32> to vector<8x16xf32>
      %453 = vector.extract_strided_slice %374 {offsets = [6, 0], sizes = [8, 16], strides = [1, 1]} : vector<14x16xf32> to vector<8x16xf32>
      %454 = arith.addf %452, %453 : vector<8x16xf32>
      %cst_98 = arith.constant 0.703727424 : f32
      %455 = vector.broadcast %cst_98 : f32 to vector<8x16xf32>
      %456 = arith.mulf %455, %454 : vector<8x16xf32>
      %457 = arith.addf %451, %456 : vector<8x16xf32>
      %458 = vector.extract_strided_slice %377 {offsets = [0, 0], sizes = [8, 16], strides = [1, 1]} : vector<14x16xf32> to vector<8x16xf32>
      %459 = vector.extract_strided_slice %377 {offsets = [6, 0], sizes = [8, 16], strides = [1, 1]} : vector<14x16xf32> to vector<8x16xf32>
      %460 = arith.addf %458, %459 : vector<8x16xf32>
      %cst_99 = arith.constant 0.669906735 : f32
      %461 = vector.broadcast %cst_99 : f32 to vector<8x16xf32>
      %462 = arith.mulf %461, %460 : vector<8x16xf32>
      %463 = arith.addf %457, %462 : vector<8x16xf32>
      %464 = vector.extract_strided_slice %380 {offsets = [0, 0], sizes = [8, 16], strides = [1, 1]} : vector<14x16xf32> to vector<8x16xf32>
      %465 = vector.extract_strided_slice %380 {offsets = [6, 0], sizes = [8, 16], strides = [1, 1]} : vector<14x16xf32> to vector<8x16xf32>
      %466 = arith.addf %464, %465 : vector<8x16xf32>
      %cst_100 = arith.constant 0.624125063 : f32
      %467 = vector.broadcast %cst_100 : f32 to vector<8x16xf32>
      %468 = arith.mulf %467, %466 : vector<8x16xf32>
      %469 = arith.addf %463, %468 : vector<8x16xf32>
      %470 = arith.mulf %469, %334 : vector<8x16xf32>
      %471 = math.exp %470 : vector<8x16xf32>
      %472 = vector.shape_cast %471 : vector<8x16xf32> to vector<1x8x16xf32>
      %c0_101 = arith.constant 0 : index
      %473 = arith.index_cast %363 : i32 to index
      %c0_102 = arith.constant 0 : index
      %c0_103 = arith.constant 0 : index
      %474 = vector.load %arg3[%c0_101, %473, %c0_102, %c0_103] : memref<1x81x8x16xf32, #tpu.memory_space<vmem>>, vector<1x1x8x16xf32>
      %475 = vector.shape_cast %474 : vector<1x1x8x16xf32> to vector<1x8x16xf32>
      %476 = vector.shape_cast %472 : vector<1x8x16xf32> to vector<1x1x8x16xf32>
      tpu.vector_store %arg3[%c0_101, %473, %c0_102, %c0_103], %476 {strides = array<i32>} : memref<1x81x8x16xf32, #tpu.memory_space<vmem>>, vector<1x1x8x16xf32>,
      %477 = arith.addf %arg5, %471 : vector<8x16xf32>
      scf.yield %477 : vector<8x16xf32>
    }
    %c9_i32_57 = arith.constant 9 : i32
    %c0_i32_58 = arith.constant 0 : i32
    %c9_i32_59 = arith.constant 9 : i32
    %346 = arith.addi %c0_i32_58, %c9_i32_59 : i32
    %c1_i32_60 = arith.constant 1 : i32
    %347 = scf.for %arg4 = %c0_i32_58 to %346 step %c1_i32_60 iter_args(%arg5 = %345) -> (vector<8x16xf32>)  : i32 {
      %c45_i32 = arith.constant 45 : i32
      %363 = arith.addi %c45_i32, %arg4 : i32
      %364 = arith.addi %0, %arg4 : i32
      %c0_82 = arith.constant 0 : index
      %365 = arith.index_cast %364 : i32 to index
      %c5_83 = arith.constant 5 : index
      %366 = vector.load %arg2[%c0_82, %365, %c5_83] : memref<1x30x30xf32, #tpu.memory_space<vmem>>, vector<1x14x22xf32>
      %367 = vector.shape_cast %366 : vector<1x14x22xf32> to vector<14x22xf32>
      %368 = arith.subf %367, %21 : vector<14x22xf32>
      %369 = arith.mulf %17, %368 : vector<14x22xf32>
      %370 = arith.mulf %369, %368 : vector<14x22xf32>
      %371 = vector.extract_strided_slice %370 {offsets = [0, 3], sizes = [14, 16], strides = [1, 1]} : vector<14x22xf32> to vector<14x16xf32>
      %372 = vector.extract_strided_slice %370 {offsets = [0, 2], sizes = [14, 16], strides = [1, 1]} : vector<14x22xf32> to vector<14x16xf32>
      %373 = vector.extract_strided_slice %370 {offsets = [0, 4], sizes = [14, 16], strides = [1, 1]} : vector<14x22xf32> to vector<14x16xf32>
      %374 = arith.addf %372, %373 : vector<14x16xf32>
      %375 = vector.extract_strided_slice %370 {offsets = [0, 1], sizes = [14, 16], strides = [1, 1]} : vector<14x22xf32> to vector<14x16xf32>
      %376 = vector.extract_strided_slice %370 {offsets = [0, 5], sizes = [14, 16], strides = [1, 1]} : vector<14x22xf32> to vector<14x16xf32>
      %377 = arith.addf %375, %376 : vector<14x16xf32>
      %378 = vector.extract_strided_slice %370 {offsets = [0, 0], sizes = [14, 16], strides = [1, 1]} : vector<14x22xf32> to vector<14x16xf32>
      %379 = vector.extract_strided_slice %370 {offsets = [0, 6], sizes = [14, 16], strides = [1, 1]} : vector<14x22xf32> to vector<14x16xf32>
      %380 = arith.addf %378, %379 : vector<14x16xf32>
      %cst_84 = arith.constant 0.000000e+00 : f32
      %381 = vector.broadcast %cst_84 : f32 to vector<8x16xf32>
      %382 = vector.extract_strided_slice %371 {offsets = [3, 0], sizes = [8, 16], strides = [1, 1]} : vector<14x16xf32> to vector<8x16xf32>
      %cst_85 = arith.constant 1.000000e+00 : f32
      %383 = vector.broadcast %cst_85 : f32 to vector<8x16xf32>
      %384 = arith.mulf %383, %382 : vector<8x16xf32>
      %385 = arith.addf %381, %384 : vector<8x16xf32>
      %386 = vector.extract_strided_slice %374 {offsets = [3, 0], sizes = [8, 16], strides = [1, 1]} : vector<14x16xf32> to vector<8x16xf32>
      %cst_86 = arith.constant 0.894839346 : f32
      %387 = vector.broadcast %cst_86 : f32 to vector<8x16xf32>
      %388 = arith.mulf %387, %386 : vector<8x16xf32>
      %389 = arith.addf %385, %388 : vector<8x16xf32>
      %390 = vector.extract_strided_slice %377 {offsets = [3, 0], sizes = [8, 16], strides = [1, 1]} : vector<14x16xf32> to vector<8x16xf32>
      %cst_87 = arith.constant 0.800737381 : f32
      %391 = vector.broadcast %cst_87 : f32 to vector<8x16xf32>
      %392 = arith.mulf %391, %390 : vector<8x16xf32>
      %393 = arith.addf %389, %392 : vector<8x16xf32>
      %394 = vector.extract_strided_slice %380 {offsets = [3, 0], sizes = [8, 16], strides = [1, 1]} : vector<14x16xf32> to vector<8x16xf32>
      %cst_88 = arith.constant 0.716531336 : f32
      %395 = vector.broadcast %cst_88 : f32 to vector<8x16xf32>
      %396 = arith.mulf %395, %394 : vector<8x16xf32>
      %397 = arith.addf %393, %396 : vector<8x16xf32>
      %398 = vector.extract_strided_slice %371 {offsets = [2, 0], sizes = [8, 16], strides = [1, 1]} : vector<14x16xf32> to vector<8x16xf32>
      %399 = vector.extract_strided_slice %371 {offsets = [4, 0], sizes = [8, 16], strides = [1, 1]} : vector<14x16xf32> to vector<8x16xf32>
      %400 = arith.addf %398, %399 : vector<8x16xf32>
      %cst_89 = arith.constant 0.894839346 : f32
      %401 = vector.broadcast %cst_89 : f32 to vector<8x16xf32>
      %402 = arith.mulf %401, %400 : vector<8x16xf32>
      %403 = arith.addf %397, %402 : vector<8x16xf32>
      %404 = vector.extract_strided_slice %374 {offsets = [2, 0], sizes = [8, 16], strides = [1, 1]} : vector<14x16xf32> to vector<8x16xf32>
      %405 = vector.extract_strided_slice %374 {offsets = [4, 0], sizes = [8, 16], strides = [1, 1]} : vector<14x16xf32> to vector<8x16xf32>
      %406 = arith.addf %404, %405 : vector<8x16xf32>
      %cst_90 = arith.constant 0.854588806 : f32
      %407 = vector.broadcast %cst_90 : f32 to vector<8x16xf32>
      %408 = arith.mulf %407, %406 : vector<8x16xf32>
      %409 = arith.addf %403, %408 : vector<8x16xf32>
      %410 = vector.extract_strided_slice %377 {offsets = [2, 0], sizes = [8, 16], strides = [1, 1]} : vector<14x16xf32> to vector<8x16xf32>
      %411 = vector.extract_strided_slice %377 {offsets = [4, 0], sizes = [8, 16], strides = [1, 1]} : vector<14x16xf32> to vector<8x16xf32>
      %412 = arith.addf %410, %411 : vector<8x16xf32>
      %cst_91 = arith.constant 0.780007302 : f32
      %413 = vector.broadcast %cst_91 : f32 to vector<8x16xf32>
      %414 = arith.mulf %413, %412 : vector<8x16xf32>
      %415 = arith.addf %409, %414 : vector<8x16xf32>
      %416 = vector.extract_strided_slice %380 {offsets = [2, 0], sizes = [8, 16], strides = [1, 1]} : vector<14x16xf32> to vector<8x16xf32>
      %417 = vector.extract_strided_slice %380 {offsets = [4, 0], sizes = [8, 16], strides = [1, 1]} : vector<14x16xf32> to vector<8x16xf32>
      %418 = arith.addf %416, %417 : vector<8x16xf32>
      %cst_92 = arith.constant 0.703727424 : f32
      %419 = vector.broadcast %cst_92 : f32 to vector<8x16xf32>
      %420 = arith.mulf %419, %418 : vector<8x16xf32>
      %421 = arith.addf %415, %420 : vector<8x16xf32>
      %422 = vector.extract_strided_slice %371 {offsets = [1, 0], sizes = [8, 16], strides = [1, 1]} : vector<14x16xf32> to vector<8x16xf32>
      %423 = vector.extract_strided_slice %371 {offsets = [5, 0], sizes = [8, 16], strides = [1, 1]} : vector<14x16xf32> to vector<8x16xf32>
      %424 = arith.addf %422, %423 : vector<8x16xf32>
      %cst_93 = arith.constant 0.800737381 : f32
      %425 = vector.broadcast %cst_93 : f32 to vector<8x16xf32>
      %426 = arith.mulf %425, %424 : vector<8x16xf32>
      %427 = arith.addf %421, %426 : vector<8x16xf32>
      %428 = vector.extract_strided_slice %374 {offsets = [1, 0], sizes = [8, 16], strides = [1, 1]} : vector<14x16xf32> to vector<8x16xf32>
      %429 = vector.extract_strided_slice %374 {offsets = [5, 0], sizes = [8, 16], strides = [1, 1]} : vector<14x16xf32> to vector<8x16xf32>
      %430 = arith.addf %428, %429 : vector<8x16xf32>
      %cst_94 = arith.constant 0.780007302 : f32
      %431 = vector.broadcast %cst_94 : f32 to vector<8x16xf32>
      %432 = arith.mulf %431, %430 : vector<8x16xf32>
      %433 = arith.addf %427, %432 : vector<8x16xf32>
      %434 = vector.extract_strided_slice %377 {offsets = [1, 0], sizes = [8, 16], strides = [1, 1]} : vector<14x16xf32> to vector<8x16xf32>
      %435 = vector.extract_strided_slice %377 {offsets = [5, 0], sizes = [8, 16], strides = [1, 1]} : vector<14x16xf32> to vector<8x16xf32>
      %436 = arith.addf %434, %435 : vector<8x16xf32>
      %cst_95 = arith.constant 0.730322062 : f32
      %437 = vector.broadcast %cst_95 : f32 to vector<8x16xf32>
      %438 = arith.mulf %437, %436 : vector<8x16xf32>
      %439 = arith.addf %433, %438 : vector<8x16xf32>
      %440 = vector.extract_strided_slice %380 {offsets = [1, 0], sizes = [8, 16], strides = [1, 1]} : vector<14x16xf32> to vector<8x16xf32>
      %441 = vector.extract_strided_slice %380 {offsets = [5, 0], sizes = [8, 16], strides = [1, 1]} : vector<14x16xf32> to vector<8x16xf32>
      %442 = arith.addf %440, %441 : vector<8x16xf32>
      %cst_96 = arith.constant 0.669906735 : f32
      %443 = vector.broadcast %cst_96 : f32 to vector<8x16xf32>
      %444 = arith.mulf %443, %442 : vector<8x16xf32>
      %445 = arith.addf %439, %444 : vector<8x16xf32>
      %446 = vector.extract_strided_slice %371 {offsets = [0, 0], sizes = [8, 16], strides = [1, 1]} : vector<14x16xf32> to vector<8x16xf32>
      %447 = vector.extract_strided_slice %371 {offsets = [6, 0], sizes = [8, 16], strides = [1, 1]} : vector<14x16xf32> to vector<8x16xf32>
      %448 = arith.addf %446, %447 : vector<8x16xf32>
      %cst_97 = arith.constant 0.716531336 : f32
      %449 = vector.broadcast %cst_97 : f32 to vector<8x16xf32>
      %450 = arith.mulf %449, %448 : vector<8x16xf32>
      %451 = arith.addf %445, %450 : vector<8x16xf32>
      %452 = vector.extract_strided_slice %374 {offsets = [0, 0], sizes = [8, 16], strides = [1, 1]} : vector<14x16xf32> to vector<8x16xf32>
      %453 = vector.extract_strided_slice %374 {offsets = [6, 0], sizes = [8, 16], strides = [1, 1]} : vector<14x16xf32> to vector<8x16xf32>
      %454 = arith.addf %452, %453 : vector<8x16xf32>
      %cst_98 = arith.constant 0.703727424 : f32
      %455 = vector.broadcast %cst_98 : f32 to vector<8x16xf32>
      %456 = arith.mulf %455, %454 : vector<8x16xf32>
      %457 = arith.addf %451, %456 : vector<8x16xf32>
      %458 = vector.extract_strided_slice %377 {offsets = [0, 0], sizes = [8, 16], strides = [1, 1]} : vector<14x16xf32> to vector<8x16xf32>
      %459 = vector.extract_strided_slice %377 {offsets = [6, 0], sizes = [8, 16], strides = [1, 1]} : vector<14x16xf32> to vector<8x16xf32>
      %460 = arith.addf %458, %459 : vector<8x16xf32>
      %cst_99 = arith.constant 0.669906735 : f32
      %461 = vector.broadcast %cst_99 : f32 to vector<8x16xf32>
      %462 = arith.mulf %461, %460 : vector<8x16xf32>
      %463 = arith.addf %457, %462 : vector<8x16xf32>
      %464 = vector.extract_strided_slice %380 {offsets = [0, 0], sizes = [8, 16], strides = [1, 1]} : vector<14x16xf32> to vector<8x16xf32>
      %465 = vector.extract_strided_slice %380 {offsets = [6, 0], sizes = [8, 16], strides = [1, 1]} : vector<14x16xf32> to vector<8x16xf32>
      %466 = arith.addf %464, %465 : vector<8x16xf32>
      %cst_100 = arith.constant 0.624125063 : f32
      %467 = vector.broadcast %cst_100 : f32 to vector<8x16xf32>
      %468 = arith.mulf %467, %466 : vector<8x16xf32>
      %469 = arith.addf %463, %468 : vector<8x16xf32>
      %470 = arith.mulf %469, %334 : vector<8x16xf32>
      %471 = math.exp %470 : vector<8x16xf32>
      %472 = vector.shape_cast %471 : vector<8x16xf32> to vector<1x8x16xf32>
      %c0_101 = arith.constant 0 : index
      %473 = arith.index_cast %363 : i32 to index
      %c0_102 = arith.constant 0 : index
      %c0_103 = arith.constant 0 : index
      %474 = vector.load %arg3[%c0_101, %473, %c0_102, %c0_103] : memref<1x81x8x16xf32, #tpu.memory_space<vmem>>, vector<1x1x8x16xf32>
      %475 = vector.shape_cast %474 : vector<1x1x8x16xf32> to vector<1x8x16xf32>
      %476 = vector.shape_cast %472 : vector<1x8x16xf32> to vector<1x1x8x16xf32>
      tpu.vector_store %arg3[%c0_101, %473, %c0_102, %c0_103], %476 {strides = array<i32>} : memref<1x81x8x16xf32, #tpu.memory_space<vmem>>, vector<1x1x8x16xf32>,
      %477 = arith.addf %arg5, %471 : vector<8x16xf32>
      scf.yield %477 : vector<8x16xf32>
    }
    %c9_i32_61 = arith.constant 9 : i32
    %c0_i32_62 = arith.constant 0 : i32
    %c9_i32_63 = arith.constant 9 : i32
    %348 = arith.addi %c0_i32_62, %c9_i32_63 : i32
    %c1_i32_64 = arith.constant 1 : i32
    %349 = scf.for %arg4 = %c0_i32_62 to %348 step %c1_i32_64 iter_args(%arg5 = %347) -> (vector<8x16xf32>)  : i32 {
      %c54_i32 = arith.constant 54 : i32
      %363 = arith.addi %c54_i32, %arg4 : i32
      %364 = arith.addi %0, %arg4 : i32
      %c0_82 = arith.constant 0 : index
      %365 = arith.index_cast %364 : i32 to index
      %c6 = arith.constant 6 : index
      %366 = vector.load %arg2[%c0_82, %365, %c6] : memref<1x30x30xf32, #tpu.memory_space<vmem>>, vector<1x14x22xf32>
      %367 = vector.shape_cast %366 : vector<1x14x22xf32> to vector<14x22xf32>
      %368 = arith.subf %367, %21 : vector<14x22xf32>
      %369 = arith.mulf %17, %368 : vector<14x22xf32>
      %370 = arith.mulf %369, %368 : vector<14x22xf32>
      %371 = vector.extract_strided_slice %370 {offsets = [0, 3], sizes = [14, 16], strides = [1, 1]} : vector<14x22xf32> to vector<14x16xf32>
      %372 = vector.extract_strided_slice %370 {offsets = [0, 2], sizes = [14, 16], strides = [1, 1]} : vector<14x22xf32> to vector<14x16xf32>
      %373 = vector.extract_strided_slice %370 {offsets = [0, 4], sizes = [14, 16], strides = [1, 1]} : vector<14x22xf32> to vector<14x16xf32>
      %374 = arith.addf %372, %373 : vector<14x16xf32>
      %375 = vector.extract_strided_slice %370 {offsets = [0, 1], sizes = [14, 16], strides = [1, 1]} : vector<14x22xf32> to vector<14x16xf32>
      %376 = vector.extract_strided_slice %370 {offsets = [0, 5], sizes = [14, 16], strides = [1, 1]} : vector<14x22xf32> to vector<14x16xf32>
      %377 = arith.addf %375, %376 : vector<14x16xf32>
      %378 = vector.extract_strided_slice %370 {offsets = [0, 0], sizes = [14, 16], strides = [1, 1]} : vector<14x22xf32> to vector<14x16xf32>
      %379 = vector.extract_strided_slice %370 {offsets = [0, 6], sizes = [14, 16], strides = [1, 1]} : vector<14x22xf32> to vector<14x16xf32>
      %380 = arith.addf %378, %379 : vector<14x16xf32>
      %cst_83 = arith.constant 0.000000e+00 : f32
      %381 = vector.broadcast %cst_83 : f32 to vector<8x16xf32>
      %382 = vector.extract_strided_slice %371 {offsets = [3, 0], sizes = [8, 16], strides = [1, 1]} : vector<14x16xf32> to vector<8x16xf32>
      %cst_84 = arith.constant 1.000000e+00 : f32
      %383 = vector.broadcast %cst_84 : f32 to vector<8x16xf32>
      %384 = arith.mulf %383, %382 : vector<8x16xf32>
      %385 = arith.addf %381, %384 : vector<8x16xf32>
      %386 = vector.extract_strided_slice %374 {offsets = [3, 0], sizes = [8, 16], strides = [1, 1]} : vector<14x16xf32> to vector<8x16xf32>
      %cst_85 = arith.constant 0.894839346 : f32
      %387 = vector.broadcast %cst_85 : f32 to vector<8x16xf32>
      %388 = arith.mulf %387, %386 : vector<8x16xf32>
      %389 = arith.addf %385, %388 : vector<8x16xf32>
      %390 = vector.extract_strided_slice %377 {offsets = [3, 0], sizes = [8, 16], strides = [1, 1]} : vector<14x16xf32> to vector<8x16xf32>
      %cst_86 = arith.constant 0.800737381 : f32
      %391 = vector.broadcast %cst_86 : f32 to vector<8x16xf32>
      %392 = arith.mulf %391, %390 : vector<8x16xf32>
      %393 = arith.addf %389, %392 : vector<8x16xf32>
      %394 = vector.extract_strided_slice %380 {offsets = [3, 0], sizes = [8, 16], strides = [1, 1]} : vector<14x16xf32> to vector<8x16xf32>
      %cst_87 = arith.constant 0.716531336 : f32
      %395 = vector.broadcast %cst_87 : f32 to vector<8x16xf32>
      %396 = arith.mulf %395, %394 : vector<8x16xf32>
      %397 = arith.addf %393, %396 : vector<8x16xf32>
      %398 = vector.extract_strided_slice %371 {offsets = [2, 0], sizes = [8, 16], strides = [1, 1]} : vector<14x16xf32> to vector<8x16xf32>
      %399 = vector.extract_strided_slice %371 {offsets = [4, 0], sizes = [8, 16], strides = [1, 1]} : vector<14x16xf32> to vector<8x16xf32>
      %400 = arith.addf %398, %399 : vector<8x16xf32>
      %cst_88 = arith.constant 0.894839346 : f32
      %401 = vector.broadcast %cst_88 : f32 to vector<8x16xf32>
      %402 = arith.mulf %401, %400 : vector<8x16xf32>
      %403 = arith.addf %397, %402 : vector<8x16xf32>
      %404 = vector.extract_strided_slice %374 {offsets = [2, 0], sizes = [8, 16], strides = [1, 1]} : vector<14x16xf32> to vector<8x16xf32>
      %405 = vector.extract_strided_slice %374 {offsets = [4, 0], sizes = [8, 16], strides = [1, 1]} : vector<14x16xf32> to vector<8x16xf32>
      %406 = arith.addf %404, %405 : vector<8x16xf32>
      %cst_89 = arith.constant 0.854588806 : f32
      %407 = vector.broadcast %cst_89 : f32 to vector<8x16xf32>
      %408 = arith.mulf %407, %406 : vector<8x16xf32>
      %409 = arith.addf %403, %408 : vector<8x16xf32>
      %410 = vector.extract_strided_slice %377 {offsets = [2, 0], sizes = [8, 16], strides = [1, 1]} : vector<14x16xf32> to vector<8x16xf32>
      %411 = vector.extract_strided_slice %377 {offsets = [4, 0], sizes = [8, 16], strides = [1, 1]} : vector<14x16xf32> to vector<8x16xf32>
      %412 = arith.addf %410, %411 : vector<8x16xf32>
      %cst_90 = arith.constant 0.780007302 : f32
      %413 = vector.broadcast %cst_90 : f32 to vector<8x16xf32>
      %414 = arith.mulf %413, %412 : vector<8x16xf32>
      %415 = arith.addf %409, %414 : vector<8x16xf32>
      %416 = vector.extract_strided_slice %380 {offsets = [2, 0], sizes = [8, 16], strides = [1, 1]} : vector<14x16xf32> to vector<8x16xf32>
      %417 = vector.extract_strided_slice %380 {offsets = [4, 0], sizes = [8, 16], strides = [1, 1]} : vector<14x16xf32> to vector<8x16xf32>
      %418 = arith.addf %416, %417 : vector<8x16xf32>
      %cst_91 = arith.constant 0.703727424 : f32
      %419 = vector.broadcast %cst_91 : f32 to vector<8x16xf32>
      %420 = arith.mulf %419, %418 : vector<8x16xf32>
      %421 = arith.addf %415, %420 : vector<8x16xf32>
      %422 = vector.extract_strided_slice %371 {offsets = [1, 0], sizes = [8, 16], strides = [1, 1]} : vector<14x16xf32> to vector<8x16xf32>
      %423 = vector.extract_strided_slice %371 {offsets = [5, 0], sizes = [8, 16], strides = [1, 1]} : vector<14x16xf32> to vector<8x16xf32>
      %424 = arith.addf %422, %423 : vector<8x16xf32>
      %cst_92 = arith.constant 0.800737381 : f32
      %425 = vector.broadcast %cst_92 : f32 to vector<8x16xf32>
      %426 = arith.mulf %425, %424 : vector<8x16xf32>
      %427 = arith.addf %421, %426 : vector<8x16xf32>
      %428 = vector.extract_strided_slice %374 {offsets = [1, 0], sizes = [8, 16], strides = [1, 1]} : vector<14x16xf32> to vector<8x16xf32>
      %429 = vector.extract_strided_slice %374 {offsets = [5, 0], sizes = [8, 16], strides = [1, 1]} : vector<14x16xf32> to vector<8x16xf32>
      %430 = arith.addf %428, %429 : vector<8x16xf32>
      %cst_93 = arith.constant 0.780007302 : f32
      %431 = vector.broadcast %cst_93 : f32 to vector<8x16xf32>
      %432 = arith.mulf %431, %430 : vector<8x16xf32>
      %433 = arith.addf %427, %432 : vector<8x16xf32>
      %434 = vector.extract_strided_slice %377 {offsets = [1, 0], sizes = [8, 16], strides = [1, 1]} : vector<14x16xf32> to vector<8x16xf32>
      %435 = vector.extract_strided_slice %377 {offsets = [5, 0], sizes = [8, 16], strides = [1, 1]} : vector<14x16xf32> to vector<8x16xf32>
      %436 = arith.addf %434, %435 : vector<8x16xf32>
      %cst_94 = arith.constant 0.730322062 : f32
      %437 = vector.broadcast %cst_94 : f32 to vector<8x16xf32>
      %438 = arith.mulf %437, %436 : vector<8x16xf32>
      %439 = arith.addf %433, %438 : vector<8x16xf32>
      %440 = vector.extract_strided_slice %380 {offsets = [1, 0], sizes = [8, 16], strides = [1, 1]} : vector<14x16xf32> to vector<8x16xf32>
      %441 = vector.extract_strided_slice %380 {offsets = [5, 0], sizes = [8, 16], strides = [1, 1]} : vector<14x16xf32> to vector<8x16xf32>
      %442 = arith.addf %440, %441 : vector<8x16xf32>
      %cst_95 = arith.constant 0.669906735 : f32
      %443 = vector.broadcast %cst_95 : f32 to vector<8x16xf32>
      %444 = arith.mulf %443, %442 : vector<8x16xf32>
      %445 = arith.addf %439, %444 : vector<8x16xf32>
      %446 = vector.extract_strided_slice %371 {offsets = [0, 0], sizes = [8, 16], strides = [1, 1]} : vector<14x16xf32> to vector<8x16xf32>
      %447 = vector.extract_strided_slice %371 {offsets = [6, 0], sizes = [8, 16], strides = [1, 1]} : vector<14x16xf32> to vector<8x16xf32>
      %448 = arith.addf %446, %447 : vector<8x16xf32>
      %cst_96 = arith.constant 0.716531336 : f32
      %449 = vector.broadcast %cst_96 : f32 to vector<8x16xf32>
      %450 = arith.mulf %449, %448 : vector<8x16xf32>
      %451 = arith.addf %445, %450 : vector<8x16xf32>
      %452 = vector.extract_strided_slice %374 {offsets = [0, 0], sizes = [8, 16], strides = [1, 1]} : vector<14x16xf32> to vector<8x16xf32>
      %453 = vector.extract_strided_slice %374 {offsets = [6, 0], sizes = [8, 16], strides = [1, 1]} : vector<14x16xf32> to vector<8x16xf32>
      %454 = arith.addf %452, %453 : vector<8x16xf32>
      %cst_97 = arith.constant 0.703727424 : f32
      %455 = vector.broadcast %cst_97 : f32 to vector<8x16xf32>
      %456 = arith.mulf %455, %454 : vector<8x16xf32>
      %457 = arith.addf %451, %456 : vector<8x16xf32>
      %458 = vector.extract_strided_slice %377 {offsets = [0, 0], sizes = [8, 16], strides = [1, 1]} : vector<14x16xf32> to vector<8x16xf32>
      %459 = vector.extract_strided_slice %377 {offsets = [6, 0], sizes = [8, 16], strides = [1, 1]} : vector<14x16xf32> to vector<8x16xf32>
      %460 = arith.addf %458, %459 : vector<8x16xf32>
      %cst_98 = arith.constant 0.669906735 : f32
      %461 = vector.broadcast %cst_98 : f32 to vector<8x16xf32>
      %462 = arith.mulf %461, %460 : vector<8x16xf32>
      %463 = arith.addf %457, %462 : vector<8x16xf32>
      %464 = vector.extract_strided_slice %380 {offsets = [0, 0], sizes = [8, 16], strides = [1, 1]} : vector<14x16xf32> to vector<8x16xf32>
      %465 = vector.extract_strided_slice %380 {offsets = [6, 0], sizes = [8, 16], strides = [1, 1]} : vector<14x16xf32> to vector<8x16xf32>
      %466 = arith.addf %464, %465 : vector<8x16xf32>
      %cst_99 = arith.constant 0.624125063 : f32
      %467 = vector.broadcast %cst_99 : f32 to vector<8x16xf32>
      %468 = arith.mulf %467, %466 : vector<8x16xf32>
      %469 = arith.addf %463, %468 : vector<8x16xf32>
      %470 = arith.mulf %469, %334 : vector<8x16xf32>
      %471 = math.exp %470 : vector<8x16xf32>
      %472 = vector.shape_cast %471 : vector<8x16xf32> to vector<1x8x16xf32>
      %c0_100 = arith.constant 0 : index
      %473 = arith.index_cast %363 : i32 to index
      %c0_101 = arith.constant 0 : index
      %c0_102 = arith.constant 0 : index
      %474 = vector.load %arg3[%c0_100, %473, %c0_101, %c0_102] : memref<1x81x8x16xf32, #tpu.memory_space<vmem>>, vector<1x1x8x16xf32>
      %475 = vector.shape_cast %474 : vector<1x1x8x16xf32> to vector<1x8x16xf32>
      %476 = vector.shape_cast %472 : vector<1x8x16xf32> to vector<1x1x8x16xf32>
      tpu.vector_store %arg3[%c0_100, %473, %c0_101, %c0_102], %476 {strides = array<i32>} : memref<1x81x8x16xf32, #tpu.memory_space<vmem>>, vector<1x1x8x16xf32>,
      %477 = arith.addf %arg5, %471 : vector<8x16xf32>
      scf.yield %477 : vector<8x16xf32>
    }
    %c9_i32_65 = arith.constant 9 : i32
    %c0_i32_66 = arith.constant 0 : i32
    %c9_i32_67 = arith.constant 9 : i32
    %350 = arith.addi %c0_i32_66, %c9_i32_67 : i32
    %c1_i32_68 = arith.constant 1 : i32
    %351 = scf.for %arg4 = %c0_i32_66 to %350 step %c1_i32_68 iter_args(%arg5 = %349) -> (vector<8x16xf32>)  : i32 {
      %c63_i32 = arith.constant 63 : i32
      %363 = arith.addi %c63_i32, %arg4 : i32
      %364 = arith.addi %0, %arg4 : i32
      %c0_82 = arith.constant 0 : index
      %365 = arith.index_cast %364 : i32 to index
      %c7 = arith.constant 7 : index
      %366 = vector.load %arg2[%c0_82, %365, %c7] : memref<1x30x30xf32, #tpu.memory_space<vmem>>, vector<1x14x22xf32>
      %367 = vector.shape_cast %366 : vector<1x14x22xf32> to vector<14x22xf32>
      %368 = arith.subf %367, %21 : vector<14x22xf32>
      %369 = arith.mulf %17, %368 : vector<14x22xf32>
      %370 = arith.mulf %369, %368 : vector<14x22xf32>
      %371 = vector.extract_strided_slice %370 {offsets = [0, 3], sizes = [14, 16], strides = [1, 1]} : vector<14x22xf32> to vector<14x16xf32>
      %372 = vector.extract_strided_slice %370 {offsets = [0, 2], sizes = [14, 16], strides = [1, 1]} : vector<14x22xf32> to vector<14x16xf32>
      %373 = vector.extract_strided_slice %370 {offsets = [0, 4], sizes = [14, 16], strides = [1, 1]} : vector<14x22xf32> to vector<14x16xf32>
      %374 = arith.addf %372, %373 : vector<14x16xf32>
      %375 = vector.extract_strided_slice %370 {offsets = [0, 1], sizes = [14, 16], strides = [1, 1]} : vector<14x22xf32> to vector<14x16xf32>
      %376 = vector.extract_strided_slice %370 {offsets = [0, 5], sizes = [14, 16], strides = [1, 1]} : vector<14x22xf32> to vector<14x16xf32>
      %377 = arith.addf %375, %376 : vector<14x16xf32>
      %378 = vector.extract_strided_slice %370 {offsets = [0, 0], sizes = [14, 16], strides = [1, 1]} : vector<14x22xf32> to vector<14x16xf32>
      %379 = vector.extract_strided_slice %370 {offsets = [0, 6], sizes = [14, 16], strides = [1, 1]} : vector<14x22xf32> to vector<14x16xf32>
      %380 = arith.addf %378, %379 : vector<14x16xf32>
      %cst_83 = arith.constant 0.000000e+00 : f32
      %381 = vector.broadcast %cst_83 : f32 to vector<8x16xf32>
      %382 = vector.extract_strided_slice %371 {offsets = [3, 0], sizes = [8, 16], strides = [1, 1]} : vector<14x16xf32> to vector<8x16xf32>
      %cst_84 = arith.constant 1.000000e+00 : f32
      %383 = vector.broadcast %cst_84 : f32 to vector<8x16xf32>
      %384 = arith.mulf %383, %382 : vector<8x16xf32>
      %385 = arith.addf %381, %384 : vector<8x16xf32>
      %386 = vector.extract_strided_slice %374 {offsets = [3, 0], sizes = [8, 16], strides = [1, 1]} : vector<14x16xf32> to vector<8x16xf32>
      %cst_85 = arith.constant 0.894839346 : f32
      %387 = vector.broadcast %cst_85 : f32 to vector<8x16xf32>
      %388 = arith.mulf %387, %386 : vector<8x16xf32>
      %389 = arith.addf %385, %388 : vector<8x16xf32>
      %390 = vector.extract_strided_slice %377 {offsets = [3, 0], sizes = [8, 16], strides = [1, 1]} : vector<14x16xf32> to vector<8x16xf32>
      %cst_86 = arith.constant 0.800737381 : f32
      %391 = vector.broadcast %cst_86 : f32 to vector<8x16xf32>
      %392 = arith.mulf %391, %390 : vector<8x16xf32>
      %393 = arith.addf %389, %392 : vector<8x16xf32>
      %394 = vector.extract_strided_slice %380 {offsets = [3, 0], sizes = [8, 16], strides = [1, 1]} : vector<14x16xf32> to vector<8x16xf32>
      %cst_87 = arith.constant 0.716531336 : f32
      %395 = vector.broadcast %cst_87 : f32 to vector<8x16xf32>
      %396 = arith.mulf %395, %394 : vector<8x16xf32>
      %397 = arith.addf %393, %396 : vector<8x16xf32>
      %398 = vector.extract_strided_slice %371 {offsets = [2, 0], sizes = [8, 16], strides = [1, 1]} : vector<14x16xf32> to vector<8x16xf32>
      %399 = vector.extract_strided_slice %371 {offsets = [4, 0], sizes = [8, 16], strides = [1, 1]} : vector<14x16xf32> to vector<8x16xf32>
      %400 = arith.addf %398, %399 : vector<8x16xf32>
      %cst_88 = arith.constant 0.894839346 : f32
      %401 = vector.broadcast %cst_88 : f32 to vector<8x16xf32>
      %402 = arith.mulf %401, %400 : vector<8x16xf32>
      %403 = arith.addf %397, %402 : vector<8x16xf32>
      %404 = vector.extract_strided_slice %374 {offsets = [2, 0], sizes = [8, 16], strides = [1, 1]} : vector<14x16xf32> to vector<8x16xf32>
      %405 = vector.extract_strided_slice %374 {offsets = [4, 0], sizes = [8, 16], strides = [1, 1]} : vector<14x16xf32> to vector<8x16xf32>
      %406 = arith.addf %404, %405 : vector<8x16xf32>
      %cst_89 = arith.constant 0.854588806 : f32
      %407 = vector.broadcast %cst_89 : f32 to vector<8x16xf32>
      %408 = arith.mulf %407, %406 : vector<8x16xf32>
      %409 = arith.addf %403, %408 : vector<8x16xf32>
      %410 = vector.extract_strided_slice %377 {offsets = [2, 0], sizes = [8, 16], strides = [1, 1]} : vector<14x16xf32> to vector<8x16xf32>
      %411 = vector.extract_strided_slice %377 {offsets = [4, 0], sizes = [8, 16], strides = [1, 1]} : vector<14x16xf32> to vector<8x16xf32>
      %412 = arith.addf %410, %411 : vector<8x16xf32>
      %cst_90 = arith.constant 0.780007302 : f32
      %413 = vector.broadcast %cst_90 : f32 to vector<8x16xf32>
      %414 = arith.mulf %413, %412 : vector<8x16xf32>
      %415 = arith.addf %409, %414 : vector<8x16xf32>
      %416 = vector.extract_strided_slice %380 {offsets = [2, 0], sizes = [8, 16], strides = [1, 1]} : vector<14x16xf32> to vector<8x16xf32>
      %417 = vector.extract_strided_slice %380 {offsets = [4, 0], sizes = [8, 16], strides = [1, 1]} : vector<14x16xf32> to vector<8x16xf32>
      %418 = arith.addf %416, %417 : vector<8x16xf32>
      %cst_91 = arith.constant 0.703727424 : f32
      %419 = vector.broadcast %cst_91 : f32 to vector<8x16xf32>
      %420 = arith.mulf %419, %418 : vector<8x16xf32>
      %421 = arith.addf %415, %420 : vector<8x16xf32>
      %422 = vector.extract_strided_slice %371 {offsets = [1, 0], sizes = [8, 16], strides = [1, 1]} : vector<14x16xf32> to vector<8x16xf32>
      %423 = vector.extract_strided_slice %371 {offsets = [5, 0], sizes = [8, 16], strides = [1, 1]} : vector<14x16xf32> to vector<8x16xf32>
      %424 = arith.addf %422, %423 : vector<8x16xf32>
      %cst_92 = arith.constant 0.800737381 : f32
      %425 = vector.broadcast %cst_92 : f32 to vector<8x16xf32>
      %426 = arith.mulf %425, %424 : vector<8x16xf32>
      %427 = arith.addf %421, %426 : vector<8x16xf32>
      %428 = vector.extract_strided_slice %374 {offsets = [1, 0], sizes = [8, 16], strides = [1, 1]} : vector<14x16xf32> to vector<8x16xf32>
      %429 = vector.extract_strided_slice %374 {offsets = [5, 0], sizes = [8, 16], strides = [1, 1]} : vector<14x16xf32> to vector<8x16xf32>
      %430 = arith.addf %428, %429 : vector<8x16xf32>
      %cst_93 = arith.constant 0.780007302 : f32
      %431 = vector.broadcast %cst_93 : f32 to vector<8x16xf32>
      %432 = arith.mulf %431, %430 : vector<8x16xf32>
      %433 = arith.addf %427, %432 : vector<8x16xf32>
      %434 = vector.extract_strided_slice %377 {offsets = [1, 0], sizes = [8, 16], strides = [1, 1]} : vector<14x16xf32> to vector<8x16xf32>
      %435 = vector.extract_strided_slice %377 {offsets = [5, 0], sizes = [8, 16], strides = [1, 1]} : vector<14x16xf32> to vector<8x16xf32>
      %436 = arith.addf %434, %435 : vector<8x16xf32>
      %cst_94 = arith.constant 0.730322062 : f32
      %437 = vector.broadcast %cst_94 : f32 to vector<8x16xf32>
      %438 = arith.mulf %437, %436 : vector<8x16xf32>
      %439 = arith.addf %433, %438 : vector<8x16xf32>
      %440 = vector.extract_strided_slice %380 {offsets = [1, 0], sizes = [8, 16], strides = [1, 1]} : vector<14x16xf32> to vector<8x16xf32>
      %441 = vector.extract_strided_slice %380 {offsets = [5, 0], sizes = [8, 16], strides = [1, 1]} : vector<14x16xf32> to vector<8x16xf32>
      %442 = arith.addf %440, %441 : vector<8x16xf32>
      %cst_95 = arith.constant 0.669906735 : f32
      %443 = vector.broadcast %cst_95 : f32 to vector<8x16xf32>
      %444 = arith.mulf %443, %442 : vector<8x16xf32>
      %445 = arith.addf %439, %444 : vector<8x16xf32>
      %446 = vector.extract_strided_slice %371 {offsets = [0, 0], sizes = [8, 16], strides = [1, 1]} : vector<14x16xf32> to vector<8x16xf32>
      %447 = vector.extract_strided_slice %371 {offsets = [6, 0], sizes = [8, 16], strides = [1, 1]} : vector<14x16xf32> to vector<8x16xf32>
      %448 = arith.addf %446, %447 : vector<8x16xf32>
      %cst_96 = arith.constant 0.716531336 : f32
      %449 = vector.broadcast %cst_96 : f32 to vector<8x16xf32>
      %450 = arith.mulf %449, %448 : vector<8x16xf32>
      %451 = arith.addf %445, %450 : vector<8x16xf32>
      %452 = vector.extract_strided_slice %374 {offsets = [0, 0], sizes = [8, 16], strides = [1, 1]} : vector<14x16xf32> to vector<8x16xf32>
      %453 = vector.extract_strided_slice %374 {offsets = [6, 0], sizes = [8, 16], strides = [1, 1]} : vector<14x16xf32> to vector<8x16xf32>
      %454 = arith.addf %452, %453 : vector<8x16xf32>
      %cst_97 = arith.constant 0.703727424 : f32
      %455 = vector.broadcast %cst_97 : f32 to vector<8x16xf32>
      %456 = arith.mulf %455, %454 : vector<8x16xf32>
      %457 = arith.addf %451, %456 : vector<8x16xf32>
      %458 = vector.extract_strided_slice %377 {offsets = [0, 0], sizes = [8, 16], strides = [1, 1]} : vector<14x16xf32> to vector<8x16xf32>
      %459 = vector.extract_strided_slice %377 {offsets = [6, 0], sizes = [8, 16], strides = [1, 1]} : vector<14x16xf32> to vector<8x16xf32>
      %460 = arith.addf %458, %459 : vector<8x16xf32>
      %cst_98 = arith.constant 0.669906735 : f32
      %461 = vector.broadcast %cst_98 : f32 to vector<8x16xf32>
      %462 = arith.mulf %461, %460 : vector<8x16xf32>
      %463 = arith.addf %457, %462 : vector<8x16xf32>
      %464 = vector.extract_strided_slice %380 {offsets = [0, 0], sizes = [8, 16], strides = [1, 1]} : vector<14x16xf32> to vector<8x16xf32>
      %465 = vector.extract_strided_slice %380 {offsets = [6, 0], sizes = [8, 16], strides = [1, 1]} : vector<14x16xf32> to vector<8x16xf32>
      %466 = arith.addf %464, %465 : vector<8x16xf32>
      %cst_99 = arith.constant 0.624125063 : f32
      %467 = vector.broadcast %cst_99 : f32 to vector<8x16xf32>
      %468 = arith.mulf %467, %466 : vector<8x16xf32>
      %469 = arith.addf %463, %468 : vector<8x16xf32>
      %470 = arith.mulf %469, %334 : vector<8x16xf32>
      %471 = math.exp %470 : vector<8x16xf32>
      %472 = vector.shape_cast %471 : vector<8x16xf32> to vector<1x8x16xf32>
      %c0_100 = arith.constant 0 : index
      %473 = arith.index_cast %363 : i32 to index
      %c0_101 = arith.constant 0 : index
      %c0_102 = arith.constant 0 : index
      %474 = vector.load %arg3[%c0_100, %473, %c0_101, %c0_102] : memref<1x81x8x16xf32, #tpu.memory_space<vmem>>, vector<1x1x8x16xf32>
      %475 = vector.shape_cast %474 : vector<1x1x8x16xf32> to vector<1x8x16xf32>
      %476 = vector.shape_cast %472 : vector<1x8x16xf32> to vector<1x1x8x16xf32>
      tpu.vector_store %arg3[%c0_100, %473, %c0_101, %c0_102], %476 {strides = array<i32>} : memref<1x81x8x16xf32, #tpu.memory_space<vmem>>, vector<1x1x8x16xf32>,
      %477 = arith.addf %arg5, %471 : vector<8x16xf32>
      scf.yield %477 : vector<8x16xf32>
    }
    %c9_i32_69 = arith.constant 9 : i32
    %c0_i32_70 = arith.constant 0 : i32
    %c9_i32_71 = arith.constant 9 : i32
    %352 = arith.addi %c0_i32_70, %c9_i32_71 : i32
    %c1_i32_72 = arith.constant 1 : i32
    %353 = scf.for %arg4 = %c0_i32_70 to %352 step %c1_i32_72 iter_args(%arg5 = %351) -> (vector<8x16xf32>)  : i32 {
      %c72_i32 = arith.constant 72 : i32
      %363 = arith.addi %c72_i32, %arg4 : i32
      %364 = arith.addi %0, %arg4 : i32
      %c0_82 = arith.constant 0 : index
      %365 = arith.index_cast %364 : i32 to index
      %c8 = arith.constant 8 : index
      %366 = vector.load %arg2[%c0_82, %365, %c8] : memref<1x30x30xf32, #tpu.memory_space<vmem>>, vector<1x14x22xf32>
      %367 = vector.shape_cast %366 : vector<1x14x22xf32> to vector<14x22xf32>
      %368 = arith.subf %367, %21 : vector<14x22xf32>
      %369 = arith.mulf %17, %368 : vector<14x22xf32>
      %370 = arith.mulf %369, %368 : vector<14x22xf32>
      %371 = vector.extract_strided_slice %370 {offsets = [0, 3], sizes = [14, 16], strides = [1, 1]} : vector<14x22xf32> to vector<14x16xf32>
      %372 = vector.extract_strided_slice %370 {offsets = [0, 2], sizes = [14, 16], strides = [1, 1]} : vector<14x22xf32> to vector<14x16xf32>
      %373 = vector.extract_strided_slice %370 {offsets = [0, 4], sizes = [14, 16], strides = [1, 1]} : vector<14x22xf32> to vector<14x16xf32>
      %374 = arith.addf %372, %373 : vector<14x16xf32>
      %375 = vector.extract_strided_slice %370 {offsets = [0, 1], sizes = [14, 16], strides = [1, 1]} : vector<14x22xf32> to vector<14x16xf32>
      %376 = vector.extract_strided_slice %370 {offsets = [0, 5], sizes = [14, 16], strides = [1, 1]} : vector<14x22xf32> to vector<14x16xf32>
      %377 = arith.addf %375, %376 : vector<14x16xf32>
      %378 = vector.extract_strided_slice %370 {offsets = [0, 0], sizes = [14, 16], strides = [1, 1]} : vector<14x22xf32> to vector<14x16xf32>
      %379 = vector.extract_strided_slice %370 {offsets = [0, 6], sizes = [14, 16], strides = [1, 1]} : vector<14x22xf32> to vector<14x16xf32>
      %380 = arith.addf %378, %379 : vector<14x16xf32>
      %cst_83 = arith.constant 0.000000e+00 : f32
      %381 = vector.broadcast %cst_83 : f32 to vector<8x16xf32>
      %382 = vector.extract_strided_slice %371 {offsets = [3, 0], sizes = [8, 16], strides = [1, 1]} : vector<14x16xf32> to vector<8x16xf32>
      %cst_84 = arith.constant 1.000000e+00 : f32
      %383 = vector.broadcast %cst_84 : f32 to vector<8x16xf32>
      %384 = arith.mulf %383, %382 : vector<8x16xf32>
      %385 = arith.addf %381, %384 : vector<8x16xf32>
      %386 = vector.extract_strided_slice %374 {offsets = [3, 0], sizes = [8, 16], strides = [1, 1]} : vector<14x16xf32> to vector<8x16xf32>
      %cst_85 = arith.constant 0.894839346 : f32
      %387 = vector.broadcast %cst_85 : f32 to vector<8x16xf32>
      %388 = arith.mulf %387, %386 : vector<8x16xf32>
      %389 = arith.addf %385, %388 : vector<8x16xf32>
      %390 = vector.extract_strided_slice %377 {offsets = [3, 0], sizes = [8, 16], strides = [1, 1]} : vector<14x16xf32> to vector<8x16xf32>
      %cst_86 = arith.constant 0.800737381 : f32
      %391 = vector.broadcast %cst_86 : f32 to vector<8x16xf32>
      %392 = arith.mulf %391, %390 : vector<8x16xf32>
      %393 = arith.addf %389, %392 : vector<8x16xf32>
      %394 = vector.extract_strided_slice %380 {offsets = [3, 0], sizes = [8, 16], strides = [1, 1]} : vector<14x16xf32> to vector<8x16xf32>
      %cst_87 = arith.constant 0.716531336 : f32
      %395 = vector.broadcast %cst_87 : f32 to vector<8x16xf32>
      %396 = arith.mulf %395, %394 : vector<8x16xf32>
      %397 = arith.addf %393, %396 : vector<8x16xf32>
      %398 = vector.extract_strided_slice %371 {offsets = [2, 0], sizes = [8, 16], strides = [1, 1]} : vector<14x16xf32> to vector<8x16xf32>
      %399 = vector.extract_strided_slice %371 {offsets = [4, 0], sizes = [8, 16], strides = [1, 1]} : vector<14x16xf32> to vector<8x16xf32>
      %400 = arith.addf %398, %399 : vector<8x16xf32>
      %cst_88 = arith.constant 0.894839346 : f32
      %401 = vector.broadcast %cst_88 : f32 to vector<8x16xf32>
      %402 = arith.mulf %401, %400 : vector<8x16xf32>
      %403 = arith.addf %397, %402 : vector<8x16xf32>
      %404 = vector.extract_strided_slice %374 {offsets = [2, 0], sizes = [8, 16], strides = [1, 1]} : vector<14x16xf32> to vector<8x16xf32>
      %405 = vector.extract_strided_slice %374 {offsets = [4, 0], sizes = [8, 16], strides = [1, 1]} : vector<14x16xf32> to vector<8x16xf32>
      %406 = arith.addf %404, %405 : vector<8x16xf32>
      %cst_89 = arith.constant 0.854588806 : f32
      %407 = vector.broadcast %cst_89 : f32 to vector<8x16xf32>
      %408 = arith.mulf %407, %406 : vector<8x16xf32>
      %409 = arith.addf %403, %408 : vector<8x16xf32>
      %410 = vector.extract_strided_slice %377 {offsets = [2, 0], sizes = [8, 16], strides = [1, 1]} : vector<14x16xf32> to vector<8x16xf32>
      %411 = vector.extract_strided_slice %377 {offsets = [4, 0], sizes = [8, 16], strides = [1, 1]} : vector<14x16xf32> to vector<8x16xf32>
      %412 = arith.addf %410, %411 : vector<8x16xf32>
      %cst_90 = arith.constant 0.780007302 : f32
      %413 = vector.broadcast %cst_90 : f32 to vector<8x16xf32>
      %414 = arith.mulf %413, %412 : vector<8x16xf32>
      %415 = arith.addf %409, %414 : vector<8x16xf32>
      %416 = vector.extract_strided_slice %380 {offsets = [2, 0], sizes = [8, 16], strides = [1, 1]} : vector<14x16xf32> to vector<8x16xf32>
      %417 = vector.extract_strided_slice %380 {offsets = [4, 0], sizes = [8, 16], strides = [1, 1]} : vector<14x16xf32> to vector<8x16xf32>
      %418 = arith.addf %416, %417 : vector<8x16xf32>
      %cst_91 = arith.constant 0.703727424 : f32
      %419 = vector.broadcast %cst_91 : f32 to vector<8x16xf32>
      %420 = arith.mulf %419, %418 : vector<8x16xf32>
      %421 = arith.addf %415, %420 : vector<8x16xf32>
      %422 = vector.extract_strided_slice %371 {offsets = [1, 0], sizes = [8, 16], strides = [1, 1]} : vector<14x16xf32> to vector<8x16xf32>
      %423 = vector.extract_strided_slice %371 {offsets = [5, 0], sizes = [8, 16], strides = [1, 1]} : vector<14x16xf32> to vector<8x16xf32>
      %424 = arith.addf %422, %423 : vector<8x16xf32>
      %cst_92 = arith.constant 0.800737381 : f32
      %425 = vector.broadcast %cst_92 : f32 to vector<8x16xf32>
      %426 = arith.mulf %425, %424 : vector<8x16xf32>
      %427 = arith.addf %421, %426 : vector<8x16xf32>
      %428 = vector.extract_strided_slice %374 {offsets = [1, 0], sizes = [8, 16], strides = [1, 1]} : vector<14x16xf32> to vector<8x16xf32>
      %429 = vector.extract_strided_slice %374 {offsets = [5, 0], sizes = [8, 16], strides = [1, 1]} : vector<14x16xf32> to vector<8x16xf32>
      %430 = arith.addf %428, %429 : vector<8x16xf32>
      %cst_93 = arith.constant 0.780007302 : f32
      %431 = vector.broadcast %cst_93 : f32 to vector<8x16xf32>
      %432 = arith.mulf %431, %430 : vector<8x16xf32>
      %433 = arith.addf %427, %432 : vector<8x16xf32>
      %434 = vector.extract_strided_slice %377 {offsets = [1, 0], sizes = [8, 16], strides = [1, 1]} : vector<14x16xf32> to vector<8x16xf32>
      %435 = vector.extract_strided_slice %377 {offsets = [5, 0], sizes = [8, 16], strides = [1, 1]} : vector<14x16xf32> to vector<8x16xf32>
      %436 = arith.addf %434, %435 : vector<8x16xf32>
      %cst_94 = arith.constant 0.730322062 : f32
      %437 = vector.broadcast %cst_94 : f32 to vector<8x16xf32>
      %438 = arith.mulf %437, %436 : vector<8x16xf32>
      %439 = arith.addf %433, %438 : vector<8x16xf32>
      %440 = vector.extract_strided_slice %380 {offsets = [1, 0], sizes = [8, 16], strides = [1, 1]} : vector<14x16xf32> to vector<8x16xf32>
      %441 = vector.extract_strided_slice %380 {offsets = [5, 0], sizes = [8, 16], strides = [1, 1]} : vector<14x16xf32> to vector<8x16xf32>
      %442 = arith.addf %440, %441 : vector<8x16xf32>
      %cst_95 = arith.constant 0.669906735 : f32
      %443 = vector.broadcast %cst_95 : f32 to vector<8x16xf32>
      %444 = arith.mulf %443, %442 : vector<8x16xf32>
      %445 = arith.addf %439, %444 : vector<8x16xf32>
      %446 = vector.extract_strided_slice %371 {offsets = [0, 0], sizes = [8, 16], strides = [1, 1]} : vector<14x16xf32> to vector<8x16xf32>
      %447 = vector.extract_strided_slice %371 {offsets = [6, 0], sizes = [8, 16], strides = [1, 1]} : vector<14x16xf32> to vector<8x16xf32>
      %448 = arith.addf %446, %447 : vector<8x16xf32>
      %cst_96 = arith.constant 0.716531336 : f32
      %449 = vector.broadcast %cst_96 : f32 to vector<8x16xf32>
      %450 = arith.mulf %449, %448 : vector<8x16xf32>
      %451 = arith.addf %445, %450 : vector<8x16xf32>
      %452 = vector.extract_strided_slice %374 {offsets = [0, 0], sizes = [8, 16], strides = [1, 1]} : vector<14x16xf32> to vector<8x16xf32>
      %453 = vector.extract_strided_slice %374 {offsets = [6, 0], sizes = [8, 16], strides = [1, 1]} : vector<14x16xf32> to vector<8x16xf32>
      %454 = arith.addf %452, %453 : vector<8x16xf32>
      %cst_97 = arith.constant 0.703727424 : f32
      %455 = vector.broadcast %cst_97 : f32 to vector<8x16xf32>
      %456 = arith.mulf %455, %454 : vector<8x16xf32>
      %457 = arith.addf %451, %456 : vector<8x16xf32>
      %458 = vector.extract_strided_slice %377 {offsets = [0, 0], sizes = [8, 16], strides = [1, 1]} : vector<14x16xf32> to vector<8x16xf32>
      %459 = vector.extract_strided_slice %377 {offsets = [6, 0], sizes = [8, 16], strides = [1, 1]} : vector<14x16xf32> to vector<8x16xf32>
      %460 = arith.addf %458, %459 : vector<8x16xf32>
      %cst_98 = arith.constant 0.669906735 : f32
      %461 = vector.broadcast %cst_98 : f32 to vector<8x16xf32>
      %462 = arith.mulf %461, %460 : vector<8x16xf32>
      %463 = arith.addf %457, %462 : vector<8x16xf32>
      %464 = vector.extract_strided_slice %380 {offsets = [0, 0], sizes = [8, 16], strides = [1, 1]} : vector<14x16xf32> to vector<8x16xf32>
      %465 = vector.extract_strided_slice %380 {offsets = [6, 0], sizes = [8, 16], strides = [1, 1]} : vector<14x16xf32> to vector<8x16xf32>
      %466 = arith.addf %464, %465 : vector<8x16xf32>
      %cst_99 = arith.constant 0.624125063 : f32
      %467 = vector.broadcast %cst_99 : f32 to vector<8x16xf32>
      %468 = arith.mulf %467, %466 : vector<8x16xf32>
      %469 = arith.addf %463, %468 : vector<8x16xf32>
      %470 = arith.mulf %469, %334 : vector<8x16xf32>
      %471 = math.exp %470 : vector<8x16xf32>
      %472 = vector.shape_cast %471 : vector<8x16xf32> to vector<1x8x16xf32>
      %c0_100 = arith.constant 0 : index
      %473 = arith.index_cast %363 : i32 to index
      %c0_101 = arith.constant 0 : index
      %c0_102 = arith.constant 0 : index
      %474 = vector.load %arg3[%c0_100, %473, %c0_101, %c0_102] : memref<1x81x8x16xf32, #tpu.memory_space<vmem>>, vector<1x1x8x16xf32>
      %475 = vector.shape_cast %474 : vector<1x1x8x16xf32> to vector<1x8x16xf32>
      %476 = vector.shape_cast %472 : vector<1x8x16xf32> to vector<1x1x8x16xf32>
      tpu.vector_store %arg3[%c0_100, %473, %c0_101, %c0_102], %476 {strides = array<i32>} : memref<1x81x8x16xf32, #tpu.memory_space<vmem>>, vector<1x1x8x16xf32>,
      %477 = arith.addf %arg5, %471 : vector<8x16xf32>
      scf.yield %477 : vector<8x16xf32>
    }
    %c9_i32_73 = arith.constant 9 : i32
    %354 = tpu.reciprocal %353 : vector<8x16xf32> -> vector<8x16xf32>
    %c0_74 = arith.constant 0 : index
    %c0_75 = arith.constant 0 : index
    %c0_76 = arith.constant 0 : index
    %c0_77 = arith.constant 0 : index
    %355 = vector.load %arg3[%c0_74, %c0_75, %c0_76, %c0_77] : memref<1x81x8x16xf32, #tpu.memory_space<vmem>>, vector<1x81x8x16xf32>
    %356 = vector.shape_cast %355 : vector<1x81x8x16xf32> to vector<81x8x16xf32>
    %357 = vector.shape_cast %354 : vector<8x16xf32> to vector<1x8x16xf32>
    %358 = vector.broadcast %357 : vector<1x8x16xf32> to vector<81x8x16xf32>
    %359 = arith.mulf %356, %358 : vector<81x8x16xf32>
    %c0_78 = arith.constant 0 : index
    %c0_79 = arith.constant 0 : index
    %c0_80 = arith.constant 0 : index
    %c0_81 = arith.constant 0 : index
    %360 = vector.load %arg3[%c0_78, %c0_79, %c0_80, %c0_81] : memref<1x81x8x16xf32, #tpu.memory_space<vmem>>, vector<1x81x8x16xf32>
    %361 = vector.shape_cast %360 : vector<1x81x8x16xf32> to vector<81x8x16xf32>
    %362 = vector.shape_cast %359 : vector<81x8x16xf32> to vector<1x81x8x16xf32>
    tpu.vector_store %arg3[%c0_78, %c0_79, %c0_80, %c0_81], %362 {strides = array<i32>} : memref<1x81x8x16xf32, #tpu.memory_space<vmem>>, vector<1x81x8x16xf32>,
    return
  }
  func.func @transform_0(%arg0: i32, %arg1: i32) -> (i32, i32, i32) {
    %c0_i32 = arith.constant 0 : i32
    %c0_i32_0 = arith.constant 0 : i32
    %c0_i32_1 = arith.constant 0 : i32
    return %arg0, %c0_i32, %c0_i32_0 : i32, i32, i32
  }
  func.func @transform_1(%arg0: i32, %arg1: i32) -> (i32, i32, i32, i32) {
    %c0_i32 = arith.constant 0 : i32
    %c0_i32_0 = arith.constant 0 : i32
    %c0_i32_1 = arith.constant 0 : i32
    return %arg0, %c0_i32, %arg1, %c0_i32_0 : i32, i32, i32, i32
  }
}

</mosaic_0001>

<llo_original>
// kernel: tpu_custom_call.1
$region0: #{tpu_custom_call.1}
  #allocation0 [shape = 'u32[]', space=smem, size = 0x4, offset = 0x4, fixed_abs, tag = 'smem constant byte address 0x4 - core index']
  #allocation1 [shape = 'u32[144,128]{1,0:T(1,128)}', space=vmem, size = 0x12000, scoped, tag = 'internal scratch']
  %s0 = inlined_call_operand.vmem [shape: f32[2,30,30], index: 0, kind: input, shape index: {}]
  %s1 = inlined_call_operand.vmem [shape: f32[2,81,16,16], index: 1, kind: output, shape index: {}]
  %s2 = sld [smem:[#allocation0]]
  $region134: #{tpu_custom_call.1} parent=0
    _
  %s4 = ssub.s32 1, %s2
  %s5 = scalar_select 0, %s4, %s2
  $region1: #{tpu_custom_call.1} parent=0
    #allocation2 [shape = 'u8[663552]{0}', space=vmem, size = 0xa2000, scoped, tag = 'output window, operand 0']
    loop: start=0, step=1, limit=6
    $region2: #{tpu_custom_call.1} parent=1 // loop_pre_header
      _
    $region3: #{tpu_custom_call.1} parent=1 // loop_header
      %s7 = sphi 0, %s11
      %p8 = scmp.ge.s32.totalorder %s7, 6
      %s14 = sphi 0, %s26
      %s15 = sphi 0, %s22
      %s16 = sphi 0, %s14
      %s17 = sphi 0, %s15
      %s18 = sphi 0, %s16
      %s19 = sphi 0, %s17
      %s29 = sphi 0, %s31
      %s32 = sphi 0, %s29
      %s33 = sphi 0, %s32
      %s49 = sphi 0, %s33
      %s57 = sphi 0, %s59
      %s60 = sphi 0, %s57
      %s61 = sphi 0, %s60
      %s77 = sphi 0, %s61
    $region4: #{tpu_custom_call.1} parent=1 // loop_header_branch
      %10 = sbr.rel (%p8) target = $region8
    $region5: #{tpu_custom_call.1} parent=1 // loop_body
      %s12 = ssub.s32 %s7, 1
      %s13 = ssub.s32 %s7, 2
      %s20 = sadd.s32 1, %s15
      %p21 = scmp.ge.s32.totalorder %s20, 2
      %s22 = scalar_select %p21, 0, %s20
      %s23 = sadd.s32 1, %s14
      %s24 = scalar_select %p21, %s23, %s14
      %p25 = scmp.ge.s32.totalorder %s24, 2
      %s26 = scalar_select %p25, 0, %s24
      %s27 = ssub.s32 %s14, %s26
      %p28 = scmp.eq.s32.totalorder %s27, 0
      %s30 = sadd.s32 %s29, 1
      %s31 = scalar_select %p28, %s29, %s30
      %p34 = pneg %p28
      %p35 = scmp.eq.s32.totalorder %s7, 3
      %p36 = por %p34, %p35
      %p37 = scmp.ne.s32.totalorder %s29, %s32
      %p38 = scmp.eq.s32.totalorder %s7, 0
      %p39 = por %p37, %p38
      %p40 = scmp.ne.s32.totalorder %s29, %s32
      %p41 = scmp.eq.s32.totalorder %s12, 3
      %p42 = por %p40, %p41
      %p43 = scmp.ne.s32.totalorder %s32, %s33
      %p44 = scmp.eq.s32.totalorder %s12, 0
      %p45 = por %p43, %p44
      %p46 = scmp.ne.s32.totalorder %s32, %s33
      %p47 = scmp.eq.s32.totalorder %s13, 3
      %p48 = por %p46, %p47
      %p50 = scmp.ne.s32.totalorder %s33, %s49
      %p51 = scmp.eq.s32.totalorder %s13, 0
      %p52 = por %p50, %p51
      %s53 = ssub.s32 %s14, %s26
      %s54 = ssub.s32 %s15, %s22
      %s55 = sor.u32 %s53, %s54
      %p56 = scmp.eq.s32.totalorder %s55, 0
      %s58 = sadd.s32 %s57, 1
      %s59 = scalar_select %p56, %s57, %s58
      %p62 = pneg %p56
      %p63 = scmp.eq.s32.totalorder %s7, 3
      %p64 = por %p62, %p63
      %p65 = scmp.ne.s32.totalorder %s57, %s60
      %p66 = scmp.eq.s32.totalorder %s7, 0
      %p67 = por %p65, %p66
      %p68 = scmp.ne.s32.totalorder %s57, %s60
      %p69 = scmp.eq.s32.totalorder %s12, 3
      %p70 = por %p68, %p69
      %p71 = scmp.ne.s32.totalorder %s60, %s61
      %p72 = scmp.eq.s32.totalorder %s12, 0
      %p73 = por %p71, %p72
      %p74 = scmp.ne.s32.totalorder %s60, %s61
      %p75 = scmp.eq.s32.totalorder %s13, 3
      %p76 = por %p74, %p75
      %p78 = scmp.ne.s32.totalorder %s61, %s77
      %p79 = scmp.eq.s32.totalorder %s13, 0
      %p80 = por %p78, %p79
      %p81 = scmp.le.s32.totalorder 1, %s7
      %p82 = scmp.lt.s32.totalorder %s7, 5
      %p83 = pnand %p81, %p82
      %p84 = pneg %p83
      // Predicated region
      $region9: #{tpu_custom_call.1} parent=5 // pred_check
        _
      $region10: #{tpu_custom_call.1} parent=5 // pred_check_branch
        %86 = sbr.rel (%p83) target = $region12
      $region11: #{tpu_custom_call.1} parent=5 // pred_region
        %s87 = ssub.s32 %s7, 1
      $region12: #{tpu_custom_call.1} parent=5 // pred_fallthru
        _
      %p88 = scmp.lt.s32.totalorder %s7, 4
      // Predicated region
      $region13: #{tpu_custom_call.1} parent=5 // pred_check
        %p89 = pneg %p88
      $region14: #{tpu_custom_call.1} parent=5 // pred_check_branch
        %91 = sbr.rel (%p89) target = $region16
      $region15: #{tpu_custom_call.1} parent=5 // pred_region
        // Predicated region
        $region17: #{tpu_custom_call.1} parent=15 // pred_check
          %p92 = pneg %p39
        $region18: #{tpu_custom_call.1} parent=15 // pred_check_branch
          %94 = sbr.rel (%p92) target = $region20
        $region19: #{tpu_custom_call.1} parent=15 // pred_region
          %p95 = scmp.lt.s32.totalorder %s14, 1
          %s96 = scalar_select %p95, %s14, 1
          %s97 = smul.addr %s96, 4
          %s98 = smul.addr %s97, 8
          %s99 = scalar_lea.vmem %s0, %s98
        $region20: #{tpu_custom_call.1} parent=15 // pred_fallthru
          _
      $region16: #{tpu_custom_call.1} parent=5 // pred_fallthru
        _
      %p100 = scmp.le.s32.totalorder 1, %s7
      %p101 = scmp.lt.s32.totalorder %s7, 5
      %p102 = pnand %p100, %p101
      %p103 = pneg %p102
      // Predicated region
      $region21: #{tpu_custom_call.1} parent=5 // pred_check
        _
      $region22: #{tpu_custom_call.1} parent=5 // pred_check_branch
        %105 = sbr.rel (%p102) target = $region24
      $region23: #{tpu_custom_call.1} parent=5 // pred_region
        %s106 = ssub.s32 %s7, 1
        %p107 = scmp.lt.s32.totalorder %s16, 1
        %s108 = scalar_select %p107, %s16, 1
        %s109 = smul.addr %s108, 4
        %s110 = smul.addr %s109, 8
        %s111 = scalar_lea.vmem %s0, %s110
        %p112 = pneg %p45
        %p113 = pneg %p42
        %p114 = pneg %p73
        %p115 = pneg %p70
        %s116 = sand.u32 %s60, 1
        %s117 = sand.u32 %s60, 1
        %s118 = smul.addr %s117, 648
        %s119 = scalar_lea.vmem [#allocation2], %s118
        %p120 = scmp.lt.s32.totalorder %s16, 1
        %s121 = scalar_select %p120, %s16, 1
        %s122 = smul.addr %s121, 4
        %s123 = smul.addr %s122, 8
        %s124 = scalar_lea.vmem %s0, %s123
        %s125 = smul.u32 %s17, 8
        %v126 = vlaneseq
        %v127 = vshrl.u32 %v126, 7
        %v128 = vadd.s32 %v127, 8
        %v129 = vstv %s125
        %v130 = vadd.s32 %v127, %v129
        %v131 = vadd.s32 %v128, %v129
        %v132 = vlaneseq
        %v133 = vand.u32 %v132, 127
        %vm134 = vcmp.ge.s32.totalorder %v130, 3
        %vm135 = vcmp.ge.s32.totalorder %v131, 3
        %vm136 = vcmp.lt.s32.totalorder %v130, 19
        %vm137 = vcmp.lt.s32.totalorder %v131, 19
        %vm138 = vmand %vm134, %vm136
        %vm139 = vmand %vm135, %vm137
        %vm140 = vcmp.ge.s32.totalorder %v133, 3
        %vm141 = vmand %vm138, %vm140
        %vm142 = vmand %vm139, %vm140
        %vm143 = vcmp.lt.s32.totalorder %v133, 19
        %vm144 = vmand %vm141, %vm143
        %vm145 = vmand %vm142, %vm143
        %v146 = vsel %vm144, 1, 0
        %v147 = vsel %vm145, 1, 0
        %v148 = vcvt.s32.f32 %v146
        %v149 = vcvt.s32.f32 %v147
        %s150 = sadd.s32 %s125, 4
        %s151 = scalar_lea.vmem %s124, %s150
        %v152 = vld [vmem:[%s151] sm:$0xff]
        %v153 = vld [vmem:[%s151 + $0x8] sm:$0x3f]
        %s154 = sadd.s32 %s125, 3
        %s155 = scalar_lea.vmem %s124, %s154
        %v156 = vld [vmem:[%s155] sm:$0xff]
        %v157 = vld [vmem:[%s155 + $0x8] sm:$0x3f]
        %160 = vrot.lane.b32.xlu0 %v156, 125
        %v161 = vpop.permute.xlu0 %160
        %162 = vrot.lane.b32.xlu0 %v157, 125
        %v163 = vpop.permute.xlu0 %162
        %v166 = vmul.f32 %v148, %v161
        %v167 = vmul.f32 %v149, %v163
        %170 = vrot.lane.b32.xlu0 %v166, 127
        %v171 = vpop.permute.xlu0 %170
        %172 = vrot.lane.b32.xlu0 %v167, 127
        %v173 = vpop.permute.xlu0 %172
        %v176 = vadd.f32 %v166, %v171
        %v177 = vadd.f32 %v167, %v173
        %178 = vrot.lane.b32.xlu0 %v166, 126
        %v179 = vpop.permute.xlu0 %178
        %180 = vrot.lane.b32.xlu0 %v167, 126
        %v181 = vpop.permute.xlu0 %180
        %v184 = vadd.f32 %v176, %v179
        %v185 = vadd.f32 %v177, %v181
        %186 = vrot.lane.b32.xlu0 %v166, 125
        %v187 = vpop.permute.xlu0 %186
        %188 = vrot.lane.b32.xlu0 %v167, 125
        %v189 = vpop.permute.xlu0 %188
        %v192 = vadd.f32 %v184, %v187
        %v193 = vadd.f32 %v185, %v189
        %194 = vrot.lane.b32.xlu0 %v166, 124
        %v195 = vpop.permute.xlu0 %194
        %196 = vrot.lane.b32.xlu0 %v167, 124
        %v197 = vpop.permute.xlu0 %196
        %v200 = vadd.f32 %v192, %v195
        %v201 = vadd.f32 %v193, %v197
        %202 = vrot.lane.b32.xlu0 %v166, 123
        %v203 = vpop.permute.xlu0 %202
        %204 = vrot.lane.b32.xlu0 %v167, 123
        %v205 = vpop.permute.xlu0 %204
        %v208 = vadd.f32 %v200, %v203
        %v209 = vadd.f32 %v201, %v205
        %210 = vrot.lane.b32.xlu0 %v166, 122
        %v211 = vpop.permute.xlu0 %210
        %212 = vrot.lane.b32.xlu0 %v167, 122
        %v213 = vpop.permute.xlu0 %212
        %v216 = vadd.f32 %v208, %v211
        %v217 = vadd.f32 %v209, %v213
        %vm220 = vcmask 1046528
        %v221 = vrot.slane %v216, 1
        %v222 = vrot.slane %v217, 1
        %v223 = vsel %vm220, %v221, %v222
        %v225 = vadd.f32 %v216, %v223
        %vm226 = vcmask 1045504
        %v227 = vrot.slane %v216, 2
        %v228 = vrot.slane %v217, 2
        %v229 = vsel %vm226, %v227, %v228
        %v231 = vadd.f32 %v225, %v229
        %vm232 = vcmask 1044480
        %v233 = vrot.slane %v216, 3
        %v234 = vrot.slane %v217, 3
        %v235 = vsel %vm232, %v233, %v234
        %v237 = vadd.f32 %v231, %v235
        %vm238 = vcmask 1043456
        %v239 = vrot.slane %v216, 4
        %v240 = vrot.slane %v217, 4
        %v241 = vsel %vm238, %v239, %v240
        %v243 = vadd.f32 %v237, %v241
        %vm244 = vcmask 1042432
        %v245 = vrot.slane %v216, 5
        %v246 = vrot.slane %v217, 5
        %v247 = vsel %vm244, %v245, %v246
        %v249 = vadd.f32 %v243, %v247
        %vm250 = vcmask 1041408
        %v251 = vrot.slane %v216, 6
        %v252 = vrot.slane %v217, 6
        %v253 = vsel %vm250, %v251, %v252
        %v255 = vadd.f32 %v249, %v253
        %258 = vrot.lane.b32.xlu0 %v152, 125
        %v259 = vpop.permute.xlu0 %258
        %260 = vrot.lane.b32.xlu0 %v153, 125
        %v261 = vpop.permute.xlu0 %260
        %v264 = vmul.f32 %v148, %v259
        %v265 = vmul.f32 %v149, %v261
        %268 = vrot.lane.b32.xlu0 %v264, 127
        %v269 = vpop.permute.xlu0 %268
        %270 = vrot.lane.b32.xlu0 %v265, 127
        %v271 = vpop.permute.xlu0 %270
        %v274 = vadd.f32 %v264, %v269
        %v275 = vadd.f32 %v265, %v271
        %276 = vrot.lane.b32.xlu0 %v264, 126
        %v277 = vpop.permute.xlu0 %276
        %278 = vrot.lane.b32.xlu0 %v265, 126
        %v279 = vpop.permute.xlu0 %278
        %v282 = vadd.f32 %v274, %v277
        %v283 = vadd.f32 %v275, %v279
        %284 = vrot.lane.b32.xlu0 %v264, 125
        %v285 = vpop.permute.xlu0 %284
        %286 = vrot.lane.b32.xlu0 %v265, 125
        %v287 = vpop.permute.xlu0 %286
        %v290 = vadd.f32 %v282, %v285
        %v291 = vadd.f32 %v283, %v287
        %292 = vrot.lane.b32.xlu0 %v264, 124
        %v293 = vpop.permute.xlu0 %292
        %294 = vrot.lane.b32.xlu0 %v265, 124
        %v295 = vpop.permute.xlu0 %294
        %v298 = vadd.f32 %v290, %v293
        %v299 = vadd.f32 %v291, %v295
        %300 = vrot.lane.b32.xlu0 %v264, 123
        %v301 = vpop.permute.xlu0 %300
        %302 = vrot.lane.b32.xlu0 %v265, 123
        %v303 = vpop.permute.xlu0 %302
        %v306 = vadd.f32 %v298, %v301
        %v307 = vadd.f32 %v299, %v303
        %308 = vrot.lane.b32.xlu0 %v264, 122
        %v309 = vpop.permute.xlu0 %308
        %310 = vrot.lane.b32.xlu0 %v265, 122
        %v311 = vpop.permute.xlu0 %310
        %v314 = vadd.f32 %v306, %v309
        %v315 = vadd.f32 %v307, %v311
        %v318 = vrot.slane %v314, 1
        %v319 = vrot.slane %v315, 1
        %v320 = vsel %vm220, %v318, %v319
        %v322 = vadd.f32 %v314, %v320
        %v323 = vrot.slane %v314, 2
        %v324 = vrot.slane %v315, 2
        %v325 = vsel %vm226, %v323, %v324
        %v327 = vadd.f32 %v322, %v325
        %v328 = vrot.slane %v314, 3
        %v329 = vrot.slane %v315, 3
        %v330 = vsel %vm232, %v328, %v329
        %v332 = vadd.f32 %v327, %v330
        %v333 = vrot.slane %v314, 4
        %v334 = vrot.slane %v315, 4
        %v335 = vsel %vm238, %v333, %v334
        %v337 = vadd.f32 %v332, %v335
        %v338 = vrot.slane %v314, 5
        %v339 = vrot.slane %v315, 5
        %v340 = vsel %vm244, %v338, %v339
        %v342 = vadd.f32 %v337, %v340
        %v343 = vrot.slane %v314, 6
        %v344 = vrot.slane %v315, 6
        %v345 = vsel %vm250, %v343, %v344
        %v347 = vadd.f32 %v342, %v345
        %s348 = sadd.s32 %s125, 5
        %s349 = scalar_lea.vmem %s124, %s348
        %v350 = vld [vmem:[%s349] sm:$0xff]
        %v351 = vld [vmem:[%s349 + $0x8] sm:$0x3f]
        %354 = vrot.lane.b32.xlu0 %v350, 125
        %v355 = vpop.permute.xlu0 %354
        %356 = vrot.lane.b32.xlu0 %v351, 125
        %v357 = vpop.permute.xlu0 %356
        %v360 = vmul.f32 %v148, %v355
        %v361 = vmul.f32 %v149, %v357
        %364 = vrot.lane.b32.xlu0 %v360, 127
        %v365 = vpop.permute.xlu0 %364
        %366 = vrot.lane.b32.xlu0 %v361, 127
        %v367 = vpop.permute.xlu0 %366
        %v370 = vadd.f32 %v360, %v365
        %v371 = vadd.f32 %v361, %v367
        %372 = vrot.lane.b32.xlu0 %v360, 126
        %v373 = vpop.permute.xlu0 %372
        %374 = vrot.lane.b32.xlu0 %v361, 126
        %v375 = vpop.permute.xlu0 %374
        %v378 = vadd.f32 %v370, %v373
        %v379 = vadd.f32 %v371, %v375
        %380 = vrot.lane.b32.xlu0 %v360, 125
        %v381 = vpop.permute.xlu0 %380
        %382 = vrot.lane.b32.xlu0 %v361, 125
        %v383 = vpop.permute.xlu0 %382
        %v386 = vadd.f32 %v378, %v381
        %v387 = vadd.f32 %v379, %v383
        %388 = vrot.lane.b32.xlu0 %v360, 124
        %v389 = vpop.permute.xlu0 %388
        %390 = vrot.lane.b32.xlu0 %v361, 124
        %v391 = vpop.permute.xlu0 %390
        %v394 = vadd.f32 %v386, %v389
        %v395 = vadd.f32 %v387, %v391
        %396 = vrot.lane.b32.xlu0 %v360, 123
        %v397 = vpop.permute.xlu0 %396
        %398 = vrot.lane.b32.xlu0 %v361, 123
        %v399 = vpop.permute.xlu0 %398
        %v402 = vadd.f32 %v394, %v397
        %v403 = vadd.f32 %v395, %v399
        %404 = vrot.lane.b32.xlu0 %v360, 122
        %v405 = vpop.permute.xlu0 %404
        %406 = vrot.lane.b32.xlu0 %v361, 122
        %v407 = vpop.permute.xlu0 %406
        %v410 = vadd.f32 %v402, %v405
        %v411 = vadd.f32 %v403, %v407
        %v414 = vrot.slane %v410, 1
        %v415 = vrot.slane %v411, 1
        %v416 = vsel %vm220, %v414, %v415
        %v418 = vadd.f32 %v410, %v416
        %v419 = vrot.slane %v410, 2
        %v420 = vrot.slane %v411, 2
        %v421 = vsel %vm226, %v419, %v420
        %v423 = vadd.f32 %v418, %v421
        %v424 = vrot.slane %v410, 3
        %v425 = vrot.slane %v411, 3
        %v426 = vsel %vm232, %v424, %v425
        %v428 = vadd.f32 %v423, %v426
        %v429 = vrot.slane %v410, 4
        %v430 = vrot.slane %v411, 4
        %v431 = vsel %vm238, %v429, %v430
        %v433 = vadd.f32 %v428, %v431
        %v434 = vrot.slane %v410, 5
        %v435 = vrot.slane %v411, 5
        %v436 = vsel %vm244, %v434, %v435
        %v438 = vadd.f32 %v433, %v436
        %v439 = vrot.slane %v410, 6
        %v440 = vrot.slane %v411, 6
        %v441 = vsel %vm250, %v439, %v440
        %v443 = vadd.f32 %v438, %v441
        %444 = vrot.lane.b32.xlu0 %v156, 124
        %v445 = vpop.permute.xlu0 %444
        %446 = vrot.lane.b32.xlu0 %v157, 124
        %v447 = vpop.permute.xlu0 %446
        %v450 = vmul.f32 %v148, %v445
        %v451 = vmul.f32 %v149, %v447
        %454 = vrot.lane.b32.xlu0 %v450, 127
        %v455 = vpop.permute.xlu0 %454
        %456 = vrot.lane.b32.xlu0 %v451, 127
        %v457 = vpop.permute.xlu0 %456
        %v460 = vadd.f32 %v450, %v455
        %v461 = vadd.f32 %v451, %v457
        %462 = vrot.lane.b32.xlu0 %v450, 126
        %v463 = vpop.permute.xlu0 %462
        %464 = vrot.lane.b32.xlu0 %v451, 126
        %v465 = vpop.permute.xlu0 %464
        %v468 = vadd.f32 %v460, %v463
        %v469 = vadd.f32 %v461, %v465
        %470 = vrot.lane.b32.xlu0 %v450, 125
        %v471 = vpop.permute.xlu0 %470
        %472 = vrot.lane.b32.xlu0 %v451, 125
        %v473 = vpop.permute.xlu0 %472
        %v476 = vadd.f32 %v468, %v471
        %v477 = vadd.f32 %v469, %v473
        %478 = vrot.lane.b32.xlu0 %v450, 124
        %v479 = vpop.permute.xlu0 %478
        %480 = vrot.lane.b32.xlu0 %v451, 124
        %v481 = vpop.permute.xlu0 %480
        %v484 = vadd.f32 %v476, %v479
        %v485 = vadd.f32 %v477, %v481
        %486 = vrot.lane.b32.xlu0 %v450, 123
        %v487 = vpop.permute.xlu0 %486
        %488 = vrot.lane.b32.xlu0 %v451, 123
        %v489 = vpop.permute.xlu0 %488
        %v492 = vadd.f32 %v484, %v487
        %v493 = vadd.f32 %v485, %v489
        %494 = vrot.lane.b32.xlu0 %v450, 122
        %v495 = vpop.permute.xlu0 %494
        %496 = vrot.lane.b32.xlu0 %v451, 122
        %v497 = vpop.permute.xlu0 %496
        %v500 = vadd.f32 %v492, %v495
        %v501 = vadd.f32 %v493, %v497
        %v504 = vrot.slane %v500, 1
        %v505 = vrot.slane %v501, 1
        %v506 = vsel %vm220, %v504, %v505
        %v508 = vadd.f32 %v500, %v506
        %v509 = vrot.slane %v500, 2
        %v510 = vrot.slane %v501, 2
        %v511 = vsel %vm226, %v509, %v510
        %v513 = vadd.f32 %v508, %v511
        %v514 = vrot.slane %v500, 3
        %v515 = vrot.slane %v501, 3
        %v516 = vsel %vm232, %v514, %v515
        %v518 = vadd.f32 %v513, %v516
        %v519 = vrot.slane %v500, 4
        %v520 = vrot.slane %v501, 4
        %v521 = vsel %vm238, %v519, %v520
        %v523 = vadd.f32 %v518, %v521
        %v524 = vrot.slane %v500, 5
        %v525 = vrot.slane %v501, 5
        %v526 = vsel %vm244, %v524, %v525
        %v528 = vadd.f32 %v523, %v526
        %v529 = vrot.slane %v500, 6
        %v530 = vrot.slane %v501, 6
        %v531 = vsel %vm250, %v529, %v530
        %v533 = vadd.f32 %v528, %v531
        %534 = vrot.lane.b32.xlu0 %v152, 124
        %v535 = vpop.permute.xlu0 %534
        %536 = vrot.lane.b32.xlu0 %v153, 124
        %v537 = vpop.permute.xlu0 %536
        %v540 = vmul.f32 %v148, %v535
        %v541 = vmul.f32 %v149, %v537
        %544 = vrot.lane.b32.xlu0 %v540, 127
        %v545 = vpop.permute.xlu0 %544
        %546 = vrot.lane.b32.xlu0 %v541, 127
        %v547 = vpop.permute.xlu0 %546
        %v550 = vadd.f32 %v540, %v545
        %v551 = vadd.f32 %v541, %v547
        %552 = vrot.lane.b32.xlu0 %v540, 126
        %v553 = vpop.permute.xlu0 %552
        %554 = vrot.lane.b32.xlu0 %v541, 126
        %v555 = vpop.permute.xlu0 %554
        %v558 = vadd.f32 %v550, %v553
        %v559 = vadd.f32 %v551, %v555
        %560 = vrot.lane.b32.xlu0 %v540, 125
        %v561 = vpop.permute.xlu0 %560
        %562 = vrot.lane.b32.xlu0 %v541, 125
        %v563 = vpop.permute.xlu0 %562
        %v566 = vadd.f32 %v558, %v561
        %v567 = vadd.f32 %v559, %v563
        %568 = vrot.lane.b32.xlu0 %v540, 124
        %v569 = vpop.permute.xlu0 %568
        %570 = vrot.lane.b32.xlu0 %v541, 124
        %v571 = vpop.permute.xlu0 %570
        %v574 = vadd.f32 %v566, %v569
        %v575 = vadd.f32 %v567, %v571
        %576 = vrot.lane.b32.xlu0 %v540, 123
        %v577 = vpop.permute.xlu0 %576
        %578 = vrot.lane.b32.xlu0 %v541, 123
        %v579 = vpop.permute.xlu0 %578
        %v582 = vadd.f32 %v574, %v577
        %v583 = vadd.f32 %v575, %v579
        %584 = vrot.lane.b32.xlu0 %v540, 122
        %v585 = vpop.permute.xlu0 %584
        %586 = vrot.lane.b32.xlu0 %v541, 122
        %v587 = vpop.permute.xlu0 %586
        %v590 = vadd.f32 %v582, %v585
        %v591 = vadd.f32 %v583, %v587
        %v594 = vrot.slane %v590, 1
        %v595 = vrot.slane %v591, 1
        %v596 = vsel %vm220, %v594, %v595
        %v598 = vadd.f32 %v590, %v596
        %v599 = vrot.slane %v590, 2
        %v600 = vrot.slane %v591, 2
        %v601 = vsel %vm226, %v599, %v600
        %v603 = vadd.f32 %v598, %v601
        %v604 = vrot.slane %v590, 3
        %v605 = vrot.slane %v591, 3
        %v606 = vsel %vm232, %v604, %v605
        %v608 = vadd.f32 %v603, %v606
        %v609 = vrot.slane %v590, 4
        %v610 = vrot.slane %v591, 4
        %v611 = vsel %vm238, %v609, %v610
        %v613 = vadd.f32 %v608, %v611
        %v614 = vrot.slane %v590, 5
        %v615 = vrot.slane %v591, 5
        %v616 = vsel %vm244, %v614, %v615
        %v618 = vadd.f32 %v613, %v616
        %v619 = vrot.slane %v590, 6
        %v620 = vrot.slane %v591, 6
        %v621 = vsel %vm250, %v619, %v620
        %v623 = vadd.f32 %v618, %v621
        %624 = vrot.lane.b32.xlu0 %v350, 124
        %v625 = vpop.permute.xlu0 %624
        %626 = vrot.lane.b32.xlu0 %v351, 124
        %v627 = vpop.permute.xlu0 %626
        %v630 = vmul.f32 %v148, %v625
        %v631 = vmul.f32 %v149, %v627
        %634 = vrot.lane.b32.xlu0 %v630, 127
        %v635 = vpop.permute.xlu0 %634
        %636 = vrot.lane.b32.xlu0 %v631, 127
        %v637 = vpop.permute.xlu0 %636
        %v640 = vadd.f32 %v630, %v635
        %v641 = vadd.f32 %v631, %v637
        %642 = vrot.lane.b32.xlu0 %v630, 126
        %v643 = vpop.permute.xlu0 %642
        %644 = vrot.lane.b32.xlu0 %v631, 126
        %v645 = vpop.permute.xlu0 %644
        %v648 = vadd.f32 %v640, %v643
        %v649 = vadd.f32 %v641, %v645
        %650 = vrot.lane.b32.xlu0 %v630, 125
        %v651 = vpop.permute.xlu0 %650
        %652 = vrot.lane.b32.xlu0 %v631, 125
        %v653 = vpop.permute.xlu0 %652
        %v656 = vadd.f32 %v648, %v651
        %v657 = vadd.f32 %v649, %v653
        %658 = vrot.lane.b32.xlu0 %v630, 124
        %v659 = vpop.permute.xlu0 %658
        %660 = vrot.lane.b32.xlu0 %v631, 124
        %v661 = vpop.permute.xlu0 %660
        %v664 = vadd.f32 %v656, %v659
        %v665 = vadd.f32 %v657, %v661
        %666 = vrot.lane.b32.xlu0 %v630, 123
        %v667 = vpop.permute.xlu0 %666
        %668 = vrot.lane.b32.xlu0 %v631, 123
        %v669 = vpop.permute.xlu0 %668
        %v672 = vadd.f32 %v664, %v667
        %v673 = vadd.f32 %v665, %v669
        %674 = vrot.lane.b32.xlu0 %v630, 122
        %v675 = vpop.permute.xlu0 %674
        %676 = vrot.lane.b32.xlu0 %v631, 122
        %v677 = vpop.permute.xlu0 %676
        %v680 = vadd.f32 %v672, %v675
        %v681 = vadd.f32 %v673, %v677
        %v684 = vrot.slane %v680, 1
        %v685 = vrot.slane %v681, 1
        %v686 = vsel %vm220, %v684, %v685
        %v688 = vadd.f32 %v680, %v686
        %v689 = vrot.slane %v680, 2
        %v690 = vrot.slane %v681, 2
        %v691 = vsel %vm226, %v689, %v690
        %v693 = vadd.f32 %v688, %v691
        %v694 = vrot.slane %v680, 3
        %v695 = vrot.slane %v681, 3
        %v696 = vsel %vm232, %v694, %v695
        %v698 = vadd.f32 %v693, %v696
        %v699 = vrot.slane %v680, 4
        %v700 = vrot.slane %v681, 4
        %v701 = vsel %vm238, %v699, %v700
        %v703 = vadd.f32 %v698, %v701
        %v704 = vrot.slane %v680, 5
        %v705 = vrot.slane %v681, 5
        %v706 = vsel %vm244, %v704, %v705
        %v708 = vadd.f32 %v703, %v706
        %v709 = vrot.slane %v680, 6
        %v710 = vrot.slane %v681, 6
        %v711 = vsel %vm250, %v709, %v710
        %v713 = vadd.f32 %v708, %v711
        %714 = vrot.lane.b32.xlu0 %v156, 123
        %v715 = vpop.permute.xlu0 %714
        %716 = vrot.lane.b32.xlu0 %v157, 123
        %v717 = vpop.permute.xlu0 %716
        %v720 = vmul.f32 %v148, %v715
        %v721 = vmul.f32 %v149, %v717
        %724 = vrot.lane.b32.xlu0 %v720, 127
        %v725 = vpop.permute.xlu0 %724
        %726 = vrot.lane.b32.xlu0 %v721, 127
        %v727 = vpop.permute.xlu0 %726
        %v730 = vadd.f32 %v720, %v725
        %v731 = vadd.f32 %v721, %v727
        %732 = vrot.lane.b32.xlu0 %v720, 126
        %v733 = vpop.permute.xlu0 %732
        %734 = vrot.lane.b32.xlu0 %v721, 126
        %v735 = vpop.permute.xlu0 %734
        %v738 = vadd.f32 %v730, %v733
        %v739 = vadd.f32 %v731, %v735
        %740 = vrot.lane.b32.xlu0 %v720, 125
        %v741 = vpop.permute.xlu0 %740
        %742 = vrot.lane.b32.xlu0 %v721, 125
        %v743 = vpop.permute.xlu0 %742
        %v746 = vadd.f32 %v738, %v741
        %v747 = vadd.f32 %v739, %v743
        %748 = vrot.lane.b32.xlu0 %v720, 124
        %v749 = vpop.permute.xlu0 %748
        %750 = vrot.lane.b32.xlu0 %v721, 124
        %v751 = vpop.permute.xlu0 %750
        %v754 = vadd.f32 %v746, %v749
        %v755 = vadd.f32 %v747, %v751
        %756 = vrot.lane.b32.xlu0 %v720, 123
        %v757 = vpop.permute.xlu0 %756
        %758 = vrot.lane.b32.xlu0 %v721, 123
        %v759 = vpop.permute.xlu0 %758
        %v762 = vadd.f32 %v754, %v757
        %v763 = vadd.f32 %v755, %v759
        %764 = vrot.lane.b32.xlu0 %v720, 122
        %v765 = vpop.permute.xlu0 %764
        %766 = vrot.lane.b32.xlu0 %v721, 122
        %v767 = vpop.permute.xlu0 %766
        %v770 = vadd.f32 %v762, %v765
        %v771 = vadd.f32 %v763, %v767
        %v774 = vrot.slane %v770, 1
        %v775 = vrot.slane %v771, 1
        %v776 = vsel %vm220, %v774, %v775
        %v778 = vadd.f32 %v770, %v776
        %v779 = vrot.slane %v770, 2
        %v780 = vrot.slane %v771, 2
        %v781 = vsel %vm226, %v779, %v780
        %v783 = vadd.f32 %v778, %v781
        %v784 = vrot.slane %v770, 3
        %v785 = vrot.slane %v771, 3
        %v786 = vsel %vm232, %v784, %v785
        %v788 = vadd.f32 %v783, %v786
        %v789 = vrot.slane %v770, 4
        %v790 = vrot.slane %v771, 4
        %v791 = vsel %vm238, %v789, %v790
        %v793 = vadd.f32 %v788, %v791
        %v794 = vrot.slane %v770, 5
        %v795 = vrot.slane %v771, 5
        %v796 = vsel %vm244, %v794, %v795
        %v798 = vadd.f32 %v793, %v796
        %v799 = vrot.slane %v770, 6
        %v800 = vrot.slane %v771, 6
        %v801 = vsel %vm250, %v799, %v800
        %v803 = vadd.f32 %v798, %v801
        %804 = vrot.lane.b32.xlu0 %v152, 123
        %v805 = vpop.permute.xlu0 %804
        %806 = vrot.lane.b32.xlu0 %v153, 123
        %v807 = vpop.permute.xlu0 %806
        %v810 = vmul.f32 %v148, %v805
        %v811 = vmul.f32 %v149, %v807
        %814 = vrot.lane.b32.xlu0 %v810, 127
        %v815 = vpop.permute.xlu0 %814
        %816 = vrot.lane.b32.xlu0 %v811, 127
        %v817 = vpop.permute.xlu0 %816
        %v820 = vadd.f32 %v810, %v815
        %v821 = vadd.f32 %v811, %v817
        %822 = vrot.lane.b32.xlu0 %v810, 126
        %v823 = vpop.permute.xlu0 %822
        %824 = vrot.lane.b32.xlu0 %v811, 126
        %v825 = vpop.permute.xlu0 %824
        %v828 = vadd.f32 %v820, %v823
        %v829 = vadd.f32 %v821, %v825
        %830 = vrot.lane.b32.xlu0 %v810, 125
        %v831 = vpop.permute.xlu0 %830
        %832 = vrot.lane.b32.xlu0 %v811, 125
        %v833 = vpop.permute.xlu0 %832
        %v836 = vadd.f32 %v828, %v831
        %v837 = vadd.f32 %v829, %v833
        %838 = vrot.lane.b32.xlu0 %v810, 124
        %v839 = vpop.permute.xlu0 %838
        %840 = vrot.lane.b32.xlu0 %v811, 124
        %v841 = vpop.permute.xlu0 %840
        %v844 = vadd.f32 %v836, %v839
        %v845 = vadd.f32 %v837, %v841
        %846 = vrot.lane.b32.xlu0 %v810, 123
        %v847 = vpop.permute.xlu0 %846
        %848 = vrot.lane.b32.xlu0 %v811, 123
        %v849 = vpop.permute.xlu0 %848
        %v852 = vadd.f32 %v844, %v847
        %v853 = vadd.f32 %v845, %v849
        %854 = vrot.lane.b32.xlu0 %v810, 122
        %v855 = vpop.permute.xlu0 %854
        %856 = vrot.lane.b32.xlu0 %v811, 122
        %v857 = vpop.permute.xlu0 %856
        %v860 = vadd.f32 %v852, %v855
        %v861 = vadd.f32 %v853, %v857
        %v864 = vrot.slane %v860, 1
        %v865 = vrot.slane %v861, 1
        %v866 = vsel %vm220, %v864, %v865
        %v868 = vadd.f32 %v860, %v866
        %v869 = vrot.slane %v860, 2
        %v870 = vrot.slane %v861, 2
        %v871 = vsel %vm226, %v869, %v870
        %v873 = vadd.f32 %v868, %v871
        %v874 = vrot.slane %v860, 3
        %v875 = vrot.slane %v861, 3
        %v876 = vsel %vm232, %v874, %v875
        %v878 = vadd.f32 %v873, %v876
        %v879 = vrot.slane %v860, 4
        %v880 = vrot.slane %v861, 4
        %v881 = vsel %vm238, %v879, %v880
        %v883 = vadd.f32 %v878, %v881
        %v884 = vrot.slane %v860, 5
        %v885 = vrot.slane %v861, 5
        %v886 = vsel %vm244, %v884, %v885
        %v888 = vadd.f32 %v883, %v886
        %v889 = vrot.slane %v860, 6
        %v890 = vrot.slane %v861, 6
        %v891 = vsel %vm250, %v889, %v890
        %v893 = vadd.f32 %v888, %v891
        %894 = vrot.lane.b32.xlu0 %v350, 123
        %v895 = vpop.permute.xlu0 %894
        %896 = vrot.lane.b32.xlu0 %v351, 123
        %v897 = vpop.permute.xlu0 %896
        %v900 = vmul.f32 %v148, %v895
        %v901 = vmul.f32 %v149, %v897
        %904 = vrot.lane.b32.xlu0 %v900, 127
        %v905 = vpop.permute.xlu0 %904
        %906 = vrot.lane.b32.xlu0 %v901, 127
        %v907 = vpop.permute.xlu0 %906
        %v910 = vadd.f32 %v900, %v905
        %v911 = vadd.f32 %v901, %v907
        %912 = vrot.lane.b32.xlu0 %v900, 126
        %v913 = vpop.permute.xlu0 %912
        %914 = vrot.lane.b32.xlu0 %v901, 126
        %v915 = vpop.permute.xlu0 %914
        %v918 = vadd.f32 %v910, %v913
        %v919 = vadd.f32 %v911, %v915
        %920 = vrot.lane.b32.xlu0 %v900, 125
        %v921 = vpop.permute.xlu0 %920
        %922 = vrot.lane.b32.xlu0 %v901, 125
        %v923 = vpop.permute.xlu0 %922
        %v926 = vadd.f32 %v918, %v921
        %v927 = vadd.f32 %v919, %v923
        %928 = vrot.lane.b32.xlu0 %v900, 124
        %v929 = vpop.permute.xlu0 %928
        %930 = vrot.lane.b32.xlu0 %v901, 124
        %v931 = vpop.permute.xlu0 %930
        %v934 = vadd.f32 %v926, %v929
        %v935 = vadd.f32 %v927, %v931
        %936 = vrot.lane.b32.xlu0 %v900, 123
        %v937 = vpop.permute.xlu0 %936
        %938 = vrot.lane.b32.xlu0 %v901, 123
        %v939 = vpop.permute.xlu0 %938
        %v942 = vadd.f32 %v934, %v937
        %v943 = vadd.f32 %v935, %v939
        %944 = vrot.lane.b32.xlu0 %v900, 122
        %v945 = vpop.permute.xlu0 %944
        %946 = vrot.lane.b32.xlu0 %v901, 122
        %v947 = vpop.permute.xlu0 %946
        %v950 = vadd.f32 %v942, %v945
        %v951 = vadd.f32 %v943, %v947
        %v954 = vrot.slane %v950, 1
        %v955 = vrot.slane %v951, 1
        %v956 = vsel %vm220, %v954, %v955
        %v958 = vadd.f32 %v950, %v956
        %v959 = vrot.slane %v950, 2
        %v960 = vrot.slane %v951, 2
        %v961 = vsel %vm226, %v959, %v960
        %v963 = vadd.f32 %v958, %v961
        %v964 = vrot.slane %v950, 3
        %v965 = vrot.slane %v951, 3
        %v966 = vsel %vm232, %v964, %v965
        %v968 = vadd.f32 %v963, %v966
        %v969 = vrot.slane %v950, 4
        %v970 = vrot.slane %v951, 4
        %v971 = vsel %vm238, %v969, %v970
        %v973 = vadd.f32 %v968, %v971
        %v974 = vrot.slane %v950, 5
        %v975 = vrot.slane %v951, 5
        %v976 = vsel %vm244, %v974, %v975
        %v978 = vadd.f32 %v973, %v976
        %v979 = vrot.slane %v950, 6
        %v980 = vrot.slane %v951, 6
        %v981 = vsel %vm250, %v979, %v980
        %v983 = vadd.f32 %v978, %v981
        %vm984 = vcmask 130048
        %v985 = vsel %vm984, %v255, 0.0
        %v986 = vsel %vm984, %v347, 0.0
        %v987 = vadd.f32 %v985, %v986
        %v988 = vsel %vm984, %v443, 0.0
        %v989 = vadd.f32 %v987, %v988
        %v990 = vsel %vm984, %v533, 0.0
        %v991 = vadd.f32 %v989, %v990
        %v992 = vsel %vm984, %v623, 0.0
        %v993 = vadd.f32 %v991, %v992
        %v994 = vsel %vm984, %v713, 0.0
        %v995 = vadd.f32 %v993, %v994
        %v996 = vsel %vm984, %v803, 0.0
        %v997 = vadd.f32 %v995, %v996
        %v998 = vsel %vm984, %v893, 0.0
        %v999 = vadd.f32 %v997, %v998
        %v1000 = vsel %vm984, %v983, 0.0
        %v1001 = vadd.f32 %v999, %v1000
        %v1002 = vrcp.pop 9.0
        %v1003 = vmul.f32 %v1001, %v1002
        %v1004 = vsub.f32 %v255, %v1003
        %v1005 = vsub.f32 %v347, %v1003
        %v1006 = vsub.f32 %v443, %v1003
        %v1007 = vsub.f32 %v533, %v1003
        %v1008 = vsub.f32 %v623, %v1003
        %v1009 = vsub.f32 %v713, %v1003
        %v1010 = vsub.f32 %v803, %v1003
        %v1011 = vsub.f32 %v893, %v1003
        %v1012 = vsub.f32 %v983, %v1003
        %v1013 = vmul.f32 %v1004, %v1004
        %v1014 = vmul.f32 %v1005, %v1005
        %v1015 = vmul.f32 %v1006, %v1006
        %v1016 = vmul.f32 %v1007, %v1007
        %v1017 = vmul.f32 %v1008, %v1008
        %v1018 = vmul.f32 %v1009, %v1009
        %v1019 = vmul.f32 %v1010, %v1010
        %v1020 = vmul.f32 %v1011, %v1011
        %v1021 = vmul.f32 %v1012, %v1012
        %v1022 = vsel %vm984, %v1013, 0.0
        %v1023 = vsel %vm984, %v1014, 0.0
        %v1024 = vadd.f32 %v1022, %v1023
        %v1025 = vsel %vm984, %v1015, 0.0
        %v1026 = vadd.f32 %v1024, %v1025
        %v1027 = vsel %vm984, %v1016, 0.0
        %v1028 = vadd.f32 %v1026, %v1027
        %v1029 = vsel %vm984, %v1017, 0.0
        %v1030 = vadd.f32 %v1028, %v1029
        %v1031 = vsel %vm984, %v1018, 0.0
        %v1032 = vadd.f32 %v1030, %v1031
        %v1033 = vsel %vm984, %v1019, 0.0
        %v1034 = vadd.f32 %v1032, %v1033
        %v1035 = vsel %vm984, %v1020, 0.0
        %v1036 = vadd.f32 %v1034, %v1035
        %v1037 = vsel %vm984, %v1021, 0.0
        %v1038 = vadd.f32 %v1036, %v1037
        %v1039 = vrcp.pop 8.0
        %v1040 = vmul.f32 %v1038, %v1039
        %v1041 = vadd.f32 %v1040, 1e-08
        %v1042 = vrcp.pop %v1041
        %v1043 = vsub.f32 0.0, %v1042
        loop: start=0, step=1, limit=9
        $region25: #{tpu_custom_call.1} parent=23 // loop_pre_header
          _
        $region26: #{tpu_custom_call.1} parent=23 // loop_header
          %s1045 = sphi 0, %s1049
          %p1046 = scmp.ge.s32.totalorder %s1045, 9
          %v1050 = vphi 0.0, %v1376
          %v1051 = vphi 0.0, %v1377
        $region27: #{tpu_custom_call.1} parent=23 // loop_header_branch
          %1048 = sbr.rel (%p1046) target = $region31
        $region28: #{tpu_custom_call.1} parent=23 // loop_body
          %s1052 = sadd.s32 %s125, %s1045
          %s1053 = scalar_lea.vmem %s124, %s1052
          %v1054 = vld [vmem:[%s1053] sm:$0xff]
          %v1055 = vld [vmem:[%s1053 + $0x8] sm:$0x3f]
          %v1056 = vsub.f32 %v1054, %v535
          %v1057 = vsub.f32 %v1055, %v537
          %v1058 = vmul.f32 %v148, %v1056
          %v1059 = vmul.f32 %v149, %v1057
          %v1060 = vmul.f32 %v1058, %v1056
          %v1061 = vmul.f32 %v1059, %v1057
          %1064 = vrot.lane.b32.xlu0 %v1060, 126
          %v1065 = vpop.permute.xlu0 %1064
          %1066 = vrot.lane.b32.xlu0 %v1061, 126
          %v1067 = vpop.permute.xlu0 %1066
          %v1070 = vadd.f32 %v1060, %v1065
          %v1071 = vadd.f32 %v1061, %v1067
          %1072 = vrot.lane.b32.xlu0 %v1060, 124
          %v1073 = vpop.permute.xlu0 %1072
          %1074 = vrot.lane.b32.xlu0 %v1061, 124
          %v1075 = vpop.permute.xlu0 %1074
          %v1078 = vadd.f32 %v1060, %v1073
          %v1079 = vadd.f32 %v1061, %v1075
          %1080 = vrot.lane.b32.xlu0 %v1060, 122
          %v1081 = vpop.permute.xlu0 %1080
          %1082 = vrot.lane.b32.xlu0 %v1061, 122
          %v1083 = vpop.permute.xlu0 %1082
          %v1086 = vadd.f32 %v1060, %v1081
          %v1087 = vadd.f32 %v1061, %v1083
          %v1088 = vadd.f32 %v1060, 0.0
          %v1089 = vadd.f32 %v1061, 0.0
          %v1090 = vmul.f32 %v1070, 0.89483935
          %v1091 = vmul.f32 %v1071, 0.89483935
          %1094 = vrot.lane.b32.xlu0 %v1090, 1
          %v1095 = vpop.permute.xlu0 %1094
          %1096 = vrot.lane.b32.xlu0 %v1091, 1
          %v1097 = vpop.permute.xlu0 %1096
          %v1100 = vadd.f32 %v1088, %v1095
          %v1101 = vadd.f32 %v1089, %v1097
          %v1102 = vmul.f32 %v1078, 0.8007374
          %v1103 = vmul.f32 %v1079, 0.8007374
          %1106 = vrot.lane.b32.xlu0 %v1102, 2
          %v1107 = vpop.permute.xlu0 %1106
          %1108 = vrot.lane.b32.xlu0 %v1103, 2
          %v1109 = vpop.permute.xlu0 %1108
          %v1112 = vadd.f32 %v1100, %v1107
          %v1113 = vadd.f32 %v1101, %v1109
          %v1114 = vmul.f32 %v1086, 0.71653134
          %v1115 = vmul.f32 %v1087, 0.71653134
          %1118 = vrot.lane.b32.xlu0 %v1114, 3
          %v1119 = vpop.permute.xlu0 %1118
          %1120 = vrot.lane.b32.xlu0 %v1115, 3
          %v1121 = vpop.permute.xlu0 %1120
          %v1124 = vadd.f32 %v1112, %v1119
          %v1125 = vadd.f32 %v1113, %v1121
          %v1126 = vrot.slane %v1060, 2
          %v1127 = vrot.slane %v1061, 2
          %v1128 = vsel %vm226, %v1126, %v1127
          %v1131 = vadd.f32 %v1060, %v1128
          %v1132 = vadd.f32 %v1061, %v1127
          %v1133 = vmul.f32 %v1131, 0.89483935
          %v1134 = vmul.f32 %v1132, 0.89483935
          %vm1137 = vcmask 1040384
          %v1138 = vrot.slane %v1133, 7
          %v1139 = vrot.slane %v1134, 7
          %v1140 = vsel %vm1137, %v1138, %v1139
          %v1143 = vadd.f32 %v1124, %v1138
          %v1144 = vadd.f32 %v1125, %v1140
          %v1147 = vrot.slane %v1070, 2
          %v1148 = vrot.slane %v1071, 2
          %v1149 = vsel %vm226, %v1147, %v1148
          %v1152 = vadd.f32 %v1070, %v1149
          %v1153 = vadd.f32 %v1071, %v1148
          %v1154 = vmul.f32 %v1152, 0.8545888
          %v1155 = vmul.f32 %v1153, 0.8545888
          %v1158 = vrot.slane %v1154, 7
          %v1159 = vrot.slane %v1155, 7
          %v1160 = vsel %vm1137, %v1158, %v1159
          %1161 = vrot.lane.b32.xlu0 %v1158, 1
          %v1162 = vpop.permute.xlu0 %1161
          %1163 = vrot.lane.b32.xlu0 %v1160, 1
          %v1164 = vpop.permute.xlu0 %1163
          %v1167 = vadd.f32 %v1143, %v1162
          %v1168 = vadd.f32 %v1144, %v1164
          %v1171 = vrot.slane %v1078, 2
          %v1172 = vrot.slane %v1079, 2
          %v1173 = vsel %vm226, %v1171, %v1172
          %v1176 = vadd.f32 %v1078, %v1173
          %v1177 = vadd.f32 %v1079, %v1172
          %v1178 = vmul.f32 %v1176, 0.7800073
          %v1179 = vmul.f32 %v1177, 0.7800073
          %v1182 = vrot.slane %v1178, 7
          %v1183 = vrot.slane %v1179, 7
          %v1184 = vsel %vm1137, %v1182, %v1183
          %1185 = vrot.lane.b32.xlu0 %v1182, 2
          %v1186 = vpop.permute.xlu0 %1185
          %1187 = vrot.lane.b32.xlu0 %v1184, 2
          %v1188 = vpop.permute.xlu0 %1187
          %v1191 = vadd.f32 %v1167, %v1186
          %v1192 = vadd.f32 %v1168, %v1188
          %v1195 = vrot.slane %v1086, 2
          %v1196 = vrot.slane %v1087, 2
          %v1197 = vsel %vm226, %v1195, %v1196
          %v1200 = vadd.f32 %v1086, %v1197
          %v1201 = vadd.f32 %v1087, %v1196
          %v1202 = vmul.f32 %v1200, 0.7037274
          %v1203 = vmul.f32 %v1201, 0.7037274
          %v1206 = vrot.slane %v1202, 7
          %v1207 = vrot.slane %v1203, 7
          %v1208 = vsel %vm1137, %v1206, %v1207
          %1209 = vrot.lane.b32.xlu0 %v1206, 3
          %v1210 = vpop.permute.xlu0 %1209
          %1211 = vrot.lane.b32.xlu0 %v1208, 3
          %v1212 = vpop.permute.xlu0 %1211
          %v1215 = vadd.f32 %v1191, %v1210
          %v1216 = vadd.f32 %v1192, %v1212
          %v1217 = vrot.slane %v1060, 4
          %v1218 = vrot.slane %v1061, 4
          %v1219 = vsel %vm238, %v1217, %v1218
          %v1222 = vadd.f32 %v1060, %v1219
          %v1223 = vadd.f32 %v1061, %v1218
          %v1224 = vmul.f32 %v1222, 0.8007374
          %v1225 = vmul.f32 %v1223, 0.8007374
          %v1228 = vrot.slane %v1224, 6
          %v1229 = vrot.slane %v1225, 6
          %v1230 = vsel %vm250, %v1228, %v1229
          %v1233 = vadd.f32 %v1215, %v1228
          %v1234 = vadd.f32 %v1216, %v1230
          %v1235 = vrot.slane %v1070, 4
          %v1236 = vrot.slane %v1071, 4
          %v1237 = vsel %vm238, %v1235, %v1236
          %v1240 = vadd.f32 %v1070, %v1237
          %v1241 = vadd.f32 %v1071, %v1236
          %v1242 = vmul.f32 %v1240, 0.7800073
          %v1243 = vmul.f32 %v1241, 0.7800073
          %v1246 = vrot.slane %v1242, 6
          %v1247 = vrot.slane %v1243, 6
          %v1248 = vsel %vm250, %v1246, %v1247
          %1249 = vrot.lane.b32.xlu0 %v1246, 1
          %v1250 = vpop.permute.xlu0 %1249
          %1251 = vrot.lane.b32.xlu0 %v1248, 1
          %v1252 = vpop.permute.xlu0 %1251
          %v1255 = vadd.f32 %v1233, %v1250
          %v1256 = vadd.f32 %v1234, %v1252
          %v1257 = vrot.slane %v1078, 4
          %v1258 = vrot.slane %v1079, 4
          %v1259 = vsel %vm238, %v1257, %v1258
          %v1262 = vadd.f32 %v1078, %v1259
          %v1263 = vadd.f32 %v1079, %v1258
          %v1264 = vmul.f32 %v1262, 0.73032206
          %v1265 = vmul.f32 %v1263, 0.73032206
          %v1268 = vrot.slane %v1264, 6
          %v1269 = vrot.slane %v1265, 6
          %v1270 = vsel %vm250, %v1268, %v1269
          %1271 = vrot.lane.b32.xlu0 %v1268, 2
          %v1272 = vpop.permute.xlu0 %1271
          %1273 = vrot.lane.b32.xlu0 %v1270, 2
          %v1274 = vpop.permute.xlu0 %1273
          %v1277 = vadd.f32 %v1255, %v1272
          %v1278 = vadd.f32 %v1256, %v1274
          %v1279 = vrot.slane %v1086, 4
          %v1280 = vrot.slane %v1087, 4
          %v1281 = vsel %vm238, %v1279, %v1280
          %v1284 = vadd.f32 %v1086, %v1281
          %v1285 = vadd.f32 %v1087, %v1280
          %v1286 = vmul.f32 %v1284, 0.66990674
          %v1287 = vmul.f32 %v1285, 0.66990674
          %v1290 = vrot.slane %v1286, 6
          %v1291 = vrot.slane %v1287, 6
          %v1292 = vsel %vm250, %v1290, %v1291
          %1293 = vrot.lane.b32.xlu0 %v1290, 3
          %v1294 = vpop.permute.xlu0 %1293
          %1295 = vrot.lane.b32.xlu0 %v1292, 3
          %v1296 = vpop.permute.xlu0 %1295
          %v1299 = vadd.f32 %v1277, %v1294
          %v1300 = vadd.f32 %v1278, %v1296
          %v1301 = vrot.slane %v1060, 6
          %v1302 = vrot.slane %v1061, 6
          %v1303 = vsel %vm250, %v1301, %v1302
          %v1305 = vadd.f32 %v1060, %v1303
          %v1306 = vmul.f32 %v1305, 0.71653134
          %v1308 = vrot.slane %v1306, 5
          %v1310 = vadd.f32 %v1299, %v1308
          %v1311 = vadd.f32 %v1300, %v1308
          %v1312 = vrot.slane %v1070, 6
          %v1313 = vrot.slane %v1071, 6
          %v1314 = vsel %vm250, %v1312, %v1313
          %v1316 = vadd.f32 %v1070, %v1314
          %v1317 = vmul.f32 %v1316, 0.7037274
          %v1319 = vrot.slane %v1317, 5
          %1320 = vrot.lane.b32.xlu0 %v1319, 1
          %v1321 = vpop.permute.xlu0 %1320
          %v1323 = vadd.f32 %v1310, %v1321
          %v1324 = vadd.f32 %v1311, %v1321
          %v1325 = vrot.slane %v1078, 6
          %v1326 = vrot.slane %v1079, 6
          %v1327 = vsel %vm250, %v1325, %v1326
          %v1329 = vadd.f32 %v1078, %v1327
          %v1330 = vmul.f32 %v1329, 0.66990674
          %v1332 = vrot.slane %v1330, 5
          %1333 = vrot.lane.b32.xlu0 %v1332, 2
          %v1334 = vpop.permute.xlu0 %1333
          %v1336 = vadd.f32 %v1323, %v1334
          %v1337 = vadd.f32 %v1324, %v1334
          %v1338 = vrot.slane %v1086, 6
          %v1339 = vrot.slane %v1087, 6
          %v1340 = vsel %vm250, %v1338, %v1339
          %v1342 = vadd.f32 %v1086, %v1340
          %v1343 = vmul.f32 %v1342, 0.62412506
          %v1345 = vrot.slane %v1343, 5
          %1346 = vrot.lane.b32.xlu0 %v1345, 3
          %v1347 = vpop.permute.xlu0 %1346
          %v1349 = vadd.f32 %v1336, %v1347
          %v1350 = vadd.f32 %v1337, %v1347
          %v1352 = vrot.slane %v1043, 5
          %1353 = vrot.lane.b32.xlu0 %v1352, 3
          %v1354 = vpop.permute.xlu0 %1353
          %v1356 = vmul.f32 %v1349, %v1354
          %v1357 = vmul.f32 %v1350, %v1354
          %v1358 = vmul.f32 %v1356, 1.442695
          %v1359 = vpow.pop %v1358
          %v1360 = vmul.f32 %v1357, 1.442695
          %v1361 = vpow.pop %v1360
          %1364 = vrot.lane.b32.xlu0 %v1359, 125
          %v1365 = vpop.permute.xlu0 %1364
          %1366 = vrot.lane.b32.xlu0 %v1361, 125
          %v1367 = vpop.permute.xlu0 %1366
          %s1370 = smul.u32 %s1045, 8
          %s1371 = scalar_lea.vmem %s119, %s1370 [#allocation2]
          %vm1372 = vcmask 130051
          %1373 = vst.msk [vmem:[%s1371 - $0x3] sm:$0xf8] %vm1372, %v1365
          %vm1374 = vcmask 124928
          %1375 = vst.msk [vmem:[%s1371 + $0x5] sm:$0x7] %vm1374, %v1367
          %v1376 = vadd.f32 %v1050, %v1359
          %v1377 = vadd.f32 %v1051, %v1361
        $region29: #{tpu_custom_call.1} parent=23 // loop_footer
          %s1049 = sadd.s32 1, %s1045
        $region30: #{tpu_custom_call.1} parent=23 // loop_footer_branch
          %1044 = sbr.rel target = $region26
        $region31: #{tpu_custom_call.1} parent=23 // loop_exit
          _
        loop: start=0, step=1, limit=9
        $region32: #{tpu_custom_call.1} parent=23 // loop_pre_header
          _
        $region33: #{tpu_custom_call.1} parent=23 // loop_header
          %s1379 = sphi 0, %s1383
          %p1380 = scmp.ge.s32.totalorder %s1379, 9
          %v1384 = vphi %v1050, %v1719
          %v1385 = vphi %v1051, %v1720
        $region34: #{tpu_custom_call.1} parent=23 // loop_header_branch
          %1382 = sbr.rel (%p1380) target = $region38
        $region35: #{tpu_custom_call.1} parent=23 // loop_body
          %s1386 = sadd.s32 %s1379, 9
          %s1387 = sadd.s32 %s125, %s1379
          %s1388 = scalar_lea.vmem %s124, %s1387
          %v1389 = vld [vmem:[%s1388] sm:$0xff]
          %v1390 = vld [vmem:[%s1388 + $0x8] sm:$0x3f]
          %v1391 = vsub.f32 %v1389, %v259
          %v1392 = vsub.f32 %v1390, %v261
          %1395 = vrot.lane.b32.xlu0 %v1391, 127
          %v1396 = vpop.permute.xlu0 %1395
          %1397 = vrot.lane.b32.xlu0 %v1392, 127
          %v1398 = vpop.permute.xlu0 %1397
          %v1401 = vmul.f32 %v148, %v1396
          %v1402 = vmul.f32 %v149, %v1398
          %v1403 = vmul.f32 %v1401, %v1396
          %v1404 = vmul.f32 %v1402, %v1398
          %1407 = vrot.lane.b32.xlu0 %v1403, 126
          %v1408 = vpop.permute.xlu0 %1407
          %1409 = vrot.lane.b32.xlu0 %v1404, 126
          %v1410 = vpop.permute.xlu0 %1409
          %v1413 = vadd.f32 %v1403, %v1408
          %v1414 = vadd.f32 %v1404, %v1410
          %1415 = vrot.lane.b32.xlu0 %v1403, 124
          %v1416 = vpop.permute.xlu0 %1415
          %1417 = vrot.lane.b32.xlu0 %v1404, 124
          %v1418 = vpop.permute.xlu0 %1417
          %v1421 = vadd.f32 %v1403, %v1416
          %v1422 = vadd.f32 %v1404, %v1418
          %1423 = vrot.lane.b32.xlu0 %v1403, 122
          %v1424 = vpop.permute.xlu0 %1423
          %1425 = vrot.lane.b32.xlu0 %v1404, 122
          %v1426 = vpop.permute.xlu0 %1425
          %v1429 = vadd.f32 %v1403, %v1424
          %v1430 = vadd.f32 %v1404, %v1426
          %v1431 = vadd.f32 %v1403, 0.0
          %v1432 = vadd.f32 %v1404, 0.0
          %v1433 = vmul.f32 %v1413, 0.89483935
          %v1434 = vmul.f32 %v1414, 0.89483935
          %1437 = vrot.lane.b32.xlu0 %v1433, 1
          %v1438 = vpop.permute.xlu0 %1437
          %1439 = vrot.lane.b32.xlu0 %v1434, 1
          %v1440 = vpop.permute.xlu0 %1439
          %v1443 = vadd.f32 %v1431, %v1438
          %v1444 = vadd.f32 %v1432, %v1440
          %v1445 = vmul.f32 %v1421, 0.8007374
          %v1446 = vmul.f32 %v1422, 0.8007374
          %1449 = vrot.lane.b32.xlu0 %v1445, 2
          %v1450 = vpop.permute.xlu0 %1449
          %1451 = vrot.lane.b32.xlu0 %v1446, 2
          %v1452 = vpop.permute.xlu0 %1451
          %v1455 = vadd.f32 %v1443, %v1450
          %v1456 = vadd.f32 %v1444, %v1452
          %v1457 = vmul.f32 %v1429, 0.71653134
          %v1458 = vmul.f32 %v1430, 0.71653134
          %1461 = vrot.lane.b32.xlu0 %v1457, 3
          %v1462 = vpop.permute.xlu0 %1461
          %1463 = vrot.lane.b32.xlu0 %v1458, 3
          %v1464 = vpop.permute.xlu0 %1463
          %v1467 = vadd.f32 %v1455, %v1462
          %v1468 = vadd.f32 %v1456, %v1464
          %v1469 = vrot.slane %v1403, 2
          %v1470 = vrot.slane %v1404, 2
          %v1471 = vsel %vm226, %v1469, %v1470
          %v1474 = vadd.f32 %v1403, %v1471
          %v1475 = vadd.f32 %v1404, %v1470
          %v1476 = vmul.f32 %v1474, 0.89483935
          %v1477 = vmul.f32 %v1475, 0.89483935
          %vm1480 = vcmask 1040384
          %v1481 = vrot.slane %v1476, 7
          %v1482 = vrot.slane %v1477, 7
          %v1483 = vsel %vm1480, %v1481, %v1482
          %v1486 = vadd.f32 %v1467, %v1481
          %v1487 = vadd.f32 %v1468, %v1483
          %v1490 = vrot.slane %v1413, 2
          %v1491 = vrot.slane %v1414, 2
          %v1492 = vsel %vm226, %v1490, %v1491
          %v1495 = vadd.f32 %v1413, %v1492
          %v1496 = vadd.f32 %v1414, %v1491
          %v1497 = vmul.f32 %v1495, 0.8545888
          %v1498 = vmul.f32 %v1496, 0.8545888
          %v1501 = vrot.slane %v1497, 7
          %v1502 = vrot.slane %v1498, 7
          %v1503 = vsel %vm1480, %v1501, %v1502
          %1504 = vrot.lane.b32.xlu0 %v1501, 1
          %v1505 = vpop.permute.xlu0 %1504
          %1506 = vrot.lane.b32.xlu0 %v1503, 1
          %v1507 = vpop.permute.xlu0 %1506
          %v1510 = vadd.f32 %v1486, %v1505
          %v1511 = vadd.f32 %v1487, %v1507
          %v1514 = vrot.slane %v1421, 2
          %v1515 = vrot.slane %v1422, 2
          %v1516 = vsel %vm226, %v1514, %v1515
          %v1519 = vadd.f32 %v1421, %v1516
          %v1520 = vadd.f32 %v1422, %v1515
          %v1521 = vmul.f32 %v1519, 0.7800073
          %v1522 = vmul.f32 %v1520, 0.7800073
          %v1525 = vrot.slane %v1521, 7
          %v1526 = vrot.slane %v1522, 7
          %v1527 = vsel %vm1480, %v1525, %v1526
          %1528 = vrot.lane.b32.xlu0 %v1525, 2
          %v1529 = vpop.permute.xlu0 %1528
          %1530 = vrot.lane.b32.xlu0 %v1527, 2
          %v1531 = vpop.permute.xlu0 %1530
          %v1534 = vadd.f32 %v1510, %v1529
          %v1535 = vadd.f32 %v1511, %v1531
          %v1538 = vrot.slane %v1429, 2
          %v1539 = vrot.slane %v1430, 2
          %v1540 = vsel %vm226, %v1538, %v1539
          %v1543 = vadd.f32 %v1429, %v1540
          %v1544 = vadd.f32 %v1430, %v1539
          %v1545 = vmul.f32 %v1543, 0.7037274
          %v1546 = vmul.f32 %v1544, 0.7037274
          %v1549 = vrot.slane %v1545, 7
          %v1550 = vrot.slane %v1546, 7
          %v1551 = vsel %vm1480, %v1549, %v1550
          %1552 = vrot.lane.b32.xlu0 %v1549, 3
          %v1553 = vpop.permute.xlu0 %1552
          %1554 = vrot.lane.b32.xlu0 %v1551, 3
          %v1555 = vpop.permute.xlu0 %1554
          %v1558 = vadd.f32 %v1534, %v1553
          %v1559 = vadd.f32 %v1535, %v1555
          %v1560 = vrot.slane %v1403, 4
          %v1561 = vrot.slane %v1404, 4
          %v1562 = vsel %vm238, %v1560, %v1561
          %v1565 = vadd.f32 %v1403, %v1562
          %v1566 = vadd.f32 %v1404, %v1561
          %v1567 = vmul.f32 %v1565, 0.8007374
          %v1568 = vmul.f32 %v1566, 0.8007374
          %v1571 = vrot.slane %v1567, 6
          %v1572 = vrot.slane %v1568, 6
          %v1573 = vsel %vm250, %v1571, %v1572
          %v1576 = vadd.f32 %v1558, %v1571
          %v1577 = vadd.f32 %v1559, %v1573
          %v1578 = vrot.slane %v1413, 4
          %v1579 = vrot.slane %v1414, 4
          %v1580 = vsel %vm238, %v1578, %v1579
          %v1583 = vadd.f32 %v1413, %v1580
          %v1584 = vadd.f32 %v1414, %v1579
          %v1585 = vmul.f32 %v1583, 0.7800073
          %v1586 = vmul.f32 %v1584, 0.7800073
          %v1589 = vrot.slane %v1585, 6
          %v1590 = vrot.slane %v1586, 6
          %v1591 = vsel %vm250, %v1589, %v1590
          %1592 = vrot.lane.b32.xlu0 %v1589, 1
          %v1593 = vpop.permute.xlu0 %1592
          %1594 = vrot.lane.b32.xlu0 %v1591, 1
          %v1595 = vpop.permute.xlu0 %1594
          %v1598 = vadd.f32 %v1576, %v1593
          %v1599 = vadd.f32 %v1577, %v1595
          %v1600 = vrot.slane %v1421, 4
          %v1601 = vrot.slane %v1422, 4
          %v1602 = vsel %vm238, %v1600, %v1601
          %v1605 = vadd.f32 %v1421, %v1602
          %v1606 = vadd.f32 %v1422, %v1601
          %v1607 = vmul.f32 %v1605, 0.73032206
          %v1608 = vmul.f32 %v1606, 0.73032206
          %v1611 = vrot.slane %v1607, 6
          %v1612 = vrot.slane %v1608, 6
          %v1613 = vsel %vm250, %v1611, %v1612
          %1614 = vrot.lane.b32.xlu0 %v1611, 2
          %v1615 = vpop.permute.xlu0 %1614
          %1616 = vrot.lane.b32.xlu0 %v1613, 2
          %v1617 = vpop.permute.xlu0 %1616
          %v1620 = vadd.f32 %v1598, %v1615
          %v1621 = vadd.f32 %v1599, %v1617
          %v1622 = vrot.slane %v1429, 4
          %v1623 = vrot.slane %v1430, 4
          %v1624 = vsel %vm238, %v1622, %v1623
          %v1627 = vadd.f32 %v1429, %v1624
          %v1628 = vadd.f32 %v1430, %v1623
          %v1629 = vmul.f32 %v1627, 0.66990674
          %v1630 = vmul.f32 %v1628, 0.66990674
          %v1633 = vrot.slane %v1629, 6
          %v1634 = vrot.slane %v1630, 6
          %v1635 = vsel %vm250, %v1633, %v1634
          %1636 = vrot.lane.b32.xlu0 %v1633, 3
          %v1637 = vpop.permute.xlu0 %1636
          %1638 = vrot.lane.b32.xlu0 %v1635, 3
          %v1639 = vpop.permute.xlu0 %1638
          %v1642 = vadd.f32 %v1620, %v1637
          %v1643 = vadd.f32 %v1621, %v1639
          %v1644 = vrot.slane %v1403, 6
          %v1645 = vrot.slane %v1404, 6
          %v1646 = vsel %vm250, %v1644, %v1645
          %v1648 = vadd.f32 %v1403, %v1646
          %v1649 = vmul.f32 %v1648, 0.71653134
          %v1651 = vrot.slane %v1649, 5
          %v1653 = vadd.f32 %v1642, %v1651
          %v1654 = vadd.f32 %v1643, %v1651
          %v1655 = vrot.slane %v1413, 6
          %v1656 = vrot.slane %v1414, 6
          %v1657 = vsel %vm250, %v1655, %v1656
          %v1659 = vadd.f32 %v1413, %v1657
          %v1660 = vmul.f32 %v1659, 0.7037274
          %v1662 = vrot.slane %v1660, 5
          %1663 = vrot.lane.b32.xlu0 %v1662, 1
          %v1664 = vpop.permute.xlu0 %1663
          %v1666 = vadd.f32 %v1653, %v1664
          %v1667 = vadd.f32 %v1654, %v1664
          %v1668 = vrot.slane %v1421, 6
          %v1669 = vrot.slane %v1422, 6
          %v1670 = vsel %vm250, %v1668, %v1669
          %v1672 = vadd.f32 %v1421, %v1670
          %v1673 = vmul.f32 %v1672, 0.66990674
          %v1675 = vrot.slane %v1673, 5
          %1676 = vrot.lane.b32.xlu0 %v1675, 2
          %v1677 = vpop.permute.xlu0 %1676
          %v1679 = vadd.f32 %v1666, %v1677
          %v1680 = vadd.f32 %v1667, %v1677
          %v1681 = vrot.slane %v1429, 6
          %v1682 = vrot.slane %v1430, 6
          %v1683 = vsel %vm250, %v1681, %v1682
          %v1685 = vadd.f32 %v1429, %v1683
          %v1686 = vmul.f32 %v1685, 0.62412506
          %v1688 = vrot.slane %v1686, 5
          %1689 = vrot.lane.b32.xlu0 %v1688, 3
          %v1690 = vpop.permute.xlu0 %1689
          %v1692 = vadd.f32 %v1679, %v1690
          %v1693 = vadd.f32 %v1680, %v1690
          %v1695 = vrot.slane %v1043, 5
          %1696 = vrot.lane.b32.xlu0 %v1695, 3
          %v1697 = vpop.permute.xlu0 %1696
          %v1699 = vmul.f32 %v1692, %v1697
          %v1700 = vmul.f32 %v1693, %v1697
          %v1701 = vmul.f32 %v1699, 1.442695
          %v1702 = vpow.pop %v1701
          %v1703 = vmul.f32 %v1700, 1.442695
          %v1704 = vpow.pop %v1703
          %1707 = vrot.lane.b32.xlu0 %v1702, 125
          %v1708 = vpop.permute.xlu0 %1707
          %1709 = vrot.lane.b32.xlu0 %v1704, 125
          %v1710 = vpop.permute.xlu0 %1709
          %s1713 = smul.u32 %s1386, 8
          %s1714 = scalar_lea.vmem %s119, %s1713 [#allocation2]
          %vm1715 = vcmask 130051
          %1716 = vst.msk [vmem:[%s1714 - $0x3] sm:$0xf8] %vm1715, %v1708
          %vm1717 = vcmask 124928
          %1718 = vst.msk [vmem:[%s1714 + $0x5] sm:$0x7] %vm1717, %v1710
          %v1719 = vadd.f32 %v1384, %v1702
          %v1720 = vadd.f32 %v1385, %v1704
        $region36: #{tpu_custom_call.1} parent=23 // loop_footer
          %s1383 = sadd.s32 1, %s1379
        $region37: #{tpu_custom_call.1} parent=23 // loop_footer_branch
          %1378 = sbr.rel target = $region33
        $region38: #{tpu_custom_call.1} parent=23 // loop_exit
          _
        loop: start=0, step=1, limit=9
        $region39: #{tpu_custom_call.1} parent=23 // loop_pre_header
          _
        $region40: #{tpu_custom_call.1} parent=23 // loop_header
          %s1722 = sphi 0, %s1726
          %p1723 = scmp.ge.s32.totalorder %s1722, 9
          %v1727 = vphi %v1384, %v2068
          %v1728 = vphi %v1385, %v2069
        $region41: #{tpu_custom_call.1} parent=23 // loop_header_branch
          %1725 = sbr.rel (%p1723) target = $region45
        $region42: #{tpu_custom_call.1} parent=23 // loop_body
          %s1729 = sadd.s32 %s1722, 18
          %s1730 = sadd.s32 %s125, %s1722
          %s1731 = scalar_lea.vmem %s124, %s1730
          %v1732 = vld [vmem:[%s1731] sm:$0xff]
          %v1733 = vld [vmem:[%s1731 + $0x8] sm:$0x3f]
          %1734 = vrot.lane.b32.xlu0 %v152, 126
          %v1735 = vpop.permute.xlu0 %1734
          %1736 = vrot.lane.b32.xlu0 %v153, 126
          %v1737 = vpop.permute.xlu0 %1736
          %v1740 = vsub.f32 %v1732, %v1735
          %v1741 = vsub.f32 %v1733, %v1737
          %1744 = vrot.lane.b32.xlu0 %v1740, 126
          %v1745 = vpop.permute.xlu0 %1744
          %1746 = vrot.lane.b32.xlu0 %v1741, 126
          %v1747 = vpop.permute.xlu0 %1746
          %v1750 = vmul.f32 %v148, %v1745
          %v1751 = vmul.f32 %v149, %v1747
          %v1752 = vmul.f32 %v1750, %v1745
          %v1753 = vmul.f32 %v1751, %v1747
          %1756 = vrot.lane.b32.xlu0 %v1752, 126
          %v1757 = vpop.permute.xlu0 %1756
          %1758 = vrot.lane.b32.xlu0 %v1753, 126
          %v1759 = vpop.permute.xlu0 %1758
          %v1762 = vadd.f32 %v1752, %v1757
          %v1763 = vadd.f32 %v1753, %v1759
          %1764 = vrot.lane.b32.xlu0 %v1752, 124
          %v1765 = vpop.permute.xlu0 %1764
          %1766 = vrot.lane.b32.xlu0 %v1753, 124
          %v1767 = vpop.permute.xlu0 %1766
          %v1770 = vadd.f32 %v1752, %v1765
          %v1771 = vadd.f32 %v1753, %v1767
          %1772 = vrot.lane.b32.xlu0 %v1752, 122
          %v1773 = vpop.permute.xlu0 %1772
          %1774 = vrot.lane.b32.xlu0 %v1753, 122
          %v1775 = vpop.permute.xlu0 %1774
          %v1778 = vadd.f32 %v1752, %v1773
          %v1779 = vadd.f32 %v1753, %v1775
          %v1780 = vadd.f32 %v1752, 0.0
          %v1781 = vadd.f32 %v1753, 0.0
          %v1782 = vmul.f32 %v1762, 0.89483935
          %v1783 = vmul.f32 %v1763, 0.89483935
          %1786 = vrot.lane.b32.xlu0 %v1782, 1
          %v1787 = vpop.permute.xlu0 %1786
          %1788 = vrot.lane.b32.xlu0 %v1783, 1
          %v1789 = vpop.permute.xlu0 %1788
          %v1792 = vadd.f32 %v1780, %v1787
          %v1793 = vadd.f32 %v1781, %v1789
          %v1794 = vmul.f32 %v1770, 0.8007374
          %v1795 = vmul.f32 %v1771, 0.8007374
          %1798 = vrot.lane.b32.xlu0 %v1794, 2
          %v1799 = vpop.permute.xlu0 %1798
          %1800 = vrot.lane.b32.xlu0 %v1795, 2
          %v1801 = vpop.permute.xlu0 %1800
          %v1804 = vadd.f32 %v1792, %v1799
          %v1805 = vadd.f32 %v1793, %v1801
          %v1806 = vmul.f32 %v1778, 0.71653134
          %v1807 = vmul.f32 %v1779, 0.71653134
          %1810 = vrot.lane.b32.xlu0 %v1806, 3
          %v1811 = vpop.permute.xlu0 %1810
          %1812 = vrot.lane.b32.xlu0 %v1807, 3
          %v1813 = vpop.permute.xlu0 %1812
          %v1816 = vadd.f32 %v1804, %v1811
          %v1817 = vadd.f32 %v1805, %v1813
          %v1818 = vrot.slane %v1752, 2
          %v1819 = vrot.slane %v1753, 2
          %v1820 = vsel %vm226, %v1818, %v1819
          %v1823 = vadd.f32 %v1752, %v1820
          %v1824 = vadd.f32 %v1753, %v1819
          %v1825 = vmul.f32 %v1823, 0.89483935
          %v1826 = vmul.f32 %v1824, 0.89483935
          %vm1829 = vcmask 1040384
          %v1830 = vrot.slane %v1825, 7
          %v1831 = vrot.slane %v1826, 7
          %v1832 = vsel %vm1829, %v1830, %v1831
          %v1835 = vadd.f32 %v1816, %v1830
          %v1836 = vadd.f32 %v1817, %v1832
          %v1839 = vrot.slane %v1762, 2
          %v1840 = vrot.slane %v1763, 2
          %v1841 = vsel %vm226, %v1839, %v1840
          %v1844 = vadd.f32 %v1762, %v1841
          %v1845 = vadd.f32 %v1763, %v1840
          %v1846 = vmul.f32 %v1844, 0.8545888
          %v1847 = vmul.f32 %v1845, 0.8545888
          %v1850 = vrot.slane %v1846, 7
          %v1851 = vrot.slane %v1847, 7
          %v1852 = vsel %vm1829, %v1850, %v1851
          %1853 = vrot.lane.b32.xlu0 %v1850, 1
          %v1854 = vpop.permute.xlu0 %1853
          %1855 = vrot.lane.b32.xlu0 %v1852, 1
          %v1856 = vpop.permute.xlu0 %1855
          %v1859 = vadd.f32 %v1835, %v1854
          %v1860 = vadd.f32 %v1836, %v1856
          %v1863 = vrot.slane %v1770, 2
          %v1864 = vrot.slane %v1771, 2
          %v1865 = vsel %vm226, %v1863, %v1864
          %v1868 = vadd.f32 %v1770, %v1865
          %v1869 = vadd.f32 %v1771, %v1864
          %v1870 = vmul.f32 %v1868, 0.7800073
          %v1871 = vmul.f32 %v1869, 0.7800073
          %v1874 = vrot.slane %v1870, 7
          %v1875 = vrot.slane %v1871, 7
          %v1876 = vsel %vm1829, %v1874, %v1875
          %1877 = vrot.lane.b32.xlu0 %v1874, 2
          %v1878 = vpop.permute.xlu0 %1877
          %1879 = vrot.lane.b32.xlu0 %v1876, 2
          %v1880 = vpop.permute.xlu0 %1879
          %v1883 = vadd.f32 %v1859, %v1878
          %v1884 = vadd.f32 %v1860, %v1880
          %v1887 = vrot.slane %v1778, 2
          %v1888 = vrot.slane %v1779, 2
          %v1889 = vsel %vm226, %v1887, %v1888
          %v1892 = vadd.f32 %v1778, %v1889
          %v1893 = vadd.f32 %v1779, %v1888
          %v1894 = vmul.f32 %v1892, 0.7037274
          %v1895 = vmul.f32 %v1893, 0.7037274
          %v1898 = vrot.slane %v1894, 7
          %v1899 = vrot.slane %v1895, 7
          %v1900 = vsel %vm1829, %v1898, %v1899
          %1901 = vrot.lane.b32.xlu0 %v1898, 3
          %v1902 = vpop.permute.xlu0 %1901
          %1903 = vrot.lane.b32.xlu0 %v1900, 3
          %v1904 = vpop.permute.xlu0 %1903
          %v1907 = vadd.f32 %v1883, %v1902
          %v1908 = vadd.f32 %v1884, %v1904
          %v1909 = vrot.slane %v1752, 4
          %v1910 = vrot.slane %v1753, 4
          %v1911 = vsel %vm238, %v1909, %v1910
          %v1914 = vadd.f32 %v1752, %v1911
          %v1915 = vadd.f32 %v1753, %v1910
          %v1916 = vmul.f32 %v1914, 0.8007374
          %v1917 = vmul.f32 %v1915, 0.8007374
          %v1920 = vrot.slane %v1916, 6
          %v1921 = vrot.slane %v1917, 6
          %v1922 = vsel %vm250, %v1920, %v1921
          %v1925 = vadd.f32 %v1907, %v1920
          %v1926 = vadd.f32 %v1908, %v1922
          %v1927 = vrot.slane %v1762, 4
          %v1928 = vrot.slane %v1763, 4
          %v1929 = vsel %vm238, %v1927, %v1928
          %v1932 = vadd.f32 %v1762, %v1929
          %v1933 = vadd.f32 %v1763, %v1928
          %v1934 = vmul.f32 %v1932, 0.7800073
          %v1935 = vmul.f32 %v1933, 0.7800073
          %v1938 = vrot.slane %v1934, 6
          %v1939 = vrot.slane %v1935, 6
          %v1940 = vsel %vm250, %v1938, %v1939
          %1941 = vrot.lane.b32.xlu0 %v1938, 1
          %v1942 = vpop.permute.xlu0 %1941
          %1943 = vrot.lane.b32.xlu0 %v1940, 1
          %v1944 = vpop.permute.xlu0 %1943
          %v1947 = vadd.f32 %v1925, %v1942
          %v1948 = vadd.f32 %v1926, %v1944
          %v1949 = vrot.slane %v1770, 4
          %v1950 = vrot.slane %v1771, 4
          %v1951 = vsel %vm238, %v1949, %v1950
          %v1954 = vadd.f32 %v1770, %v1951
          %v1955 = vadd.f32 %v1771, %v1950
          %v1956 = vmul.f32 %v1954, 0.73032206
          %v1957 = vmul.f32 %v1955, 0.73032206
          %v1960 = vrot.slane %v1956, 6
          %v1961 = vrot.slane %v1957, 6
          %v1962 = vsel %vm250, %v1960, %v1961
          %1963 = vrot.lane.b32.xlu0 %v1960, 2
          %v1964 = vpop.permute.xlu0 %1963
          %1965 = vrot.lane.b32.xlu0 %v1962, 2
          %v1966 = vpop.permute.xlu0 %1965
          %v1969 = vadd.f32 %v1947, %v1964
          %v1970 = vadd.f32 %v1948, %v1966
          %v1971 = vrot.slane %v1778, 4
          %v1972 = vrot.slane %v1779, 4
          %v1973 = vsel %vm238, %v1971, %v1972
          %v1976 = vadd.f32 %v1778, %v1973
          %v1977 = vadd.f32 %v1779, %v1972
          %v1978 = vmul.f32 %v1976, 0.66990674
          %v1979 = vmul.f32 %v1977, 0.66990674
          %v1982 = vrot.slane %v1978, 6
          %v1983 = vrot.slane %v1979, 6
          %v1984 = vsel %vm250, %v1982, %v1983
          %1985 = vrot.lane.b32.xlu0 %v1982, 3
          %v1986 = vpop.permute.xlu0 %1985
          %1987 = vrot.lane.b32.xlu0 %v1984, 3
          %v1988 = vpop.permute.xlu0 %1987
          %v1991 = vadd.f32 %v1969, %v1986
          %v1992 = vadd.f32 %v1970, %v1988
          %v1993 = vrot.slane %v1752, 6
          %v1994 = vrot.slane %v1753, 6
          %v1995 = vsel %vm250, %v1993, %v1994
          %v1997 = vadd.f32 %v1752, %v1995
          %v1998 = vmul.f32 %v1997, 0.71653134
          %v2000 = vrot.slane %v1998, 5
          %v2002 = vadd.f32 %v1991, %v2000
          %v2003 = vadd.f32 %v1992, %v2000
          %v2004 = vrot.slane %v1762, 6
          %v2005 = vrot.slane %v1763, 6
          %v2006 = vsel %vm250, %v2004, %v2005
          %v2008 = vadd.f32 %v1762, %v2006
          %v2009 = vmul.f32 %v2008, 0.7037274
          %v2011 = vrot.slane %v2009, 5
          %2012 = vrot.lane.b32.xlu0 %v2011, 1
          %v2013 = vpop.permute.xlu0 %2012
          %v2015 = vadd.f32 %v2002, %v2013
          %v2016 = vadd.f32 %v2003, %v2013
          %v2017 = vrot.slane %v1770, 6
          %v2018 = vrot.slane %v1771, 6
          %v2019 = vsel %vm250, %v2017, %v2018
          %v2021 = vadd.f32 %v1770, %v2019
          %v2022 = vmul.f32 %v2021, 0.66990674
          %v2024 = vrot.slane %v2022, 5
          %2025 = vrot.lane.b32.xlu0 %v2024, 2
          %v2026 = vpop.permute.xlu0 %2025
          %v2028 = vadd.f32 %v2015, %v2026
          %v2029 = vadd.f32 %v2016, %v2026
          %v2030 = vrot.slane %v1778, 6
          %v2031 = vrot.slane %v1779, 6
          %v2032 = vsel %vm250, %v2030, %v2031
          %v2034 = vadd.f32 %v1778, %v2032
          %v2035 = vmul.f32 %v2034, 0.62412506
          %v2037 = vrot.slane %v2035, 5
          %2038 = vrot.lane.b32.xlu0 %v2037, 3
          %v2039 = vpop.permute.xlu0 %2038
          %v2041 = vadd.f32 %v2028, %v2039
          %v2042 = vadd.f32 %v2029, %v2039
          %v2044 = vrot.slane %v1043, 5
          %2045 = vrot.lane.b32.xlu0 %v2044, 3
          %v2046 = vpop.permute.xlu0 %2045
          %v2048 = vmul.f32 %v2041, %v2046
          %v2049 = vmul.f32 %v2042, %v2046
          %v2050 = vmul.f32 %v2048, 1.442695
          %v2051 = vpow.pop %v2050
          %v2052 = vmul.f32 %v2049, 1.442695
          %v2053 = vpow.pop %v2052
          %2056 = vrot.lane.b32.xlu0 %v2051, 125
          %v2057 = vpop.permute.xlu0 %2056
          %2058 = vrot.lane.b32.xlu0 %v2053, 125
          %v2059 = vpop.permute.xlu0 %2058
          %s2062 = smul.u32 %s1729, 8
          %s2063 = scalar_lea.vmem %s119, %s2062 [#allocation2]
          %vm2064 = vcmask 130051
          %2065 = vst.msk [vmem:[%s2063 - $0x3] sm:$0xf8] %vm2064, %v2057
          %vm2066 = vcmask 124928
          %2067 = vst.msk [vmem:[%s2063 + $0x5] sm:$0x7] %vm2066, %v2059
          %v2068 = vadd.f32 %v1727, %v2051
          %v2069 = vadd.f32 %v1728, %v2053
        $region43: #{tpu_custom_call.1} parent=23 // loop_footer
          %s1726 = sadd.s32 1, %s1722
        $region44: #{tpu_custom_call.1} parent=23 // loop_footer_branch
          %1721 = sbr.rel target = $region40
        $region45: #{tpu_custom_call.1} parent=23 // loop_exit
          _
        loop: start=0, step=1, limit=9
        $region46: #{tpu_custom_call.1} parent=23 // loop_pre_header
          _
        $region47: #{tpu_custom_call.1} parent=23 // loop_header
          %s2071 = sphi 0, %s2075
          %p2072 = scmp.ge.s32.totalorder %s2071, 9
          %v2076 = vphi %v1727, %v2417
          %v2077 = vphi %v1728, %v2418
        $region48: #{tpu_custom_call.1} parent=23 // loop_header_branch
          %2074 = sbr.rel (%p2072) target = $region52
        $region49: #{tpu_custom_call.1} parent=23 // loop_body
          %s2078 = sadd.s32 %s2071, 27
          %s2079 = sadd.s32 %s125, %s2071
          %s2080 = scalar_lea.vmem %s124, %s2079
          %v2081 = vld [vmem:[%s2080] sm:$0xff]
          %v2082 = vld [vmem:[%s2080 + $0x8] sm:$0x3f]
          %2083 = vrot.lane.b32.xlu0 %v152, 127
          %v2084 = vpop.permute.xlu0 %2083
          %2085 = vrot.lane.b32.xlu0 %v153, 127
          %v2086 = vpop.permute.xlu0 %2085
          %v2089 = vsub.f32 %v2081, %v2084
          %v2090 = vsub.f32 %v2082, %v2086
          %2093 = vrot.lane.b32.xlu0 %v2089, 125
          %v2094 = vpop.permute.xlu0 %2093
          %2095 = vrot.lane.b32.xlu0 %v2090, 125
          %v2096 = vpop.permute.xlu0 %2095
          %v2099 = vmul.f32 %v148, %v2094
          %v2100 = vmul.f32 %v149, %v2096
          %v2101 = vmul.f32 %v2099, %v2094
          %v2102 = vmul.f32 %v2100, %v2096
          %2105 = vrot.lane.b32.xlu0 %v2101, 126
          %v2106 = vpop.permute.xlu0 %2105
          %2107 = vrot.lane.b32.xlu0 %v2102, 126
          %v2108 = vpop.permute.xlu0 %2107
          %v2111 = vadd.f32 %v2101, %v2106
          %v2112 = vadd.f32 %v2102, %v2108
          %2113 = vrot.lane.b32.xlu0 %v2101, 124
          %v2114 = vpop.permute.xlu0 %2113
          %2115 = vrot.lane.b32.xlu0 %v2102, 124
          %v2116 = vpop.permute.xlu0 %2115
          %v2119 = vadd.f32 %v2101, %v2114
          %v2120 = vadd.f32 %v2102, %v2116
          %2121 = vrot.lane.b32.xlu0 %v2101, 122
          %v2122 = vpop.permute.xlu0 %2121
          %2123 = vrot.lane.b32.xlu0 %v2102, 122
          %v2124 = vpop.permute.xlu0 %2123
          %v2127 = vadd.f32 %v2101, %v2122
          %v2128 = vadd.f32 %v2102, %v2124
          %v2129 = vadd.f32 %v2101, 0.0
          %v2130 = vadd.f32 %v2102, 0.0
          %v2131 = vmul.f32 %v2111, 0.89483935
          %v2132 = vmul.f32 %v2112, 0.89483935
          %2135 = vrot.lane.b32.xlu0 %v2131, 1
          %v2136 = vpop.permute.xlu0 %2135
          %2137 = vrot.lane.b32.xlu0 %v2132, 1
          %v2138 = vpop.permute.xlu0 %2137
          %v2141 = vadd.f32 %v2129, %v2136
          %v2142 = vadd.f32 %v2130, %v2138
          %v2143 = vmul.f32 %v2119, 0.8007374
          %v2144 = vmul.f32 %v2120, 0.8007374
          %2147 = vrot.lane.b32.xlu0 %v2143, 2
          %v2148 = vpop.permute.xlu0 %2147
          %2149 = vrot.lane.b32.xlu0 %v2144, 2
          %v2150 = vpop.permute.xlu0 %2149
          %v2153 = vadd.f32 %v2141, %v2148
          %v2154 = vadd.f32 %v2142, %v2150
          %v2155 = vmul.f32 %v2127, 0.71653134
          %v2156 = vmul.f32 %v2128, 0.71653134
          %2159 = vrot.lane.b32.xlu0 %v2155, 3
          %v2160 = vpop.permute.xlu0 %2159
          %2161 = vrot.lane.b32.xlu0 %v2156, 3
          %v2162 = vpop.permute.xlu0 %2161
          %v2165 = vadd.f32 %v2153, %v2160
          %v2166 = vadd.f32 %v2154, %v2162
          %v2167 = vrot.slane %v2101, 2
          %v2168 = vrot.slane %v2102, 2
          %v2169 = vsel %vm226, %v2167, %v2168
          %v2172 = vadd.f32 %v2101, %v2169
          %v2173 = vadd.f32 %v2102, %v2168
          %v2174 = vmul.f32 %v2172, 0.89483935
          %v2175 = vmul.f32 %v2173, 0.89483935
          %vm2178 = vcmask 1040384
          %v2179 = vrot.slane %v2174, 7
          %v2180 = vrot.slane %v2175, 7
          %v2181 = vsel %vm2178, %v2179, %v2180
          %v2184 = vadd.f32 %v2165, %v2179
          %v2185 = vadd.f32 %v2166, %v2181
          %v2188 = vrot.slane %v2111, 2
          %v2189 = vrot.slane %v2112, 2
          %v2190 = vsel %vm226, %v2188, %v2189
          %v2193 = vadd.f32 %v2111, %v2190
          %v2194 = vadd.f32 %v2112, %v2189
          %v2195 = vmul.f32 %v2193, 0.8545888
          %v2196 = vmul.f32 %v2194, 0.8545888
          %v2199 = vrot.slane %v2195, 7
          %v2200 = vrot.slane %v2196, 7
          %v2201 = vsel %vm2178, %v2199, %v2200
          %2202 = vrot.lane.b32.xlu0 %v2199, 1
          %v2203 = vpop.permute.xlu0 %2202
          %2204 = vrot.lane.b32.xlu0 %v2201, 1
          %v2205 = vpop.permute.xlu0 %2204
          %v2208 = vadd.f32 %v2184, %v2203
          %v2209 = vadd.f32 %v2185, %v2205
          %v2212 = vrot.slane %v2119, 2
          %v2213 = vrot.slane %v2120, 2
          %v2214 = vsel %vm226, %v2212, %v2213
          %v2217 = vadd.f32 %v2119, %v2214
          %v2218 = vadd.f32 %v2120, %v2213
          %v2219 = vmul.f32 %v2217, 0.7800073
          %v2220 = vmul.f32 %v2218, 0.7800073
          %v2223 = vrot.slane %v2219, 7
          %v2224 = vrot.slane %v2220, 7
          %v2225 = vsel %vm2178, %v2223, %v2224
          %2226 = vrot.lane.b32.xlu0 %v2223, 2
          %v2227 = vpop.permute.xlu0 %2226
          %2228 = vrot.lane.b32.xlu0 %v2225, 2
          %v2229 = vpop.permute.xlu0 %2228
          %v2232 = vadd.f32 %v2208, %v2227
          %v2233 = vadd.f32 %v2209, %v2229
          %v2236 = vrot.slane %v2127, 2
          %v2237 = vrot.slane %v2128, 2
          %v2238 = vsel %vm226, %v2236, %v2237
          %v2241 = vadd.f32 %v2127, %v2238
          %v2242 = vadd.f32 %v2128, %v2237
          %v2243 = vmul.f32 %v2241, 0.7037274
          %v2244 = vmul.f32 %v2242, 0.7037274
          %v2247 = vrot.slane %v2243, 7
          %v2248 = vrot.slane %v2244, 7
          %v2249 = vsel %vm2178, %v2247, %v2248
          %2250 = vrot.lane.b32.xlu0 %v2247, 3
          %v2251 = vpop.permute.xlu0 %2250
          %2252 = vrot.lane.b32.xlu0 %v2249, 3
          %v2253 = vpop.permute.xlu0 %2252
          %v2256 = vadd.f32 %v2232, %v2251
          %v2257 = vadd.f32 %v2233, %v2253
          %v2258 = vrot.slane %v2101, 4
          %v2259 = vrot.slane %v2102, 4
          %v2260 = vsel %vm238, %v2258, %v2259
          %v2263 = vadd.f32 %v2101, %v2260
          %v2264 = vadd.f32 %v2102, %v2259
          %v2265 = vmul.f32 %v2263, 0.8007374
          %v2266 = vmul.f32 %v2264, 0.8007374
          %v2269 = vrot.slane %v2265, 6
          %v2270 = vrot.slane %v2266, 6
          %v2271 = vsel %vm250, %v2269, %v2270
          %v2274 = vadd.f32 %v2256, %v2269
          %v2275 = vadd.f32 %v2257, %v2271
          %v2276 = vrot.slane %v2111, 4
          %v2277 = vrot.slane %v2112, 4
          %v2278 = vsel %vm238, %v2276, %v2277
          %v2281 = vadd.f32 %v2111, %v2278
          %v2282 = vadd.f32 %v2112, %v2277
          %v2283 = vmul.f32 %v2281, 0.7800073
          %v2284 = vmul.f32 %v2282, 0.7800073
          %v2287 = vrot.slane %v2283, 6
          %v2288 = vrot.slane %v2284, 6
          %v2289 = vsel %vm250, %v2287, %v2288
          %2290 = vrot.lane.b32.xlu0 %v2287, 1
          %v2291 = vpop.permute.xlu0 %2290
          %2292 = vrot.lane.b32.xlu0 %v2289, 1
          %v2293 = vpop.permute.xlu0 %2292
          %v2296 = vadd.f32 %v2274, %v2291
          %v2297 = vadd.f32 %v2275, %v2293
          %v2298 = vrot.slane %v2119, 4
          %v2299 = vrot.slane %v2120, 4
          %v2300 = vsel %vm238, %v2298, %v2299
          %v2303 = vadd.f32 %v2119, %v2300
          %v2304 = vadd.f32 %v2120, %v2299
          %v2305 = vmul.f32 %v2303, 0.73032206
          %v2306 = vmul.f32 %v2304, 0.73032206
          %v2309 = vrot.slane %v2305, 6
          %v2310 = vrot.slane %v2306, 6
          %v2311 = vsel %vm250, %v2309, %v2310
          %2312 = vrot.lane.b32.xlu0 %v2309, 2
          %v2313 = vpop.permute.xlu0 %2312
          %2314 = vrot.lane.b32.xlu0 %v2311, 2
          %v2315 = vpop.permute.xlu0 %2314
          %v2318 = vadd.f32 %v2296, %v2313
          %v2319 = vadd.f32 %v2297, %v2315
          %v2320 = vrot.slane %v2127, 4
          %v2321 = vrot.slane %v2128, 4
          %v2322 = vsel %vm238, %v2320, %v2321
          %v2325 = vadd.f32 %v2127, %v2322
          %v2326 = vadd.f32 %v2128, %v2321
          %v2327 = vmul.f32 %v2325, 0.66990674
          %v2328 = vmul.f32 %v2326, 0.66990674
          %v2331 = vrot.slane %v2327, 6
          %v2332 = vrot.slane %v2328, 6
          %v2333 = vsel %vm250, %v2331, %v2332
          %2334 = vrot.lane.b32.xlu0 %v2331, 3
          %v2335 = vpop.permute.xlu0 %2334
          %2336 = vrot.lane.b32.xlu0 %v2333, 3
          %v2337 = vpop.permute.xlu0 %2336
          %v2340 = vadd.f32 %v2318, %v2335
          %v2341 = vadd.f32 %v2319, %v2337
          %v2342 = vrot.slane %v2101, 6
          %v2343 = vrot.slane %v2102, 6
          %v2344 = vsel %vm250, %v2342, %v2343
          %v2346 = vadd.f32 %v2101, %v2344
          %v2347 = vmul.f32 %v2346, 0.71653134
          %v2349 = vrot.slane %v2347, 5
          %v2351 = vadd.f32 %v2340, %v2349
          %v2352 = vadd.f32 %v2341, %v2349
          %v2353 = vrot.slane %v2111, 6
          %v2354 = vrot.slane %v2112, 6
          %v2355 = vsel %vm250, %v2353, %v2354
          %v2357 = vadd.f32 %v2111, %v2355
          %v2358 = vmul.f32 %v2357, 0.7037274
          %v2360 = vrot.slane %v2358, 5
          %2361 = vrot.lane.b32.xlu0 %v2360, 1
          %v2362 = vpop.permute.xlu0 %2361
          %v2364 = vadd.f32 %v2351, %v2362
          %v2365 = vadd.f32 %v2352, %v2362
          %v2366 = vrot.slane %v2119, 6
          %v2367 = vrot.slane %v2120, 6
          %v2368 = vsel %vm250, %v2366, %v2367
          %v2370 = vadd.f32 %v2119, %v2368
          %v2371 = vmul.f32 %v2370, 0.66990674
          %v2373 = vrot.slane %v2371, 5
          %2374 = vrot.lane.b32.xlu0 %v2373, 2
          %v2375 = vpop.permute.xlu0 %2374
          %v2377 = vadd.f32 %v2364, %v2375
          %v2378 = vadd.f32 %v2365, %v2375
          %v2379 = vrot.slane %v2127, 6
          %v2380 = vrot.slane %v2128, 6
          %v2381 = vsel %vm250, %v2379, %v2380
          %v2383 = vadd.f32 %v2127, %v2381
          %v2384 = vmul.f32 %v2383, 0.62412506
          %v2386 = vrot.slane %v2384, 5
          %2387 = vrot.lane.b32.xlu0 %v2386, 3
          %v2388 = vpop.permute.xlu0 %2387
          %v2390 = vadd.f32 %v2377, %v2388
          %v2391 = vadd.f32 %v2378, %v2388
          %v2393 = vrot.slane %v1043, 5
          %2394 = vrot.lane.b32.xlu0 %v2393, 3
          %v2395 = vpop.permute.xlu0 %2394
          %v2397 = vmul.f32 %v2390, %v2395
          %v2398 = vmul.f32 %v2391, %v2395
          %v2399 = vmul.f32 %v2397, 1.442695
          %v2400 = vpow.pop %v2399
          %v2401 = vmul.f32 %v2398, 1.442695
          %v2402 = vpow.pop %v2401
          %2405 = vrot.lane.b32.xlu0 %v2400, 125
          %v2406 = vpop.permute.xlu0 %2405
          %2407 = vrot.lane.b32.xlu0 %v2402, 125
          %v2408 = vpop.permute.xlu0 %2407
          %s2411 = smul.u32 %s2078, 8
          %s2412 = scalar_lea.vmem %s119, %s2411 [#allocation2]
          %vm2413 = vcmask 130051
          %2414 = vst.msk [vmem:[%s2412 - $0x3] sm:$0xf8] %vm2413, %v2406
          %vm2415 = vcmask 124928
          %2416 = vst.msk [vmem:[%s2412 + $0x5] sm:$0x7] %vm2415, %v2408
          %v2417 = vadd.f32 %v2076, %v2400
          %v2418 = vadd.f32 %v2077, %v2402
        $region50: #{tpu_custom_call.1} parent=23 // loop_footer
          %s2075 = sadd.s32 1, %s2071
        $region51: #{tpu_custom_call.1} parent=23 // loop_footer_branch
          %2070 = sbr.rel target = $region47
        $region52: #{tpu_custom_call.1} parent=23 // loop_exit
          _
        loop: start=0, step=1, limit=9
        $region53: #{tpu_custom_call.1} parent=23 // loop_pre_header
          _
        $region54: #{tpu_custom_call.1} parent=23 // loop_header
          %s2420 = sphi 0, %s2424
          %p2421 = scmp.ge.s32.totalorder %s2420, 9
          %v2425 = vphi %v2076, %v2760
          %v2426 = vphi %v2077, %v2761
        $region55: #{tpu_custom_call.1} parent=23 // loop_header_branch
          %2423 = sbr.rel (%p2421) target = $region59
        $region56: #{tpu_custom_call.1} parent=23 // loop_body
          %s2427 = sadd.s32 %s2420, 36
          %s2428 = sadd.s32 %s125, %s2420
          %s2429 = scalar_lea.vmem %s124, %s2428
          %v2430 = vld [vmem:[%s2429] sm:$0xff]
          %v2431 = vld [vmem:[%s2429 + $0x8] sm:$0x3f]
          %v2432 = vsub.f32 %v2430, %v152
          %v2433 = vsub.f32 %v2431, %v153
          %2436 = vrot.lane.b32.xlu0 %v2432, 124
          %v2437 = vpop.permute.xlu0 %2436
          %2438 = vrot.lane.b32.xlu0 %v2433, 124
          %v2439 = vpop.permute.xlu0 %2438
          %v2442 = vmul.f32 %v148, %v2437
          %v2443 = vmul.f32 %v149, %v2439
          %v2444 = vmul.f32 %v2442, %v2437
          %v2445 = vmul.f32 %v2443, %v2439
          %2448 = vrot.lane.b32.xlu0 %v2444, 126
          %v2449 = vpop.permute.xlu0 %2448
          %2450 = vrot.lane.b32.xlu0 %v2445, 126
          %v2451 = vpop.permute.xlu0 %2450
          %v2454 = vadd.f32 %v2444, %v2449
          %v2455 = vadd.f32 %v2445, %v2451
          %2456 = vrot.lane.b32.xlu0 %v2444, 124
          %v2457 = vpop.permute.xlu0 %2456
          %2458 = vrot.lane.b32.xlu0 %v2445, 124
          %v2459 = vpop.permute.xlu0 %2458
          %v2462 = vadd.f32 %v2444, %v2457
          %v2463 = vadd.f32 %v2445, %v2459
          %2464 = vrot.lane.b32.xlu0 %v2444, 122
          %v2465 = vpop.permute.xlu0 %2464
          %2466 = vrot.lane.b32.xlu0 %v2445, 122
          %v2467 = vpop.permute.xlu0 %2466
          %v2470 = vadd.f32 %v2444, %v2465
          %v2471 = vadd.f32 %v2445, %v2467
          %v2472 = vadd.f32 %v2444, 0.0
          %v2473 = vadd.f32 %v2445, 0.0
          %v2474 = vmul.f32 %v2454, 0.89483935
          %v2475 = vmul.f32 %v2455, 0.89483935
          %2478 = vrot.lane.b32.xlu0 %v2474, 1
          %v2479 = vpop.permute.xlu0 %2478
          %2480 = vrot.lane.b32.xlu0 %v2475, 1
          %v2481 = vpop.permute.xlu0 %2480
          %v2484 = vadd.f32 %v2472, %v2479
          %v2485 = vadd.f32 %v2473, %v2481
          %v2486 = vmul.f32 %v2462, 0.8007374
          %v2487 = vmul.f32 %v2463, 0.8007374
          %2490 = vrot.lane.b32.xlu0 %v2486, 2
          %v2491 = vpop.permute.xlu0 %2490
          %2492 = vrot.lane.b32.xlu0 %v2487, 2
          %v2493 = vpop.permute.xlu0 %2492
          %v2496 = vadd.f32 %v2484, %v2491
          %v2497 = vadd.f32 %v2485, %v2493
          %v2498 = vmul.f32 %v2470, 0.71653134
          %v2499 = vmul.f32 %v2471, 0.71653134
          %2502 = vrot.lane.b32.xlu0 %v2498, 3
          %v2503 = vpop.permute.xlu0 %2502
          %2504 = vrot.lane.b32.xlu0 %v2499, 3
          %v2505 = vpop.permute.xlu0 %2504
          %v2508 = vadd.f32 %v2496, %v2503
          %v2509 = vadd.f32 %v2497, %v2505
          %v2510 = vrot.slane %v2444, 2
          %v2511 = vrot.slane %v2445, 2
          %v2512 = vsel %vm226, %v2510, %v2511
          %v2515 = vadd.f32 %v2444, %v2512
          %v2516 = vadd.f32 %v2445, %v2511
          %v2517 = vmul.f32 %v2515, 0.89483935
          %v2518 = vmul.f32 %v2516, 0.89483935
          %vm2521 = vcmask 1040384
          %v2522 = vrot.slane %v2517, 7
          %v2523 = vrot.slane %v2518, 7
          %v2524 = vsel %vm2521, %v2522, %v2523
          %v2527 = vadd.f32 %v2508, %v2522
          %v2528 = vadd.f32 %v2509, %v2524
          %v2531 = vrot.slane %v2454, 2
          %v2532 = vrot.slane %v2455, 2
          %v2533 = vsel %vm226, %v2531, %v2532
          %v2536 = vadd.f32 %v2454, %v2533
          %v2537 = vadd.f32 %v2455, %v2532
          %v2538 = vmul.f32 %v2536, 0.8545888
          %v2539 = vmul.f32 %v2537, 0.8545888
          %v2542 = vrot.slane %v2538, 7
          %v2543 = vrot.slane %v2539, 7
          %v2544 = vsel %vm2521, %v2542, %v2543
          %2545 = vrot.lane.b32.xlu0 %v2542, 1
          %v2546 = vpop.permute.xlu0 %2545
          %2547 = vrot.lane.b32.xlu0 %v2544, 1
          %v2548 = vpop.permute.xlu0 %2547
          %v2551 = vadd.f32 %v2527, %v2546
          %v2552 = vadd.f32 %v2528, %v2548
          %v2555 = vrot.slane %v2462, 2
          %v2556 = vrot.slane %v2463, 2
          %v2557 = vsel %vm226, %v2555, %v2556
          %v2560 = vadd.f32 %v2462, %v2557
          %v2561 = vadd.f32 %v2463, %v2556
          %v2562 = vmul.f32 %v2560, 0.7800073
          %v2563 = vmul.f32 %v2561, 0.7800073
          %v2566 = vrot.slane %v2562, 7
          %v2567 = vrot.slane %v2563, 7
          %v2568 = vsel %vm2521, %v2566, %v2567
          %2569 = vrot.lane.b32.xlu0 %v2566, 2
          %v2570 = vpop.permute.xlu0 %2569
          %2571 = vrot.lane.b32.xlu0 %v2568, 2
          %v2572 = vpop.permute.xlu0 %2571
          %v2575 = vadd.f32 %v2551, %v2570
          %v2576 = vadd.f32 %v2552, %v2572
          %v2579 = vrot.slane %v2470, 2
          %v2580 = vrot.slane %v2471, 2
          %v2581 = vsel %vm226, %v2579, %v2580
          %v2584 = vadd.f32 %v2470, %v2581
          %v2585 = vadd.f32 %v2471, %v2580
          %v2586 = vmul.f32 %v2584, 0.7037274
          %v2587 = vmul.f32 %v2585, 0.7037274
          %v2590 = vrot.slane %v2586, 7
          %v2591 = vrot.slane %v2587, 7
          %v2592 = vsel %vm2521, %v2590, %v2591
          %2593 = vrot.lane.b32.xlu0 %v2590, 3
          %v2594 = vpop.permute.xlu0 %2593
          %2595 = vrot.lane.b32.xlu0 %v2592, 3
          %v2596 = vpop.permute.xlu0 %2595
          %v2599 = vadd.f32 %v2575, %v2594
          %v2600 = vadd.f32 %v2576, %v2596
          %v2601 = vrot.slane %v2444, 4
          %v2602 = vrot.slane %v2445, 4
          %v2603 = vsel %vm238, %v2601, %v2602
          %v2606 = vadd.f32 %v2444, %v2603
          %v2607 = vadd.f32 %v2445, %v2602
          %v2608 = vmul.f32 %v2606, 0.8007374
          %v2609 = vmul.f32 %v2607, 0.8007374
          %v2612 = vrot.slane %v2608, 6
          %v2613 = vrot.slane %v2609, 6
          %v2614 = vsel %vm250, %v2612, %v2613
          %v2617 = vadd.f32 %v2599, %v2612
          %v2618 = vadd.f32 %v2600, %v2614
          %v2619 = vrot.slane %v2454, 4
          %v2620 = vrot.slane %v2455, 4
          %v2621 = vsel %vm238, %v2619, %v2620
          %v2624 = vadd.f32 %v2454, %v2621
          %v2625 = vadd.f32 %v2455, %v2620
          %v2626 = vmul.f32 %v2624, 0.7800073
          %v2627 = vmul.f32 %v2625, 0.7800073
          %v2630 = vrot.slane %v2626, 6
          %v2631 = vrot.slane %v2627, 6
          %v2632 = vsel %vm250, %v2630, %v2631
          %2633 = vrot.lane.b32.xlu0 %v2630, 1
          %v2634 = vpop.permute.xlu0 %2633
          %2635 = vrot.lane.b32.xlu0 %v2632, 1
          %v2636 = vpop.permute.xlu0 %2635
          %v2639 = vadd.f32 %v2617, %v2634
          %v2640 = vadd.f32 %v2618, %v2636
          %v2641 = vrot.slane %v2462, 4
          %v2642 = vrot.slane %v2463, 4
          %v2643 = vsel %vm238, %v2641, %v2642
          %v2646 = vadd.f32 %v2462, %v2643
          %v2647 = vadd.f32 %v2463, %v2642
          %v2648 = vmul.f32 %v2646, 0.73032206
          %v2649 = vmul.f32 %v2647, 0.73032206
          %v2652 = vrot.slane %v2648, 6
          %v2653 = vrot.slane %v2649, 6
          %v2654 = vsel %vm250, %v2652, %v2653
          %2655 = vrot.lane.b32.xlu0 %v2652, 2
          %v2656 = vpop.permute.xlu0 %2655
          %2657 = vrot.lane.b32.xlu0 %v2654, 2
          %v2658 = vpop.permute.xlu0 %2657
          %v2661 = vadd.f32 %v2639, %v2656
          %v2662 = vadd.f32 %v2640, %v2658
          %v2663 = vrot.slane %v2470, 4
          %v2664 = vrot.slane %v2471, 4
          %v2665 = vsel %vm238, %v2663, %v2664
          %v2668 = vadd.f32 %v2470, %v2665
          %v2669 = vadd.f32 %v2471, %v2664
          %v2670 = vmul.f32 %v2668, 0.66990674
          %v2671 = vmul.f32 %v2669, 0.66990674
          %v2674 = vrot.slane %v2670, 6
          %v2675 = vrot.slane %v2671, 6
          %v2676 = vsel %vm250, %v2674, %v2675
          %2677 = vrot.lane.b32.xlu0 %v2674, 3
          %v2678 = vpop.permute.xlu0 %2677
          %2679 = vrot.lane.b32.xlu0 %v2676, 3
          %v2680 = vpop.permute.xlu0 %2679
          %v2683 = vadd.f32 %v2661, %v2678
          %v2684 = vadd.f32 %v2662, %v2680
          %v2685 = vrot.slane %v2444, 6
          %v2686 = vrot.slane %v2445, 6
          %v2687 = vsel %vm250, %v2685, %v2686
          %v2689 = vadd.f32 %v2444, %v2687
          %v2690 = vmul.f32 %v2689, 0.71653134
          %v2692 = vrot.slane %v2690, 5
          %v2694 = vadd.f32 %v2683, %v2692
          %v2695 = vadd.f32 %v2684, %v2692
          %v2696 = vrot.slane %v2454, 6
          %v2697 = vrot.slane %v2455, 6
          %v2698 = vsel %vm250, %v2696, %v2697
          %v2700 = vadd.f32 %v2454, %v2698
          %v2701 = vmul.f32 %v2700, 0.7037274
          %v2703 = vrot.slane %v2701, 5
          %2704 = vrot.lane.b32.xlu0 %v2703, 1
          %v2705 = vpop.permute.xlu0 %2704
          %v2707 = vadd.f32 %v2694, %v2705
          %v2708 = vadd.f32 %v2695, %v2705
          %v2709 = vrot.slane %v2462, 6
          %v2710 = vrot.slane %v2463, 6
          %v2711 = vsel %vm250, %v2709, %v2710
          %v2713 = vadd.f32 %v2462, %v2711
          %v2714 = vmul.f32 %v2713, 0.66990674
          %v2716 = vrot.slane %v2714, 5
          %2717 = vrot.lane.b32.xlu0 %v2716, 2
          %v2718 = vpop.permute.xlu0 %2717
          %v2720 = vadd.f32 %v2707, %v2718
          %v2721 = vadd.f32 %v2708, %v2718
          %v2722 = vrot.slane %v2470, 6
          %v2723 = vrot.slane %v2471, 6
          %v2724 = vsel %vm250, %v2722, %v2723
          %v2726 = vadd.f32 %v2470, %v2724
          %v2727 = vmul.f32 %v2726, 0.62412506
          %v2729 = vrot.slane %v2727, 5
          %2730 = vrot.lane.b32.xlu0 %v2729, 3
          %v2731 = vpop.permute.xlu0 %2730
          %v2733 = vadd.f32 %v2720, %v2731
          %v2734 = vadd.f32 %v2721, %v2731
          %v2736 = vrot.slane %v1043, 5
          %2737 = vrot.lane.b32.xlu0 %v2736, 3
          %v2738 = vpop.permute.xlu0 %2737
          %v2740 = vmul.f32 %v2733, %v2738
          %v2741 = vmul.f32 %v2734, %v2738
          %v2742 = vmul.f32 %v2740, 1.442695
          %v2743 = vpow.pop %v2742
          %v2744 = vmul.f32 %v2741, 1.442695
          %v2745 = vpow.pop %v2744
          %2748 = vrot.lane.b32.xlu0 %v2743, 125
          %v2749 = vpop.permute.xlu0 %2748
          %2750 = vrot.lane.b32.xlu0 %v2745, 125
          %v2751 = vpop.permute.xlu0 %2750
          %s2754 = smul.u32 %s2427, 8
          %s2755 = scalar_lea.vmem %s119, %s2754 [#allocation2]
          %vm2756 = vcmask 130051
          %2757 = vst.msk [vmem:[%s2755 - $0x3] sm:$0xf8] %vm2756, %v2749
          %vm2758 = vcmask 124928
          %2759 = vst.msk [vmem:[%s2755 + $0x5] sm:$0x7] %vm2758, %v2751
          %v2760 = vadd.f32 %v2425, %v2743
          %v2761 = vadd.f32 %v2426, %v2745
        $region57: #{tpu_custom_call.1} parent=23 // loop_footer
          %s2424 = sadd.s32 1, %s2420
        $region58: #{tpu_custom_call.1} parent=23 // loop_footer_branch
          %2419 = sbr.rel target = $region54
        $region59: #{tpu_custom_call.1} parent=23 // loop_exit
          _
        loop: start=0, step=1, limit=9
        $region60: #{tpu_custom_call.1} parent=23 // loop_pre_header
          _
        $region61: #{tpu_custom_call.1} parent=23 // loop_header
          %s2763 = sphi 0, %s2767
          %p2764 = scmp.ge.s32.totalorder %s2763, 9
          %v2768 = vphi %v2425, %v3109
          %v2769 = vphi %v2426, %v3110
        $region62: #{tpu_custom_call.1} parent=23 // loop_header_branch
          %2766 = sbr.rel (%p2764) target = $region66
        $region63: #{tpu_custom_call.1} parent=23 // loop_body
          %s2770 = sadd.s32 %s2763, 45
          %s2771 = sadd.s32 %s125, %s2763
          %s2772 = scalar_lea.vmem %s124, %s2771
          %v2773 = vld [vmem:[%s2772] sm:$0xff]
          %v2774 = vld [vmem:[%s2772 + $0x8] sm:$0x3f]
          %2775 = vrot.lane.b32.xlu0 %v152, 1
          %v2776 = vpop.permute.xlu0 %2775
          %2777 = vrot.lane.b32.xlu0 %v153, 1
          %v2778 = vpop.permute.xlu0 %2777
          %v2781 = vsub.f32 %v2773, %v2776
          %v2782 = vsub.f32 %v2774, %v2778
          %2785 = vrot.lane.b32.xlu0 %v2781, 123
          %v2786 = vpop.permute.xlu0 %2785
          %2787 = vrot.lane.b32.xlu0 %v2782, 123
          %v2788 = vpop.permute.xlu0 %2787
          %v2791 = vmul.f32 %v148, %v2786
          %v2792 = vmul.f32 %v149, %v2788
          %v2793 = vmul.f32 %v2791, %v2786
          %v2794 = vmul.f32 %v2792, %v2788
          %2797 = vrot.lane.b32.xlu0 %v2793, 126
          %v2798 = vpop.permute.xlu0 %2797
          %2799 = vrot.lane.b32.xlu0 %v2794, 126
          %v2800 = vpop.permute.xlu0 %2799
          %v2803 = vadd.f32 %v2793, %v2798
          %v2804 = vadd.f32 %v2794, %v2800
          %2805 = vrot.lane.b32.xlu0 %v2793, 124
          %v2806 = vpop.permute.xlu0 %2805
          %2807 = vrot.lane.b32.xlu0 %v2794, 124
          %v2808 = vpop.permute.xlu0 %2807
          %v2811 = vadd.f32 %v2793, %v2806
          %v2812 = vadd.f32 %v2794, %v2808
          %2813 = vrot.lane.b32.xlu0 %v2793, 122
          %v2814 = vpop.permute.xlu0 %2813
          %2815 = vrot.lane.b32.xlu0 %v2794, 122
          %v2816 = vpop.permute.xlu0 %2815
          %v2819 = vadd.f32 %v2793, %v2814
          %v2820 = vadd.f32 %v2794, %v2816
          %v2821 = vadd.f32 %v2793, 0.0
          %v2822 = vadd.f32 %v2794, 0.0
          %v2823 = vmul.f32 %v2803, 0.89483935
          %v2824 = vmul.f32 %v2804, 0.89483935
          %2827 = vrot.lane.b32.xlu0 %v2823, 1
          %v2828 = vpop.permute.xlu0 %2827
          %2829 = vrot.lane.b32.xlu0 %v2824, 1
          %v2830 = vpop.permute.xlu0 %2829
          %v2833 = vadd.f32 %v2821, %v2828
          %v2834 = vadd.f32 %v2822, %v2830
          %v2835 = vmul.f32 %v2811, 0.8007374
          %v2836 = vmul.f32 %v2812, 0.8007374
          %2839 = vrot.lane.b32.xlu0 %v2835, 2
          %v2840 = vpop.permute.xlu0 %2839
          %2841 = vrot.lane.b32.xlu0 %v2836, 2
          %v2842 = vpop.permute.xlu0 %2841
          %v2845 = vadd.f32 %v2833, %v2840
          %v2846 = vadd.f32 %v2834, %v2842
          %v2847 = vmul.f32 %v2819, 0.71653134
          %v2848 = vmul.f32 %v2820, 0.71653134
          %2851 = vrot.lane.b32.xlu0 %v2847, 3
          %v2852 = vpop.permute.xlu0 %2851
          %2853 = vrot.lane.b32.xlu0 %v2848, 3
          %v2854 = vpop.permute.xlu0 %2853
          %v2857 = vadd.f32 %v2845, %v2852
          %v2858 = vadd.f32 %v2846, %v2854
          %v2859 = vrot.slane %v2793, 2
          %v2860 = vrot.slane %v2794, 2
          %v2861 = vsel %vm226, %v2859, %v2860
          %v2864 = vadd.f32 %v2793, %v2861
          %v2865 = vadd.f32 %v2794, %v2860
          %v2866 = vmul.f32 %v2864, 0.89483935
          %v2867 = vmul.f32 %v2865, 0.89483935
          %vm2870 = vcmask 1040384
          %v2871 = vrot.slane %v2866, 7
          %v2872 = vrot.slane %v2867, 7
          %v2873 = vsel %vm2870, %v2871, %v2872
          %v2876 = vadd.f32 %v2857, %v2871
          %v2877 = vadd.f32 %v2858, %v2873
          %v2880 = vrot.slane %v2803, 2
          %v2881 = vrot.slane %v2804, 2
          %v2882 = vsel %vm226, %v2880, %v2881
          %v2885 = vadd.f32 %v2803, %v2882
          %v2886 = vadd.f32 %v2804, %v2881
          %v2887 = vmul.f32 %v2885, 0.8545888
          %v2888 = vmul.f32 %v2886, 0.8545888
          %v2891 = vrot.slane %v2887, 7
          %v2892 = vrot.slane %v2888, 7
          %v2893 = vsel %vm2870, %v2891, %v2892
          %2894 = vrot.lane.b32.xlu0 %v2891, 1
          %v2895 = vpop.permute.xlu0 %2894
          %2896 = vrot.lane.b32.xlu0 %v2893, 1
          %v2897 = vpop.permute.xlu0 %2896
          %v2900 = vadd.f32 %v2876, %v2895
          %v2901 = vadd.f32 %v2877, %v2897
          %v2904 = vrot.slane %v2811, 2
          %v2905 = vrot.slane %v2812, 2
          %v2906 = vsel %vm226, %v2904, %v2905
          %v2909 = vadd.f32 %v2811, %v2906
          %v2910 = vadd.f32 %v2812, %v2905
          %v2911 = vmul.f32 %v2909, 0.7800073
          %v2912 = vmul.f32 %v2910, 0.7800073
          %v2915 = vrot.slane %v2911, 7
          %v2916 = vrot.slane %v2912, 7
          %v2917 = vsel %vm2870, %v2915, %v2916
          %2918 = vrot.lane.b32.xlu0 %v2915, 2
          %v2919 = vpop.permute.xlu0 %2918
          %2920 = vrot.lane.b32.xlu0 %v2917, 2
          %v2921 = vpop.permute.xlu0 %2920
          %v2924 = vadd.f32 %v2900, %v2919
          %v2925 = vadd.f32 %v2901, %v2921
          %v2928 = vrot.slane %v2819, 2
          %v2929 = vrot.slane %v2820, 2
          %v2930 = vsel %vm226, %v2928, %v2929
          %v2933 = vadd.f32 %v2819, %v2930
          %v2934 = vadd.f32 %v2820, %v2929
          %v2935 = vmul.f32 %v2933, 0.7037274
          %v2936 = vmul.f32 %v2934, 0.7037274
          %v2939 = vrot.slane %v2935, 7
          %v2940 = vrot.slane %v2936, 7
          %v2941 = vsel %vm2870, %v2939, %v2940
          %2942 = vrot.lane.b32.xlu0 %v2939, 3
          %v2943 = vpop.permute.xlu0 %2942
          %2944 = vrot.lane.b32.xlu0 %v2941, 3
          %v2945 = vpop.permute.xlu0 %2944
          %v2948 = vadd.f32 %v2924, %v2943
          %v2949 = vadd.f32 %v2925, %v2945
          %v2950 = vrot.slane %v2793, 4
          %v2951 = vrot.slane %v2794, 4
          %v2952 = vsel %vm238, %v2950, %v2951
          %v2955 = vadd.f32 %v2793, %v2952
          %v2956 = vadd.f32 %v2794, %v2951
          %v2957 = vmul.f32 %v2955, 0.8007374
          %v2958 = vmul.f32 %v2956, 0.8007374
          %v2961 = vrot.slane %v2957, 6
          %v2962 = vrot.slane %v2958, 6
          %v2963 = vsel %vm250, %v2961, %v2962
          %v2966 = vadd.f32 %v2948, %v2961
          %v2967 = vadd.f32 %v2949, %v2963
          %v2968 = vrot.slane %v2803, 4
          %v2969 = vrot.slane %v2804, 4
          %v2970 = vsel %vm238, %v2968, %v2969
          %v2973 = vadd.f32 %v2803, %v2970
          %v2974 = vadd.f32 %v2804, %v2969
          %v2975 = vmul.f32 %v2973, 0.7800073
          %v2976 = vmul.f32 %v2974, 0.7800073
          %v2979 = vrot.slane %v2975, 6
          %v2980 = vrot.slane %v2976, 6
          %v2981 = vsel %vm250, %v2979, %v2980
          %2982 = vrot.lane.b32.xlu0 %v2979, 1
          %v2983 = vpop.permute.xlu0 %2982
          %2984 = vrot.lane.b32.xlu0 %v2981, 1
          %v2985 = vpop.permute.xlu0 %2984
          %v2988 = vadd.f32 %v2966, %v2983
          %v2989 = vadd.f32 %v2967, %v2985
          %v2990 = vrot.slane %v2811, 4
          %v2991 = vrot.slane %v2812, 4
          %v2992 = vsel %vm238, %v2990, %v2991
          %v2995 = vadd.f32 %v2811, %v2992
          %v2996 = vadd.f32 %v2812, %v2991
          %v2997 = vmul.f32 %v2995, 0.73032206
          %v2998 = vmul.f32 %v2996, 0.73032206
          %v3001 = vrot.slane %v2997, 6
          %v3002 = vrot.slane %v2998, 6
          %v3003 = vsel %vm250, %v3001, %v3002
          %3004 = vrot.lane.b32.xlu0 %v3001, 2
          %v3005 = vpop.permute.xlu0 %3004
          %3006 = vrot.lane.b32.xlu0 %v3003, 2
          %v3007 = vpop.permute.xlu0 %3006
          %v3010 = vadd.f32 %v2988, %v3005
          %v3011 = vadd.f32 %v2989, %v3007
          %v3012 = vrot.slane %v2819, 4
          %v3013 = vrot.slane %v2820, 4
          %v3014 = vsel %vm238, %v3012, %v3013
          %v3017 = vadd.f32 %v2819, %v3014
          %v3018 = vadd.f32 %v2820, %v3013
          %v3019 = vmul.f32 %v3017, 0.66990674
          %v3020 = vmul.f32 %v3018, 0.66990674
          %v3023 = vrot.slane %v3019, 6
          %v3024 = vrot.slane %v3020, 6
          %v3025 = vsel %vm250, %v3023, %v3024
          %3026 = vrot.lane.b32.xlu0 %v3023, 3
          %v3027 = vpop.permute.xlu0 %3026
          %3028 = vrot.lane.b32.xlu0 %v3025, 3
          %v3029 = vpop.permute.xlu0 %3028
          %v3032 = vadd.f32 %v3010, %v3027
          %v3033 = vadd.f32 %v3011, %v3029
          %v3034 = vrot.slane %v2793, 6
          %v3035 = vrot.slane %v2794, 6
          %v3036 = vsel %vm250, %v3034, %v3035
          %v3038 = vadd.f32 %v2793, %v3036
          %v3039 = vmul.f32 %v3038, 0.71653134
          %v3041 = vrot.slane %v3039, 5
          %v3043 = vadd.f32 %v3032, %v3041
          %v3044 = vadd.f32 %v3033, %v3041
          %v3045 = vrot.slane %v2803, 6
          %v3046 = vrot.slane %v2804, 6
          %v3047 = vsel %vm250, %v3045, %v3046
          %v3049 = vadd.f32 %v2803, %v3047
          %v3050 = vmul.f32 %v3049, 0.7037274
          %v3052 = vrot.slane %v3050, 5
          %3053 = vrot.lane.b32.xlu0 %v3052, 1
          %v3054 = vpop.permute.xlu0 %3053
          %v3056 = vadd.f32 %v3043, %v3054
          %v3057 = vadd.f32 %v3044, %v3054
          %v3058 = vrot.slane %v2811, 6
          %v3059 = vrot.slane %v2812, 6
          %v3060 = vsel %vm250, %v3058, %v3059
          %v3062 = vadd.f32 %v2811, %v3060
          %v3063 = vmul.f32 %v3062, 0.66990674
          %v3065 = vrot.slane %v3063, 5
          %3066 = vrot.lane.b32.xlu0 %v3065, 2
          %v3067 = vpop.permute.xlu0 %3066
          %v3069 = vadd.f32 %v3056, %v3067
          %v3070 = vadd.f32 %v3057, %v3067
          %v3071 = vrot.slane %v2819, 6
          %v3072 = vrot.slane %v2820, 6
          %v3073 = vsel %vm250, %v3071, %v3072
          %v3075 = vadd.f32 %v2819, %v3073
          %v3076 = vmul.f32 %v3075, 0.62412506
          %v3078 = vrot.slane %v3076, 5
          %3079 = vrot.lane.b32.xlu0 %v3078, 3
          %v3080 = vpop.permute.xlu0 %3079
          %v3082 = vadd.f32 %v3069, %v3080
          %v3083 = vadd.f32 %v3070, %v3080
          %v3085 = vrot.slane %v1043, 5
          %3086 = vrot.lane.b32.xlu0 %v3085, 3
          %v3087 = vpop.permute.xlu0 %3086
          %v3089 = vmul.f32 %v3082, %v3087
          %v3090 = vmul.f32 %v3083, %v3087
          %v3091 = vmul.f32 %v3089, 1.442695
          %v3092 = vpow.pop %v3091
          %v3093 = vmul.f32 %v3090, 1.442695
          %v3094 = vpow.pop %v3093
          %3097 = vrot.lane.b32.xlu0 %v3092, 125
          %v3098 = vpop.permute.xlu0 %3097
          %3099 = vrot.lane.b32.xlu0 %v3094, 125
          %v3100 = vpop.permute.xlu0 %3099
          %s3103 = smul.u32 %s2770, 8
          %s3104 = scalar_lea.vmem %s119, %s3103 [#allocation2]
          %vm3105 = vcmask 130051
          %3106 = vst.msk [vmem:[%s3104 - $0x3] sm:$0xf8] %vm3105, %v3098
          %vm3107 = vcmask 124928
          %3108 = vst.msk [vmem:[%s3104 + $0x5] sm:$0x7] %vm3107, %v3100
          %v3109 = vadd.f32 %v2768, %v3092
          %v3110 = vadd.f32 %v2769, %v3094
        $region64: #{tpu_custom_call.1} parent=23 // loop_footer
          %s2767 = sadd.s32 1, %s2763
        $region65: #{tpu_custom_call.1} parent=23 // loop_footer_branch
          %2762 = sbr.rel target = $region61
        $region66: #{tpu_custom_call.1} parent=23 // loop_exit
          _
        loop: start=0, step=1, limit=9
        $region67: #{tpu_custom_call.1} parent=23 // loop_pre_header
          _
        $region68: #{tpu_custom_call.1} parent=23 // loop_header
          %s3112 = sphi 0, %s3116
          %p3113 = scmp.ge.s32.totalorder %s3112, 9
          %v3117 = vphi %v2768, %v3458
          %v3118 = vphi %v2769, %v3459
        $region69: #{tpu_custom_call.1} parent=23 // loop_header_branch
          %3115 = sbr.rel (%p3113) target = $region73
        $region70: #{tpu_custom_call.1} parent=23 // loop_body
          %s3119 = sadd.s32 %s3112, 54
          %s3120 = sadd.s32 %s125, %s3112
          %s3121 = scalar_lea.vmem %s124, %s3120
          %v3122 = vld [vmem:[%s3121] sm:$0xff]
          %v3123 = vld [vmem:[%s3121 + $0x8] sm:$0x3f]
          %3124 = vrot.lane.b32.xlu0 %v152, 2
          %v3125 = vpop.permute.xlu0 %3124
          %3126 = vrot.lane.b32.xlu0 %v153, 2
          %v3127 = vpop.permute.xlu0 %3126
          %v3130 = vsub.f32 %v3122, %v3125
          %v3131 = vsub.f32 %v3123, %v3127
          %3134 = vrot.lane.b32.xlu0 %v3130, 122
          %v3135 = vpop.permute.xlu0 %3134
          %3136 = vrot.lane.b32.xlu0 %v3131, 122
          %v3137 = vpop.permute.xlu0 %3136
          %v3140 = vmul.f32 %v148, %v3135
          %v3141 = vmul.f32 %v149, %v3137
          %v3142 = vmul.f32 %v3140, %v3135
          %v3143 = vmul.f32 %v3141, %v3137
          %3146 = vrot.lane.b32.xlu0 %v3142, 126
          %v3147 = vpop.permute.xlu0 %3146
          %3148 = vrot.lane.b32.xlu0 %v3143, 126
          %v3149 = vpop.permute.xlu0 %3148
          %v3152 = vadd.f32 %v3142, %v3147
          %v3153 = vadd.f32 %v3143, %v3149
          %3154 = vrot.lane.b32.xlu0 %v3142, 124
          %v3155 = vpop.permute.xlu0 %3154
          %3156 = vrot.lane.b32.xlu0 %v3143, 124
          %v3157 = vpop.permute.xlu0 %3156
          %v3160 = vadd.f32 %v3142, %v3155
          %v3161 = vadd.f32 %v3143, %v3157
          %3162 = vrot.lane.b32.xlu0 %v3142, 122
          %v3163 = vpop.permute.xlu0 %3162
          %3164 = vrot.lane.b32.xlu0 %v3143, 122
          %v3165 = vpop.permute.xlu0 %3164
          %v3168 = vadd.f32 %v3142, %v3163
          %v3169 = vadd.f32 %v3143, %v3165
          %v3170 = vadd.f32 %v3142, 0.0
          %v3171 = vadd.f32 %v3143, 0.0
          %v3172 = vmul.f32 %v3152, 0.89483935
          %v3173 = vmul.f32 %v3153, 0.89483935
          %3176 = vrot.lane.b32.xlu0 %v3172, 1
          %v3177 = vpop.permute.xlu0 %3176
          %3178 = vrot.lane.b32.xlu0 %v3173, 1
          %v3179 = vpop.permute.xlu0 %3178
          %v3182 = vadd.f32 %v3170, %v3177
          %v3183 = vadd.f32 %v3171, %v3179
          %v3184 = vmul.f32 %v3160, 0.8007374
          %v3185 = vmul.f32 %v3161, 0.8007374
          %3188 = vrot.lane.b32.xlu0 %v3184, 2
          %v3189 = vpop.permute.xlu0 %3188
          %3190 = vrot.lane.b32.xlu0 %v3185, 2
          %v3191 = vpop.permute.xlu0 %3190
          %v3194 = vadd.f32 %v3182, %v3189
          %v3195 = vadd.f32 %v3183, %v3191
          %v3196 = vmul.f32 %v3168, 0.71653134
          %v3197 = vmul.f32 %v3169, 0.71653134
          %3200 = vrot.lane.b32.xlu0 %v3196, 3
          %v3201 = vpop.permute.xlu0 %3200
          %3202 = vrot.lane.b32.xlu0 %v3197, 3
          %v3203 = vpop.permute.xlu0 %3202
          %v3206 = vadd.f32 %v3194, %v3201
          %v3207 = vadd.f32 %v3195, %v3203
          %v3208 = vrot.slane %v3142, 2
          %v3209 = vrot.slane %v3143, 2
          %v3210 = vsel %vm226, %v3208, %v3209
          %v3213 = vadd.f32 %v3142, %v3210
          %v3214 = vadd.f32 %v3143, %v3209
          %v3215 = vmul.f32 %v3213, 0.89483935
          %v3216 = vmul.f32 %v3214, 0.89483935
          %vm3219 = vcmask 1040384
          %v3220 = vrot.slane %v3215, 7
          %v3221 = vrot.slane %v3216, 7
          %v3222 = vsel %vm3219, %v3220, %v3221
          %v3225 = vadd.f32 %v3206, %v3220
          %v3226 = vadd.f32 %v3207, %v3222
          %v3229 = vrot.slane %v3152, 2
          %v3230 = vrot.slane %v3153, 2
          %v3231 = vsel %vm226, %v3229, %v3230
          %v3234 = vadd.f32 %v3152, %v3231
          %v3235 = vadd.f32 %v3153, %v3230
          %v3236 = vmul.f32 %v3234, 0.8545888
          %v3237 = vmul.f32 %v3235, 0.8545888
          %v3240 = vrot.slane %v3236, 7
          %v3241 = vrot.slane %v3237, 7
          %v3242 = vsel %vm3219, %v3240, %v3241
          %3243 = vrot.lane.b32.xlu0 %v3240, 1
          %v3244 = vpop.permute.xlu0 %3243
          %3245 = vrot.lane.b32.xlu0 %v3242, 1
          %v3246 = vpop.permute.xlu0 %3245
          %v3249 = vadd.f32 %v3225, %v3244
          %v3250 = vadd.f32 %v3226, %v3246
          %v3253 = vrot.slane %v3160, 2
          %v3254 = vrot.slane %v3161, 2
          %v3255 = vsel %vm226, %v3253, %v3254
          %v3258 = vadd.f32 %v3160, %v3255
          %v3259 = vadd.f32 %v3161, %v3254
          %v3260 = vmul.f32 %v3258, 0.7800073
          %v3261 = vmul.f32 %v3259, 0.7800073
          %v3264 = vrot.slane %v3260, 7
          %v3265 = vrot.slane %v3261, 7
          %v3266 = vsel %vm3219, %v3264, %v3265
          %3267 = vrot.lane.b32.xlu0 %v3264, 2
          %v3268 = vpop.permute.xlu0 %3267
          %3269 = vrot.lane.b32.xlu0 %v3266, 2
          %v3270 = vpop.permute.xlu0 %3269
          %v3273 = vadd.f32 %v3249, %v3268
          %v3274 = vadd.f32 %v3250, %v3270
          %v3277 = vrot.slane %v3168, 2
          %v3278 = vrot.slane %v3169, 2
          %v3279 = vsel %vm226, %v3277, %v3278
          %v3282 = vadd.f32 %v3168, %v3279
          %v3283 = vadd.f32 %v3169, %v3278
          %v3284 = vmul.f32 %v3282, 0.7037274
          %v3285 = vmul.f32 %v3283, 0.7037274
          %v3288 = vrot.slane %v3284, 7
          %v3289 = vrot.slane %v3285, 7
          %v3290 = vsel %vm3219, %v3288, %v3289
          %3291 = vrot.lane.b32.xlu0 %v3288, 3
          %v3292 = vpop.permute.xlu0 %3291
          %3293 = vrot.lane.b32.xlu0 %v3290, 3
          %v3294 = vpop.permute.xlu0 %3293
          %v3297 = vadd.f32 %v3273, %v3292
          %v3298 = vadd.f32 %v3274, %v3294
          %v3299 = vrot.slane %v3142, 4
          %v3300 = vrot.slane %v3143, 4
          %v3301 = vsel %vm238, %v3299, %v3300
          %v3304 = vadd.f32 %v3142, %v3301
          %v3305 = vadd.f32 %v3143, %v3300
          %v3306 = vmul.f32 %v3304, 0.8007374
          %v3307 = vmul.f32 %v3305, 0.8007374
          %v3310 = vrot.slane %v3306, 6
          %v3311 = vrot.slane %v3307, 6
          %v3312 = vsel %vm250, %v3310, %v3311
          %v3315 = vadd.f32 %v3297, %v3310
          %v3316 = vadd.f32 %v3298, %v3312
          %v3317 = vrot.slane %v3152, 4
          %v3318 = vrot.slane %v3153, 4
          %v3319 = vsel %vm238, %v3317, %v3318
          %v3322 = vadd.f32 %v3152, %v3319
          %v3323 = vadd.f32 %v3153, %v3318
          %v3324 = vmul.f32 %v3322, 0.7800073
          %v3325 = vmul.f32 %v3323, 0.7800073
          %v3328 = vrot.slane %v3324, 6
          %v3329 = vrot.slane %v3325, 6
          %v3330 = vsel %vm250, %v3328, %v3329
          %3331 = vrot.lane.b32.xlu0 %v3328, 1
          %v3332 = vpop.permute.xlu0 %3331
          %3333 = vrot.lane.b32.xlu0 %v3330, 1
          %v3334 = vpop.permute.xlu0 %3333
          %v3337 = vadd.f32 %v3315, %v3332
          %v3338 = vadd.f32 %v3316, %v3334
          %v3339 = vrot.slane %v3160, 4
          %v3340 = vrot.slane %v3161, 4
          %v3341 = vsel %vm238, %v3339, %v3340
          %v3344 = vadd.f32 %v3160, %v3341
          %v3345 = vadd.f32 %v3161, %v3340
          %v3346 = vmul.f32 %v3344, 0.73032206
          %v3347 = vmul.f32 %v3345, 0.73032206
          %v3350 = vrot.slane %v3346, 6
          %v3351 = vrot.slane %v3347, 6
          %v3352 = vsel %vm250, %v3350, %v3351
          %3353 = vrot.lane.b32.xlu0 %v3350, 2
          %v3354 = vpop.permute.xlu0 %3353
          %3355 = vrot.lane.b32.xlu0 %v3352, 2
          %v3356 = vpop.permute.xlu0 %3355
          %v3359 = vadd.f32 %v3337, %v3354
          %v3360 = vadd.f32 %v3338, %v3356
          %v3361 = vrot.slane %v3168, 4
          %v3362 = vrot.slane %v3169, 4
          %v3363 = vsel %vm238, %v3361, %v3362
          %v3366 = vadd.f32 %v3168, %v3363
          %v3367 = vadd.f32 %v3169, %v3362
          %v3368 = vmul.f32 %v3366, 0.66990674
          %v3369 = vmul.f32 %v3367, 0.66990674
          %v3372 = vrot.slane %v3368, 6
          %v3373 = vrot.slane %v3369, 6
          %v3374 = vsel %vm250, %v3372, %v3373
          %3375 = vrot.lane.b32.xlu0 %v3372, 3
          %v3376 = vpop.permute.xlu0 %3375
          %3377 = vrot.lane.b32.xlu0 %v3374, 3
          %v3378 = vpop.permute.xlu0 %3377
          %v3381 = vadd.f32 %v3359, %v3376
          %v3382 = vadd.f32 %v3360, %v3378
          %v3383 = vrot.slane %v3142, 6
          %v3384 = vrot.slane %v3143, 6
          %v3385 = vsel %vm250, %v3383, %v3384
          %v3387 = vadd.f32 %v3142, %v3385
          %v3388 = vmul.f32 %v3387, 0.71653134
          %v3390 = vrot.slane %v3388, 5
          %v3392 = vadd.f32 %v3381, %v3390
          %v3393 = vadd.f32 %v3382, %v3390
          %v3394 = vrot.slane %v3152, 6
          %v3395 = vrot.slane %v3153, 6
          %v3396 = vsel %vm250, %v3394, %v3395
          %v3398 = vadd.f32 %v3152, %v3396
          %v3399 = vmul.f32 %v3398, 0.7037274
          %v3401 = vrot.slane %v3399, 5
          %3402 = vrot.lane.b32.xlu0 %v3401, 1
          %v3403 = vpop.permute.xlu0 %3402
          %v3405 = vadd.f32 %v3392, %v3403
          %v3406 = vadd.f32 %v3393, %v3403
          %v3407 = vrot.slane %v3160, 6
          %v3408 = vrot.slane %v3161, 6
          %v3409 = vsel %vm250, %v3407, %v3408
          %v3411 = vadd.f32 %v3160, %v3409
          %v3412 = vmul.f32 %v3411, 0.66990674
          %v3414 = vrot.slane %v3412, 5
          %3415 = vrot.lane.b32.xlu0 %v3414, 2
          %v3416 = vpop.permute.xlu0 %3415
          %v3418 = vadd.f32 %v3405, %v3416
          %v3419 = vadd.f32 %v3406, %v3416
          %v3420 = vrot.slane %v3168, 6
          %v3421 = vrot.slane %v3169, 6
          %v3422 = vsel %vm250, %v3420, %v3421
          %v3424 = vadd.f32 %v3168, %v3422
          %v3425 = vmul.f32 %v3424, 0.62412506
          %v3427 = vrot.slane %v3425, 5
          %3428 = vrot.lane.b32.xlu0 %v3427, 3
          %v3429 = vpop.permute.xlu0 %3428
          %v3431 = vadd.f32 %v3418, %v3429
          %v3432 = vadd.f32 %v3419, %v3429
          %v3434 = vrot.slane %v1043, 5
          %3435 = vrot.lane.b32.xlu0 %v3434, 3
          %v3436 = vpop.permute.xlu0 %3435
          %v3438 = vmul.f32 %v3431, %v3436
          %v3439 = vmul.f32 %v3432, %v3436
          %v3440 = vmul.f32 %v3438, 1.442695
          %v3441 = vpow.pop %v3440
          %v3442 = vmul.f32 %v3439, 1.442695
          %v3443 = vpow.pop %v3442
          %3446 = vrot.lane.b32.xlu0 %v3441, 125
          %v3447 = vpop.permute.xlu0 %3446
          %3448 = vrot.lane.b32.xlu0 %v3443, 125
          %v3449 = vpop.permute.xlu0 %3448
          %s3452 = smul.u32 %s3119, 8
          %s3453 = scalar_lea.vmem %s119, %s3452 [#allocation2]
          %vm3454 = vcmask 130051
          %3455 = vst.msk [vmem:[%s3453 - $0x3] sm:$0xf8] %vm3454, %v3447
          %vm3456 = vcmask 124928
          %3457 = vst.msk [vmem:[%s3453 + $0x5] sm:$0x7] %vm3456, %v3449
          %v3458 = vadd.f32 %v3117, %v3441
          %v3459 = vadd.f32 %v3118, %v3443
        $region71: #{tpu_custom_call.1} parent=23 // loop_footer
          %s3116 = sadd.s32 1, %s3112
        $region72: #{tpu_custom_call.1} parent=23 // loop_footer_branch
          %3111 = sbr.rel target = $region68
        $region73: #{tpu_custom_call.1} parent=23 // loop_exit
          _
        loop: start=0, step=1, limit=9
        $region74: #{tpu_custom_call.1} parent=23 // loop_pre_header
          _
        $region75: #{tpu_custom_call.1} parent=23 // loop_header
          %s3461 = sphi 0, %s3465
          %p3462 = scmp.ge.s32.totalorder %s3461, 9
          %v3466 = vphi %v3117, %v3807
          %v3467 = vphi %v3118, %v3808
        $region76: #{tpu_custom_call.1} parent=23 // loop_header_branch
          %3464 = sbr.rel (%p3462) target = $region80
        $region77: #{tpu_custom_call.1} parent=23 // loop_body
          %s3468 = sadd.s32 %s3461, 63
          %s3469 = sadd.s32 %s125, %s3461
          %s3470 = scalar_lea.vmem %s124, %s3469
          %v3471 = vld [vmem:[%s3470] sm:$0xff]
          %v3472 = vld [vmem:[%s3470 + $0x8] sm:$0x3f]
          %3473 = vrot.lane.b32.xlu0 %v152, 3
          %v3474 = vpop.permute.xlu0 %3473
          %3475 = vrot.lane.b32.xlu0 %v153, 3
          %v3476 = vpop.permute.xlu0 %3475
          %v3479 = vsub.f32 %v3471, %v3474
          %v3480 = vsub.f32 %v3472, %v3476
          %3483 = vrot.lane.b32.xlu0 %v3479, 121
          %v3484 = vpop.permute.xlu0 %3483
          %3485 = vrot.lane.b32.xlu0 %v3480, 121
          %v3486 = vpop.permute.xlu0 %3485
          %v3489 = vmul.f32 %v148, %v3484
          %v3490 = vmul.f32 %v149, %v3486
          %v3491 = vmul.f32 %v3489, %v3484
          %v3492 = vmul.f32 %v3490, %v3486
          %3495 = vrot.lane.b32.xlu0 %v3491, 126
          %v3496 = vpop.permute.xlu0 %3495
          %3497 = vrot.lane.b32.xlu0 %v3492, 126
          %v3498 = vpop.permute.xlu0 %3497
          %v3501 = vadd.f32 %v3491, %v3496
          %v3502 = vadd.f32 %v3492, %v3498
          %3503 = vrot.lane.b32.xlu0 %v3491, 124
          %v3504 = vpop.permute.xlu0 %3503
          %3505 = vrot.lane.b32.xlu0 %v3492, 124
          %v3506 = vpop.permute.xlu0 %3505
          %v3509 = vadd.f32 %v3491, %v3504
          %v3510 = vadd.f32 %v3492, %v3506
          %3511 = vrot.lane.b32.xlu0 %v3491, 122
          %v3512 = vpop.permute.xlu0 %3511
          %3513 = vrot.lane.b32.xlu0 %v3492, 122
          %v3514 = vpop.permute.xlu0 %3513
          %v3517 = vadd.f32 %v3491, %v3512
          %v3518 = vadd.f32 %v3492, %v3514
          %v3519 = vadd.f32 %v3491, 0.0
          %v3520 = vadd.f32 %v3492, 0.0
          %v3521 = vmul.f32 %v3501, 0.89483935
          %v3522 = vmul.f32 %v3502, 0.89483935
          %3525 = vrot.lane.b32.xlu0 %v3521, 1
          %v3526 = vpop.permute.xlu0 %3525
          %3527 = vrot.lane.b32.xlu0 %v3522, 1
          %v3528 = vpop.permute.xlu0 %3527
          %v3531 = vadd.f32 %v3519, %v3526
          %v3532 = vadd.f32 %v3520, %v3528
          %v3533 = vmul.f32 %v3509, 0.8007374
          %v3534 = vmul.f32 %v3510, 0.8007374
          %3537 = vrot.lane.b32.xlu0 %v3533, 2
          %v3538 = vpop.permute.xlu0 %3537
          %3539 = vrot.lane.b32.xlu0 %v3534, 2
          %v3540 = vpop.permute.xlu0 %3539
          %v3543 = vadd.f32 %v3531, %v3538
          %v3544 = vadd.f32 %v3532, %v3540
          %v3545 = vmul.f32 %v3517, 0.71653134
          %v3546 = vmul.f32 %v3518, 0.71653134
          %3549 = vrot.lane.b32.xlu0 %v3545, 3
          %v3550 = vpop.permute.xlu0 %3549
          %3551 = vrot.lane.b32.xlu0 %v3546, 3
          %v3552 = vpop.permute.xlu0 %3551
          %v3555 = vadd.f32 %v3543, %v3550
          %v3556 = vadd.f32 %v3544, %v3552
          %v3557 = vrot.slane %v3491, 2
          %v3558 = vrot.slane %v3492, 2
          %v3559 = vsel %vm226, %v3557, %v3558
          %v3562 = vadd.f32 %v3491, %v3559
          %v3563 = vadd.f32 %v3492, %v3558
          %v3564 = vmul.f32 %v3562, 0.89483935
          %v3565 = vmul.f32 %v3563, 0.89483935
          %vm3568 = vcmask 1040384
          %v3569 = vrot.slane %v3564, 7
          %v3570 = vrot.slane %v3565, 7
          %v3571 = vsel %vm3568, %v3569, %v3570
          %v3574 = vadd.f32 %v3555, %v3569
          %v3575 = vadd.f32 %v3556, %v3571
          %v3578 = vrot.slane %v3501, 2
          %v3579 = vrot.slane %v3502, 2
          %v3580 = vsel %vm226, %v3578, %v3579
          %v3583 = vadd.f32 %v3501, %v3580
          %v3584 = vadd.f32 %v3502, %v3579
          %v3585 = vmul.f32 %v3583, 0.8545888
          %v3586 = vmul.f32 %v3584, 0.8545888
          %v3589 = vrot.slane %v3585, 7
          %v3590 = vrot.slane %v3586, 7
          %v3591 = vsel %vm3568, %v3589, %v3590
          %3592 = vrot.lane.b32.xlu0 %v3589, 1
          %v3593 = vpop.permute.xlu0 %3592
          %3594 = vrot.lane.b32.xlu0 %v3591, 1
          %v3595 = vpop.permute.xlu0 %3594
          %v3598 = vadd.f32 %v3574, %v3593
          %v3599 = vadd.f32 %v3575, %v3595
          %v3602 = vrot.slane %v3509, 2
          %v3603 = vrot.slane %v3510, 2
          %v3604 = vsel %vm226, %v3602, %v3603
          %v3607 = vadd.f32 %v3509, %v3604
          %v3608 = vadd.f32 %v3510, %v3603
          %v3609 = vmul.f32 %v3607, 0.7800073
          %v3610 = vmul.f32 %v3608, 0.7800073
          %v3613 = vrot.slane %v3609, 7
          %v3614 = vrot.slane %v3610, 7
          %v3615 = vsel %vm3568, %v3613, %v3614
          %3616 = vrot.lane.b32.xlu0 %v3613, 2
          %v3617 = vpop.permute.xlu0 %3616
          %3618 = vrot.lane.b32.xlu0 %v3615, 2
          %v3619 = vpop.permute.xlu0 %3618
          %v3622 = vadd.f32 %v3598, %v3617
          %v3623 = vadd.f32 %v3599, %v3619
          %v3626 = vrot.slane %v3517, 2
          %v3627 = vrot.slane %v3518, 2
          %v3628 = vsel %vm226, %v3626, %v3627
          %v3631 = vadd.f32 %v3517, %v3628
          %v3632 = vadd.f32 %v3518, %v3627
          %v3633 = vmul.f32 %v3631, 0.7037274
          %v3634 = vmul.f32 %v3632, 0.7037274
          %v3637 = vrot.slane %v3633, 7
          %v3638 = vrot.slane %v3634, 7
          %v3639 = vsel %vm3568, %v3637, %v3638
          %3640 = vrot.lane.b32.xlu0 %v3637, 3
          %v3641 = vpop.permute.xlu0 %3640
          %3642 = vrot.lane.b32.xlu0 %v3639, 3
          %v3643 = vpop.permute.xlu0 %3642
          %v3646 = vadd.f32 %v3622, %v3641
          %v3647 = vadd.f32 %v3623, %v3643
          %v3648 = vrot.slane %v3491, 4
          %v3649 = vrot.slane %v3492, 4
          %v3650 = vsel %vm238, %v3648, %v3649
          %v3653 = vadd.f32 %v3491, %v3650
          %v3654 = vadd.f32 %v3492, %v3649
          %v3655 = vmul.f32 %v3653, 0.8007374
          %v3656 = vmul.f32 %v3654, 0.8007374
          %v3659 = vrot.slane %v3655, 6
          %v3660 = vrot.slane %v3656, 6
          %v3661 = vsel %vm250, %v3659, %v3660
          %v3664 = vadd.f32 %v3646, %v3659
          %v3665 = vadd.f32 %v3647, %v3661
          %v3666 = vrot.slane %v3501, 4
          %v3667 = vrot.slane %v3502, 4
          %v3668 = vsel %vm238, %v3666, %v3667
          %v3671 = vadd.f32 %v3501, %v3668
          %v3672 = vadd.f32 %v3502, %v3667
          %v3673 = vmul.f32 %v3671, 0.7800073
          %v3674 = vmul.f32 %v3672, 0.7800073
          %v3677 = vrot.slane %v3673, 6
          %v3678 = vrot.slane %v3674, 6
          %v3679 = vsel %vm250, %v3677, %v3678
          %3680 = vrot.lane.b32.xlu0 %v3677, 1
          %v3681 = vpop.permute.xlu0 %3680
          %3682 = vrot.lane.b32.xlu0 %v3679, 1
          %v3683 = vpop.permute.xlu0 %3682
          %v3686 = vadd.f32 %v3664, %v3681
          %v3687 = vadd.f32 %v3665, %v3683
          %v3688 = vrot.slane %v3509, 4
          %v3689 = vrot.slane %v3510, 4
          %v3690 = vsel %vm238, %v3688, %v3689
          %v3693 = vadd.f32 %v3509, %v3690
          %v3694 = vadd.f32 %v3510, %v3689
          %v3695 = vmul.f32 %v3693, 0.73032206
          %v3696 = vmul.f32 %v3694, 0.73032206
          %v3699 = vrot.slane %v3695, 6
          %v3700 = vrot.slane %v3696, 6
          %v3701 = vsel %vm250, %v3699, %v3700
          %3702 = vrot.lane.b32.xlu0 %v3699, 2
          %v3703 = vpop.permute.xlu0 %3702
          %3704 = vrot.lane.b32.xlu0 %v3701, 2
          %v3705 = vpop.permute.xlu0 %3704
          %v3708 = vadd.f32 %v3686, %v3703
          %v3709 = vadd.f32 %v3687, %v3705
          %v3710 = vrot.slane %v3517, 4
          %v3711 = vrot.slane %v3518, 4
          %v3712 = vsel %vm238, %v3710, %v3711
          %v3715 = vadd.f32 %v3517, %v3712
          %v3716 = vadd.f32 %v3518, %v3711
          %v3717 = vmul.f32 %v3715, 0.66990674
          %v3718 = vmul.f32 %v3716, 0.66990674
          %v3721 = vrot.slane %v3717, 6
          %v3722 = vrot.slane %v3718, 6
          %v3723 = vsel %vm250, %v3721, %v3722
          %3724 = vrot.lane.b32.xlu0 %v3721, 3
          %v3725 = vpop.permute.xlu0 %3724
          %3726 = vrot.lane.b32.xlu0 %v3723, 3
          %v3727 = vpop.permute.xlu0 %3726
          %v3730 = vadd.f32 %v3708, %v3725
          %v3731 = vadd.f32 %v3709, %v3727
          %v3732 = vrot.slane %v3491, 6
          %v3733 = vrot.slane %v3492, 6
          %v3734 = vsel %vm250, %v3732, %v3733
          %v3736 = vadd.f32 %v3491, %v3734
          %v3737 = vmul.f32 %v3736, 0.71653134
          %v3739 = vrot.slane %v3737, 5
          %v3741 = vadd.f32 %v3730, %v3739
          %v3742 = vadd.f32 %v3731, %v3739
          %v3743 = vrot.slane %v3501, 6
          %v3744 = vrot.slane %v3502, 6
          %v3745 = vsel %vm250, %v3743, %v3744
          %v3747 = vadd.f32 %v3501, %v3745
          %v3748 = vmul.f32 %v3747, 0.7037274
          %v3750 = vrot.slane %v3748, 5
          %3751 = vrot.lane.b32.xlu0 %v3750, 1
          %v3752 = vpop.permute.xlu0 %3751
          %v3754 = vadd.f32 %v3741, %v3752
          %v3755 = vadd.f32 %v3742, %v3752
          %v3756 = vrot.slane %v3509, 6
          %v3757 = vrot.slane %v3510, 6
          %v3758 = vsel %vm250, %v3756, %v3757
          %v3760 = vadd.f32 %v3509, %v3758
          %v3761 = vmul.f32 %v3760, 0.66990674
          %v3763 = vrot.slane %v3761, 5
          %3764 = vrot.lane.b32.xlu0 %v3763, 2
          %v3765 = vpop.permute.xlu0 %3764
          %v3767 = vadd.f32 %v3754, %v3765
          %v3768 = vadd.f32 %v3755, %v3765
          %v3769 = vrot.slane %v3517, 6
          %v3770 = vrot.slane %v3518, 6
          %v3771 = vsel %vm250, %v3769, %v3770
          %v3773 = vadd.f32 %v3517, %v3771
          %v3774 = vmul.f32 %v3773, 0.62412506
          %v3776 = vrot.slane %v3774, 5
          %3777 = vrot.lane.b32.xlu0 %v3776, 3
          %v3778 = vpop.permute.xlu0 %3777
          %v3780 = vadd.f32 %v3767, %v3778
          %v3781 = vadd.f32 %v3768, %v3778
          %v3783 = vrot.slane %v1043, 5
          %3784 = vrot.lane.b32.xlu0 %v3783, 3
          %v3785 = vpop.permute.xlu0 %3784
          %v3787 = vmul.f32 %v3780, %v3785
          %v3788 = vmul.f32 %v3781, %v3785
          %v3789 = vmul.f32 %v3787, 1.442695
          %v3790 = vpow.pop %v3789
          %v3791 = vmul.f32 %v3788, 1.442695
          %v3792 = vpow.pop %v3791
          %3795 = vrot.lane.b32.xlu0 %v3790, 125
          %v3796 = vpop.permute.xlu0 %3795
          %3797 = vrot.lane.b32.xlu0 %v3792, 125
          %v3798 = vpop.permute.xlu0 %3797
          %s3801 = smul.u32 %s3468, 8
          %s3802 = scalar_lea.vmem %s119, %s3801 [#allocation2]
          %vm3803 = vcmask 130051
          %3804 = vst.msk [vmem:[%s3802 - $0x3] sm:$0xf8] %vm3803, %v3796
          %vm3805 = vcmask 124928
          %3806 = vst.msk [vmem:[%s3802 + $0x5] sm:$0x7] %vm3805, %v3798
          %v3807 = vadd.f32 %v3466, %v3790
          %v3808 = vadd.f32 %v3467, %v3792
        $region78: #{tpu_custom_call.1} parent=23 // loop_footer
          %s3465 = sadd.s32 1, %s3461
        $region79: #{tpu_custom_call.1} parent=23 // loop_footer_branch
          %3460 = sbr.rel target = $region75
        $region80: #{tpu_custom_call.1} parent=23 // loop_exit
          _
        loop: start=0, step=1, limit=9
        $region81: #{tpu_custom_call.1} parent=23 // loop_pre_header
          _
        $region82: #{tpu_custom_call.1} parent=23 // loop_header
          %s3810 = sphi 0, %s3814
          %p3811 = scmp.ge.s32.totalorder %s3810, 9
          %v3815 = vphi %v3466, %v4156
          %v3816 = vphi %v3467, %v4157
        $region83: #{tpu_custom_call.1} parent=23 // loop_header_branch
          %3813 = sbr.rel (%p3811) target = $region87
        $region84: #{tpu_custom_call.1} parent=23 // loop_body
          %s3817 = sadd.s32 %s3810, 72
          %s3818 = sadd.s32 %s125, %s3810
          %s3819 = scalar_lea.vmem %s124, %s3818
          %v3820 = vld [vmem:[%s3819] sm:$0xff]
          %v3821 = vld [vmem:[%s3819 + $0x8] sm:$0x3f]
          %3822 = vrot.lane.b32.xlu0 %v152, 4
          %v3823 = vpop.permute.xlu0 %3822
          %3824 = vrot.lane.b32.xlu0 %v153, 4
          %v3825 = vpop.permute.xlu0 %3824
          %v3828 = vsub.f32 %v3820, %v3823
          %v3829 = vsub.f32 %v3821, %v3825
          %3832 = vrot.lane.b32.xlu0 %v3828, 120
          %v3833 = vpop.permute.xlu0 %3832
          %3834 = vrot.lane.b32.xlu0 %v3829, 120
          %v3835 = vpop.permute.xlu0 %3834
          %v3838 = vmul.f32 %v148, %v3833
          %v3839 = vmul.f32 %v149, %v3835
          %v3840 = vmul.f32 %v3838, %v3833
          %v3841 = vmul.f32 %v3839, %v3835
          %3844 = vrot.lane.b32.xlu0 %v3840, 126
          %v3845 = vpop.permute.xlu0 %3844
          %3846 = vrot.lane.b32.xlu0 %v3841, 126
          %v3847 = vpop.permute.xlu0 %3846
          %v3850 = vadd.f32 %v3840, %v3845
          %v3851 = vadd.f32 %v3841, %v3847
          %3852 = vrot.lane.b32.xlu0 %v3840, 124
          %v3853 = vpop.permute.xlu0 %3852
          %3854 = vrot.lane.b32.xlu0 %v3841, 124
          %v3855 = vpop.permute.xlu0 %3854
          %v3858 = vadd.f32 %v3840, %v3853
          %v3859 = vadd.f32 %v3841, %v3855
          %3860 = vrot.lane.b32.xlu0 %v3840, 122
          %v3861 = vpop.permute.xlu0 %3860
          %3862 = vrot.lane.b32.xlu0 %v3841, 122
          %v3863 = vpop.permute.xlu0 %3862
          %v3866 = vadd.f32 %v3840, %v3861
          %v3867 = vadd.f32 %v3841, %v3863
          %v3868 = vadd.f32 %v3840, 0.0
          %v3869 = vadd.f32 %v3841, 0.0
          %v3870 = vmul.f32 %v3850, 0.89483935
          %v3871 = vmul.f32 %v3851, 0.89483935
          %3874 = vrot.lane.b32.xlu0 %v3870, 1
          %v3875 = vpop.permute.xlu0 %3874
          %3876 = vrot.lane.b32.xlu0 %v3871, 1
          %v3877 = vpop.permute.xlu0 %3876
          %v3880 = vadd.f32 %v3868, %v3875
          %v3881 = vadd.f32 %v3869, %v3877
          %v3882 = vmul.f32 %v3858, 0.8007374
          %v3883 = vmul.f32 %v3859, 0.8007374
          %3886 = vrot.lane.b32.xlu0 %v3882, 2
          %v3887 = vpop.permute.xlu0 %3886
          %3888 = vrot.lane.b32.xlu0 %v3883, 2
          %v3889 = vpop.permute.xlu0 %3888
          %v3892 = vadd.f32 %v3880, %v3887
          %v3893 = vadd.f32 %v3881, %v3889
          %v3894 = vmul.f32 %v3866, 0.71653134
          %v3895 = vmul.f32 %v3867, 0.71653134
          %3898 = vrot.lane.b32.xlu0 %v3894, 3
          %v3899 = vpop.permute.xlu0 %3898
          %3900 = vrot.lane.b32.xlu0 %v3895, 3
          %v3901 = vpop.permute.xlu0 %3900
          %v3904 = vadd.f32 %v3892, %v3899
          %v3905 = vadd.f32 %v3893, %v3901
          %v3906 = vrot.slane %v3840, 2
          %v3907 = vrot.slane %v3841, 2
          %v3908 = vsel %vm226, %v3906, %v3907
          %v3911 = vadd.f32 %v3840, %v3908
          %v3912 = vadd.f32 %v3841, %v3907
          %v3913 = vmul.f32 %v3911, 0.89483935
          %v3914 = vmul.f32 %v3912, 0.89483935
          %vm3917 = vcmask 1040384
          %v3918 = vrot.slane %v3913, 7
          %v3919 = vrot.slane %v3914, 7
          %v3920 = vsel %vm3917, %v3918, %v3919
          %v3923 = vadd.f32 %v3904, %v3918
          %v3924 = vadd.f32 %v3905, %v3920
          %v3927 = vrot.slane %v3850, 2
          %v3928 = vrot.slane %v3851, 2
          %v3929 = vsel %vm226, %v3927, %v3928
          %v3932 = vadd.f32 %v3850, %v3929
          %v3933 = vadd.f32 %v3851, %v3928
          %v3934 = vmul.f32 %v3932, 0.8545888
          %v3935 = vmul.f32 %v3933, 0.8545888
          %v3938 = vrot.slane %v3934, 7
          %v3939 = vrot.slane %v3935, 7
          %v3940 = vsel %vm3917, %v3938, %v3939
          %3941 = vrot.lane.b32.xlu0 %v3938, 1
          %v3942 = vpop.permute.xlu0 %3941
          %3943 = vrot.lane.b32.xlu0 %v3940, 1
          %v3944 = vpop.permute.xlu0 %3943
          %v3947 = vadd.f32 %v3923, %v3942
          %v3948 = vadd.f32 %v3924, %v3944
          %v3951 = vrot.slane %v3858, 2
          %v3952 = vrot.slane %v3859, 2
          %v3953 = vsel %vm226, %v3951, %v3952
          %v3956 = vadd.f32 %v3858, %v3953
          %v3957 = vadd.f32 %v3859, %v3952
          %v3958 = vmul.f32 %v3956, 0.7800073
          %v3959 = vmul.f32 %v3957, 0.7800073
          %v3962 = vrot.slane %v3958, 7
          %v3963 = vrot.slane %v3959, 7
          %v3964 = vsel %vm3917, %v3962, %v3963
          %3965 = vrot.lane.b32.xlu0 %v3962, 2
          %v3966 = vpop.permute.xlu0 %3965
          %3967 = vrot.lane.b32.xlu0 %v3964, 2
          %v3968 = vpop.permute.xlu0 %3967
          %v3971 = vadd.f32 %v3947, %v3966
          %v3972 = vadd.f32 %v3948, %v3968
          %v3975 = vrot.slane %v3866, 2
          %v3976 = vrot.slane %v3867, 2
          %v3977 = vsel %vm226, %v3975, %v3976
          %v3980 = vadd.f32 %v3866, %v3977
          %v3981 = vadd.f32 %v3867, %v3976
          %v3982 = vmul.f32 %v3980, 0.7037274
          %v3983 = vmul.f32 %v3981, 0.7037274
          %v3986 = vrot.slane %v3982, 7
          %v3987 = vrot.slane %v3983, 7
          %v3988 = vsel %vm3917, %v3986, %v3987
          %3989 = vrot.lane.b32.xlu0 %v3986, 3
          %v3990 = vpop.permute.xlu0 %3989
          %3991 = vrot.lane.b32.xlu0 %v3988, 3
          %v3992 = vpop.permute.xlu0 %3991
          %v3995 = vadd.f32 %v3971, %v3990
          %v3996 = vadd.f32 %v3972, %v3992
          %v3997 = vrot.slane %v3840, 4
          %v3998 = vrot.slane %v3841, 4
          %v3999 = vsel %vm238, %v3997, %v3998
          %v4002 = vadd.f32 %v3840, %v3999
          %v4003 = vadd.f32 %v3841, %v3998
          %v4004 = vmul.f32 %v4002, 0.8007374
          %v4005 = vmul.f32 %v4003, 0.8007374
          %v4008 = vrot.slane %v4004, 6
          %v4009 = vrot.slane %v4005, 6
          %v4010 = vsel %vm250, %v4008, %v4009
          %v4013 = vadd.f32 %v3995, %v4008
          %v4014 = vadd.f32 %v3996, %v4010
          %v4015 = vrot.slane %v3850, 4
          %v4016 = vrot.slane %v3851, 4
          %v4017 = vsel %vm238, %v4015, %v4016
          %v4020 = vadd.f32 %v3850, %v4017
          %v4021 = vadd.f32 %v3851, %v4016
          %v4022 = vmul.f32 %v4020, 0.7800073
          %v4023 = vmul.f32 %v4021, 0.7800073
          %v4026 = vrot.slane %v4022, 6
          %v4027 = vrot.slane %v4023, 6
          %v4028 = vsel %vm250, %v4026, %v4027
          %4029 = vrot.lane.b32.xlu0 %v4026, 1
          %v4030 = vpop.permute.xlu0 %4029
          %4031 = vrot.lane.b32.xlu0 %v4028, 1
          %v4032 = vpop.permute.xlu0 %4031
          %v4035 = vadd.f32 %v4013, %v4030
          %v4036 = vadd.f32 %v4014, %v4032
          %v4037 = vrot.slane %v3858, 4
          %v4038 = vrot.slane %v3859, 4
          %v4039 = vsel %vm238, %v4037, %v4038
          %v4042 = vadd.f32 %v3858, %v4039
          %v4043 = vadd.f32 %v3859, %v4038
          %v4044 = vmul.f32 %v4042, 0.73032206
          %v4045 = vmul.f32 %v4043, 0.73032206
          %v4048 = vrot.slane %v4044, 6
          %v4049 = vrot.slane %v4045, 6
          %v4050 = vsel %vm250, %v4048, %v4049
          %4051 = vrot.lane.b32.xlu0 %v4048, 2
          %v4052 = vpop.permute.xlu0 %4051
          %4053 = vrot.lane.b32.xlu0 %v4050, 2
          %v4054 = vpop.permute.xlu0 %4053
          %v4057 = vadd.f32 %v4035, %v4052
          %v4058 = vadd.f32 %v4036, %v4054
          %v4059 = vrot.slane %v3866, 4
          %v4060 = vrot.slane %v3867, 4
          %v4061 = vsel %vm238, %v4059, %v4060
          %v4064 = vadd.f32 %v3866, %v4061
          %v4065 = vadd.f32 %v3867, %v4060
          %v4066 = vmul.f32 %v4064, 0.66990674
          %v4067 = vmul.f32 %v4065, 0.66990674
          %v4070 = vrot.slane %v4066, 6
          %v4071 = vrot.slane %v4067, 6
          %v4072 = vsel %vm250, %v4070, %v4071
          %4073 = vrot.lane.b32.xlu0 %v4070, 3
          %v4074 = vpop.permute.xlu0 %4073
          %4075 = vrot.lane.b32.xlu0 %v4072, 3
          %v4076 = vpop.permute.xlu0 %4075
          %v4079 = vadd.f32 %v4057, %v4074
          %v4080 = vadd.f32 %v4058, %v4076
          %v4081 = vrot.slane %v3840, 6
          %v4082 = vrot.slane %v3841, 6
          %v4083 = vsel %vm250, %v4081, %v4082
          %v4085 = vadd.f32 %v3840, %v4083
          %v4086 = vmul.f32 %v4085, 0.71653134
          %v4088 = vrot.slane %v4086, 5
          %v4090 = vadd.f32 %v4079, %v4088
          %v4091 = vadd.f32 %v4080, %v4088
          %v4092 = vrot.slane %v3850, 6
          %v4093 = vrot.slane %v3851, 6
          %v4094 = vsel %vm250, %v4092, %v4093
          %v4096 = vadd.f32 %v3850, %v4094
          %v4097 = vmul.f32 %v4096, 0.7037274
          %v4099 = vrot.slane %v4097, 5
          %4100 = vrot.lane.b32.xlu0 %v4099, 1
          %v4101 = vpop.permute.xlu0 %4100
          %v4103 = vadd.f32 %v4090, %v4101
          %v4104 = vadd.f32 %v4091, %v4101
          %v4105 = vrot.slane %v3858, 6
          %v4106 = vrot.slane %v3859, 6
          %v4107 = vsel %vm250, %v4105, %v4106
          %v4109 = vadd.f32 %v3858, %v4107
          %v4110 = vmul.f32 %v4109, 0.66990674
          %v4112 = vrot.slane %v4110, 5
          %4113 = vrot.lane.b32.xlu0 %v4112, 2
          %v4114 = vpop.permute.xlu0 %4113
          %v4116 = vadd.f32 %v4103, %v4114
          %v4117 = vadd.f32 %v4104, %v4114
          %v4118 = vrot.slane %v3866, 6
          %v4119 = vrot.slane %v3867, 6
          %v4120 = vsel %vm250, %v4118, %v4119
          %v4122 = vadd.f32 %v3866, %v4120
          %v4123 = vmul.f32 %v4122, 0.62412506
          %v4125 = vrot.slane %v4123, 5
          %4126 = vrot.lane.b32.xlu0 %v4125, 3
          %v4127 = vpop.permute.xlu0 %4126
          %v4129 = vadd.f32 %v4116, %v4127
          %v4130 = vadd.f32 %v4117, %v4127
          %v4132 = vrot.slane %v1043, 5
          %4133 = vrot.lane.b32.xlu0 %v4132, 3
          %v4134 = vpop.permute.xlu0 %4133
          %v4136 = vmul.f32 %v4129, %v4134
          %v4137 = vmul.f32 %v4130, %v4134
          %v4138 = vmul.f32 %v4136, 1.442695
          %v4139 = vpow.pop %v4138
          %v4140 = vmul.f32 %v4137, 1.442695
          %v4141 = vpow.pop %v4140
          %4144 = vrot.lane.b32.xlu0 %v4139, 125
          %v4145 = vpop.permute.xlu0 %4144
          %4146 = vrot.lane.b32.xlu0 %v4141, 125
          %v4147 = vpop.permute.xlu0 %4146
          %s4150 = smul.u32 %s3817, 8
          %s4151 = scalar_lea.vmem %s119, %s4150 [#allocation2]
          %vm4152 = vcmask 130051
          %4153 = vst.msk [vmem:[%s4151 - $0x3] sm:$0xf8] %vm4152, %v4145
          %vm4154 = vcmask 124928
          %4155 = vst.msk [vmem:[%s4151 + $0x5] sm:$0x7] %vm4154, %v4147
          %v4156 = vadd.f32 %v3815, %v4139
          %v4157 = vadd.f32 %v3816, %v4141
        $region85: #{tpu_custom_call.1} parent=23 // loop_footer
          %s3814 = sadd.s32 1, %s3810
        $region86: #{tpu_custom_call.1} parent=23 // loop_footer_branch
          %3809 = sbr.rel target = $region82
        $region87: #{tpu_custom_call.1} parent=23 // loop_exit
          _
        %v4158 = vrcp.pop %v3815
        %v4159 = vrcp.pop %v3816
        %v4160 = vld [vmem:[%s119] sm:$0xff]
        %v4161 = vld [vmem:[%s119 + $0x8] sm:$0xff]
        %v4162 = vld [vmem:[%s119 + $0x10] sm:$0xff]
        %v4163 = vld [vmem:[%s119 + $0x18] sm:$0xff]
        %v4164 = vld [vmem:[%s119 + $0x20] sm:$0xff]
        %v4165 = vld [vmem:[%s119 + $0x28] sm:$0xff]
        %v4166 = vld [vmem:[%s119 + $0x30] sm:$0xff]
        %v4167 = vld [vmem:[%s119 + $0x38] sm:$0xff]
        %v4168 = vld [vmem:[%s119 + $0x40] sm:$0xff]
        %v4169 = vld [vmem:[%s119 + $0x48] sm:$0xff]
        %v4170 = vld [vmem:[%s119 + $0x50] sm:$0xff]
        %v4171 = vld [vmem:[%s119 + $0x58] sm:$0xff]
        %v4172 = vld [vmem:[%s119 + $0x60] sm:$0xff]
        %v4173 = vld [vmem:[%s119 + $0x68] sm:$0xff]
        %v4174 = vld [vmem:[%s119 + $0x70] sm:$0xff]
        %v4175 = vld [vmem:[%s119 + $0x78] sm:$0xff]
        %v4176 = vld [vmem:[%s119 + $0x80] sm:$0xff]
        %v4177 = vld [vmem:[%s119 + $0x88] sm:$0xff]
        %v4178 = vld [vmem:[%s119 + $0x90] sm:$0xff]
        %v4179 = vld [vmem:[%s119 + $0x98] sm:$0xff]
        %v4180 = vld [vmem:[%s119 + $0xa0] sm:$0xff]
        %v4181 = vld [vmem:[%s119 + $0xa8] sm:$0xff]
        %v4182 = vld [vmem:[%s119 + $0xb0] sm:$0xff]
        %v4183 = vld [vmem:[%s119 + $0xb8] sm:$0xff]
        %v4184 = vld [vmem:[%s119 + $0xc0] sm:$0xff]
        %v4185 = vld [vmem:[%s119 + $0xc8] sm:$0xff]
        %v4186 = vld [vmem:[%s119 + $0xd0] sm:$0xff]
        %v4187 = vld [vmem:[%s119 + $0xd8] sm:$0xff]
        %v4188 = vld [vmem:[%s119 + $0xe0] sm:$0xff]
        %v4189 = vld [vmem:[%s119 + $0xe8] sm:$0xff]
        %v4190 = vld [vmem:[%s119 + $0xf0] sm:$0xff]
        %v4191 = vld [vmem:[%s119 + $0xf8] sm:$0xff]
        %v4192 = vld [vmem:[%s119 + $0x100] sm:$0xff]
        %v4193 = vld [vmem:[%s119 + $0x108] sm:$0xff]
        %v4194 = vld [vmem:[%s119 + $0x110] sm:$0xff]
        %v4195 = vld [vmem:[%s119 + $0x118] sm:$0xff]
        %v4196 = vld [vmem:[%s119 + $0x120] sm:$0xff]
        %v4197 = vld [vmem:[%s119 + $0x128] sm:$0xff]
        %v4198 = vld [vmem:[%s119 + $0x130] sm:$0xff]
        %v4199 = vld [vmem:[%s119 + $0x138] sm:$0xff]
        %v4200 = vld [vmem:[%s119 + $0x140] sm:$0xff]
        %v4201 = vld [vmem:[%s119 + $0x148] sm:$0xff]
        %v4202 = vld [vmem:[%s119 + $0x150] sm:$0xff]
        %v4203 = vld [vmem:[%s119 + $0x158] sm:$0xff]
        %v4204 = vld [vmem:[%s119 + $0x160] sm:$0xff]
        %v4205 = vld [vmem:[%s119 + $0x168] sm:$0xff]
        %v4206 = vld [vmem:[%s119 + $0x170] sm:$0xff]
        %v4207 = vld [vmem:[%s119 + $0x178] sm:$0xff]
        %v4208 = vld [vmem:[%s119 + $0x180] sm:$0xff]
        %v4209 = vld [vmem:[%s119 + $0x188] sm:$0xff]
        %v4210 = vld [vmem:[%s119 + $0x190] sm:$0xff]
        %v4211 = vld [vmem:[%s119 + $0x198] sm:$0xff]
        %v4212 = vld [vmem:[%s119 + $0x1a0] sm:$0xff]
        %v4213 = vld [vmem:[%s119 + $0x1a8] sm:$0xff]
        %v4214 = vld [vmem:[%s119 + $0x1b0] sm:$0xff]
        %v4215 = vld [vmem:[%s119 + $0x1b8] sm:$0xff]
        %v4216 = vld [vmem:[%s119 + $0x1c0] sm:$0xff]
        %v4217 = vld [vmem:[%s119 + $0x1c8] sm:$0xff]
        %v4218 = vld [vmem:[%s119 + $0x1d0] sm:$0xff]
        %v4219 = vld [vmem:[%s119 + $0x1d8] sm:$0xff]
        %v4220 = vld [vmem:[%s119 + $0x1e0] sm:$0xff]
        %v4221 = vld [vmem:[%s119 + $0x1e8] sm:$0xff]
        %v4222 = vld [vmem:[%s119 + $0x1f0] sm:$0xff]
        %v4223 = vld [vmem:[%s119 + $0x1f8] sm:$0xff]
        %v4224 = vld [vmem:[%s119 + $0x200] sm:$0xff]
        %v4225 = vld [vmem:[%s119 + $0x208] sm:$0xff]
        %v4226 = vld [vmem:[%s119 + $0x210] sm:$0xff]
        %v4227 = vld [vmem:[%s119 + $0x218] sm:$0xff]
        %v4228 = vld [vmem:[%s119 + $0x220] sm:$0xff]
        %v4229 = vld [vmem:[%s119 + $0x228] sm:$0xff]
        %v4230 = vld [vmem:[%s119 + $0x230] sm:$0xff]
        %v4231 = vld [vmem:[%s119 + $0x238] sm:$0xff]
        %v4232 = vld [vmem:[%s119 + $0x240] sm:$0xff]
        %v4233 = vld [vmem:[%s119 + $0x248] sm:$0xff]
        %v4234 = vld [vmem:[%s119 + $0x250] sm:$0xff]
        %v4235 = vld [vmem:[%s119 + $0x258] sm:$0xff]
        %v4236 = vld [vmem:[%s119 + $0x260] sm:$0xff]
        %v4237 = vld [vmem:[%s119 + $0x268] sm:$0xff]
        %v4238 = vld [vmem:[%s119 + $0x270] sm:$0xff]
        %v4239 = vld [vmem:[%s119 + $0x278] sm:$0xff]
        %v4240 = vld [vmem:[%s119 + $0x280] sm:$0xff]
        %v4243 = vrot.slane %v4158, 3
        %v4244 = vrot.slane %v4159, 3
        %v4245 = vsel %vm232, %v4243, %v4244
        %4246 = vrot.lane.b32.xlu0 %v4245, 125
        %v4247 = vpop.permute.xlu0 %4246
        %v4249 = vmul.f32 %v4160, %v4247
        %v4250 = vmul.f32 %v4161, %v4247
        %v4251 = vmul.f32 %v4162, %v4247
        %v4252 = vmul.f32 %v4163, %v4247
        %v4253 = vmul.f32 %v4164, %v4247
        %v4254 = vmul.f32 %v4165, %v4247
        %v4255 = vmul.f32 %v4166, %v4247
        %v4256 = vmul.f32 %v4167, %v4247
        %v4257 = vmul.f32 %v4168, %v4247
        %v4258 = vmul.f32 %v4169, %v4247
        %v4259 = vmul.f32 %v4170, %v4247
        %v4260 = vmul.f32 %v4171, %v4247
        %v4261 = vmul.f32 %v4172, %v4247
        %v4262 = vmul.f32 %v4173, %v4247
        %v4263 = vmul.f32 %v4174, %v4247
        %v4264 = vmul.f32 %v4175, %v4247
        %v4265 = vmul.f32 %v4176, %v4247
        %v4266 = vmul.f32 %v4177, %v4247
        %v4267 = vmul.f32 %v4178, %v4247
        %v4268 = vmul.f32 %v4179, %v4247
        %v4269 = vmul.f32 %v4180, %v4247
        %v4270 = vmul.f32 %v4181, %v4247
        %v4271 = vmul.f32 %v4182, %v4247
        %v4272 = vmul.f32 %v4183, %v4247
        %v4273 = vmul.f32 %v4184, %v4247
        %v4274 = vmul.f32 %v4185, %v4247
        %v4275 = vmul.f32 %v4186, %v4247
        %v4276 = vmul.f32 %v4187, %v4247
        %v4277 = vmul.f32 %v4188, %v4247
        %v4278 = vmul.f32 %v4189, %v4247
        %v4279 = vmul.f32 %v4190, %v4247
        %v4280 = vmul.f32 %v4191, %v4247
        %v4281 = vmul.f32 %v4192, %v4247
        %v4282 = vmul.f32 %v4193, %v4247
        %v4283 = vmul.f32 %v4194, %v4247
        %v4284 = vmul.f32 %v4195, %v4247
        %v4285 = vmul.f32 %v4196, %v4247
        %v4286 = vmul.f32 %v4197, %v4247
        %v4287 = vmul.f32 %v4198, %v4247
        %v4288 = vmul.f32 %v4199, %v4247
        %v4289 = vmul.f32 %v4200, %v4247
        %v4290 = vmul.f32 %v4201, %v4247
        %v4291 = vmul.f32 %v4202, %v4247
        %v4292 = vmul.f32 %v4203, %v4247
        %v4293 = vmul.f32 %v4204, %v4247
        %v4294 = vmul.f32 %v4205, %v4247
        %v4295 = vmul.f32 %v4206, %v4247
        %v4296 = vmul.f32 %v4207, %v4247
        %v4297 = vmul.f32 %v4208, %v4247
        %v4298 = vmul.f32 %v4209, %v4247
        %v4299 = vmul.f32 %v4210, %v4247
        %v4300 = vmul.f32 %v4211, %v4247
        %v4301 = vmul.f32 %v4212, %v4247
        %v4302 = vmul.f32 %v4213, %v4247
        %v4303 = vmul.f32 %v4214, %v4247
        %v4304 = vmul.f32 %v4215, %v4247
        %v4305 = vmul.f32 %v4216, %v4247
        %v4306 = vmul.f32 %v4217, %v4247
        %v4307 = vmul.f32 %v4218, %v4247
        %v4308 = vmul.f32 %v4219, %v4247
        %v4309 = vmul.f32 %v4220, %v4247
        %v4310 = vmul.f32 %v4221, %v4247
        %v4311 = vmul.f32 %v4222, %v4247
        %v4312 = vmul.f32 %v4223, %v4247
        %v4313 = vmul.f32 %v4224, %v4247
        %v4314 = vmul.f32 %v4225, %v4247
        %v4315 = vmul.f32 %v4226, %v4247
        %v4316 = vmul.f32 %v4227, %v4247
        %v4317 = vmul.f32 %v4228, %v4247
        %v4318 = vmul.f32 %v4229, %v4247
        %v4319 = vmul.f32 %v4230, %v4247
        %v4320 = vmul.f32 %v4231, %v4247
        %v4321 = vmul.f32 %v4232, %v4247
        %v4322 = vmul.f32 %v4233, %v4247
        %v4323 = vmul.f32 %v4234, %v4247
        %v4324 = vmul.f32 %v4235, %v4247
        %v4325 = vmul.f32 %v4236, %v4247
        %v4326 = vmul.f32 %v4237, %v4247
        %v4327 = vmul.f32 %v4238, %v4247
        %v4328 = vmul.f32 %v4239, %v4247
        %v4329 = vmul.f32 %v4240, %v4247
        %4330 = vst.msk [vmem:[%s119] sm:$0xff] %vm984, %v4249
        %4331 = vst.msk [vmem:[%s119 + $0x8] sm:$0xff] %vm984, %v4250
        %4332 = vst.msk [vmem:[%s119 + $0x10] sm:$0xff] %vm984, %v4251
        %4333 = vst.msk [vmem:[%s119 + $0x18] sm:$0xff] %vm984, %v4252
        %4334 = vst.msk [vmem:[%s119 + $0x20] sm:$0xff] %vm984, %v4253
        %4335 = vst.msk [vmem:[%s119 + $0x28] sm:$0xff] %vm984, %v4254
        %4336 = vst.msk [vmem:[%s119 + $0x30] sm:$0xff] %vm984, %v4255
        %4337 = vst.msk [vmem:[%s119 + $0x38] sm:$0xff] %vm984, %v4256
        %4338 = vst.msk [vmem:[%s119 + $0x40] sm:$0xff] %vm984, %v4257
        %4339 = vst.msk [vmem:[%s119 + $0x48] sm:$0xff] %vm984, %v4258
        %4340 = vst.msk [vmem:[%s119 + $0x50] sm:$0xff] %vm984, %v4259
        %4341 = vst.msk [vmem:[%s119 + $0x58] sm:$0xff] %vm984, %v4260
        %4342 = vst.msk [vmem:[%s119 + $0x60] sm:$0xff] %vm984, %v4261
        %4343 = vst.msk [vmem:[%s119 + $0x68] sm:$0xff] %vm984, %v4262
        %4344 = vst.msk [vmem:[%s119 + $0x70] sm:$0xff] %vm984, %v4263
        %4345 = vst.msk [vmem:[%s119 + $0x78] sm:$0xff] %vm984, %v4264
        %4346 = vst.msk [vmem:[%s119 + $0x80] sm:$0xff] %vm984, %v4265
        %4347 = vst.msk [vmem:[%s119 + $0x88] sm:$0xff] %vm984, %v4266
        %4348 = vst.msk [vmem:[%s119 + $0x90] sm:$0xff] %vm984, %v4267
        %4349 = vst.msk [vmem:[%s119 + $0x98] sm:$0xff] %vm984, %v4268
        %4350 = vst.msk [vmem:[%s119 + $0xa0] sm:$0xff] %vm984, %v4269
        %4351 = vst.msk [vmem:[%s119 + $0xa8] sm:$0xff] %vm984, %v4270
        %4352 = vst.msk [vmem:[%s119 + $0xb0] sm:$0xff] %vm984, %v4271
        %4353 = vst.msk [vmem:[%s119 + $0xb8] sm:$0xff] %vm984, %v4272
        %4354 = vst.msk [vmem:[%s119 + $0xc0] sm:$0xff] %vm984, %v4273
        %4355 = vst.msk [vmem:[%s119 + $0xc8] sm:$0xff] %vm984, %v4274
        %4356 = vst.msk [vmem:[%s119 + $0xd0] sm:$0xff] %vm984, %v4275
        %4357 = vst.msk [vmem:[%s119 + $0xd8] sm:$0xff] %vm984, %v4276
        %4358 = vst.msk [vmem:[%s119 + $0xe0] sm:$0xff] %vm984, %v4277
        %4359 = vst.msk [vmem:[%s119 + $0xe8] sm:$0xff] %vm984, %v4278
        %4360 = vst.msk [vmem:[%s119 + $0xf0] sm:$0xff] %vm984, %v4279
        %4361 = vst.msk [vmem:[%s119 + $0xf8] sm:$0xff] %vm984, %v4280
        %4362 = vst.msk [vmem:[%s119 + $0x100] sm:$0xff] %vm984, %v4281
        %4363 = vst.msk [vmem:[%s119 + $0x108] sm:$0xff] %vm984, %v4282
        %4364 = vst.msk [vmem:[%s119 + $0x110] sm:$0xff] %vm984, %v4283
        %4365 = vst.msk [vmem:[%s119 + $0x118] sm:$0xff] %vm984, %v4284
        %4366 = vst.msk [vmem:[%s119 + $0x120] sm:$0xff] %vm984, %v4285
        %4367 = vst.msk [vmem:[%s119 + $0x128] sm:$0xff] %vm984, %v4286
        %4368 = vst.msk [vmem:[%s119 + $0x130] sm:$0xff] %vm984, %v4287
        %4369 = vst.msk [vmem:[%s119 + $0x138] sm:$0xff] %vm984, %v4288
        %4370 = vst.msk [vmem:[%s119 + $0x140] sm:$0xff] %vm984, %v4289
        %4371 = vst.msk [vmem:[%s119 + $0x148] sm:$0xff] %vm984, %v4290
        %4372 = vst.msk [vmem:[%s119 + $0x150] sm:$0xff] %vm984, %v4291
        %4373 = vst.msk [vmem:[%s119 + $0x158] sm:$0xff] %vm984, %v4292
        %4374 = vst.msk [vmem:[%s119 + $0x160] sm:$0xff] %vm984, %v4293
        %4375 = vst.msk [vmem:[%s119 + $0x168] sm:$0xff] %vm984, %v4294
        %4376 = vst.msk [vmem:[%s119 + $0x170] sm:$0xff] %vm984, %v4295
        %4377 = vst.msk [vmem:[%s119 + $0x178] sm:$0xff] %vm984, %v4296
        %4378 = vst.msk [vmem:[%s119 + $0x180] sm:$0xff] %vm984, %v4297
        %4379 = vst.msk [vmem:[%s119 + $0x188] sm:$0xff] %vm984, %v4298
        %4380 = vst.msk [vmem:[%s119 + $0x190] sm:$0xff] %vm984, %v4299
        %4381 = vst.msk [vmem:[%s119 + $0x198] sm:$0xff] %vm984, %v4300
        %4382 = vst.msk [vmem:[%s119 + $0x1a0] sm:$0xff] %vm984, %v4301
        %4383 = vst.msk [vmem:[%s119 + $0x1a8] sm:$0xff] %vm984, %v4302
        %4384 = vst.msk [vmem:[%s119 + $0x1b0] sm:$0xff] %vm984, %v4303
        %4385 = vst.msk [vmem:[%s119 + $0x1b8] sm:$0xff] %vm984, %v4304
        %4386 = vst.msk [vmem:[%s119 + $0x1c0] sm:$0xff] %vm984, %v4305
        %4387 = vst.msk [vmem:[%s119 + $0x1c8] sm:$0xff] %vm984, %v4306
        %4388 = vst.msk [vmem:[%s119 + $0x1d0] sm:$0xff] %vm984, %v4307
        %4389 = vst.msk [vmem:[%s119 + $0x1d8] sm:$0xff] %vm984, %v4308
        %4390 = vst.msk [vmem:[%s119 + $0x1e0] sm:$0xff] %vm984, %v4309
        %4391 = vst.msk [vmem:[%s119 + $0x1e8] sm:$0xff] %vm984, %v4310
        %4392 = vst.msk [vmem:[%s119 + $0x1f0] sm:$0xff] %vm984, %v4311
        %4393 = vst.msk [vmem:[%s119 + $0x1f8] sm:$0xff] %vm984, %v4312
        %4394 = vst.msk [vmem:[%s119 + $0x200] sm:$0xff] %vm984, %v4313
        %4395 = vst.msk [vmem:[%s119 + $0x208] sm:$0xff] %vm984, %v4314
        %4396 = vst.msk [vmem:[%s119 + $0x210] sm:$0xff] %vm984, %v4315
        %4397 = vst.msk [vmem:[%s119 + $0x218] sm:$0xff] %vm984, %v4316
        %4398 = vst.msk [vmem:[%s119 + $0x220] sm:$0xff] %vm984, %v4317
        %4399 = vst.msk [vmem:[%s119 + $0x228] sm:$0xff] %vm984, %v4318
        %4400 = vst.msk [vmem:[%s119 + $0x230] sm:$0xff] %vm984, %v4319
        %4401 = vst.msk [vmem:[%s119 + $0x238] sm:$0xff] %vm984, %v4320
        %4402 = vst.msk [vmem:[%s119 + $0x240] sm:$0xff] %vm984, %v4321
        %4403 = vst.msk [vmem:[%s119 + $0x248] sm:$0xff] %vm984, %v4322
        %4404 = vst.msk [vmem:[%s119 + $0x250] sm:$0xff] %vm984, %v4323
        %4405 = vst.msk [vmem:[%s119 + $0x258] sm:$0xff] %vm984, %v4324
        %4406 = vst.msk [vmem:[%s119 + $0x260] sm:$0xff] %vm984, %v4325
        %4407 = vst.msk [vmem:[%s119 + $0x268] sm:$0xff] %vm984, %v4326
        %4408 = vst.msk [vmem:[%s119 + $0x270] sm:$0xff] %vm984, %v4327
        %4409 = vst.msk [vmem:[%s119 + $0x278] sm:$0xff] %vm984, %v4328
        %4410 = vst.msk [vmem:[%s119 + $0x280] sm:$0xff] %vm984, %v4329
        %s4411 = sand.u32 %s60, 1
        %s4412 = sand.u32 %s60, 1
        %s4413 = smul.addr %s4412, 648
        %s4414 = scalar_lea.vmem [#allocation2], %s4413
        // Predicated region
        $region88: #{tpu_custom_call.1} parent=23 // pred_check
          %p4415 = pneg %p70
        $region89: #{tpu_custom_call.1} parent=23 // pred_check_branch
          %4417 = sbr.rel (%p4415) target = $region91
        $region90: #{tpu_custom_call.1} parent=23 // pred_region
          %s4418 = smul.addr %s16, 162
          %s4419 = sadd.s32 %s17, %s4418
          %s4420 = smul.addr %s4419, 8
          %s4421 = scalar_lea.vmem %s1, %s4420
          // Predicated region
          $region92: #{tpu_custom_call.1} parent=90 // pred_check
            _
          $region93: #{tpu_custom_call.1} parent=90 // pred_check_branch
            %4423 = sbr.rel (0) target = $region95
          $region94: #{tpu_custom_call.1} parent=90 // pred_region
            // Predicated region
            $region96: #{tpu_custom_call.1} parent=94 // pred_check
              _
            $region97: #{tpu_custom_call.1} parent=94 // pred_check_branch
              %4425 = sbr.rel (0) target = $region99
            $region98: #{tpu_custom_call.1} parent=94 // pred_region
              // Predicated region
              $region111: #{tpu_custom_call.1} parent=98 // pred_check
                _
              $region112: #{tpu_custom_call.1} parent=98 // pred_check_branch
                %4601 = sbr.rel (0) target = $region114
              $region113: #{tpu_custom_call.1} parent=98 // pred_region
                loop: start=0, step=1, limit=1
                $region115: #{tpu_custom_call.1} parent=113 // loop_pre_header
                  _
                $region116: #{tpu_custom_call.1} parent=113 // loop_header
                  %s4603 = sphi 0, %s4607
                  %p4604 = scmp.ge.s32.totalorder %s4603, 1
                  %s4608 = sphi %s4414, %s4414
                  %s4609 = sphi %s4421, %s4421
                $region117: #{tpu_custom_call.1} parent=113 // loop_header_branch
                  %4606 = sbr.rel (%p4604) target = $region121
                $region118: #{tpu_custom_call.1} parent=113 // loop_body
                  %v4610 = vld [vmem:[%s4608] sm:$0xff]
                  %4611 = vst [vmem:[%s4609] sm:$0xff] %v4610
                  %v4612 = vld [vmem:[%s4608 + $0x8] sm:$0xff]
                  %4613 = vst [vmem:[%s4609 + $0x10] sm:$0xff] %v4612
                  %v4614 = vld [vmem:[%s4608 + $0x10] sm:$0xff]
                  %4615 = vst [vmem:[%s4609 + $0x20] sm:$0xff] %v4614
                  %v4616 = vld [vmem:[%s4608 + $0x18] sm:$0xff]
                  %4617 = vst [vmem:[%s4609 + $0x30] sm:$0xff] %v4616
                  %v4618 = vld [vmem:[%s4608 + $0x20] sm:$0xff]
                  %4619 = vst [vmem:[%s4609 + $0x40] sm:$0xff] %v4618
                  %v4620 = vld [vmem:[%s4608 + $0x28] sm:$0xff]
                  %4621 = vst [vmem:[%s4609 + $0x50] sm:$0xff] %v4620
                  %v4622 = vld [vmem:[%s4608 + $0x30] sm:$0xff]
                  %4623 = vst [vmem:[%s4609 + $0x60] sm:$0xff] %v4622
                  %v4624 = vld [vmem:[%s4608 + $0x38] sm:$0xff]
                  %4625 = vst [vmem:[%s4609 + $0x70] sm:$0xff] %v4624
                  %v4626 = vld [vmem:[%s4608 + $0x40] sm:$0xff]
                  %4627 = vst [vmem:[%s4609 + $0x80] sm:$0xff] %v4626
                  %v4628 = vld [vmem:[%s4608 + $0x48] sm:$0xff]
                  %4629 = vst [vmem:[%s4609 + $0x90] sm:$0xff] %v4628
                  %v4630 = vld [vmem:[%s4608 + $0x50] sm:$0xff]
                  %4631 = vst [vmem:[%s4609 + $0xa0] sm:$0xff] %v4630
                  %v4632 = vld [vmem:[%s4608 + $0x58] sm:$0xff]
                  %4633 = vst [vmem:[%s4609 + $0xb0] sm:$0xff] %v4632
                  %v4634 = vld [vmem:[%s4608 + $0x60] sm:$0xff]
                  %4635 = vst [vmem:[%s4609 + $0xc0] sm:$0xff] %v4634
                  %v4636 = vld [vmem:[%s4608 + $0x68] sm:$0xff]
                  %4637 = vst [vmem:[%s4609 + $0xd0] sm:$0xff] %v4636
                  %v4638 = vld [vmem:[%s4608 + $0x70] sm:$0xff]
                  %4639 = vst [vmem:[%s4609 + $0xe0] sm:$0xff] %v4638
                  %v4640 = vld [vmem:[%s4608 + $0x78] sm:$0xff]
                  %4641 = vst [vmem:[%s4609 + $0xf0] sm:$0xff] %v4640
                  %v4642 = vld [vmem:[%s4608 + $0x80] sm:$0xff]
                  %4643 = vst [vmem:[%s4609 + $0x100] sm:$0xff] %v4642
                  %v4644 = vld [vmem:[%s4608 + $0x88] sm:$0xff]
                  %4645 = vst [vmem:[%s4609 + $0x110] sm:$0xff] %v4644
                  %v4646 = vld [vmem:[%s4608 + $0x90] sm:$0xff]
                  %4647 = vst [vmem:[%s4609 + $0x120] sm:$0xff] %v4646
                  %v4648 = vld [vmem:[%s4608 + $0x98] sm:$0xff]
                  %4649 = vst [vmem:[%s4609 + $0x130] sm:$0xff] %v4648
                  %v4650 = vld [vmem:[%s4608 + $0xa0] sm:$0xff]
                  %4651 = vst [vmem:[%s4609 + $0x140] sm:$0xff] %v4650
                  %v4652 = vld [vmem:[%s4608 + $0xa8] sm:$0xff]
                  %4653 = vst [vmem:[%s4609 + $0x150] sm:$0xff] %v4652
                  %v4654 = vld [vmem:[%s4608 + $0xb0] sm:$0xff]
                  %4655 = vst [vmem:[%s4609 + $0x160] sm:$0xff] %v4654
                  %v4656 = vld [vmem:[%s4608 + $0xb8] sm:$0xff]
                  %4657 = vst [vmem:[%s4609 + $0x170] sm:$0xff] %v4656
                  %v4658 = vld [vmem:[%s4608 + $0xc0] sm:$0xff]
                  %4659 = vst [vmem:[%s4609 + $0x180] sm:$0xff] %v4658
                  %v4660 = vld [vmem:[%s4608 + $0xc8] sm:$0xff]
                  %4661 = vst [vmem:[%s4609 + $0x190] sm:$0xff] %v4660
                  %v4662 = vld [vmem:[%s4608 + $0xd0] sm:$0xff]
                  %4663 = vst [vmem:[%s4609 + $0x1a0] sm:$0xff] %v4662
                  %v4664 = vld [vmem:[%s4608 + $0xd8] sm:$0xff]
                  %4665 = vst [vmem:[%s4609 + $0x1b0] sm:$0xff] %v4664
                  %v4666 = vld [vmem:[%s4608 + $0xe0] sm:$0xff]
                  %4667 = vst [vmem:[%s4609 + $0x1c0] sm:$0xff] %v4666
                  %v4668 = vld [vmem:[%s4608 + $0xe8] sm:$0xff]
                  %4669 = vst [vmem:[%s4609 + $0x1d0] sm:$0xff] %v4668
                  %v4670 = vld [vmem:[%s4608 + $0xf0] sm:$0xff]
                  %4671 = vst [vmem:[%s4609 + $0x1e0] sm:$0xff] %v4670
                  %v4672 = vld [vmem:[%s4608 + $0xf8] sm:$0xff]
                  %4673 = vst [vmem:[%s4609 + $0x1f0] sm:$0xff] %v4672
                  %v4674 = vld [vmem:[%s4608 + $0x100] sm:$0xff]
                  %4675 = vst [vmem:[%s4609 + $0x200] sm:$0xff] %v4674
                  %v4676 = vld [vmem:[%s4608 + $0x108] sm:$0xff]
                  %4677 = vst [vmem:[%s4609 + $0x210] sm:$0xff] %v4676
                  %v4678 = vld [vmem:[%s4608 + $0x110] sm:$0xff]
                  %4679 = vst [vmem:[%s4609 + $0x220] sm:$0xff] %v4678
                  %v4680 = vld [vmem:[%s4608 + $0x118] sm:$0xff]
                  %4681 = vst [vmem:[%s4609 + $0x230] sm:$0xff] %v4680
                  %v4682 = vld [vmem:[%s4608 + $0x120] sm:$0xff]
                  %4683 = vst [vmem:[%s4609 + $0x240] sm:$0xff] %v4682
                  %v4684 = vld [vmem:[%s4608 + $0x128] sm:$0xff]
                  %4685 = vst [vmem:[%s4609 + $0x250] sm:$0xff] %v4684
                  %v4686 = vld [vmem:[%s4608 + $0x130] sm:$0xff]
                  %4687 = vst [vmem:[%s4609 + $0x260] sm:$0xff] %v4686
                  %v4688 = vld [vmem:[%s4608 + $0x138] sm:$0xff]
                  %4689 = vst [vmem:[%s4609 + $0x270] sm:$0xff] %v4688
                  %v4690 = vld [vmem:[%s4608 + $0x140] sm:$0xff]
                  %4691 = vst [vmem:[%s4609 + $0x280] sm:$0xff] %v4690
                  %v4692 = vld [vmem:[%s4608 + $0x148] sm:$0xff]
                  %4693 = vst [vmem:[%s4609 + $0x290] sm:$0xff] %v4692
                  %v4694 = vld [vmem:[%s4608 + $0x150] sm:$0xff]
                  %4695 = vst [vmem:[%s4609 + $0x2a0] sm:$0xff] %v4694
                  %v4696 = vld [vmem:[%s4608 + $0x158] sm:$0xff]
                  %4697 = vst [vmem:[%s4609 + $0x2b0] sm:$0xff] %v4696
                  %v4698 = vld [vmem:[%s4608 + $0x160] sm:$0xff]
                  %4699 = vst [vmem:[%s4609 + $0x2c0] sm:$0xff] %v4698
                  %v4700 = vld [vmem:[%s4608 + $0x168] sm:$0xff]
                  %4701 = vst [vmem:[%s4609 + $0x2d0] sm:$0xff] %v4700
                  %v4702 = vld [vmem:[%s4608 + $0x170] sm:$0xff]
                  %4703 = vst [vmem:[%s4609 + $0x2e0] sm:$0xff] %v4702
                  %v4704 = vld [vmem:[%s4608 + $0x178] sm:$0xff]
                  %4705 = vst [vmem:[%s4609 + $0x2f0] sm:$0xff] %v4704
                  %v4706 = vld [vmem:[%s4608 + $0x180] sm:$0xff]
                  %4707 = vst [vmem:[%s4609 + $0x300] sm:$0xff] %v4706
                  %v4708 = vld [vmem:[%s4608 + $0x188] sm:$0xff]
                  %4709 = vst [vmem:[%s4609 + $0x310] sm:$0xff] %v4708
                  %v4710 = vld [vmem:[%s4608 + $0x190] sm:$0xff]
                  %4711 = vst [vmem:[%s4609 + $0x320] sm:$0xff] %v4710
                  %v4712 = vld [vmem:[%s4608 + $0x198] sm:$0xff]
                  %4713 = vst [vmem:[%s4609 + $0x330] sm:$0xff] %v4712
                  %v4714 = vld [vmem:[%s4608 + $0x1a0] sm:$0xff]
                  %4715 = vst [vmem:[%s4609 + $0x340] sm:$0xff] %v4714
                  %v4716 = vld [vmem:[%s4608 + $0x1a8] sm:$0xff]
                  %4717 = vst [vmem:[%s4609 + $0x350] sm:$0xff] %v4716
                  %v4718 = vld [vmem:[%s4608 + $0x1b0] sm:$0xff]
                  %4719 = vst [vmem:[%s4609 + $0x360] sm:$0xff] %v4718
                  %v4720 = vld [vmem:[%s4608 + $0x1b8] sm:$0xff]
                  %4721 = vst [vmem:[%s4609 + $0x370] sm:$0xff] %v4720
                  %v4722 = vld [vmem:[%s4608 + $0x1c0] sm:$0xff]
                  %4723 = vst [vmem:[%s4609 + $0x380] sm:$0xff] %v4722
                  %v4724 = vld [vmem:[%s4608 + $0x1c8] sm:$0xff]
                  %4725 = vst [vmem:[%s4609 + $0x390] sm:$0xff] %v4724
                  %v4726 = vld [vmem:[%s4608 + $0x1d0] sm:$0xff]
                  %4727 = vst [vmem:[%s4609 + $0x3a0] sm:$0xff] %v4726
                  %v4728 = vld [vmem:[%s4608 + $0x1d8] sm:$0xff]
                  %4729 = vst [vmem:[%s4609 + $0x3b0] sm:$0xff] %v4728
                  %v4730 = vld [vmem:[%s4608 + $0x1e0] sm:$0xff]
                  %4731 = vst [vmem:[%s4609 + $0x3c0] sm:$0xff] %v4730
                  %v4732 = vld [vmem:[%s4608 + $0x1e8] sm:$0xff]
                  %4733 = vst [vmem:[%s4609 + $0x3d0] sm:$0xff] %v4732
                  %v4734 = vld [vmem:[%s4608 + $0x1f0] sm:$0xff]
                  %4735 = vst [vmem:[%s4609 + $0x3e0] sm:$0xff] %v4734
                  %v4736 = vld [vmem:[%s4608 + $0x1f8] sm:$0xff]
                  %4737 = vst [vmem:[%s4609 + $0x3f0] sm:$0xff] %v4736
                  %v4738 = vld [vmem:[%s4608 + $0x200] sm:$0xff]
                  %4739 = vst [vmem:[%s4609 + $0x400] sm:$0xff] %v4738
                  %v4740 = vld [vmem:[%s4608 + $0x208] sm:$0xff]
                  %4741 = vst [vmem:[%s4609 + $0x410] sm:$0xff] %v4740
                  %v4742 = vld [vmem:[%s4608 + $0x210] sm:$0xff]
                  %4743 = vst [vmem:[%s4609 + $0x420] sm:$0xff] %v4742
                  %v4744 = vld [vmem:[%s4608 + $0x218] sm:$0xff]
                  %4745 = vst [vmem:[%s4609 + $0x430] sm:$0xff] %v4744
                  %v4746 = vld [vmem:[%s4608 + $0x220] sm:$0xff]
                  %4747 = vst [vmem:[%s4609 + $0x440] sm:$0xff] %v4746
                  %v4748 = vld [vmem:[%s4608 + $0x228] sm:$0xff]
                  %4749 = vst [vmem:[%s4609 + $0x450] sm:$0xff] %v4748
                  %v4750 = vld [vmem:[%s4608 + $0x230] sm:$0xff]
                  %4751 = vst [vmem:[%s4609 + $0x460] sm:$0xff] %v4750
                  %v4752 = vld [vmem:[%s4608 + $0x238] sm:$0xff]
                  %4753 = vst [vmem:[%s4609 + $0x470] sm:$0xff] %v4752
                  %v4754 = vld [vmem:[%s4608 + $0x240] sm:$0xff]
                  %4755 = vst [vmem:[%s4609 + $0x480] sm:$0xff] %v4754
                  %v4756 = vld [vmem:[%s4608 + $0x248] sm:$0xff]
                  %4757 = vst [vmem:[%s4609 + $0x490] sm:$0xff] %v4756
                  %v4758 = vld [vmem:[%s4608 + $0x250] sm:$0xff]
                  %4759 = vst [vmem:[%s4609 + $0x4a0] sm:$0xff] %v4758
                  %v4760 = vld [vmem:[%s4608 + $0x258] sm:$0xff]
                  %4761 = vst [vmem:[%s4609 + $0x4b0] sm:$0xff] %v4760
                  %v4762 = vld [vmem:[%s4608 + $0x260] sm:$0xff]
                  %4763 = vst [vmem:[%s4609 + $0x4c0] sm:$0xff] %v4762
                  %v4764 = vld [vmem:[%s4608 + $0x268] sm:$0xff]
                  %4765 = vst [vmem:[%s4609 + $0x4d0] sm:$0xff] %v4764
                  %v4766 = vld [vmem:[%s4608 + $0x270] sm:$0xff]
                  %4767 = vst [vmem:[%s4609 + $0x4e0] sm:$0xff] %v4766
                  %v4768 = vld [vmem:[%s4608 + $0x278] sm:$0xff]
                  %4769 = vst [vmem:[%s4609 + $0x4f0] sm:$0xff] %v4768
                  %v4770 = vld [vmem:[%s4608 + $0x280] sm:$0xff]
                  %4771 = vst [vmem:[%s4609 + $0x500] sm:$0xff] %v4770
                $region119: #{tpu_custom_call.1} parent=113 // loop_footer
                  %s4607 = sadd.s32 1, %s4603
                $region120: #{tpu_custom_call.1} parent=113 // loop_footer_branch
                  %4602 = sbr.rel target = $region116
                $region121: #{tpu_custom_call.1} parent=113 // loop_exit
                  _
              $region114: #{tpu_custom_call.1} parent=98 // pred_fallthru
                _
              // Predicated region
              $region122: #{tpu_custom_call.1} parent=98 // pred_check
                _
              $region123: #{tpu_custom_call.1} parent=98 // pred_check_branch
                %4773 = sbr.rel target = $region125
              $region124: #{tpu_custom_call.1} parent=98 // pred_region
                _
              $region125: #{tpu_custom_call.1} parent=98 // pred_fallthru
                _
            $region99: #{tpu_custom_call.1} parent=94 // pred_fallthru
              _
            // Predicated region
            $region100: #{tpu_custom_call.1} parent=94 // pred_check
              _
            $region101: #{tpu_custom_call.1} parent=94 // pred_check_branch
              %4427 = sbr.rel target = $region103
            $region102: #{tpu_custom_call.1} parent=94 // pred_region
              %s4429 = ssub.s32 256, 1
              loop: start=0, step=1, limit=1
              $region104: #{tpu_custom_call.1} parent=102 // loop_pre_header
                _
              $region105: #{tpu_custom_call.1} parent=102 // loop_header
                %s4431 = sphi 0, %s4435
                %p4432 = scmp.ge.s32.totalorder %s4431, 1
                %s4436 = sphi %s4414, %s4414
                %s4437 = sphi %s4421, %s4421
              $region106: #{tpu_custom_call.1} parent=102 // loop_header_branch
                %4434 = sbr.rel (%p4432) target = $region110
              $region107: #{tpu_custom_call.1} parent=102 // loop_body
                %v4438 = vld [vmem:[%s4436] sm:%s4429]
                %4439 = vst [vmem:[%s4437] sm:%s4429] %v4438
                %v4440 = vld [vmem:[%s4436 + $0x8] sm:%s4429]
                %4441 = vst [vmem:[%s4437 + $0x10] sm:%s4429] %v4440
                %v4442 = vld [vmem:[%s4436 + $0x10] sm:%s4429]
                %4443 = vst [vmem:[%s4437 + $0x20] sm:%s4429] %v4442
                %v4444 = vld [vmem:[%s4436 + $0x18] sm:%s4429]
                %4445 = vst [vmem:[%s4437 + $0x30] sm:%s4429] %v4444
                %v4446 = vld [vmem:[%s4436 + $0x20] sm:%s4429]
                %4447 = vst [vmem:[%s4437 + $0x40] sm:%s4429] %v4446
                %v4448 = vld [vmem:[%s4436 + $0x28] sm:%s4429]
                %4449 = vst [vmem:[%s4437 + $0x50] sm:%s4429] %v4448
                %v4450 = vld [vmem:[%s4436 + $0x30] sm:%s4429]
                %4451 = vst [vmem:[%s4437 + $0x60] sm:%s4429] %v4450
                %v4452 = vld [vmem:[%s4436 + $0x38] sm:%s4429]
                %4453 = vst [vmem:[%s4437 + $0x70] sm:%s4429] %v4452
                %v4454 = vld [vmem:[%s4436 + $0x40] sm:%s4429]
                %4455 = vst [vmem:[%s4437 + $0x80] sm:%s4429] %v4454
                %v4456 = vld [vmem:[%s4436 + $0x48] sm:%s4429]
                %4457 = vst [vmem:[%s4437 + $0x90] sm:%s4429] %v4456
                %v4458 = vld [vmem:[%s4436 + $0x50] sm:%s4429]
                %4459 = vst [vmem:[%s4437 + $0xa0] sm:%s4429] %v4458
                %v4460 = vld [vmem:[%s4436 + $0x58] sm:%s4429]
                %4461 = vst [vmem:[%s4437 + $0xb0] sm:%s4429] %v4460
                %v4462 = vld [vmem:[%s4436 + $0x60] sm:%s4429]
                %4463 = vst [vmem:[%s4437 + $0xc0] sm:%s4429] %v4462
                %v4464 = vld [vmem:[%s4436 + $0x68] sm:%s4429]
                %4465 = vst [vmem:[%s4437 + $0xd0] sm:%s4429] %v4464
                %v4466 = vld [vmem:[%s4436 + $0x70] sm:%s4429]
                %4467 = vst [vmem:[%s4437 + $0xe0] sm:%s4429] %v4466
                %v4468 = vld [vmem:[%s4436 + $0x78] sm:%s4429]
                %4469 = vst [vmem:[%s4437 + $0xf0] sm:%s4429] %v4468
                %v4470 = vld [vmem:[%s4436 + $0x80] sm:%s4429]
                %4471 = vst [vmem:[%s4437 + $0x100] sm:%s4429] %v4470
                %v4472 = vld [vmem:[%s4436 + $0x88] sm:%s4429]
                %4473 = vst [vmem:[%s4437 + $0x110] sm:%s4429] %v4472
                %v4474 = vld [vmem:[%s4436 + $0x90] sm:%s4429]
                %4475 = vst [vmem:[%s4437 + $0x120] sm:%s4429] %v4474
                %v4476 = vld [vmem:[%s4436 + $0x98] sm:%s4429]
                %4477 = vst [vmem:[%s4437 + $0x130] sm:%s4429] %v4476
                %v4478 = vld [vmem:[%s4436 + $0xa0] sm:%s4429]
                %4479 = vst [vmem:[%s4437 + $0x140] sm:%s4429] %v4478
                %v4480 = vld [vmem:[%s4436 + $0xa8] sm:%s4429]
                %4481 = vst [vmem:[%s4437 + $0x150] sm:%s4429] %v4480
                %v4482 = vld [vmem:[%s4436 + $0xb0] sm:%s4429]
                %4483 = vst [vmem:[%s4437 + $0x160] sm:%s4429] %v4482
                %v4484 = vld [vmem:[%s4436 + $0xb8] sm:%s4429]
                %4485 = vst [vmem:[%s4437 + $0x170] sm:%s4429] %v4484
                %v4486 = vld [vmem:[%s4436 + $0xc0] sm:%s4429]
                %4487 = vst [vmem:[%s4437 + $0x180] sm:%s4429] %v4486
                %v4488 = vld [vmem:[%s4436 + $0xc8] sm:%s4429]
                %4489 = vst [vmem:[%s4437 + $0x190] sm:%s4429] %v4488
                %v4490 = vld [vmem:[%s4436 + $0xd0] sm:%s4429]
                %4491 = vst [vmem:[%s4437 + $0x1a0] sm:%s4429] %v4490
                %v4492 = vld [vmem:[%s4436 + $0xd8] sm:%s4429]
                %4493 = vst [vmem:[%s4437 + $0x1b0] sm:%s4429] %v4492
                %v4494 = vld [vmem:[%s4436 + $0xe0] sm:%s4429]
                %4495 = vst [vmem:[%s4437 + $0x1c0] sm:%s4429] %v4494
                %v4496 = vld [vmem:[%s4436 + $0xe8] sm:%s4429]
                %4497 = vst [vmem:[%s4437 + $0x1d0] sm:%s4429] %v4496
                %v4498 = vld [vmem:[%s4436 + $0xf0] sm:%s4429]
                %4499 = vst [vmem:[%s4437 + $0x1e0] sm:%s4429] %v4498
                %v4500 = vld [vmem:[%s4436 + $0xf8] sm:%s4429]
                %4501 = vst [vmem:[%s4437 + $0x1f0] sm:%s4429] %v4500
                %v4502 = vld [vmem:[%s4436 + $0x100] sm:%s4429]
                %4503 = vst [vmem:[%s4437 + $0x200] sm:%s4429] %v4502
                %v4504 = vld [vmem:[%s4436 + $0x108] sm:%s4429]
                %4505 = vst [vmem:[%s4437 + $0x210] sm:%s4429] %v4504
                %v4506 = vld [vmem:[%s4436 + $0x110] sm:%s4429]
                %4507 = vst [vmem:[%s4437 + $0x220] sm:%s4429] %v4506
                %v4508 = vld [vmem:[%s4436 + $0x118] sm:%s4429]
                %4509 = vst [vmem:[%s4437 + $0x230] sm:%s4429] %v4508
                %v4510 = vld [vmem:[%s4436 + $0x120] sm:%s4429]
                %4511 = vst [vmem:[%s4437 + $0x240] sm:%s4429] %v4510
                %v4512 = vld [vmem:[%s4436 + $0x128] sm:%s4429]
                %4513 = vst [vmem:[%s4437 + $0x250] sm:%s4429] %v4512
                %v4514 = vld [vmem:[%s4436 + $0x130] sm:%s4429]
                %4515 = vst [vmem:[%s4437 + $0x260] sm:%s4429] %v4514
                %v4516 = vld [vmem:[%s4436 + $0x138] sm:%s4429]
                %4517 = vst [vmem:[%s4437 + $0x270] sm:%s4429] %v4516
                %v4518 = vld [vmem:[%s4436 + $0x140] sm:%s4429]
                %4519 = vst [vmem:[%s4437 + $0x280] sm:%s4429] %v4518
                %v4520 = vld [vmem:[%s4436 + $0x148] sm:%s4429]
                %4521 = vst [vmem:[%s4437 + $0x290] sm:%s4429] %v4520
                %v4522 = vld [vmem:[%s4436 + $0x150] sm:%s4429]
                %4523 = vst [vmem:[%s4437 + $0x2a0] sm:%s4429] %v4522
                %v4524 = vld [vmem:[%s4436 + $0x158] sm:%s4429]
                %4525 = vst [vmem:[%s4437 + $0x2b0] sm:%s4429] %v4524
                %v4526 = vld [vmem:[%s4436 + $0x160] sm:%s4429]
                %4527 = vst [vmem:[%s4437 + $0x2c0] sm:%s4429] %v4526
                %v4528 = vld [vmem:[%s4436 + $0x168] sm:%s4429]
                %4529 = vst [vmem:[%s4437 + $0x2d0] sm:%s4429] %v4528
                %v4530 = vld [vmem:[%s4436 + $0x170] sm:%s4429]
                %4531 = vst [vmem:[%s4437 + $0x2e0] sm:%s4429] %v4530
                %v4532 = vld [vmem:[%s4436 + $0x178] sm:%s4429]
                %4533 = vst [vmem:[%s4437 + $0x2f0] sm:%s4429] %v4532
                %v4534 = vld [vmem:[%s4436 + $0x180] sm:%s4429]
                %4535 = vst [vmem:[%s4437 + $0x300] sm:%s4429] %v4534
                %v4536 = vld [vmem:[%s4436 + $0x188] sm:%s4429]
                %4537 = vst [vmem:[%s4437 + $0x310] sm:%s4429] %v4536
                %v4538 = vld [vmem:[%s4436 + $0x190] sm:%s4429]
                %4539 = vst [vmem:[%s4437 + $0x320] sm:%s4429] %v4538
                %v4540 = vld [vmem:[%s4436 + $0x198] sm:%s4429]
                %4541 = vst [vmem:[%s4437 + $0x330] sm:%s4429] %v4540
                %v4542 = vld [vmem:[%s4436 + $0x1a0] sm:%s4429]
                %4543 = vst [vmem:[%s4437 + $0x340] sm:%s4429] %v4542
                %v4544 = vld [vmem:[%s4436 + $0x1a8] sm:%s4429]
                %4545 = vst [vmem:[%s4437 + $0x350] sm:%s4429] %v4544
                %v4546 = vld [vmem:[%s4436 + $0x1b0] sm:%s4429]
                %4547 = vst [vmem:[%s4437 + $0x360] sm:%s4429] %v4546
                %v4548 = vld [vmem:[%s4436 + $0x1b8] sm:%s4429]
                %4549 = vst [vmem:[%s4437 + $0x370] sm:%s4429] %v4548
                %v4550 = vld [vmem:[%s4436 + $0x1c0] sm:%s4429]
                %4551 = vst [vmem:[%s4437 + $0x380] sm:%s4429] %v4550
                %v4552 = vld [vmem:[%s4436 + $0x1c8] sm:%s4429]
                %4553 = vst [vmem:[%s4437 + $0x390] sm:%s4429] %v4552
                %v4554 = vld [vmem:[%s4436 + $0x1d0] sm:%s4429]
                %4555 = vst [vmem:[%s4437 + $0x3a0] sm:%s4429] %v4554
                %v4556 = vld [vmem:[%s4436 + $0x1d8] sm:%s4429]
                %4557 = vst [vmem:[%s4437 + $0x3b0] sm:%s4429] %v4556
                %v4558 = vld [vmem:[%s4436 + $0x1e0] sm:%s4429]
                %4559 = vst [vmem:[%s4437 + $0x3c0] sm:%s4429] %v4558
                %v4560 = vld [vmem:[%s4436 + $0x1e8] sm:%s4429]
                %4561 = vst [vmem:[%s4437 + $0x3d0] sm:%s4429] %v4560
                %v4562 = vld [vmem:[%s4436 + $0x1f0] sm:%s4429]
                %4563 = vst [vmem:[%s4437 + $0x3e0] sm:%s4429] %v4562
                %v4564 = vld [vmem:[%s4436 + $0x1f8] sm:%s4429]
                %4565 = vst [vmem:[%s4437 + $0x3f0] sm:%s4429] %v4564
                %v4566 = vld [vmem:[%s4436 + $0x200] sm:%s4429]
                %4567 = vst [vmem:[%s4437 + $0x400] sm:%s4429] %v4566
                %v4568 = vld [vmem:[%s4436 + $0x208] sm:%s4429]
                %4569 = vst [vmem:[%s4437 + $0x410] sm:%s4429] %v4568
                %v4570 = vld [vmem:[%s4436 + $0x210] sm:%s4429]
                %4571 = vst [vmem:[%s4437 + $0x420] sm:%s4429] %v4570
                %v4572 = vld [vmem:[%s4436 + $0x218] sm:%s4429]
                %4573 = vst [vmem:[%s4437 + $0x430] sm:%s4429] %v4572
                %v4574 = vld [vmem:[%s4436 + $0x220] sm:%s4429]
                %4575 = vst [vmem:[%s4437 + $0x440] sm:%s4429] %v4574
                %v4576 = vld [vmem:[%s4436 + $0x228] sm:%s4429]
                %4577 = vst [vmem:[%s4437 + $0x450] sm:%s4429] %v4576
                %v4578 = vld [vmem:[%s4436 + $0x230] sm:%s4429]
                %4579 = vst [vmem:[%s4437 + $0x460] sm:%s4429] %v4578
                %v4580 = vld [vmem:[%s4436 + $0x238] sm:%s4429]
                %4581 = vst [vmem:[%s4437 + $0x470] sm:%s4429] %v4580
                %v4582 = vld [vmem:[%s4436 + $0x240] sm:%s4429]
                %4583 = vst [vmem:[%s4437 + $0x480] sm:%s4429] %v4582
                %v4584 = vld [vmem:[%s4436 + $0x248] sm:%s4429]
                %4585 = vst [vmem:[%s4437 + $0x490] sm:%s4429] %v4584
                %v4586 = vld [vmem:[%s4436 + $0x250] sm:%s4429]
                %4587 = vst [vmem:[%s4437 + $0x4a0] sm:%s4429] %v4586
                %v4588 = vld [vmem:[%s4436 + $0x258] sm:%s4429]
                %4589 = vst [vmem:[%s4437 + $0x4b0] sm:%s4429] %v4588
                %v4590 = vld [vmem:[%s4436 + $0x260] sm:%s4429]
                %4591 = vst [vmem:[%s4437 + $0x4c0] sm:%s4429] %v4590
                %v4592 = vld [vmem:[%s4436 + $0x268] sm:%s4429]
                %4593 = vst [vmem:[%s4437 + $0x4d0] sm:%s4429] %v4592
                %v4594 = vld [vmem:[%s4436 + $0x270] sm:%s4429]
                %4595 = vst [vmem:[%s4437 + $0x4e0] sm:%s4429] %v4594
                %v4596 = vld [vmem:[%s4436 + $0x278] sm:%s4429]
                %4597 = vst [vmem:[%s4437 + $0x4f0] sm:%s4429] %v4596
                %v4598 = vld [vmem:[%s4436 + $0x280] sm:%s4429]
                %4599 = vst [vmem:[%s4437 + $0x500] sm:%s4429] %v4598
              $region108: #{tpu_custom_call.1} parent=102 // loop_footer
                %s4435 = sadd.s32 1, %s4431
              $region109: #{tpu_custom_call.1} parent=102 // loop_footer_branch
                %4430 = sbr.rel target = $region105
              $region110: #{tpu_custom_call.1} parent=102 // loop_exit
                _
            $region103: #{tpu_custom_call.1} parent=94 // pred_fallthru
              _
          $region95: #{tpu_custom_call.1} parent=90 // pred_fallthru
            _
          %4774 = vnop
        $region91: #{tpu_custom_call.1} parent=23 // pred_fallthru
          _
      $region24: #{tpu_custom_call.1} parent=5 // pred_fallthru
        _
      %p4775 = scmp.le.s32.totalorder 2, %s7
      // Predicated region
      $region126: #{tpu_custom_call.1} parent=5 // pred_check
        %p4776 = pneg %p4775
      $region127: #{tpu_custom_call.1} parent=5 // pred_check_branch
        %4778 = sbr.rel (%p4776) target = $region129
      $region128: #{tpu_custom_call.1} parent=5 // pred_region
        %s4779 = ssub.s32 %s7, 2
        // Predicated region
        $region130: #{tpu_custom_call.1} parent=128 // pred_check
          %p4780 = pneg %p76
        $region131: #{tpu_custom_call.1} parent=128 // pred_check_branch
          %4782 = sbr.rel (%p4780) target = $region133
        $region132: #{tpu_custom_call.1} parent=128 // pred_region
          %s4783 = sand.u32 %s61, 1
          %s4784 = sand.u32 %s61, 1
          %s4785 = smul.addr %s4784, 648
          %s4786 = scalar_lea.vmem [#allocation2], %s4785
        $region133: #{tpu_custom_call.1} parent=128 // pred_fallthru
          _
      $region129: #{tpu_custom_call.1} parent=5 // pred_fallthru
        _
    $region6: #{tpu_custom_call.1} parent=1 // loop_footer
      %s11 = sadd.s32 1, %s7
    $region7: #{tpu_custom_call.1} parent=1 // loop_footer_branch
      %6 = sbr.rel target = $region3
    $region8: #{tpu_custom_call.1} parent=1 // loop_exit
      _

</llo_original>
